<compile_context>
chip_gen: v7x
topology: tpu7x:2x2x1
jax: 0.10.0
libtpu: 0.0.40
codegen_flags: <defaults>
</compile_context>

<pallas_src>
import functools

import numpy as np
import jax
import jax.numpy as jnp
from jax.experimental import pallas as pl
from jax.experimental.pallas import tpu as pltpu

# ---------------------------------------------------------------------------
# Config (mirrors `args`)
# ---------------------------------------------------------------------------
ITERATION = 3
POSE_AGG_MODE = "add"
FEATURE_DIM = 1000
FEATURE_PAD = 1024                        # lane-padded feature width
POSE6D_DIM = 16 * 6                       # 96
POSE6D_PAD = 128                          # lane-padded pose width
MLP_HID = (512, 256, 128)
NUM_MANO_JOINTS = 16
NUM_VERTS = 778
NUM_BETAS = 10
MANO_PARENTS = (-1, 0, 1, 2, 0, 4, 5, 0, 7, 8, 0, 10, 11, 0, 13, 14)
TIP_VERT_IDS = (77, 177, 277, 377, 477)   # synthetic fingertip vertex ids

# Kinematic-tree levels (depth-wise batched FK).
_LEVEL1 = (1, 4, 7, 10, 13)
_LEVEL2 = (2, 5, 8, 11, 14)
_LEVEL3 = (3, 6, 9, 12, 15)
_LEVEL1_ARR = np.array(_LEVEL1)
_LEVEL2_ARR = np.array(_LEVEL2)
_LEVEL3_ARR = np.array(_LEVEL3)
_FK_ORDER = np.array((0,) + _LEVEL1 + _LEVEL2 + _LEVEL3)
_FK_INV = np.argsort(_FK_ORDER)
_PARENTS_ARR = np.array(MANO_PARENTS[1:])

_BATCH_PAD = 16                           # bf16 sublane packing


def _round_up(x, m):
    return -(-x // m) * m


def _pad_rows(x, mult=_BATCH_PAD):
    m = x.shape[0]
    mp = _round_up(max(m, mult), mult)
    if mp == m:
        return x, m
    return jnp.zeros((mp,) + x.shape[1:], x.dtype).at[:m].set(x), m


def _pad2d(w, kp, np_):
    k, n = w.shape
    return jnp.zeros((kp, np_), w.dtype).at[:k, :n].set(w)


def _vmem_bytes(arrays, out_bytes, lo=8 << 20, hi=24 << 20):
    est = sum(int(a.size) * a.dtype.itemsize for a in arrays) + out_bytes
    return int(min(max(int(est * 1.5) + (2 << 20), lo), hi))


# ---------------------------------------------------------------------------
# Single-step Pallas linear:  y = x @ W + b  (weights fit VMEM -> no grid)
# ---------------------------------------------------------------------------
def _linear_kernel(x_ref, w_ref, b_ref, o_ref):
    o_ref[...] = jnp.dot(x_ref[...], w_ref[...],
                         preferred_element_type=jnp.float32) + b_ref[...]


def pallas_linear(x, w, b):
    """x: (M, K) bf16, w: (K, N) bf16, b: (1, N) f32 -> (M, N) f32."""
    xp, m = _pad_rows(x)
    mp = xp.shape[0]
    n = w.shape[1]
    vmem = _vmem_bytes((xp, w, b), mp * n * 4)
    out = pl.pallas_call(
        _linear_kernel,
        out_shape=jax.ShapeDtypeStruct((mp, n), jnp.float32),
        compiler_params=pltpu.CompilerParams(vmem_limit_bytes=vmem),
    )(xp, w, b)
    return out[:m]


# ---------------------------------------------------------------------------
# Fused backbone + iterative pose decoder (single pallas_call, one launch)
# ---------------------------------------------------------------------------
def _backbone_decoder_kernel(img_ref, bbw_ref, bbb_ref,
                             w1f_ref, w1p_ref, b1_ref,
                             w2_ref, b2_ref, w3_ref, b3_ref,
                             w4_ref, b4_ref, out_ref):
    bp = img_ref.shape[0]

    # Backbone stand-in: one matmul; the feature stays in VMEM/registers.
    feat = jnp.dot(img_ref[...], bbw_ref[...],
                   preferred_element_type=jnp.float32) + bbb_ref[...]
    feat_bf = feat.astype(jnp.bfloat16)

    # Feature-side W1 projection for ALL iterations at once (hoisted off the
    # pose-carry serial chain): (bp, 1024) @ (1024, 3*512).
    h_all = jnp.dot(feat_bf, w1f_ref[...], preferred_element_type=jnp.float32)

    # pose_6d init: identity rotation's top-2 rows per joint ([1,0,0,0,1,0]x16),
    # lane-padded to 128 with exact zeros — generated in-kernel (no HBM input).
    lane = jax.lax.broadcasted_iota(jnp.int32, (bp, POSE6D_PAD), 1)
    lm = lane % 6
    pose = jnp.where((lane < POSE6D_DIM) & ((lm == 0) | (lm == 4)),
                     jnp.float32(1.0), jnp.float32(0.0))

    h0 = MLP_HID[0]
    # Fully unrolled (t = 3, static): pose carried in registers, weights indexed
    # statically from the resident (t, K, N) VMEM blocks.
    for i in range(ITERATION):
        h = h_all[:, i * h0:(i + 1) * h0]
        h = h + jnp.dot(pose.astype(jnp.bfloat16), w1p_ref[i],
                        preferred_element_type=jnp.float32)
        h = jnp.maximum(h + b1_ref[i], 0.0)
        h = jnp.maximum(
            jnp.dot(h.astype(jnp.bfloat16), w2_ref[i],
                    preferred_element_type=jnp.float32) + b2_ref[i], 0.0)
        h = jnp.maximum(
            jnp.dot(h.astype(jnp.bfloat16), w3_ref[i],
                    preferred_element_type=jnp.float32) + b3_ref[i], 0.0)
        delta = jnp.dot(h.astype(jnp.bfloat16), w4_ref[i],
                        preferred_element_type=jnp.float32) + b4_ref[i]

        # pose_agg_mode == 'add'; delta[:, 96:] == 0 because W4/b4 pad cols are 0.
        pose = pose + delta
        out_ref[i] = pose


def backbone_and_decoder(img_flat_bf16, params):
    xp, b_orig = _pad_rows(img_flat_bf16)
    bp = xp.shape[0]
    args = (xp, params["bb_w"], params["bb_b"]) + params["dec"]
    vmem = _vmem_bytes(args, ITERATION * bp * POSE6D_PAD * 4)
    out = pl.pallas_call(
        _backbone_decoder_kernel,
        out_shape=jax.ShapeDtypeStruct((ITERATION, bp, POSE6D_PAD), jnp.float32),
        compiler_params=pltpu.CompilerParams(vmem_limit_bytes=vmem),
    )(*args)
    return [out[i, :b_orig, :POSE6D_DIM] for i in range(ITERATION)]


# ---------------------------------------------------------------------------
# Rotation conversions (plain-JAX glue, exact semantics of the module)
# ---------------------------------------------------------------------------
def rotation_6d_to_matrix(d6):
    a1, a2 = d6[..., :3], d6[..., 3:]
    b1 = a1 / jnp.maximum(jnp.linalg.norm(a1, axis=-1, keepdims=True), 1e-6)
    b2 = a2 - jnp.sum(b1 * a2, axis=-1, keepdims=True) * b1
    b2 = b2 / jnp.maximum(jnp.linalg.norm(b2, axis=-1, keepdims=True), 1e-6)
    b3 = jnp.cross(b1, b2, axis=-1)
    return jnp.stack((b1, b2, b3), axis=-2)


def matrix_to_axis_angle(r):
    trace = r[..., 0, 0] + r[..., 1, 1] + r[..., 2, 2]
    cos = jnp.clip((trace - 1.0) * 0.5, -1.0, 1.0)
    angle = jnp.arccos(cos)
    axis = jnp.stack([r[..., 2, 1] - r[..., 1, 2],
                      r[..., 0, 2] - r[..., 2, 0],
                      r[..., 1, 0] - r[..., 0, 1]], axis=-1)
    sin = jnp.sin(angle)
    factor = jnp.where(sin > 1e-6, angle / (2.0 * jnp.maximum(sin, 1e-6)), 0.5)
    return axis * factor[..., None]


def pose_6d_to_axis_angle(pose_6d_vector):
    pose_6d = pose_6d_vector.reshape(-1, 16, 6)
    pose_matrix = rotation_6d_to_matrix(pose_6d)
    return matrix_to_axis_angle(pose_matrix).reshape(-1, 48)


def axis_angle_to_matrix(aa):
    angle = jnp.linalg.norm(aa, axis=-1, keepdims=True)
    axis = aa / jnp.maximum(angle, 1e-8)
    x, y, z = axis[..., 0], axis[..., 1], axis[..., 2]
    c = jnp.cos(angle)[..., 0]
    s = jnp.sin(angle)[..., 0]
    cc = 1.0 - c
    row0 = jnp.stack([c + x * x * cc, x * y * cc - z * s, x * z * cc + y * s], -1)
    row1 = jnp.stack([x * y * cc + z * s, c + y * y * cc, y * z * cc - x * s], -1)
    row2 = jnp.stack([x * z * cc - y * s, y * z * cc + x * s, c + z * z * cc], -1)
    return jnp.stack([row0, row1, row2], axis=-2)


# ---------------------------------------------------------------------------
# Synthetic MANO layer (deterministic synthetic template parameters)
# ---------------------------------------------------------------------------
def make_mano_params(key):
    k1, k2, k3, k4, k5 = jax.random.split(key, 5)
    v_template = jax.random.normal(k1, (1, NUM_VERTS * 3), jnp.float32) * 0.05
    w_shape = jax.random.normal(k2, (NUM_BETAS, NUM_VERTS * 3), jnp.float32) * 0.01
    w_pose = jax.random.normal(k3, (15 * 9, NUM_VERTS * 3), jnp.float32) * 0.001
    j_reg = jax.nn.softmax(
        jax.random.normal(k4, (NUM_MANO_JOINTS, NUM_VERTS), jnp.float32), axis=-1)
    skin_w = jax.nn.softmax(
        jax.random.normal(k5, (NUM_VERTS, NUM_MANO_JOINTS), jnp.float32) * 2.0, axis=-1)

    # Fused blend-shape weight: [betas ; pose_feat] @ W_blend + v_template -> v_posed.
    k_true = NUM_BETAS + 15 * 9                       # 145
    k_pad = _round_up(k_true, 128)                    # 256
    n_pad = _round_up(NUM_VERTS * 3, 128)             # 2432
    w_blend = jnp.concatenate([w_shape, w_pose], axis=0)          # (145, 2334)
    w_blend = _pad2d(w_blend, k_pad, n_pad).astype(jnp.bfloat16)
    b_blend = jnp.zeros((1, n_pad), jnp.float32).at[:, :NUM_VERTS * 3].set(v_template)

    # Joint regressor folded with template / shape dirs:
    #   j_reg @ (v_template + betas @ w_shape)  ==  j_template + betas @ j_shapedirs
    j_template = jnp.einsum("jv,vd->jd", j_reg, v_template.reshape(NUM_VERTS, 3))
    j_shapedirs = jnp.einsum("jv,kvd->kjd", j_reg,
                             w_shape.reshape(NUM_BETAS, NUM_VERTS, 3))

    return dict(w_blend=w_blend, b_blend=b_blend, blend_k=k_true,
                j_template=j_template, j_shapedirs=j_shapedirs, skin_w=skin_w)


def mano_layer_forward(mano, pose_aa, betas):
    b = pose_aa.shape[0]
    rots = axis_angle_to_matrix(pose_aa.reshape(b, NUM_MANO_JOINTS, 3))  # (B,16,3,3)
    pose_feat = (rots[:, 1:] - jnp.eye(3, dtype=jnp.float32)).reshape(b, 15 * 9)

    # Fused shape + pose blend-shape projection (single-step Pallas matmul).
    x_blend = jnp.concatenate([betas.astype(jnp.float32), pose_feat], axis=1)
    k_pad = mano["w_blend"].shape[0]
    x_blend = jnp.pad(x_blend, ((0, 0), (0, k_pad - x_blend.shape[1])))
    v_posed = pallas_linear(x_blend.astype(jnp.bfloat16),
                            mano["w_blend"], mano["b_blend"])
    v_posed = v_posed[:, :NUM_VERTS * 3].reshape(b, NUM_VERTS, 3)

    # Rest-pose joints (regressor pre-folded with template / shape dirs).
    joints_rest = mano["j_template"][None] + jnp.einsum(
        "bk,kjd->bjd", betas.astype(jnp.float32), mano["j_shapedirs"])   # (B,16,3)

    # Local transforms for ALL joints at once.
    rel_t = jnp.concatenate(
        [joints_rest[:, :1],
         joints_rest[:, 1:] - joints_rest[:, _PARENTS_ARR]], axis=1)     # (B,16,3)
    top = jnp.concatenate([rots, rel_t[..., None]], axis=-1)             # (B,16,3,4)
    bottom = jnp.broadcast_to(
        jnp.array([0., 0., 0., 1.], jnp.float32), (b, NUM_MANO_JOINTS, 1, 4))
    local = jnp.concatenate([top, bottom], axis=-2)                      # (B,16,4,4)

    # Depth-wise batched FK: 3 batched compositions instead of 15 serial einsums.
    g0 = local[:, 0]                                                     # (B,4,4)
    g1 = jnp.einsum("bij,bljk->blik", g0, local[:, _LEVEL1_ARR])         # (B,5,4,4)
    g2 = jnp.einsum("blij,bljk->blik", g1, local[:, _LEVEL2_ARR])
    g3 = jnp.einsum("blij,bljk->blik", g2, local[:, _LEVEL3_ARR])
    g = jnp.concatenate([g0[:, None], g1, g2, g3], axis=1)[:, _FK_INV]   # (B,16,4,4)
    joints_world = g[..., :3, 3]                                         # (B,16,3)

    # Remove rest-pose joint locations from the transforms
    # (homogeneous joint's 4th component is 0 -> only the first 3 columns matter).
    corr = jnp.einsum("bjmn,bjn->bjm", g[..., :, :3], joints_rest)       # (B,16,4)
    g_rel = g - jnp.concatenate(
        [jnp.zeros_like(g[..., :3]), corr[..., None]], axis=-1)

    # Linear blend skinning (R @ v + t form, no homogeneous concat).
    t_per_vert = jnp.einsum("vj,bjmn->bvmn", mano["skin_w"], g_rel)      # (B,V,4,4)
    verts = (jnp.einsum("bvmn,bvn->bvm", t_per_vert[..., :3, :3], v_posed)
             + t_per_vert[..., :3, 3])

    tips = verts[:, np.array(TIP_VERT_IDS), :]
    keypoints = jnp.concatenate([joints_world, tips], axis=1)            # (B,21,3)

    # manopth-style millimeter output scale.
    return verts * 1000.0, keypoints * 1000.0


# ---------------------------------------------------------------------------
# Parameter init + full forward
# ---------------------------------------------------------------------------
def init_params(key, img_flat_dim):
    keys = jax.random.split(key, 3)

    # Backbone stand-in weight (bf16, zero-padded to lane-aligned dims).
    k_pad = _round_up(img_flat_dim, 128)
    bb_w = jax.random.normal(keys[0], (img_flat_dim, FEATURE_DIM), jnp.float32) * 0.02
    bb_w = _pad2d(bb_w, k_pad, FEATURE_PAD).astype(jnp.bfloat16)
    bb_b = jnp.zeros((1, FEATURE_PAD), jnp.float32)

    # Iterative decoder weights (bf16):
    #   - W1 feature rows concatenated across iterations along N (hoisted matmul),
    #     feature rows padded 1000->1024 with zeros,
    #   - W1 pose rows padded 96->128 with zeros,
    #   - W4/b4 output cols padded 96->128 with zeros (delta pad lanes exact 0).
    t = ITERATION
    dk = jax.random.split(keys[1], 4)
    w1 = jax.random.normal(dk[0], (t, FEATURE_DIM + POSE6D_DIM, MLP_HID[0]),
                           jnp.float32) * 0.02
    w1f = jnp.transpose(w1[:, :FEATURE_DIM], (1, 0, 2)).reshape(
        FEATURE_DIM, t * MLP_HID[0])
    w1f = _pad2d(w1f, FEATURE_PAD, t * MLP_HID[0]).astype(jnp.bfloat16)
    w1p = (jnp.zeros((t, POSE6D_PAD, MLP_HID[0]), jnp.float32)
           .at[:, :POSE6D_DIM].set(w1[:, FEATURE_DIM:])).astype(jnp.bfloat16)
    w2 = (jax.random.normal(dk[1], (t, MLP_HID[0], MLP_HID[1]), jnp.float32)
          * 0.02).astype(jnp.bfloat16)
    w3 = (jax.random.normal(dk[2], (t, MLP_HID[1], MLP_HID[2]), jnp.float32)
          * 0.02).astype(jnp.bfloat16)
    w4r = jax.random.normal(dk[3], (t, MLP_HID[2], POSE6D_DIM), jnp.float32) * 0.02
    w4 = (jnp.zeros((t, MLP_HID[2], POSE6D_PAD), jnp.float32)
          .at[:, :, :POSE6D_DIM].set(w4r)).astype(jnp.bfloat16)
    b1 = jnp.zeros((t, 1, MLP_HID[0]), jnp.float32)
    b2 = jnp.zeros((t, 1, MLP_HID[1]), jnp.float32)
    b3 = jnp.zeros((t, 1, MLP_HID[2]), jnp.float32)
    b4 = jnp.zeros((t, 1, POSE6D_PAD), jnp.float32)
    dec = (w1f, w1p, b1, w2, b2, w3, b3, w4, b4)

    mano = make_mano_params(keys[2])
    return dict(bb_w=bb_w, bb_b=bb_b, dec=dec, mano=mano)


def model_forward(params, img, shape_params):
    b = img.shape[0]
    # Flatten NCHW image, pad K to the lane-aligned backbone weight, cast bf16.
    x = img.reshape(b, -1).astype(jnp.float32)
    kp = params["bb_w"].shape[0]
    if x.shape[1] != kp:
        x = jnp.pad(x, ((0, 0), (0, kp - x.shape[1])))
    x = x.astype(jnp.bfloat16)

    # Fused backbone + iterative decoder (single Pallas launch).
    pred_pose_6d = backbone_and_decoder(x, params)               # list of (B, 96)
    pose_aa = pose_6d_to_axis_angle(pred_pose_6d[-1])
    pred_mesh, pred_keypoints = mano_layer_forward(params["mano"], pose_aa, shape_params)

    return {
        "mesh_pred": [pred_mesh / 1000.0 / 0.2],
        "keypoints_pred": pred_keypoints / 1000.0 / 0.2,
        "mano_pose_pred": pred_pose_6d[::-1],
    }


if __name__ == "__main__":
    key = jax.random.PRNGKey(0)
    k_img, k_shape, k_param = jax.random.split(key, 3)

    B, C, H, W = 2, 4, 16, 16
    img = jax.random.normal(k_img, (B, C, H, W), jnp.float32)
    shape_params = jax.random.normal(k_shape, (B, NUM_BETAS), jnp.float32) * 0.1

    params = init_params(k_param, C * H * W)

    fwd = jax.jit(functools.partial(model_forward, params))
    out = fwd(img, shape_params)
    out = jax.block_until_ready(out)

    assert out["mesh_pred"][0].shape == (B, NUM_VERTS, 3)
    assert out["keypoints_pred"].shape == (B, 21, 3)
    assert len(out["mano_pose_pred"]) == ITERATION
    assert all(p.shape == (B, POSE6D_DIM) for p in out["mano_pose_pred"])
    assert all(bool(jnp.all(jnp.isfinite(p))) for p in out["mano_pose_pred"])
    assert bool(jnp.all(jnp.isfinite(out["mesh_pred"][0])))
    assert bool(jnp.all(jnp.isfinite(out["keypoints_pred"])))

    print("KERNEL_OK")
</pallas_src>

<mosaic_0001>
module attributes {stable_mosaic.version = 11 : i64} {
  func.func @_backbone_decoder_kernel(%arg0: memref<16x1024xbf16, #tpu.memory_space<vmem>>, %arg1: memref<1024x1024xbf16, #tpu.memory_space<vmem>>, %arg2: memref<1x1024xf32, #tpu.memory_space<vmem>>, %arg3: memref<1024x1536xbf16, #tpu.memory_space<vmem>>, %arg4: memref<3x128x512xbf16, #tpu.memory_space<vmem>>, %arg5: memref<3x1x512xf32, #tpu.memory_space<vmem>>, %arg6: memref<3x512x256xbf16, #tpu.memory_space<vmem>>, %arg7: memref<3x1x256xf32, #tpu.memory_space<vmem>>, %arg8: memref<3x256x128xbf16, #tpu.memory_space<vmem>>, %arg9: memref<3x1x128xf32, #tpu.memory_space<vmem>>, %arg10: memref<3x128x128xbf16, #tpu.memory_space<vmem>>, %arg11: memref<3x1x128xf32, #tpu.memory_space<vmem>>, %arg12: memref<3x16x128xf32, #tpu.memory_space<vmem>>) attributes {dimension_semantics = [], scalar_prefetch = 0 : i64, scratch_operands = 0 : i64, tpu.core_type = #tpu.core_type<tc>} {
    %c0 = arith.constant 0 : index
    %c0_0 = arith.constant 0 : index
    %0 = vector.load %arg0[%c0, %c0_0] : memref<16x1024xbf16, #tpu.memory_space<vmem>>, vector<16x1024xbf16>
    %c0_1 = arith.constant 0 : index
    %c0_2 = arith.constant 0 : index
    %1 = vector.load %arg1[%c0_1, %c0_2] : memref<1024x1024xbf16, #tpu.memory_space<vmem>>, vector<1024x1024xbf16>
    %cst = arith.constant dense<0.000000e+00> : vector<16x1024xf32>
    %2 = tpu.matmul %0, %1, %cst {dimension_numbers = #tpu.dot_dimension_numbers<[1], [0], [0], [1], [0, 0, 1, 1], [], []>} : vector<16x1024xbf16>, vector<1024x1024xbf16>, vector<16x1024xf32> -> vector<16x1024xf32>
    %c0_3 = arith.constant 0 : index
    %c0_4 = arith.constant 0 : index
    %3 = vector.load %arg2[%c0_3, %c0_4] : memref<1x1024xf32, #tpu.memory_space<vmem>>, vector<1x1024xf32>
    %4 = vector.broadcast %3 : vector<1x1024xf32> to vector<16x1024xf32>
    %5 = arith.addf %2, %4 : vector<16x1024xf32>
    %6 = arith.truncf %5 : vector<16x1024xf32> to vector<16x1024xbf16>
    %c0_5 = arith.constant 0 : index
    %c0_6 = arith.constant 0 : index
    %7 = vector.load %arg3[%c0_5, %c0_6] : memref<1024x1536xbf16, #tpu.memory_space<vmem>>, vector<1024x1536xbf16>
    %cst_7 = arith.constant dense<0.000000e+00> : vector<16x1536xf32>
    %8 = tpu.matmul %6, %7, %cst_7 {dimension_numbers = #tpu.dot_dimension_numbers<[1], [0], [0], [1], [0, 0, 1, 1], [], []>} : vector<16x1024xbf16>, vector<1024x1536xbf16>, vector<16x1536xf32> -> vector<16x1536xf32>
    %9 = tpu.iota {dimensions = array<i32: 1>} : vector<16x128xi32>
    %c6_i32 = arith.constant 6 : i32
    %c0_i32 = arith.constant 0 : i32
    %10 = arith.cmpi eq, %c6_i32, %c0_i32 : i32
    %c1_i32 = arith.constant 1 : i32
    %11 = arith.select %10, %c1_i32, %c6_i32 : i32
    %12 = vector.broadcast %11 : i32 to vector<16x128xi32>
    %13 = arith.remsi %9, %12 : vector<16x128xi32>
    %c0_i32_8 = arith.constant 0 : i32
    %14 = vector.broadcast %c0_i32_8 : i32 to vector<16x128xi32>
    %15 = arith.cmpi ne, %13, %14 : vector<16x128xi32>
    %c0_i32_9 = arith.constant 0 : i32
    %16 = vector.broadcast %c0_i32_9 : i32 to vector<16x128xi32>
    %17 = arith.cmpi slt, %13, %16 : vector<16x128xi32>
    %c0_i32_10 = arith.constant 0 : i32
    %18 = arith.cmpi slt, %11, %c0_i32_10 : i32
    %19 = vector.broadcast %18 : i1 to vector<16x128xi1>
    %20 = vector.broadcast %19 : vector<16x128xi1> to vector<16x128xi1>
    %21 = arith.xori %17, %20 : vector<16x128xi1>
    %22 = arith.andi %21, %15 : vector<16x128xi1>
    %23 = vector.broadcast %11 : i32 to vector<16x128xi32>
    %24 = arith.addi %13, %23 : vector<16x128xi32>
    %25 = arith.select %22, %24, %13 : vector<16x128xi1>, vector<16x128xi32>
    %c96_i32 = arith.constant 96 : i32
    %26 = vector.broadcast %c96_i32 : i32 to vector<16x128xi32>
    %27 = arith.cmpi slt, %9, %26 : vector<16x128xi32>
    %c0_i32_11 = arith.constant 0 : i32
    %28 = vector.broadcast %c0_i32_11 : i32 to vector<16x128xi32>
    %29 = arith.cmpi eq, %25, %28 : vector<16x128xi32>
    %c4_i32 = arith.constant 4 : i32
    %30 = vector.broadcast %c4_i32 : i32 to vector<16x128xi32>
    %31 = arith.cmpi eq, %25, %30 : vector<16x128xi32>
    %32 = arith.ori %29, %31 : vector<16x128xi1>
    %33 = arith.andi %27, %32 : vector<16x128xi1>
    %cst_12 = arith.constant 1.000000e+00 : f32
    %cst_13 = arith.constant 0.000000e+00 : f32
    %34 = vector.broadcast %cst_12 : f32 to vector<16x128xf32>
    %35 = vector.broadcast %cst_13 : f32 to vector<16x128xf32>
    %36 = arith.select %33, %34, %35 : vector<16x128xi1>, vector<16x128xf32>
    %37 = vector.extract_strided_slice %8 {offsets = [0, 0], sizes = [16, 512], strides = [1, 1]} : vector<16x1536xf32> to vector<16x512xf32>
    %38 = arith.truncf %36 : vector<16x128xf32> to vector<16x128xbf16>
    %c0_14 = arith.constant 0 : index
    %c0_15 = arith.constant 0 : index
    %c0_16 = arith.constant 0 : index
    %39 = vector.load %arg4[%c0_14, %c0_15, %c0_16] : memref<3x128x512xbf16, #tpu.memory_space<vmem>>, vector<1x128x512xbf16>
    %40 = vector.shape_cast %39 : vector<1x128x512xbf16> to vector<128x512xbf16>
    %cst_17 = arith.constant dense<0.000000e+00> : vector<16x512xf32>
    %41 = tpu.matmul %38, %40, %cst_17 {dimension_numbers = #tpu.dot_dimension_numbers<[1], [0], [0], [1], [0, 0, 1, 1], [], []>} : vector<16x128xbf16>, vector<128x512xbf16>, vector<16x512xf32> -> vector<16x512xf32>
    %42 = arith.addf %37, %41 : vector<16x512xf32>
    %c0_18 = arith.constant 0 : index
    %c0_19 = arith.constant 0 : index
    %c0_20 = arith.constant 0 : index
    %43 = vector.load %arg5[%c0_18, %c0_19, %c0_20] : memref<3x1x512xf32, #tpu.memory_space<vmem>>, vector<1x1x512xf32>
    %44 = vector.shape_cast %43 : vector<1x1x512xf32> to vector<1x512xf32>
    %45 = vector.broadcast %44 : vector<1x512xf32> to vector<16x512xf32>
    %46 = arith.addf %42, %45 : vector<16x512xf32>
    %cst_21 = arith.constant 0.000000e+00 : f32
    %47 = vector.broadcast %cst_21 : f32 to vector<16x512xf32>
    %48 = arith.maximumf %46, %47 : vector<16x512xf32>
    %49 = arith.truncf %48 : vector<16x512xf32> to vector<16x512xbf16>
    %c0_22 = arith.constant 0 : index
    %c0_23 = arith.constant 0 : index
    %c0_24 = arith.constant 0 : index
    %50 = vector.load %arg6[%c0_22, %c0_23, %c0_24] : memref<3x512x256xbf16, #tpu.memory_space<vmem>>, vector<1x512x256xbf16>
    %51 = vector.shape_cast %50 : vector<1x512x256xbf16> to vector<512x256xbf16>
    %cst_25 = arith.constant dense<0.000000e+00> : vector<16x256xf32>
    %52 = tpu.matmul %49, %51, %cst_25 {dimension_numbers = #tpu.dot_dimension_numbers<[1], [0], [0], [1], [0, 0, 1, 1], [], []>} : vector<16x512xbf16>, vector<512x256xbf16>, vector<16x256xf32> -> vector<16x256xf32>
    %c0_26 = arith.constant 0 : index
    %c0_27 = arith.constant 0 : index
    %c0_28 = arith.constant 0 : index
    %53 = vector.load %arg7[%c0_26, %c0_27, %c0_28] : memref<3x1x256xf32, #tpu.memory_space<vmem>>, vector<1x1x256xf32>
    %54 = vector.shape_cast %53 : vector<1x1x256xf32> to vector<1x256xf32>
    %55 = vector.broadcast %54 : vector<1x256xf32> to vector<16x256xf32>
    %56 = arith.addf %52, %55 : vector<16x256xf32>
    %cst_29 = arith.constant 0.000000e+00 : f32
    %57 = vector.broadcast %cst_29 : f32 to vector<16x256xf32>
    %58 = arith.maximumf %56, %57 : vector<16x256xf32>
    %59 = arith.truncf %58 : vector<16x256xf32> to vector<16x256xbf16>
    %c0_30 = arith.constant 0 : index
    %c0_31 = arith.constant 0 : index
    %c0_32 = arith.constant 0 : index
    %60 = vector.load %arg8[%c0_30, %c0_31, %c0_32] : memref<3x256x128xbf16, #tpu.memory_space<vmem>>, vector<1x256x128xbf16>
    %61 = vector.shape_cast %60 : vector<1x256x128xbf16> to vector<256x128xbf16>
    %cst_33 = arith.constant dense<0.000000e+00> : vector<16x128xf32>
    %62 = tpu.matmul %59, %61, %cst_33 {dimension_numbers = #tpu.dot_dimension_numbers<[1], [0], [0], [1], [0, 0, 1, 1], [], []>} : vector<16x256xbf16>, vector<256x128xbf16>, vector<16x128xf32> -> vector<16x128xf32>
    %c0_34 = arith.constant 0 : index
    %c0_35 = arith.constant 0 : index
    %c0_36 = arith.constant 0 : index
    %63 = vector.load %arg9[%c0_34, %c0_35, %c0_36] : memref<3x1x128xf32, #tpu.memory_space<vmem>>, vector<1x1x128xf32>
    %64 = vector.shape_cast %63 : vector<1x1x128xf32> to vector<1x128xf32>
    %65 = vector.broadcast %64 : vector<1x128xf32> to vector<16x128xf32>
    %66 = arith.addf %62, %65 : vector<16x128xf32>
    %cst_37 = arith.constant 0.000000e+00 : f32
    %67 = vector.broadcast %cst_37 : f32 to vector<16x128xf32>
    %68 = arith.maximumf %66, %67 : vector<16x128xf32>
    %69 = arith.truncf %68 : vector<16x128xf32> to vector<16x128xbf16>
    %c0_38 = arith.constant 0 : index
    %c0_39 = arith.constant 0 : index
    %c0_40 = arith.constant 0 : index
    %70 = vector.load %arg10[%c0_38, %c0_39, %c0_40] : memref<3x128x128xbf16, #tpu.memory_space<vmem>>, vector<1x128x128xbf16>
    %71 = vector.shape_cast %70 : vector<1x128x128xbf16> to vector<128x128xbf16>
    %cst_41 = arith.constant dense<0.000000e+00> : vector<16x128xf32>
    %72 = tpu.matmul %69, %71, %cst_41 {dimension_numbers = #tpu.dot_dimension_numbers<[1], [0], [0], [1], [0, 0, 1, 1], [], []>} : vector<16x128xbf16>, vector<128x128xbf16>, vector<16x128xf32> -> vector<16x128xf32>
    %c0_42 = arith.constant 0 : index
    %c0_43 = arith.constant 0 : index
    %c0_44 = arith.constant 0 : index
    %73 = vector.load %arg11[%c0_42, %c0_43, %c0_44] : memref<3x1x128xf32, #tpu.memory_space<vmem>>, vector<1x1x128xf32>
    %74 = vector.shape_cast %73 : vector<1x1x128xf32> to vector<1x128xf32>
    %75 = vector.broadcast %74 : vector<1x128xf32> to vector<16x128xf32>
    %76 = arith.addf %72, %75 : vector<16x128xf32>
    %77 = arith.addf %36, %76 : vector<16x128xf32>
    %c0_45 = arith.constant 0 : index
    %c0_46 = arith.constant 0 : index
    %c0_47 = arith.constant 0 : index
    %78 = vector.load %arg12[%c0_45, %c0_46, %c0_47] : memref<3x16x128xf32, #tpu.memory_space<vmem>>, vector<1x16x128xf32>
    %79 = vector.shape_cast %78 : vector<1x16x128xf32> to vector<16x128xf32>
    %80 = vector.shape_cast %77 : vector<16x128xf32> to vector<1x16x128xf32>
    tpu.vector_store %arg12[%c0_45, %c0_46, %c0_47], %80 {strides = array<i32>} : memref<3x16x128xf32, #tpu.memory_space<vmem>>, vector<1x16x128xf32>,
    %81 = vector.extract_strided_slice %8 {offsets = [0, 512], sizes = [16, 512], strides = [1, 1]} : vector<16x1536xf32> to vector<16x512xf32>
    %82 = arith.truncf %77 : vector<16x128xf32> to vector<16x128xbf16>
    %c1 = arith.constant 1 : index
    %c0_48 = arith.constant 0 : index
    %c0_49 = arith.constant 0 : index
    %83 = vector.load %arg4[%c1, %c0_48, %c0_49] : memref<3x128x512xbf16, #tpu.memory_space<vmem>>, vector<1x128x512xbf16>
    %84 = vector.shape_cast %83 : vector<1x128x512xbf16> to vector<128x512xbf16>
    %cst_50 = arith.constant dense<0.000000e+00> : vector<16x512xf32>
    %85 = tpu.matmul %82, %84, %cst_50 {dimension_numbers = #tpu.dot_dimension_numbers<[1], [0], [0], [1], [0, 0, 1, 1], [], []>} : vector<16x128xbf16>, vector<128x512xbf16>, vector<16x512xf32> -> vector<16x512xf32>
    %86 = arith.addf %81, %85 : vector<16x512xf32>
    %c1_51 = arith.constant 1 : index
    %c0_52 = arith.constant 0 : index
    %c0_53 = arith.constant 0 : index
    %87 = vector.load %arg5[%c1_51, %c0_52, %c0_53] : memref<3x1x512xf32, #tpu.memory_space<vmem>>, vector<1x1x512xf32>
    %88 = vector.shape_cast %87 : vector<1x1x512xf32> to vector<1x512xf32>
    %89 = vector.broadcast %88 : vector<1x512xf32> to vector<16x512xf32>
    %90 = arith.addf %86, %89 : vector<16x512xf32>
    %cst_54 = arith.constant 0.000000e+00 : f32
    %91 = vector.broadcast %cst_54 : f32 to vector<16x512xf32>
    %92 = arith.maximumf %90, %91 : vector<16x512xf32>
    %93 = arith.truncf %92 : vector<16x512xf32> to vector<16x512xbf16>
    %c1_55 = arith.constant 1 : index
    %c0_56 = arith.constant 0 : index
    %c0_57 = arith.constant 0 : index
    %94 = vector.load %arg6[%c1_55, %c0_56, %c0_57] : memref<3x512x256xbf16, #tpu.memory_space<vmem>>, vector<1x512x256xbf16>
    %95 = vector.shape_cast %94 : vector<1x512x256xbf16> to vector<512x256xbf16>
    %cst_58 = arith.constant dense<0.000000e+00> : vector<16x256xf32>
    %96 = tpu.matmul %93, %95, %cst_58 {dimension_numbers = #tpu.dot_dimension_numbers<[1], [0], [0], [1], [0, 0, 1, 1], [], []>} : vector<16x512xbf16>, vector<512x256xbf16>, vector<16x256xf32> -> vector<16x256xf32>
    %c1_59 = arith.constant 1 : index
    %c0_60 = arith.constant 0 : index
    %c0_61 = arith.constant 0 : index
    %97 = vector.load %arg7[%c1_59, %c0_60, %c0_61] : memref<3x1x256xf32, #tpu.memory_space<vmem>>, vector<1x1x256xf32>
    %98 = vector.shape_cast %97 : vector<1x1x256xf32> to vector<1x256xf32>
    %99 = vector.broadcast %98 : vector<1x256xf32> to vector<16x256xf32>
    %100 = arith.addf %96, %99 : vector<16x256xf32>
    %cst_62 = arith.constant 0.000000e+00 : f32
    %101 = vector.broadcast %cst_62 : f32 to vector<16x256xf32>
    %102 = arith.maximumf %100, %101 : vector<16x256xf32>
    %103 = arith.truncf %102 : vector<16x256xf32> to vector<16x256xbf16>
    %c1_63 = arith.constant 1 : index
    %c0_64 = arith.constant 0 : index
    %c0_65 = arith.constant 0 : index
    %104 = vector.load %arg8[%c1_63, %c0_64, %c0_65] : memref<3x256x128xbf16, #tpu.memory_space<vmem>>, vector<1x256x128xbf16>
    %105 = vector.shape_cast %104 : vector<1x256x128xbf16> to vector<256x128xbf16>
    %cst_66 = arith.constant dense<0.000000e+00> : vector<16x128xf32>
    %106 = tpu.matmul %103, %105, %cst_66 {dimension_numbers = #tpu.dot_dimension_numbers<[1], [0], [0], [1], [0, 0, 1, 1], [], []>} : vector<16x256xbf16>, vector<256x128xbf16>, vector<16x128xf32> -> vector<16x128xf32>
    %c1_67 = arith.constant 1 : index
    %c0_68 = arith.constant 0 : index
    %c0_69 = arith.constant 0 : index
    %107 = vector.load %arg9[%c1_67, %c0_68, %c0_69] : memref<3x1x128xf32, #tpu.memory_space<vmem>>, vector<1x1x128xf32>
    %108 = vector.shape_cast %107 : vector<1x1x128xf32> to vector<1x128xf32>
    %109 = vector.broadcast %108 : vector<1x128xf32> to vector<16x128xf32>
    %110 = arith.addf %106, %109 : vector<16x128xf32>
    %cst_70 = arith.constant 0.000000e+00 : f32
    %111 = vector.broadcast %cst_70 : f32 to vector<16x128xf32>
    %112 = arith.maximumf %110, %111 : vector<16x128xf32>
    %113 = arith.truncf %112 : vector<16x128xf32> to vector<16x128xbf16>
    %c1_71 = arith.constant 1 : index
    %c0_72 = arith.constant 0 : index
    %c0_73 = arith.constant 0 : index
    %114 = vector.load %arg10[%c1_71, %c0_72, %c0_73] : memref<3x128x128xbf16, #tpu.memory_space<vmem>>, vector<1x128x128xbf16>
    %115 = vector.shape_cast %114 : vector<1x128x128xbf16> to vector<128x128xbf16>
    %cst_74 = arith.constant dense<0.000000e+00> : vector<16x128xf32>
    %116 = tpu.matmul %113, %115, %cst_74 {dimension_numbers = #tpu.dot_dimension_numbers<[1], [0], [0], [1], [0, 0, 1, 1], [], []>} : vector<16x128xbf16>, vector<128x128xbf16>, vector<16x128xf32> -> vector<16x128xf32>
    %c1_75 = arith.constant 1 : index
    %c0_76 = arith.constant 0 : index
    %c0_77 = arith.constant 0 : index
    %117 = vector.load %arg11[%c1_75, %c0_76, %c0_77] : memref<3x1x128xf32, #tpu.memory_space<vmem>>, vector<1x1x128xf32>
    %118 = vector.shape_cast %117 : vector<1x1x128xf32> to vector<1x128xf32>
    %119 = vector.broadcast %118 : vector<1x128xf32> to vector<16x128xf32>
    %120 = arith.addf %116, %119 : vector<16x128xf32>
    %121 = arith.addf %77, %120 : vector<16x128xf32>
    %c1_78 = arith.constant 1 : index
    %c0_79 = arith.constant 0 : index
    %c0_80 = arith.constant 0 : index
    %122 = vector.load %arg12[%c1_78, %c0_79, %c0_80] : memref<3x16x128xf32, #tpu.memory_space<vmem>>, vector<1x16x128xf32>
    %123 = vector.shape_cast %122 : vector<1x16x128xf32> to vector<16x128xf32>
    %124 = vector.shape_cast %121 : vector<16x128xf32> to vector<1x16x128xf32>
    tpu.vector_store %arg12[%c1_78, %c0_79, %c0_80], %124 {strides = array<i32>} : memref<3x16x128xf32, #tpu.memory_space<vmem>>, vector<1x16x128xf32>,
    %125 = vector.extract_strided_slice %8 {offsets = [0, 1024], sizes = [16, 512], strides = [1, 1]} : vector<16x1536xf32> to vector<16x512xf32>
    %126 = arith.truncf %121 : vector<16x128xf32> to vector<16x128xbf16>
    %c2 = arith.constant 2 : index
    %c0_81 = arith.constant 0 : index
    %c0_82 = arith.constant 0 : index
    %127 = vector.load %arg4[%c2, %c0_81, %c0_82] : memref<3x128x512xbf16, #tpu.memory_space<vmem>>, vector<1x128x512xbf16>
    %128 = vector.shape_cast %127 : vector<1x128x512xbf16> to vector<128x512xbf16>
    %cst_83 = arith.constant dense<0.000000e+00> : vector<16x512xf32>
    %129 = tpu.matmul %126, %128, %cst_83 {dimension_numbers = #tpu.dot_dimension_numbers<[1], [0], [0], [1], [0, 0, 1, 1], [], []>} : vector<16x128xbf16>, vector<128x512xbf16>, vector<16x512xf32> -> vector<16x512xf32>
    %130 = arith.addf %125, %129 : vector<16x512xf32>
    %c2_84 = arith.constant 2 : index
    %c0_85 = arith.constant 0 : index
    %c0_86 = arith.constant 0 : index
    %131 = vector.load %arg5[%c2_84, %c0_85, %c0_86] : memref<3x1x512xf32, #tpu.memory_space<vmem>>, vector<1x1x512xf32>
    %132 = vector.shape_cast %131 : vector<1x1x512xf32> to vector<1x512xf32>
    %133 = vector.broadcast %132 : vector<1x512xf32> to vector<16x512xf32>
    %134 = arith.addf %130, %133 : vector<16x512xf32>
    %cst_87 = arith.constant 0.000000e+00 : f32
    %135 = vector.broadcast %cst_87 : f32 to vector<16x512xf32>
    %136 = arith.maximumf %134, %135 : vector<16x512xf32>
    %137 = arith.truncf %136 : vector<16x512xf32> to vector<16x512xbf16>
    %c2_88 = arith.constant 2 : index
    %c0_89 = arith.constant 0 : index
    %c0_90 = arith.constant 0 : index
    %138 = vector.load %arg6[%c2_88, %c0_89, %c0_90] : memref<3x512x256xbf16, #tpu.memory_space<vmem>>, vector<1x512x256xbf16>
    %139 = vector.shape_cast %138 : vector<1x512x256xbf16> to vector<512x256xbf16>
    %cst_91 = arith.constant dense<0.000000e+00> : vector<16x256xf32>
    %140 = tpu.matmul %137, %139, %cst_91 {dimension_numbers = #tpu.dot_dimension_numbers<[1], [0], [0], [1], [0, 0, 1, 1], [], []>} : vector<16x512xbf16>, vector<512x256xbf16>, vector<16x256xf32> -> vector<16x256xf32>
    %c2_92 = arith.constant 2 : index
    %c0_93 = arith.constant 0 : index
    %c0_94 = arith.constant 0 : index
    %141 = vector.load %arg7[%c2_92, %c0_93, %c0_94] : memref<3x1x256xf32, #tpu.memory_space<vmem>>, vector<1x1x256xf32>
    %142 = vector.shape_cast %141 : vector<1x1x256xf32> to vector<1x256xf32>
    %143 = vector.broadcast %142 : vector<1x256xf32> to vector<16x256xf32>
    %144 = arith.addf %140, %143 : vector<16x256xf32>
    %cst_95 = arith.constant 0.000000e+00 : f32
    %145 = vector.broadcast %cst_95 : f32 to vector<16x256xf32>
    %146 = arith.maximumf %144, %145 : vector<16x256xf32>
    %147 = arith.truncf %146 : vector<16x256xf32> to vector<16x256xbf16>
    %c2_96 = arith.constant 2 : index
    %c0_97 = arith.constant 0 : index
    %c0_98 = arith.constant 0 : index
    %148 = vector.load %arg8[%c2_96, %c0_97, %c0_98] : memref<3x256x128xbf16, #tpu.memory_space<vmem>>, vector<1x256x128xbf16>
    %149 = vector.shape_cast %148 : vector<1x256x128xbf16> to vector<256x128xbf16>
    %cst_99 = arith.constant dense<0.000000e+00> : vector<16x128xf32>
    %150 = tpu.matmul %147, %149, %cst_99 {dimension_numbers = #tpu.dot_dimension_numbers<[1], [0], [0], [1], [0, 0, 1, 1], [], []>} : vector<16x256xbf16>, vector<256x128xbf16>, vector<16x128xf32> -> vector<16x128xf32>
    %c2_100 = arith.constant 2 : index
    %c0_101 = arith.constant 0 : index
    %c0_102 = arith.constant 0 : index
    %151 = vector.load %arg9[%c2_100, %c0_101, %c0_102] : memref<3x1x128xf32, #tpu.memory_space<vmem>>, vector<1x1x128xf32>
    %152 = vector.shape_cast %151 : vector<1x1x128xf32> to vector<1x128xf32>
    %153 = vector.broadcast %152 : vector<1x128xf32> to vector<16x128xf32>
    %154 = arith.addf %150, %153 : vector<16x128xf32>
    %cst_103 = arith.constant 0.000000e+00 : f32
    %155 = vector.broadcast %cst_103 : f32 to vector<16x128xf32>
    %156 = arith.maximumf %154, %155 : vector<16x128xf32>
    %157 = arith.truncf %156 : vector<16x128xf32> to vector<16x128xbf16>
    %c2_104 = arith.constant 2 : index
    %c0_105 = arith.constant 0 : index
    %c0_106 = arith.constant 0 : index
    %158 = vector.load %arg10[%c2_104, %c0_105, %c0_106] : memref<3x128x128xbf16, #tpu.memory_space<vmem>>, vector<1x128x128xbf16>
    %159 = vector.shape_cast %158 : vector<1x128x128xbf16> to vector<128x128xbf16>
    %cst_107 = arith.constant dense<0.000000e+00> : vector<16x128xf32>
    %160 = tpu.matmul %157, %159, %cst_107 {dimension_numbers = #tpu.dot_dimension_numbers<[1], [0], [0], [1], [0, 0, 1, 1], [], []>} : vector<16x128xbf16>, vector<128x128xbf16>, vector<16x128xf32> -> vector<16x128xf32>
    %c2_108 = arith.constant 2 : index
    %c0_109 = arith.constant 0 : index
    %c0_110 = arith.constant 0 : index
    %161 = vector.load %arg11[%c2_108, %c0_109, %c0_110] : memref<3x1x128xf32, #tpu.memory_space<vmem>>, vector<1x1x128xf32>
    %162 = vector.shape_cast %161 : vector<1x1x128xf32> to vector<1x128xf32>
    %163 = vector.broadcast %162 : vector<1x128xf32> to vector<16x128xf32>
    %164 = arith.addf %160, %163 : vector<16x128xf32>
    %165 = arith.addf %121, %164 : vector<16x128xf32>
    %c2_111 = arith.constant 2 : index
    %c0_112 = arith.constant 0 : index
    %c0_113 = arith.constant 0 : index
    %166 = vector.load %arg12[%c2_111, %c0_112, %c0_113] : memref<3x16x128xf32, #tpu.memory_space<vmem>>, vector<1x16x128xf32>
    %167 = vector.shape_cast %166 : vector<1x16x128xf32> to vector<16x128xf32>
    %168 = vector.shape_cast %165 : vector<16x128xf32> to vector<1x16x128xf32>
    tpu.vector_store %arg12[%c2_111, %c0_112, %c0_113], %168 {strides = array<i32>} : memref<3x16x128xf32, #tpu.memory_space<vmem>>, vector<1x16x128xf32>,
    return
  }
}

module attributes {stable_mosaic.version = 11 : i64} {
  func.func @_linear_kernel(%arg0: memref<16x256xbf16, #tpu.memory_space<vmem>>, %arg1: memref<256x2432xbf16, #tpu.memory_space<vmem>>, %arg2: memref<1x2432xf32, #tpu.memory_space<vmem>>, %arg3: memref<16x2432xf32, #tpu.memory_space<vmem>>) attributes {dimension_semantics = [], scalar_prefetch = 0 : i64, scratch_operands = 0 : i64, tpu.core_type = #tpu.core_type<tc>} {
    %c0 = arith.constant 0 : index
    %c0_0 = arith.constant 0 : index
    %0 = vector.load %arg0[%c0, %c0_0] : memref<16x256xbf16, #tpu.memory_space<vmem>>, vector<16x256xbf16>
    %c0_1 = arith.constant 0 : index
    %c0_2 = arith.constant 0 : index
    %1 = vector.load %arg1[%c0_1, %c0_2] : memref<256x2432xbf16, #tpu.memory_space<vmem>>, vector<256x2432xbf16>
    %cst = arith.constant dense<0.000000e+00> : vector<16x2432xf32>
    %2 = tpu.matmul %0, %1, %cst {dimension_numbers = #tpu.dot_dimension_numbers<[1], [0], [0], [1], [0, 0, 1, 1], [], []>} : vector<16x256xbf16>, vector<256x2432xbf16>, vector<16x2432xf32> -> vector<16x2432xf32>
    %c0_3 = arith.constant 0 : index
    %c0_4 = arith.constant 0 : index
    %3 = vector.load %arg2[%c0_3, %c0_4] : memref<1x2432xf32, #tpu.memory_space<vmem>>, vector<1x2432xf32>
    %4 = vector.broadcast %3 : vector<1x2432xf32> to vector<16x2432xf32>
    %5 = arith.addf %2, %4 : vector<16x2432xf32>
    %c0_5 = arith.constant 0 : index
    %c0_6 = arith.constant 0 : index
    %6 = vector.load %arg3[%c0_5, %c0_6] : memref<16x2432xf32, #tpu.memory_space<vmem>>, vector<16x2432xf32>
    tpu.vector_store %arg3[%c0_5, %c0_6], %5 {strides = array<i32>} : memref<16x2432xf32, #tpu.memory_space<vmem>>, vector<16x2432xf32>,
    return
  }
}

</mosaic_0001>

<llo_original>
// kernel: squeeze.36
$region0: #{squeeze.36}
  %s0 = inlined_call_operand.vmem [shape: f32[1,2,96], index: 0, kind: input, shape index: {}]
  %s1 = inlined_call_operand.vmem [shape: f32[2,16,6], index: 1, kind: output, shape index: {}]
  $region1: #{squeeze.36} parent=0
    #allocation0 [shape = 'u8[4096]{0}', space=vmem, size = 0x1000, scoped, tag = 'scoped mem for input reshape']
    %s3 = sshllo.u32 0, 2
    %v4 = vld [vmem:[%s0] sm:%s3]
    %5 = vst [vmem:[#allocation0] sm:%s3] %v4
    %v6 = vld [vmem:[#allocation0] sm:$0x3]
    %vm7 = vcmask 48128
    %8 = vst.msk [vmem:[%s1] ss:$16 sm:$0x3] %vm7, %v6
    %v9 = vld [vmem:[#allocation0] sm:$0x3]
    %10 = vrot.lane.b32.xlu0 %v9, 122
    %v11 = vpop.permute.xlu0 %10
    %vm12 = vcmask 48128
    %s13 = scalar_lea.vmem %s1, 1
    %14 = vst.msk [vmem:[%s13] ss:$16 sm:$0x3] %vm12, %v11
    %v15 = vld [vmem:[#allocation0] sm:$0x3]
    %16 = vrot.lane.b32.xlu0 %v15, 116
    %v17 = vpop.permute.xlu0 %16
    %vm18 = vcmask 48128
    %s19 = scalar_lea.vmem %s1, 2
    %20 = vst.msk [vmem:[%s19] ss:$16 sm:$0x3] %vm18, %v17
    %v21 = vld [vmem:[#allocation0] sm:$0x3]
    %22 = vrot.lane.b32.xlu0 %v21, 110
    %v23 = vpop.permute.xlu0 %22
    %vm24 = vcmask 48128
    %s25 = scalar_lea.vmem %s1, 3
    %26 = vst.msk [vmem:[%s25] ss:$16 sm:$0x3] %vm24, %v23
    %v27 = vld [vmem:[#allocation0] sm:$0x3]
    %28 = vrot.lane.b32.xlu0 %v27, 104
    %v29 = vpop.permute.xlu0 %28
    %vm30 = vcmask 48128
    %s31 = scalar_lea.vmem %s1, 4
    %32 = vst.msk [vmem:[%s31] ss:$16 sm:$0x3] %vm30, %v29
    %v33 = vld [vmem:[#allocation0] sm:$0x3]
    %34 = vrot.lane.b32.xlu0 %v33, 98
    %v35 = vpop.permute.xlu0 %34
    %vm36 = vcmask 48128
    %s37 = scalar_lea.vmem %s1, 5
    %38 = vst.msk [vmem:[%s37] ss:$16 sm:$0x3] %vm36, %v35
    %v39 = vld [vmem:[#allocation0] sm:$0x3]
    %40 = vrot.lane.b32.xlu0 %v39, 92
    %v41 = vpop.permute.xlu0 %40
    %vm42 = vcmask 48128
    %s43 = scalar_lea.vmem %s1, 6
    %44 = vst.msk [vmem:[%s43] ss:$16 sm:$0x3] %vm42, %v41
    %v45 = vld [vmem:[#allocation0] sm:$0x3]
    %46 = vrot.lane.b32.xlu0 %v45, 86
    %v47 = vpop.permute.xlu0 %46
    %vm48 = vcmask 48128
    %s49 = scalar_lea.vmem %s1, 7
    %50 = vst.msk [vmem:[%s49] ss:$16 sm:$0x3] %vm48, %v47
    %v51 = vld [vmem:[#allocation0] sm:$0x3]
    %52 = vrot.lane.b32.xlu0 %v51, 80
    %v53 = vpop.permute.xlu0 %52
    %vm54 = vcmask 48128
    %s55 = scalar_lea.vmem %s1, 8
    %56 = vst.msk [vmem:[%s55] ss:$16 sm:$0x3] %vm54, %v53
    %v57 = vld [vmem:[#allocation0] sm:$0x3]
    %58 = vrot.lane.b32.xlu0 %v57, 74
    %v59 = vpop.permute.xlu0 %58
    %vm60 = vcmask 48128
    %s61 = scalar_lea.vmem %s1, 9
    %62 = vst.msk [vmem:[%s61] ss:$16 sm:$0x3] %vm60, %v59
    %v63 = vld [vmem:[#allocation0] sm:$0x3]
    %64 = vrot.lane.b32.xlu0 %v63, 68
    %v65 = vpop.permute.xlu0 %64
    %vm66 = vcmask 48128
    %s67 = scalar_lea.vmem %s1, 10
    %68 = vst.msk [vmem:[%s67] ss:$16 sm:$0x3] %vm66, %v65
    %v69 = vld [vmem:[#allocation0] sm:$0x3]
    %70 = vrot.lane.b32.xlu0 %v69, 62
    %v71 = vpop.permute.xlu0 %70
    %vm72 = vcmask 48128
    %s73 = scalar_lea.vmem %s1, 11
    %74 = vst.msk [vmem:[%s73] ss:$16 sm:$0x3] %vm72, %v71
    %v75 = vld [vmem:[#allocation0] sm:$0x3]
    %76 = vrot.lane.b32.xlu0 %v75, 56
    %v77 = vpop.permute.xlu0 %76
    %vm78 = vcmask 48128
    %s79 = scalar_lea.vmem %s1, 12
    %80 = vst.msk [vmem:[%s79] ss:$16 sm:$0x3] %vm78, %v77
    %v81 = vld [vmem:[#allocation0] sm:$0x3]
    %82 = vrot.lane.b32.xlu0 %v81, 50
    %v83 = vpop.permute.xlu0 %82
    %vm84 = vcmask 48128
    %s85 = scalar_lea.vmem %s1, 13
    %86 = vst.msk [vmem:[%s85] ss:$16 sm:$0x3] %vm84, %v83
    %v87 = vld [vmem:[#allocation0] sm:$0x3]
    %88 = vrot.lane.b32.xlu0 %v87, 44
    %v89 = vpop.permute.xlu0 %88
    %vm90 = vcmask 48128
    %s91 = scalar_lea.vmem %s1, 14
    %92 = vst.msk [vmem:[%s91] ss:$16 sm:$0x3] %vm90, %v89
    %v93 = vld [vmem:[#allocation0] sm:$0x3]
    %94 = vrot.lane.b32.xlu0 %v93, 38
    %v95 = vpop.permute.xlu0 %94
    %vm96 = vcmask 48128
    %s97 = scalar_lea.vmem %s1, 15
    %98 = vst.msk [vmem:[%s97] ss:$16 sm:$0x3] %vm96, %v95

// kernel: model_forward.3
$region0: #{model_forward.3}
  #allocation0 [shape = 'u32[]', space=smem, size = 0x4, offset = 0x4, fixed_abs, tag = 'smem constant byte address 0x4 - core index']
  #allocation1 [shape = 'u32[144,128]{1,0:T(1,128)}', space=vmem, size = 0x12000, scoped, tag = 'internal scratch']
  %s0 = inlined_call_operand.vmem [shape: bf16[16,256], index: 0, kind: input, shape index: {}]
  %s1 = inlined_call_operand.vmem [shape: bf16[256,2432], index: 1, kind: input, shape index: {}]
  %s2 = inlined_call_operand.vmem [shape: f32[1,2432], index: 2, kind: input, shape index: {}]
  %s3 = inlined_call_operand.vmem [shape: f32[16,2432], index: 3, kind: output, shape index: {}]
  %s4 = sld [smem:[#allocation0]]
  $region22: #{model_forward.3} parent=0
    _
  %s6 = ssub.s32 1, %s4
  %s7 = scalar_select 0, %s6, %s4
  // Predicated region
  $region2: #{model_forward.3} parent=0 // pred_check
    _
  $region3: #{model_forward.3} parent=0 // pred_check_branch
    %9 = sbr.rel (0) target = $region5
  $region4: #{model_forward.3} parent=0 // pred_region
    _
  $region5: #{model_forward.3} parent=0 // pred_fallthru
    _
  // Predicated region
  $region6: #{model_forward.3} parent=0 // pred_check
    _
  $region7: #{model_forward.3} parent=0 // pred_check_branch
    %11 = sbr.rel (0) target = $region9
  $region8: #{model_forward.3} parent=0 // pred_region
    _
  $region9: #{model_forward.3} parent=0 // pred_fallthru
    _
  // Predicated region
  $region10: #{model_forward.3} parent=0 // pred_check
    _
  $region11: #{model_forward.3} parent=0 // pred_check_branch
    %13 = sbr.rel (0) target = $region13
  $region12: #{model_forward.3} parent=0 // pred_region
    _
  $region13: #{model_forward.3} parent=0 // pred_fallthru
    _
  %v15 = vld [vmem:[%s0] sm:$0xff]
  %v16 = vld [vmem:[%s0 + $0x8] sm:$0xff]
  %v17 = vld [vmem:[%s1] sm:$0xff]
  %v18 = vld [vmem:[%s1 + $0x8] sm:$0xff]
  %v19 = vld [vmem:[%s1 + $0x10] sm:$0xff]
  %v20 = vld [vmem:[%s1 + $0x18] sm:$0xff]
  %v21 = vld [vmem:[%s1 + $0x20] sm:$0xff]
  %v22 = vld [vmem:[%s1 + $0x28] sm:$0xff]
  %v23 = vld [vmem:[%s1 + $0x30] sm:$0xff]
  %v24 = vld [vmem:[%s1 + $0x38] sm:$0xff]
  %v25 = vld [vmem:[%s1 + $0x40] sm:$0xff]
  %v26 = vld [vmem:[%s1 + $0x48] sm:$0xf]
  %v27 = vld [vmem:[%s1 + $0x4c] sm:$0xff]
  %v28 = vld [vmem:[%s1 + $0x54] sm:$0xff]
  %v29 = vld [vmem:[%s1 + $0x5c] sm:$0xff]
  %v30 = vld [vmem:[%s1 + $0x64] sm:$0xff]
  %v31 = vld [vmem:[%s1 + $0x6c] sm:$0xff]
  %v32 = vld [vmem:[%s1 + $0x74] sm:$0xff]
  %v33 = vld [vmem:[%s1 + $0x7c] sm:$0xff]
  %v34 = vld [vmem:[%s1 + $0x84] sm:$0xff]
  %v35 = vld [vmem:[%s1 + $0x8c] sm:$0xff]
  %v36 = vld [vmem:[%s1 + $0x94] sm:$0xf]
  %v37 = vld [vmem:[%s1 + $0x98] sm:$0xff]
  %v38 = vld [vmem:[%s1 + $0xa0] sm:$0xff]
  %v39 = vld [vmem:[%s1 + $0xa8] sm:$0xff]
  %v40 = vld [vmem:[%s1 + $0xb0] sm:$0xff]
  %v41 = vld [vmem:[%s1 + $0xb8] sm:$0xff]
  %v42 = vld [vmem:[%s1 + $0xc0] sm:$0xff]
  %v43 = vld [vmem:[%s1 + $0xc8] sm:$0xff]
  %v44 = vld [vmem:[%s1 + $0xd0] sm:$0xff]
  %v45 = vld [vmem:[%s1 + $0xd8] sm:$0xff]
  %v46 = vld [vmem:[%s1 + $0xe0] sm:$0xf]
  %v47 = vld [vmem:[%s1 + $0xe4] sm:$0xff]
  %v48 = vld [vmem:[%s1 + $0xec] sm:$0xff]
  %v49 = vld [vmem:[%s1 + $0xf4] sm:$0xff]
  %v50 = vld [vmem:[%s1 + $0xfc] sm:$0xff]
  %v51 = vld [vmem:[%s1 + $0x104] sm:$0xff]
  %v52 = vld [vmem:[%s1 + $0x10c] sm:$0xff]
  %v53 = vld [vmem:[%s1 + $0x114] sm:$0xff]
  %v54 = vld [vmem:[%s1 + $0x11c] sm:$0xff]
  %v55 = vld [vmem:[%s1 + $0x124] sm:$0xff]
  %v56 = vld [vmem:[%s1 + $0x12c] sm:$0xf]
  %v57 = vld [vmem:[%s1 + $0x130] sm:$0xff]
  %v58 = vld [vmem:[%s1 + $0x138] sm:$0xff]
  %v59 = vld [vmem:[%s1 + $0x140] sm:$0xff]
  %v60 = vld [vmem:[%s1 + $0x148] sm:$0xff]
  %v61 = vld [vmem:[%s1 + $0x150] sm:$0xff]
  %v62 = vld [vmem:[%s1 + $0x158] sm:$0xff]
  %v63 = vld [vmem:[%s1 + $0x160] sm:$0xff]
  %v64 = vld [vmem:[%s1 + $0x168] sm:$0xff]
  %v65 = vld [vmem:[%s1 + $0x170] sm:$0xff]
  %v66 = vld [vmem:[%s1 + $0x178] sm:$0xf]
  %v67 = vld [vmem:[%s1 + $0x17c] sm:$0xff]
  %v68 = vld [vmem:[%s1 + $0x184] sm:$0xff]
  %v69 = vld [vmem:[%s1 + $0x18c] sm:$0xff]
  %v70 = vld [vmem:[%s1 + $0x194] sm:$0xff]
  %v71 = vld [vmem:[%s1 + $0x19c] sm:$0xff]
  %v72 = vld [vmem:[%s1 + $0x1a4] sm:$0xff]
  %v73 = vld [vmem:[%s1 + $0x1ac] sm:$0xff]
  %v74 = vld [vmem:[%s1 + $0x1b4] sm:$0xff]
  %v75 = vld [vmem:[%s1 + $0x1bc] sm:$0xff]
  %v76 = vld [vmem:[%s1 + $0x1c4] sm:$0xf]
  %v77 = vld [vmem:[%s1 + $0x1c8] sm:$0xff]
  %v78 = vld [vmem:[%s1 + $0x1d0] sm:$0xff]
  %v79 = vld [vmem:[%s1 + $0x1d8] sm:$0xff]
  %v80 = vld [vmem:[%s1 + $0x1e0] sm:$0xff]
  %v81 = vld [vmem:[%s1 + $0x1e8] sm:$0xff]
  %v82 = vld [vmem:[%s1 + $0x1f0] sm:$0xff]
  %v83 = vld [vmem:[%s1 + $0x1f8] sm:$0xff]
  %v84 = vld [vmem:[%s1 + $0x200] sm:$0xff]
  %v85 = vld [vmem:[%s1 + $0x208] sm:$0xff]
  %v86 = vld [vmem:[%s1 + $0x210] sm:$0xf]
  %v87 = vld [vmem:[%s1 + $0x214] sm:$0xff]
  %v88 = vld [vmem:[%s1 + $0x21c] sm:$0xff]
  %v89 = vld [vmem:[%s1 + $0x224] sm:$0xff]
  %v90 = vld [vmem:[%s1 + $0x22c] sm:$0xff]
  %v91 = vld [vmem:[%s1 + $0x234] sm:$0xff]
  %v92 = vld [vmem:[%s1 + $0x23c] sm:$0xff]
  %v93 = vld [vmem:[%s1 + $0x244] sm:$0xff]
  %v94 = vld [vmem:[%s1 + $0x24c] sm:$0xff]
  %v95 = vld [vmem:[%s1 + $0x254] sm:$0xff]
  %v96 = vld [vmem:[%s1 + $0x25c] sm:$0xf]
  %v97 = vld [vmem:[%s1 + $0x260] sm:$0xff]
  %v98 = vld [vmem:[%s1 + $0x268] sm:$0xff]
  %v99 = vld [vmem:[%s1 + $0x270] sm:$0xff]
  %v100 = vld [vmem:[%s1 + $0x278] sm:$0xff]
  %v101 = vld [vmem:[%s1 + $0x280] sm:$0xff]
  %v102 = vld [vmem:[%s1 + $0x288] sm:$0xff]
  %v103 = vld [vmem:[%s1 + $0x290] sm:$0xff]
  %v104 = vld [vmem:[%s1 + $0x298] sm:$0xff]
  %v105 = vld [vmem:[%s1 + $0x2a0] sm:$0xff]
  %v106 = vld [vmem:[%s1 + $0x2a8] sm:$0xf]
  %v107 = vld [vmem:[%s1 + $0x2ac] sm:$0xff]
  %v108 = vld [vmem:[%s1 + $0x2b4] sm:$0xff]
  %v109 = vld [vmem:[%s1 + $0x2bc] sm:$0xff]
  %v110 = vld [vmem:[%s1 + $0x2c4] sm:$0xff]
  %v111 = vld [vmem:[%s1 + $0x2cc] sm:$0xff]
  %v112 = vld [vmem:[%s1 + $0x2d4] sm:$0xff]
  %v113 = vld [vmem:[%s1 + $0x2dc] sm:$0xff]
  %v114 = vld [vmem:[%s1 + $0x2e4] sm:$0xff]
  %v115 = vld [vmem:[%s1 + $0x2ec] sm:$0xff]
  %v116 = vld [vmem:[%s1 + $0x2f4] sm:$0xf]
  %v117 = vld [vmem:[%s1 + $0x2f8] sm:$0xff]
  %v118 = vld [vmem:[%s1 + $0x300] sm:$0xff]
  %v119 = vld [vmem:[%s1 + $0x308] sm:$0xff]
  %v120 = vld [vmem:[%s1 + $0x310] sm:$0xff]
  %v121 = vld [vmem:[%s1 + $0x318] sm:$0xff]
  %v122 = vld [vmem:[%s1 + $0x320] sm:$0xff]
  %v123 = vld [vmem:[%s1 + $0x328] sm:$0xff]
  %v124 = vld [vmem:[%s1 + $0x330] sm:$0xff]
  %v125 = vld [vmem:[%s1 + $0x338] sm:$0xff]
  %v126 = vld [vmem:[%s1 + $0x340] sm:$0xf]
  %v127 = vld [vmem:[%s1 + $0x344] sm:$0xff]
  %v128 = vld [vmem:[%s1 + $0x34c] sm:$0xff]
  %v129 = vld [vmem:[%s1 + $0x354] sm:$0xff]
  %v130 = vld [vmem:[%s1 + $0x35c] sm:$0xff]
  %v131 = vld [vmem:[%s1 + $0x364] sm:$0xff]
  %v132 = vld [vmem:[%s1 + $0x36c] sm:$0xff]
  %v133 = vld [vmem:[%s1 + $0x374] sm:$0xff]
  %v134 = vld [vmem:[%s1 + $0x37c] sm:$0xff]
  %v135 = vld [vmem:[%s1 + $0x384] sm:$0xff]
  %v136 = vld [vmem:[%s1 + $0x38c] sm:$0xf]
  %v137 = vld [vmem:[%s1 + $0x390] sm:$0xff]
  %v138 = vld [vmem:[%s1 + $0x398] sm:$0xff]
  %v139 = vld [vmem:[%s1 + $0x3a0] sm:$0xff]
  %v140 = vld [vmem:[%s1 + $0x3a8] sm:$0xff]
  %v141 = vld [vmem:[%s1 + $0x3b0] sm:$0xff]
  %v142 = vld [vmem:[%s1 + $0x3b8] sm:$0xff]
  %v143 = vld [vmem:[%s1 + $0x3c0] sm:$0xff]
  %v144 = vld [vmem:[%s1 + $0x3c8] sm:$0xff]
  %v145 = vld [vmem:[%s1 + $0x3d0] sm:$0xff]
  %v146 = vld [vmem:[%s1 + $0x3d8] sm:$0xf]
  %v147 = vld [vmem:[%s1 + $0x3dc] sm:$0xff]
  %v148 = vld [vmem:[%s1 + $0x3e4] sm:$0xff]
  %v149 = vld [vmem:[%s1 + $0x3ec] sm:$0xff]
  %v150 = vld [vmem:[%s1 + $0x3f4] sm:$0xff]
  %v151 = vld [vmem:[%s1 + $0x3fc] sm:$0xff]
  %v152 = vld [vmem:[%s1 + $0x404] sm:$0xff]
  %v153 = vld [vmem:[%s1 + $0x40c] sm:$0xff]
  %v154 = vld [vmem:[%s1 + $0x414] sm:$0xff]
  %v155 = vld [vmem:[%s1 + $0x41c] sm:$0xff]
  %v156 = vld [vmem:[%s1 + $0x424] sm:$0xf]
  %v157 = vld [vmem:[%s1 + $0x428] sm:$0xff]
  %v158 = vld [vmem:[%s1 + $0x430] sm:$0xff]
  %v159 = vld [vmem:[%s1 + $0x438] sm:$0xff]
  %v160 = vld [vmem:[%s1 + $0x440] sm:$0xff]
  %v161 = vld [vmem:[%s1 + $0x448] sm:$0xff]
  %v162 = vld [vmem:[%s1 + $0x450] sm:$0xff]
  %v163 = vld [vmem:[%s1 + $0x458] sm:$0xff]
  %v164 = vld [vmem:[%s1 + $0x460] sm:$0xff]
  %v165 = vld [vmem:[%s1 + $0x468] sm:$0xff]
  %v166 = vld [vmem:[%s1 + $0x470] sm:$0xf]
  %v167 = vld [vmem:[%s1 + $0x474] sm:$0xff]
  %v168 = vld [vmem:[%s1 + $0x47c] sm:$0xff]
  %v169 = vld [vmem:[%s1 + $0x484] sm:$0xff]
  %v170 = vld [vmem:[%s1 + $0x48c] sm:$0xff]
  %v171 = vld [vmem:[%s1 + $0x494] sm:$0xff]
  %v172 = vld [vmem:[%s1 + $0x49c] sm:$0xff]
  %v173 = vld [vmem:[%s1 + $0x4a4] sm:$0xff]
  %v174 = vld [vmem:[%s1 + $0x4ac] sm:$0xff]
  %v175 = vld [vmem:[%s1 + $0x4b4] sm:$0xff]
  %v176 = vld [vmem:[%s1 + $0x4bc] sm:$0xf]
  %v177 = vld [vmem:[%s1 + $0x4c0] sm:$0xff]
  %v178 = vld [vmem:[%s1 + $0x4c8] sm:$0xff]
  %v179 = vld [vmem:[%s1 + $0x4d0] sm:$0xff]
  %v180 = vld [vmem:[%s1 + $0x4d8] sm:$0xff]
  %v181 = vld [vmem:[%s1 + $0x4e0] sm:$0xff]
  %v182 = vld [vmem:[%s1 + $0x4e8] sm:$0xff]
  %v183 = vld [vmem:[%s1 + $0x4f0] sm:$0xff]
  %v184 = vld [vmem:[%s1 + $0x4f8] sm:$0xff]
  %v185 = vld [vmem:[%s1 + $0x500] sm:$0xff]
  %v186 = vld [vmem:[%s1 + $0x508] sm:$0xf]
  %v187 = vld [vmem:[%s1 + $0x50c] sm:$0xff]
  %v188 = vld [vmem:[%s1 + $0x514] sm:$0xff]
  %v189 = vld [vmem:[%s1 + $0x51c] sm:$0xff]
  %v190 = vld [vmem:[%s1 + $0x524] sm:$0xff]
  %v191 = vld [vmem:[%s1 + $0x52c] sm:$0xff]
  %v192 = vld [vmem:[%s1 + $0x534] sm:$0xff]
  %v193 = vld [vmem:[%s1 + $0x53c] sm:$0xff]
  %v194 = vld [vmem:[%s1 + $0x544] sm:$0xff]
  %v195 = vld [vmem:[%s1 + $0x54c] sm:$0xff]
  %v196 = vld [vmem:[%s1 + $0x554] sm:$0xf]
  %v197 = vld [vmem:[%s1 + $0x558] sm:$0xff]
  %v198 = vld [vmem:[%s1 + $0x560] sm:$0xff]
  %v199 = vld [vmem:[%s1 + $0x568] sm:$0xff]
  %v200 = vld [vmem:[%s1 + $0x570] sm:$0xff]
  %v201 = vld [vmem:[%s1 + $0x578] sm:$0xff]
  %v202 = vld [vmem:[%s1 + $0x580] sm:$0xff]
  %v203 = vld [vmem:[%s1 + $0x588] sm:$0xff]
  %v204 = vld [vmem:[%s1 + $0x590] sm:$0xff]
  %v205 = vld [vmem:[%s1 + $0x598] sm:$0xff]
  %v206 = vld [vmem:[%s1 + $0x5a0] sm:$0xf]
  %v207 = vld [vmem:[%s1 + $0x5a4] sm:$0xff]
  %v208 = vld [vmem:[%s1 + $0x5ac] sm:$0xff]
  %v209 = vld [vmem:[%s1 + $0x5b4] sm:$0xff]
  %v210 = vld [vmem:[%s1 + $0x5bc] sm:$0xff]
  %v211 = vld [vmem:[%s1 + $0x5c4] sm:$0xff]
  %v212 = vld [vmem:[%s1 + $0x5cc] sm:$0xff]
  %v213 = vld [vmem:[%s1 + $0x5d4] sm:$0xff]
  %v214 = vld [vmem:[%s1 + $0x5dc] sm:$0xff]
  %v215 = vld [vmem:[%s1 + $0x5e4] sm:$0xff]
  %v216 = vld [vmem:[%s1 + $0x5ec] sm:$0xf]
  %v217 = vld [vmem:[%s1 + $0x5f0] sm:$0xff]
  %v218 = vld [vmem:[%s1 + $0x5f8] sm:$0xff]
  %v219 = vld [vmem:[%s1 + $0x600] sm:$0xff]
  %v220 = vld [vmem:[%s1 + $0x608] sm:$0xff]
  %v221 = vld [vmem:[%s1 + $0x610] sm:$0xff]
  %v222 = vld [vmem:[%s1 + $0x618] sm:$0xff]
  %v223 = vld [vmem:[%s1 + $0x620] sm:$0xff]
  %v224 = vld [vmem:[%s1 + $0x628] sm:$0xff]
  %v225 = vld [vmem:[%s1 + $0x630] sm:$0xff]
  %v226 = vld [vmem:[%s1 + $0x638] sm:$0xf]
  %v227 = vld [vmem:[%s1 + $0x63c] sm:$0xff]
  %v228 = vld [vmem:[%s1 + $0x644] sm:$0xff]
  %v229 = vld [vmem:[%s1 + $0x64c] sm:$0xff]
  %v230 = vld [vmem:[%s1 + $0x654] sm:$0xff]
  %v231 = vld [vmem:[%s1 + $0x65c] sm:$0xff]
  %v232 = vld [vmem:[%s1 + $0x664] sm:$0xff]
  %v233 = vld [vmem:[%s1 + $0x66c] sm:$0xff]
  %v234 = vld [vmem:[%s1 + $0x674] sm:$0xff]
  %v235 = vld [vmem:[%s1 + $0x67c] sm:$0xff]
  %v236 = vld [vmem:[%s1 + $0x684] sm:$0xf]
  %v237 = vld [vmem:[%s1 + $0x688] sm:$0xff]
  %v238 = vld [vmem:[%s1 + $0x690] sm:$0xff]
  %v239 = vld [vmem:[%s1 + $0x698] sm:$0xff]
  %v240 = vld [vmem:[%s1 + $0x6a0] sm:$0xff]
  %v241 = vld [vmem:[%s1 + $0x6a8] sm:$0xff]
  %v242 = vld [vmem:[%s1 + $0x6b0] sm:$0xff]
  %v243 = vld [vmem:[%s1 + $0x6b8] sm:$0xff]
  %v244 = vld [vmem:[%s1 + $0x6c0] sm:$0xff]
  %v245 = vld [vmem:[%s1 + $0x6c8] sm:$0xff]
  %v246 = vld [vmem:[%s1 + $0x6d0] sm:$0xf]
  %v247 = vld [vmem:[%s1 + $0x6d4] sm:$0xff]
  %v248 = vld [vmem:[%s1 + $0x6dc] sm:$0xff]
  %v249 = vld [vmem:[%s1 + $0x6e4] sm:$0xff]
  %v250 = vld [vmem:[%s1 + $0x6ec] sm:$0xff]
  %v251 = vld [vmem:[%s1 + $0x6f4] sm:$0xff]
  %v252 = vld [vmem:[%s1 + $0x6fc] sm:$0xff]
  %v253 = vld [vmem:[%s1 + $0x704] sm:$0xff]
  %v254 = vld [vmem:[%s1 + $0x70c] sm:$0xff]
  %v255 = vld [vmem:[%s1 + $0x714] sm:$0xff]
  %v256 = vld [vmem:[%s1 + $0x71c] sm:$0xf]
  %v257 = vld [vmem:[%s1 + $0x720] sm:$0xff]
  %v258 = vld [vmem:[%s1 + $0x728] sm:$0xff]
  %v259 = vld [vmem:[%s1 + $0x730] sm:$0xff]
  %v260 = vld [vmem:[%s1 + $0x738] sm:$0xff]
  %v261 = vld [vmem:[%s1 + $0x740] sm:$0xff]
  %v262 = vld [vmem:[%s1 + $0x748] sm:$0xff]
  %v263 = vld [vmem:[%s1 + $0x750] sm:$0xff]
  %v264 = vld [vmem:[%s1 + $0x758] sm:$0xff]
  %v265 = vld [vmem:[%s1 + $0x760] sm:$0xff]
  %v266 = vld [vmem:[%s1 + $0x768] sm:$0xf]
  %v267 = vld [vmem:[%s1 + $0x76c] sm:$0xff]
  %v268 = vld [vmem:[%s1 + $0x774] sm:$0xff]
  %v269 = vld [vmem:[%s1 + $0x77c] sm:$0xff]
  %v270 = vld [vmem:[%s1 + $0x784] sm:$0xff]
  %v271 = vld [vmem:[%s1 + $0x78c] sm:$0xff]
  %v272 = vld [vmem:[%s1 + $0x794] sm:$0xff]
  %v273 = vld [vmem:[%s1 + $0x79c] sm:$0xff]
  %v274 = vld [vmem:[%s1 + $0x7a4] sm:$0xff]
  %v275 = vld [vmem:[%s1 + $0x7ac] sm:$0xff]
  %v276 = vld [vmem:[%s1 + $0x7b4] sm:$0xf]
  %v277 = vld [vmem:[%s1 + $0x7b8] sm:$0xff]
  %v278 = vld [vmem:[%s1 + $0x7c0] sm:$0xff]
  %v279 = vld [vmem:[%s1 + $0x7c8] sm:$0xff]
  %v280 = vld [vmem:[%s1 + $0x7d0] sm:$0xff]
  %v281 = vld [vmem:[%s1 + $0x7d8] sm:$0xff]
  %v282 = vld [vmem:[%s1 + $0x7e0] sm:$0xff]
  %v283 = vld [vmem:[%s1 + $0x7e8] sm:$0xff]
  %v284 = vld [vmem:[%s1 + $0x7f0] sm:$0xff]
  %v285 = vld [vmem:[%s1 + $0x7f8] sm:$0xff]
  %v286 = vld [vmem:[%s1 + $0x800] sm:$0xf]
  %v287 = vld [vmem:[%s1 + $0x804] sm:$0xff]
  %v288 = vld [vmem:[%s1 + $0x80c] sm:$0xff]
  %v289 = vld [vmem:[%s1 + $0x814] sm:$0xff]
  %v290 = vld [vmem:[%s1 + $0x81c] sm:$0xff]
  %v291 = vld [vmem:[%s1 + $0x824] sm:$0xff]
  %v292 = vld [vmem:[%s1 + $0x82c] sm:$0xff]
  %v293 = vld [vmem:[%s1 + $0x834] sm:$0xff]
  %v294 = vld [vmem:[%s1 + $0x83c] sm:$0xff]
  %v295 = vld [vmem:[%s1 + $0x844] sm:$0xff]
  %v296 = vld [vmem:[%s1 + $0x84c] sm:$0xf]
  %v297 = vld [vmem:[%s1 + $0x850] sm:$0xff]
  %v298 = vld [vmem:[%s1 + $0x858] sm:$0xff]
  %v299 = vld [vmem:[%s1 + $0x860] sm:$0xff]
  %v300 = vld [vmem:[%s1 + $0x868] sm:$0xff]
  %v301 = vld [vmem:[%s1 + $0x870] sm:$0xff]
  %v302 = vld [vmem:[%s1 + $0x878] sm:$0xff]
  %v303 = vld [vmem:[%s1 + $0x880] sm:$0xff]
  %v304 = vld [vmem:[%s1 + $0x888] sm:$0xff]
  %v305 = vld [vmem:[%s1 + $0x890] sm:$0xff]
  %v306 = vld [vmem:[%s1 + $0x898] sm:$0xf]
  %v307 = vld [vmem:[%s1 + $0x89c] sm:$0xff]
  %v308 = vld [vmem:[%s1 + $0x8a4] sm:$0xff]
  %v309 = vld [vmem:[%s1 + $0x8ac] sm:$0xff]
  %v310 = vld [vmem:[%s1 + $0x8b4] sm:$0xff]
  %v311 = vld [vmem:[%s1 + $0x8bc] sm:$0xff]
  %v312 = vld [vmem:[%s1 + $0x8c4] sm:$0xff]
  %v313 = vld [vmem:[%s1 + $0x8cc] sm:$0xff]
  %v314 = vld [vmem:[%s1 + $0x8d4] sm:$0xff]
  %v315 = vld [vmem:[%s1 + $0x8dc] sm:$0xff]
  %v316 = vld [vmem:[%s1 + $0x8e4] sm:$0xf]
  %v317 = vld [vmem:[%s1 + $0x8e8] sm:$0xff]
  %v318 = vld [vmem:[%s1 + $0x8f0] sm:$0xff]
  %v319 = vld [vmem:[%s1 + $0x8f8] sm:$0xff]
  %v320 = vld [vmem:[%s1 + $0x900] sm:$0xff]
  %v321 = vld [vmem:[%s1 + $0x908] sm:$0xff]
  %v322 = vld [vmem:[%s1 + $0x910] sm:$0xff]
  %v323 = vld [vmem:[%s1 + $0x918] sm:$0xff]
  %v324 = vld [vmem:[%s1 + $0x920] sm:$0xff]
  %v325 = vld [vmem:[%s1 + $0x928] sm:$0xff]
  %v326 = vld [vmem:[%s1 + $0x930] sm:$0xf]
  %v327 = vld [vmem:[%s1 + $0x934] sm:$0xff]
  %v328 = vld [vmem:[%s1 + $0x93c] sm:$0xff]
  %v329 = vld [vmem:[%s1 + $0x944] sm:$0xff]
  %v330 = vld [vmem:[%s1 + $0x94c] sm:$0xff]
  %v331 = vld [vmem:[%s1 + $0x954] sm:$0xff]
  %v332 = vld [vmem:[%s1 + $0x95c] sm:$0xff]
  %v333 = vld [vmem:[%s1 + $0x964] sm:$0xff]
  %v334 = vld [vmem:[%s1 + $0x96c] sm:$0xff]
  %v335 = vld [vmem:[%s1 + $0x974] sm:$0xff]
  %v336 = vld [vmem:[%s1 + $0x97c] sm:$0xf]
  %v337 = vld [vmem:[%s2] sm:$0xff]
  %v338 = vld [vmem:[%s2 + $0x8] sm:$0xff]
  %v339 = vld [vmem:[%s2 + $0x10] sm:$0x7]
  %v343 = vlaneseq
  %v344 = vshrl.u32 %v343, 7
  %v345 = vsub.s32 0, %v344
  %v346 = vrot.slane %v337, %v345
  %v347 = vlaneseq
  %v348 = vshrl.u32 %v347, 7
  %v349 = vsub.s32 1, %v348
  %v350 = vrot.slane %v337, %v349
  %v351 = vlaneseq
  %v352 = vshrl.u32 %v351, 7
  %v353 = vsub.s32 2, %v352
  %v354 = vrot.slane %v337, %v353
  %v355 = vlaneseq
  %v356 = vshrl.u32 %v355, 7
  %v357 = vsub.s32 3, %v356
  %v358 = vrot.slane %v337, %v357
  %v359 = vlaneseq
  %v360 = vshrl.u32 %v359, 7
  %v361 = vsub.s32 4, %v360
  %v362 = vrot.slane %v337, %v361
  %v363 = vlaneseq
  %v364 = vshrl.u32 %v363, 7
  %v365 = vsub.s32 5, %v364
  %v366 = vrot.slane %v337, %v365
  %v367 = vlaneseq
  %v368 = vshrl.u32 %v367, 7
  %v369 = vsub.s32 6, %v368
  %v370 = vrot.slane %v337, %v369
  %v371 = vlaneseq
  %v372 = vshrl.u32 %v371, 7
  %v373 = vsub.s32 7, %v372
  %v374 = vrot.slane %v337, %v373
  %v375 = vlaneseq
  %v376 = vshrl.u32 %v375, 7
  %v377 = vsub.s32 0, %v376
  %v378 = vrot.slane %v338, %v377
  %v379 = vlaneseq
  %v380 = vshrl.u32 %v379, 7
  %v381 = vsub.s32 1, %v380
  %v382 = vrot.slane %v338, %v381
  %v383 = vlaneseq
  %v384 = vshrl.u32 %v383, 7
  %v385 = vsub.s32 2, %v384
  %v386 = vrot.slane %v338, %v385
  %v387 = vlaneseq
  %v388 = vshrl.u32 %v387, 7
  %v389 = vsub.s32 3, %v388
  %v390 = vrot.slane %v338, %v389
  %v391 = vlaneseq
  %v392 = vshrl.u32 %v391, 7
  %v393 = vsub.s32 4, %v392
  %v394 = vrot.slane %v338, %v393
  %v395 = vlaneseq
  %v396 = vshrl.u32 %v395, 7
  %v397 = vsub.s32 5, %v396
  %v398 = vrot.slane %v338, %v397
  %v399 = vlaneseq
  %v400 = vshrl.u32 %v399, 7
  %v401 = vsub.s32 6, %v400
  %v402 = vrot.slane %v338, %v401
  %v403 = vlaneseq
  %v404 = vshrl.u32 %v403, 7
  %v405 = vsub.s32 7, %v404
  %v406 = vrot.slane %v338, %v405
  %v407 = vlaneseq
  %v408 = vshrl.u32 %v407, 7
  %v409 = vsub.s32 0, %v408
  %v410 = vrot.slane %v339, %v409
  %v411 = vlaneseq
  %v412 = vshrl.u32 %v411, 7
  %v413 = vsub.s32 1, %v412
  %v414 = vrot.slane %v339, %v413
  %v415 = vlaneseq
  %v416 = vshrl.u32 %v415, 7
  %v417 = vsub.s32 2, %v416
  %v418 = vrot.slane %v339, %v417
  %v440 = vunpack.c.l.b16 %v15
  %v441 = vunpack.c.h.b16 %v15
  %v442 = vunpack.c.l.b16 %v16
  %v443 = vunpack.c.h.b16 %v16
  %v444 = vpack.c.b16 %v442, %v440
  %v445 = vpack.c.b16 %v443, %v441
  %v768 = vunpack.c.l.b16 %v17
  %v769 = vunpack.c.h.b16 %v17
  %v770 = vunpack.c.l.b16 %v18
  %v771 = vunpack.c.h.b16 %v18
  %v772 = vunpack.c.l.b16 %v19
  %v773 = vunpack.c.h.b16 %v19
  %v774 = vunpack.c.l.b16 %v20
  %v775 = vunpack.c.h.b16 %v20
  %v776 = vunpack.c.l.b16 %v21
  %v777 = vunpack.c.h.b16 %v21
  %v778 = vunpack.c.l.b16 %v22
  %v779 = vunpack.c.h.b16 %v22
  %v780 = vunpack.c.l.b16 %v23
  %v781 = vunpack.c.h.b16 %v23
  %v782 = vunpack.c.l.b16 %v24
  %v783 = vunpack.c.h.b16 %v24
  %v784 = vunpack.c.l.b16 %v25
  %v785 = vunpack.c.h.b16 %v25
  %v786 = vunpack.c.l.b16 %v26
  %v787 = vunpack.c.l.b16 %v27
  %v788 = vunpack.c.h.b16 %v27
  %v789 = vunpack.c.l.b16 %v28
  %v790 = vunpack.c.h.b16 %v28
  %v791 = vunpack.c.l.b16 %v29
  %v792 = vunpack.c.h.b16 %v29
  %v793 = vunpack.c.l.b16 %v30
  %v794 = vunpack.c.h.b16 %v30
  %v795 = vunpack.c.l.b16 %v31
  %v796 = vunpack.c.h.b16 %v31
  %v797 = vunpack.c.l.b16 %v32
  %v798 = vunpack.c.h.b16 %v32
  %v799 = vunpack.c.l.b16 %v33
  %v800 = vunpack.c.h.b16 %v33
  %v801 = vunpack.c.l.b16 %v34
  %v802 = vunpack.c.h.b16 %v34
  %v803 = vunpack.c.l.b16 %v35
  %v804 = vunpack.c.h.b16 %v35
  %v805 = vunpack.c.l.b16 %v36
  %v806 = vunpack.c.l.b16 %v37
  %v807 = vunpack.c.h.b16 %v37
  %v808 = vunpack.c.l.b16 %v38
  %v809 = vunpack.c.h.b16 %v38
  %v810 = vunpack.c.l.b16 %v39
  %v811 = vunpack.c.h.b16 %v39
  %v812 = vunpack.c.l.b16 %v40
  %v813 = vunpack.c.h.b16 %v40
  %v814 = vunpack.c.l.b16 %v41
  %v815 = vunpack.c.h.b16 %v41
  %v816 = vunpack.c.l.b16 %v42
  %v817 = vunpack.c.h.b16 %v42
  %v818 = vunpack.c.l.b16 %v43
  %v819 = vunpack.c.h.b16 %v43
  %v820 = vunpack.c.l.b16 %v44
  %v821 = vunpack.c.h.b16 %v44
  %v822 = vunpack.c.l.b16 %v45
  %v823 = vunpack.c.h.b16 %v45
  %v824 = vunpack.c.l.b16 %v46
  %v825 = vunpack.c.l.b16 %v47
  %v826 = vunpack.c.h.b16 %v47
  %v827 = vunpack.c.l.b16 %v48
  %v828 = vunpack.c.h.b16 %v48
  %v829 = vunpack.c.l.b16 %v49
  %v830 = vunpack.c.h.b16 %v49
  %v831 = vunpack.c.l.b16 %v50
  %v832 = vunpack.c.h.b16 %v50
  %v833 = vunpack.c.l.b16 %v51
  %v834 = vunpack.c.h.b16 %v51
  %v835 = vunpack.c.l.b16 %v52
  %v836 = vunpack.c.h.b16 %v52
  %v837 = vunpack.c.l.b16 %v53
  %v838 = vunpack.c.h.b16 %v53
  %v839 = vunpack.c.l.b16 %v54
  %v840 = vunpack.c.h.b16 %v54
  %v841 = vunpack.c.l.b16 %v55
  %v842 = vunpack.c.h.b16 %v55
  %v843 = vunpack.c.l.b16 %v56
  %v844 = vunpack.c.l.b16 %v57
  %v845 = vunpack.c.h.b16 %v57
  %v846 = vunpack.c.l.b16 %v58
  %v847 = vunpack.c.h.b16 %v58
  %v848 = vunpack.c.l.b16 %v59
  %v849 = vunpack.c.h.b16 %v59
  %v850 = vunpack.c.l.b16 %v60
  %v851 = vunpack.c.h.b16 %v60
  %v852 = vunpack.c.l.b16 %v61
  %v853 = vunpack.c.h.b16 %v61
  %v854 = vunpack.c.l.b16 %v62
  %v855 = vunpack.c.h.b16 %v62
  %v856 = vunpack.c.l.b16 %v63
  %v857 = vunpack.c.h.b16 %v63
  %v858 = vunpack.c.l.b16 %v64
  %v859 = vunpack.c.h.b16 %v64
  %v860 = vunpack.c.l.b16 %v65
  %v861 = vunpack.c.h.b16 %v65
  %v862 = vunpack.c.l.b16 %v66
  %v863 = vunpack.c.l.b16 %v67
  %v864 = vunpack.c.h.b16 %v67
  %v865 = vunpack.c.l.b16 %v68
  %v866 = vunpack.c.h.b16 %v68
  %v867 = vunpack.c.l.b16 %v69
  %v868 = vunpack.c.h.b16 %v69
  %v869 = vunpack.c.l.b16 %v70
  %v870 = vunpack.c.h.b16 %v70
  %v871 = vunpack.c.l.b16 %v71
  %v872 = vunpack.c.h.b16 %v71
  %v873 = vunpack.c.l.b16 %v72
  %v874 = vunpack.c.h.b16 %v72
  %v875 = vunpack.c.l.b16 %v73
  %v876 = vunpack.c.h.b16 %v73
  %v877 = vunpack.c.l.b16 %v74
  %v878 = vunpack.c.h.b16 %v74
  %v879 = vunpack.c.l.b16 %v75
  %v880 = vunpack.c.h.b16 %v75
  %v881 = vunpack.c.l.b16 %v76
  %v882 = vunpack.c.l.b16 %v77
  %v883 = vunpack.c.h.b16 %v77
  %v884 = vunpack.c.l.b16 %v78
  %v885 = vunpack.c.h.b16 %v78
  %v886 = vunpack.c.l.b16 %v79
  %v887 = vunpack.c.h.b16 %v79
  %v888 = vunpack.c.l.b16 %v80
  %v889 = vunpack.c.h.b16 %v80
  %v890 = vunpack.c.l.b16 %v81
  %v891 = vunpack.c.h.b16 %v81
  %v892 = vunpack.c.l.b16 %v82
  %v893 = vunpack.c.h.b16 %v82
  %v894 = vunpack.c.l.b16 %v83
  %v895 = vunpack.c.h.b16 %v83
  %v896 = vunpack.c.l.b16 %v84
  %v897 = vunpack.c.h.b16 %v84
  %v898 = vunpack.c.l.b16 %v85
  %v899 = vunpack.c.h.b16 %v85
  %v900 = vunpack.c.l.b16 %v86
  %v901 = vunpack.c.l.b16 %v87
  %v902 = vunpack.c.h.b16 %v87
  %v903 = vunpack.c.l.b16 %v88
  %v904 = vunpack.c.h.b16 %v88
  %v905 = vunpack.c.l.b16 %v89
  %v906 = vunpack.c.h.b16 %v89
  %v907 = vunpack.c.l.b16 %v90
  %v908 = vunpack.c.h.b16 %v90
  %v909 = vunpack.c.l.b16 %v91
  %v910 = vunpack.c.h.b16 %v91
  %v911 = vunpack.c.l.b16 %v92
  %v912 = vunpack.c.h.b16 %v92
  %v913 = vunpack.c.l.b16 %v93
  %v914 = vunpack.c.h.b16 %v93
  %v915 = vunpack.c.l.b16 %v94
  %v916 = vunpack.c.h.b16 %v94
  %v917 = vunpack.c.l.b16 %v95
  %v918 = vunpack.c.h.b16 %v95
  %v919 = vunpack.c.l.b16 %v96
  %v920 = vunpack.c.l.b16 %v97
  %v921 = vunpack.c.h.b16 %v97
  %v922 = vunpack.c.l.b16 %v98
  %v923 = vunpack.c.h.b16 %v98
  %v924 = vunpack.c.l.b16 %v99
  %v925 = vunpack.c.h.b16 %v99
  %v926 = vunpack.c.l.b16 %v100
  %v927 = vunpack.c.h.b16 %v100
  %v928 = vunpack.c.l.b16 %v101
  %v929 = vunpack.c.h.b16 %v101
  %v930 = vunpack.c.l.b16 %v102
  %v931 = vunpack.c.h.b16 %v102
  %v932 = vunpack.c.l.b16 %v103
  %v933 = vunpack.c.h.b16 %v103
  %v934 = vunpack.c.l.b16 %v104
  %v935 = vunpack.c.h.b16 %v104
  %v936 = vunpack.c.l.b16 %v105
  %v937 = vunpack.c.h.b16 %v105
  %v938 = vunpack.c.l.b16 %v106
  %v939 = vunpack.c.l.b16 %v107
  %v940 = vunpack.c.h.b16 %v107
  %v941 = vunpack.c.l.b16 %v108
  %v942 = vunpack.c.h.b16 %v108
  %v943 = vunpack.c.l.b16 %v109
  %v944 = vunpack.c.h.b16 %v109
  %v945 = vunpack.c.l.b16 %v110
  %v946 = vunpack.c.h.b16 %v110
  %v947 = vunpack.c.l.b16 %v111
  %v948 = vunpack.c.h.b16 %v111
  %v949 = vunpack.c.l.b16 %v112
  %v950 = vunpack.c.h.b16 %v112
  %v951 = vunpack.c.l.b16 %v113
  %v952 = vunpack.c.h.b16 %v113
  %v953 = vunpack.c.l.b16 %v114
  %v954 = vunpack.c.h.b16 %v114
  %v955 = vunpack.c.l.b16 %v115
  %v956 = vunpack.c.h.b16 %v115
  %v957 = vunpack.c.l.b16 %v116
  %v958 = vunpack.c.l.b16 %v117
  %v959 = vunpack.c.h.b16 %v117
  %v960 = vunpack.c.l.b16 %v118
  %v961 = vunpack.c.h.b16 %v118
  %v962 = vunpack.c.l.b16 %v119
  %v963 = vunpack.c.h.b16 %v119
  %v964 = vunpack.c.l.b16 %v120
  %v965 = vunpack.c.h.b16 %v120
  %v966 = vunpack.c.l.b16 %v121
  %v967 = vunpack.c.h.b16 %v121
  %v968 = vunpack.c.l.b16 %v122
  %v969 = vunpack.c.h.b16 %v122
  %v970 = vunpack.c.l.b16 %v123
  %v971 = vunpack.c.h.b16 %v123
  %v972 = vunpack.c.l.b16 %v124
  %v973 = vunpack.c.h.b16 %v124
  %v974 = vunpack.c.l.b16 %v125
  %v975 = vunpack.c.h.b16 %v125
  %v976 = vunpack.c.l.b16 %v126
  %v977 = vunpack.c.l.b16 %v127
  %v978 = vunpack.c.h.b16 %v127
  %v979 = vunpack.c.l.b16 %v128
  %v980 = vunpack.c.h.b16 %v128
  %v981 = vunpack.c.l.b16 %v129
  %v982 = vunpack.c.h.b16 %v129
  %v983 = vunpack.c.l.b16 %v130
  %v984 = vunpack.c.h.b16 %v130
  %v985 = vunpack.c.l.b16 %v131
  %v986 = vunpack.c.h.b16 %v131
  %v987 = vunpack.c.l.b16 %v132
  %v988 = vunpack.c.h.b16 %v132
  %v989 = vunpack.c.l.b16 %v133
  %v990 = vunpack.c.h.b16 %v133
  %v991 = vunpack.c.l.b16 %v134
  %v992 = vunpack.c.h.b16 %v134
  %v993 = vunpack.c.l.b16 %v135
  %v994 = vunpack.c.h.b16 %v135
  %v995 = vunpack.c.l.b16 %v136
  %v996 = vunpack.c.l.b16 %v137
  %v997 = vunpack.c.h.b16 %v137
  %v998 = vunpack.c.l.b16 %v138
  %v999 = vunpack.c.h.b16 %v138
  %v1000 = vunpack.c.l.b16 %v139
  %v1001 = vunpack.c.h.b16 %v139
  %v1002 = vunpack.c.l.b16 %v140
  %v1003 = vunpack.c.h.b16 %v140
  %v1004 = vunpack.c.l.b16 %v141
  %v1005 = vunpack.c.h.b16 %v141
  %v1006 = vunpack.c.l.b16 %v142
  %v1007 = vunpack.c.h.b16 %v142
  %v1008 = vunpack.c.l.b16 %v143
  %v1009 = vunpack.c.h.b16 %v143
  %v1010 = vunpack.c.l.b16 %v144
  %v1011 = vunpack.c.h.b16 %v144
  %v1012 = vunpack.c.l.b16 %v145
  %v1013 = vunpack.c.h.b16 %v145
  %v1014 = vunpack.c.l.b16 %v146
  %v1015 = vunpack.c.l.b16 %v147
  %v1016 = vunpack.c.h.b16 %v147
  %v1017 = vunpack.c.l.b16 %v148
  %v1018 = vunpack.c.h.b16 %v148
  %v1019 = vunpack.c.l.b16 %v149
  %v1020 = vunpack.c.h.b16 %v149
  %v1021 = vunpack.c.l.b16 %v150
  %v1022 = vunpack.c.h.b16 %v150
  %v1023 = vunpack.c.l.b16 %v151
  %v1024 = vunpack.c.h.b16 %v151
  %v1025 = vunpack.c.l.b16 %v152
  %v1026 = vunpack.c.h.b16 %v152
  %v1027 = vunpack.c.l.b16 %v153
  %v1028 = vunpack.c.h.b16 %v153
  %v1029 = vunpack.c.l.b16 %v154
  %v1030 = vunpack.c.h.b16 %v154
  %v1031 = vunpack.c.l.b16 %v155
  %v1032 = vunpack.c.h.b16 %v155
  %v1033 = vunpack.c.l.b16 %v156
  %v1034 = vunpack.c.l.b16 %v157
  %v1035 = vunpack.c.h.b16 %v157
  %v1036 = vunpack.c.l.b16 %v158
  %v1037 = vunpack.c.h.b16 %v158
  %v1038 = vunpack.c.l.b16 %v159
  %v1039 = vunpack.c.h.b16 %v159
  %v1040 = vunpack.c.l.b16 %v160
  %v1041 = vunpack.c.h.b16 %v160
  %v1042 = vunpack.c.l.b16 %v161
  %v1043 = vunpack.c.h.b16 %v161
  %v1044 = vunpack.c.l.b16 %v162
  %v1045 = vunpack.c.h.b16 %v162
  %v1046 = vunpack.c.l.b16 %v163
  %v1047 = vunpack.c.h.b16 %v163
  %v1048 = vunpack.c.l.b16 %v164
  %v1049 = vunpack.c.h.b16 %v164
  %v1050 = vunpack.c.l.b16 %v165
  %v1051 = vunpack.c.h.b16 %v165
  %v1052 = vunpack.c.l.b16 %v166
  %v1053 = vunpack.c.l.b16 %v167
  %v1054 = vunpack.c.h.b16 %v167
  %v1055 = vunpack.c.l.b16 %v168
  %v1056 = vunpack.c.h.b16 %v168
  %v1057 = vunpack.c.l.b16 %v169
  %v1058 = vunpack.c.h.b16 %v169
  %v1059 = vunpack.c.l.b16 %v170
  %v1060 = vunpack.c.h.b16 %v170
  %v1061 = vunpack.c.l.b16 %v171
  %v1062 = vunpack.c.h.b16 %v171
  %v1063 = vunpack.c.l.b16 %v172
  %v1064 = vunpack.c.h.b16 %v172
  %v1065 = vunpack.c.l.b16 %v173
  %v1066 = vunpack.c.h.b16 %v173
  %v1067 = vunpack.c.l.b16 %v174
  %v1068 = vunpack.c.h.b16 %v174
  %v1069 = vunpack.c.l.b16 %v175
  %v1070 = vunpack.c.h.b16 %v175
  %v1071 = vunpack.c.l.b16 %v176
  %v1072 = vunpack.c.l.b16 %v177
  %v1073 = vunpack.c.h.b16 %v177
  %v1074 = vunpack.c.l.b16 %v178
  %v1075 = vunpack.c.h.b16 %v178
  %v1076 = vunpack.c.l.b16 %v179
  %v1077 = vunpack.c.h.b16 %v179
  %v1078 = vunpack.c.l.b16 %v180
  %v1079 = vunpack.c.h.b16 %v180
  %v1080 = vunpack.c.l.b16 %v181
  %v1081 = vunpack.c.h.b16 %v181
  %v1082 = vunpack.c.l.b16 %v182
  %v1083 = vunpack.c.h.b16 %v182
  %v1084 = vunpack.c.l.b16 %v183
  %v1085 = vunpack.c.h.b16 %v183
  %v1086 = vunpack.c.l.b16 %v184
  %v1087 = vunpack.c.h.b16 %v184
  %v1088 = vunpack.c.l.b16 %v185
  %v1089 = vunpack.c.h.b16 %v185
  %v1090 = vunpack.c.l.b16 %v186
  %v1091 = vunpack.c.l.b16 %v187
  %v1092 = vunpack.c.h.b16 %v187
  %v1093 = vunpack.c.l.b16 %v188
  %v1094 = vunpack.c.h.b16 %v188
  %v1095 = vunpack.c.l.b16 %v189
  %v1096 = vunpack.c.h.b16 %v189
  %v1097 = vunpack.c.l.b16 %v190
  %v1098 = vunpack.c.h.b16 %v190
  %v1099 = vunpack.c.l.b16 %v191
  %v1100 = vunpack.c.h.b16 %v191
  %v1101 = vunpack.c.l.b16 %v192
  %v1102 = vunpack.c.h.b16 %v192
  %v1103 = vunpack.c.l.b16 %v193
  %v1104 = vunpack.c.h.b16 %v193
  %v1105 = vunpack.c.l.b16 %v194
  %v1106 = vunpack.c.h.b16 %v194
  %v1107 = vunpack.c.l.b16 %v195
  %v1108 = vunpack.c.h.b16 %v195
  %v1109 = vunpack.c.l.b16 %v196
  %v1110 = vunpack.c.l.b16 %v197
  %v1111 = vunpack.c.h.b16 %v197
  %v1112 = vunpack.c.l.b16 %v198
  %v1113 = vunpack.c.h.b16 %v198
  %v1114 = vunpack.c.l.b16 %v199
  %v1115 = vunpack.c.h.b16 %v199
  %v1116 = vunpack.c.l.b16 %v200
  %v1117 = vunpack.c.h.b16 %v200
  %v1118 = vunpack.c.l.b16 %v201
  %v1119 = vunpack.c.h.b16 %v201
  %v1120 = vunpack.c.l.b16 %v202
  %v1121 = vunpack.c.h.b16 %v202
  %v1122 = vunpack.c.l.b16 %v203
  %v1123 = vunpack.c.h.b16 %v203
  %v1124 = vunpack.c.l.b16 %v204
  %v1125 = vunpack.c.h.b16 %v204
  %v1126 = vunpack.c.l.b16 %v205
  %v1127 = vunpack.c.h.b16 %v205
  %v1128 = vunpack.c.l.b16 %v206
  %v1129 = vunpack.c.l.b16 %v207
  %v1130 = vunpack.c.h.b16 %v207
  %v1131 = vunpack.c.l.b16 %v208
  %v1132 = vunpack.c.h.b16 %v208
  %v1133 = vunpack.c.l.b16 %v209
  %v1134 = vunpack.c.h.b16 %v209
  %v1135 = vunpack.c.l.b16 %v210
  %v1136 = vunpack.c.h.b16 %v210
  %v1137 = vunpack.c.l.b16 %v211
  %v1138 = vunpack.c.h.b16 %v211
  %v1139 = vunpack.c.l.b16 %v212
  %v1140 = vunpack.c.h.b16 %v212
  %v1141 = vunpack.c.l.b16 %v213
  %v1142 = vunpack.c.h.b16 %v213
  %v1143 = vunpack.c.l.b16 %v214
  %v1144 = vunpack.c.h.b16 %v214
  %v1145 = vunpack.c.l.b16 %v215
  %v1146 = vunpack.c.h.b16 %v215
  %v1147 = vunpack.c.l.b16 %v216
  %v1148 = vunpack.c.l.b16 %v217
  %v1149 = vunpack.c.h.b16 %v217
  %v1150 = vunpack.c.l.b16 %v218
  %v1151 = vunpack.c.h.b16 %v218
  %v1152 = vunpack.c.l.b16 %v219
  %v1153 = vunpack.c.h.b16 %v219
  %v1154 = vunpack.c.l.b16 %v220
  %v1155 = vunpack.c.h.b16 %v220
  %v1156 = vunpack.c.l.b16 %v221
  %v1157 = vunpack.c.h.b16 %v221
  %v1158 = vunpack.c.l.b16 %v222
  %v1159 = vunpack.c.h.b16 %v222
  %v1160 = vunpack.c.l.b16 %v223
  %v1161 = vunpack.c.h.b16 %v223
  %v1162 = vunpack.c.l.b16 %v224
  %v1163 = vunpack.c.h.b16 %v224
  %v1164 = vunpack.c.l.b16 %v225
  %v1165 = vunpack.c.h.b16 %v225
  %v1166 = vunpack.c.l.b16 %v226
  %v1167 = vunpack.c.l.b16 %v227
  %v1168 = vunpack.c.h.b16 %v227
  %v1169 = vunpack.c.l.b16 %v228
  %v1170 = vunpack.c.h.b16 %v228
  %v1171 = vunpack.c.l.b16 %v229
  %v1172 = vunpack.c.h.b16 %v229
  %v1173 = vunpack.c.l.b16 %v230
  %v1174 = vunpack.c.h.b16 %v230
  %v1175 = vunpack.c.l.b16 %v231
  %v1176 = vunpack.c.h.b16 %v231
  %v1177 = vunpack.c.l.b16 %v232
  %v1178 = vunpack.c.h.b16 %v232
  %v1179 = vunpack.c.l.b16 %v233
  %v1180 = vunpack.c.h.b16 %v233
  %v1181 = vunpack.c.l.b16 %v234
  %v1182 = vunpack.c.h.b16 %v234
  %v1183 = vunpack.c.l.b16 %v235
  %v1184 = vunpack.c.h.b16 %v235
  %v1185 = vunpack.c.l.b16 %v236
  %v1186 = vunpack.c.l.b16 %v237
  %v1187 = vunpack.c.h.b16 %v237
  %v1188 = vunpack.c.l.b16 %v238
  %v1189 = vunpack.c.h.b16 %v238
  %v1190 = vunpack.c.l.b16 %v239
  %v1191 = vunpack.c.h.b16 %v239
  %v1192 = vunpack.c.l.b16 %v240
  %v1193 = vunpack.c.h.b16 %v240
  %v1194 = vunpack.c.l.b16 %v241
  %v1195 = vunpack.c.h.b16 %v241
  %v1196 = vunpack.c.l.b16 %v242
  %v1197 = vunpack.c.h.b16 %v242
  %v1198 = vunpack.c.l.b16 %v243
  %v1199 = vunpack.c.h.b16 %v243
  %v1200 = vunpack.c.l.b16 %v244
  %v1201 = vunpack.c.h.b16 %v244
  %v1202 = vunpack.c.l.b16 %v245
  %v1203 = vunpack.c.h.b16 %v245
  %v1204 = vunpack.c.l.b16 %v246
  %v1205 = vunpack.c.l.b16 %v247
  %v1206 = vunpack.c.h.b16 %v247
  %v1207 = vunpack.c.l.b16 %v248
  %v1208 = vunpack.c.h.b16 %v248
  %v1209 = vunpack.c.l.b16 %v249
  %v1210 = vunpack.c.h.b16 %v249
  %v1211 = vunpack.c.l.b16 %v250
  %v1212 = vunpack.c.h.b16 %v250
  %v1213 = vunpack.c.l.b16 %v251
  %v1214 = vunpack.c.h.b16 %v251
  %v1215 = vunpack.c.l.b16 %v252
  %v1216 = vunpack.c.h.b16 %v252
  %v1217 = vunpack.c.l.b16 %v253
  %v1218 = vunpack.c.h.b16 %v253
  %v1219 = vunpack.c.l.b16 %v254
  %v1220 = vunpack.c.h.b16 %v254
  %v1221 = vunpack.c.l.b16 %v255
  %v1222 = vunpack.c.h.b16 %v255
  %v1223 = vunpack.c.l.b16 %v256
  %v1224 = vunpack.c.l.b16 %v257
  %v1225 = vunpack.c.h.b16 %v257
  %v1226 = vunpack.c.l.b16 %v258
  %v1227 = vunpack.c.h.b16 %v258
  %v1228 = vunpack.c.l.b16 %v259
  %v1229 = vunpack.c.h.b16 %v259
  %v1230 = vunpack.c.l.b16 %v260
  %v1231 = vunpack.c.h.b16 %v260
  %v1232 = vunpack.c.l.b16 %v261
  %v1233 = vunpack.c.h.b16 %v261
  %v1234 = vunpack.c.l.b16 %v262
  %v1235 = vunpack.c.h.b16 %v262
  %v1236 = vunpack.c.l.b16 %v263
  %v1237 = vunpack.c.h.b16 %v263
  %v1238 = vunpack.c.l.b16 %v264
  %v1239 = vunpack.c.h.b16 %v264
  %v1240 = vunpack.c.l.b16 %v265
  %v1241 = vunpack.c.h.b16 %v265
  %v1242 = vunpack.c.l.b16 %v266
  %v1243 = vunpack.c.l.b16 %v267
  %v1244 = vunpack.c.h.b16 %v267
  %v1245 = vunpack.c.l.b16 %v268
  %v1246 = vunpack.c.h.b16 %v268
  %v1247 = vunpack.c.l.b16 %v269
  %v1248 = vunpack.c.h.b16 %v269
  %v1249 = vunpack.c.l.b16 %v270
  %v1250 = vunpack.c.h.b16 %v270
  %v1251 = vunpack.c.l.b16 %v271
  %v1252 = vunpack.c.h.b16 %v271
  %v1253 = vunpack.c.l.b16 %v272
  %v1254 = vunpack.c.h.b16 %v272
  %v1255 = vunpack.c.l.b16 %v273
  %v1256 = vunpack.c.h.b16 %v273
  %v1257 = vunpack.c.l.b16 %v274
  %v1258 = vunpack.c.h.b16 %v274
  %v1259 = vunpack.c.l.b16 %v275
  %v1260 = vunpack.c.h.b16 %v275
  %v1261 = vunpack.c.l.b16 %v276
  %v1262 = vunpack.c.l.b16 %v277
  %v1263 = vunpack.c.h.b16 %v277
  %v1264 = vunpack.c.l.b16 %v278
  %v1265 = vunpack.c.h.b16 %v278
  %v1266 = vunpack.c.l.b16 %v279
  %v1267 = vunpack.c.h.b16 %v279
  %v1268 = vunpack.c.l.b16 %v280
  %v1269 = vunpack.c.h.b16 %v280
  %v1270 = vunpack.c.l.b16 %v281
  %v1271 = vunpack.c.h.b16 %v281
  %v1272 = vunpack.c.l.b16 %v282
  %v1273 = vunpack.c.h.b16 %v282
  %v1274 = vunpack.c.l.b16 %v283
  %v1275 = vunpack.c.h.b16 %v283
  %v1276 = vunpack.c.l.b16 %v284
  %v1277 = vunpack.c.h.b16 %v284
  %v1278 = vunpack.c.l.b16 %v285
  %v1279 = vunpack.c.h.b16 %v285
  %v1280 = vunpack.c.l.b16 %v286
  %v1281 = vunpack.c.l.b16 %v287
  %v1282 = vunpack.c.h.b16 %v287
  %v1283 = vunpack.c.l.b16 %v288
  %v1284 = vunpack.c.h.b16 %v288
  %v1285 = vunpack.c.l.b16 %v289
  %v1286 = vunpack.c.h.b16 %v289
  %v1287 = vunpack.c.l.b16 %v290
  %v1288 = vunpack.c.h.b16 %v290
  %v1289 = vunpack.c.l.b16 %v291
  %v1290 = vunpack.c.h.b16 %v291
  %v1291 = vunpack.c.l.b16 %v292
  %v1292 = vunpack.c.h.b16 %v292
  %v1293 = vunpack.c.l.b16 %v293
  %v1294 = vunpack.c.h.b16 %v293
  %v1295 = vunpack.c.l.b16 %v294
  %v1296 = vunpack.c.h.b16 %v294
  %v1297 = vunpack.c.l.b16 %v295
  %v1298 = vunpack.c.h.b16 %v295
  %v1299 = vunpack.c.l.b16 %v296
  %v1300 = vunpack.c.l.b16 %v297
  %v1301 = vunpack.c.h.b16 %v297
  %v1302 = vunpack.c.l.b16 %v298
  %v1303 = vunpack.c.h.b16 %v298
  %v1304 = vunpack.c.l.b16 %v299
  %v1305 = vunpack.c.h.b16 %v299
  %v1306 = vunpack.c.l.b16 %v300
  %v1307 = vunpack.c.h.b16 %v300
  %v1308 = vunpack.c.l.b16 %v301
  %v1309 = vunpack.c.h.b16 %v301
  %v1310 = vunpack.c.l.b16 %v302
  %v1311 = vunpack.c.h.b16 %v302
  %v1312 = vunpack.c.l.b16 %v303
  %v1313 = vunpack.c.h.b16 %v303
  %v1314 = vunpack.c.l.b16 %v304
  %v1315 = vunpack.c.h.b16 %v304
  %v1316 = vunpack.c.l.b16 %v305
  %v1317 = vunpack.c.h.b16 %v305
  %v1318 = vunpack.c.l.b16 %v306
  %v1319 = vunpack.c.l.b16 %v307
  %v1320 = vunpack.c.h.b16 %v307
  %v1321 = vunpack.c.l.b16 %v308
  %v1322 = vunpack.c.h.b16 %v308
  %v1323 = vunpack.c.l.b16 %v309
  %v1324 = vunpack.c.h.b16 %v309
  %v1325 = vunpack.c.l.b16 %v310
  %v1326 = vunpack.c.h.b16 %v310
  %v1327 = vunpack.c.l.b16 %v311
  %v1328 = vunpack.c.h.b16 %v311
  %v1329 = vunpack.c.l.b16 %v312
  %v1330 = vunpack.c.h.b16 %v312
  %v1331 = vunpack.c.l.b16 %v313
  %v1332 = vunpack.c.h.b16 %v313
  %v1333 = vunpack.c.l.b16 %v314
  %v1334 = vunpack.c.h.b16 %v314
  %v1335 = vunpack.c.l.b16 %v315
  %v1336 = vunpack.c.h.b16 %v315
  %v1337 = vunpack.c.l.b16 %v316
  %v1338 = vunpack.c.l.b16 %v317
  %v1339 = vunpack.c.h.b16 %v317
  %v1340 = vunpack.c.l.b16 %v318
  %v1341 = vunpack.c.h.b16 %v318
  %v1342 = vunpack.c.l.b16 %v319
  %v1343 = vunpack.c.h.b16 %v319
  %v1344 = vunpack.c.l.b16 %v320
  %v1345 = vunpack.c.h.b16 %v320
  %v1346 = vunpack.c.l.b16 %v321
  %v1347 = vunpack.c.h.b16 %v321
  %v1348 = vunpack.c.l.b16 %v322
  %v1349 = vunpack.c.h.b16 %v322
  %v1350 = vunpack.c.l.b16 %v323
  %v1351 = vunpack.c.h.b16 %v323
  %v1352 = vunpack.c.l.b16 %v324
  %v1353 = vunpack.c.h.b16 %v324
  %v1354 = vunpack.c.l.b16 %v325
  %v1355 = vunpack.c.h.b16 %v325
  %v1356 = vunpack.c.l.b16 %v326
  %v1357 = vunpack.c.l.b16 %v327
  %v1358 = vunpack.c.h.b16 %v327
  %v1359 = vunpack.c.l.b16 %v328
  %v1360 = vunpack.c.h.b16 %v328
  %v1361 = vunpack.c.l.b16 %v329
  %v1362 = vunpack.c.h.b16 %v329
  %v1363 = vunpack.c.l.b16 %v330
  %v1364 = vunpack.c.h.b16 %v330
  %v1365 = vunpack.c.l.b16 %v331
  %v1366 = vunpack.c.h.b16 %v331
  %v1367 = vunpack.c.l.b16 %v332
  %v1368 = vunpack.c.h.b16 %v332
  %v1369 = vunpack.c.l.b16 %v333
  %v1370 = vunpack.c.h.b16 %v333
  %v1371 = vunpack.c.l.b16 %v334
  %v1372 = vunpack.c.h.b16 %v334
  %v1373 = vunpack.c.l.b16 %v335
  %v1374 = vunpack.c.h.b16 %v335
  %v1375 = vunpack.c.l.b16 %v336
  %v1376 = vpack.c.b16 %v787, %v768
  %v1377 = vpack.c.b16 %v788, %v769
  %v1378 = vpack.c.b16 %v789, %v770
  %v1379 = vpack.c.b16 %v790, %v771
  %v1380 = vpack.c.b16 %v791, %v772
  %v1381 = vpack.c.b16 %v792, %v773
  %v1382 = vpack.c.b16 %v793, %v774
  %v1383 = vpack.c.b16 %v794, %v775
  %v1384 = vpack.c.b16 %v795, %v776
  %v1385 = vpack.c.b16 %v796, %v777
  %v1386 = vpack.c.b16 %v797, %v778
  %v1387 = vpack.c.b16 %v798, %v779
  %v1388 = vpack.c.b16 %v799, %v780
  %v1389 = vpack.c.b16 %v800, %v781
  %v1390 = vpack.c.b16 %v801, %v782
  %v1391 = vpack.c.b16 %v802, %v783
  %v1392 = vpack.c.b16 %v803, %v784
  %v1393 = vpack.c.b16 %v804, %v785
  %v1394 = vpack.c.b16 %v805, %v786
  %v1395 = vpack.c.b16 %v825, %v806
  %v1396 = vpack.c.b16 %v826, %v807
  %v1397 = vpack.c.b16 %v827, %v808
  %v1398 = vpack.c.b16 %v828, %v809
  %v1399 = vpack.c.b16 %v829, %v810
  %v1400 = vpack.c.b16 %v830, %v811
  %v1401 = vpack.c.b16 %v831, %v812
  %v1402 = vpack.c.b16 %v832, %v813
  %v1403 = vpack.c.b16 %v833, %v814
  %v1404 = vpack.c.b16 %v834, %v815
  %v1405 = vpack.c.b16 %v835, %v816
  %v1406 = vpack.c.b16 %v836, %v817
  %v1407 = vpack.c.b16 %v837, %v818
  %v1408 = vpack.c.b16 %v838, %v819
  %v1409 = vpack.c.b16 %v839, %v820
  %v1410 = vpack.c.b16 %v840, %v821
  %v1411 = vpack.c.b16 %v841, %v822
  %v1412 = vpack.c.b16 %v842, %v823
  %v1413 = vpack.c.b16 %v843, %v824
  %v1414 = vpack.c.b16 %v863, %v844
  %v1415 = vpack.c.b16 %v864, %v845
  %v1416 = vpack.c.b16 %v865, %v846
  %v1417 = vpack.c.b16 %v866, %v847
  %v1418 = vpack.c.b16 %v867, %v848
  %v1419 = vpack.c.b16 %v868, %v849
  %v1420 = vpack.c.b16 %v869, %v850
  %v1421 = vpack.c.b16 %v870, %v851
  %v1422 = vpack.c.b16 %v871, %v852
  %v1423 = vpack.c.b16 %v872, %v853
  %v1424 = vpack.c.b16 %v873, %v854
  %v1425 = vpack.c.b16 %v874, %v855
  %v1426 = vpack.c.b16 %v875, %v856
  %v1427 = vpack.c.b16 %v876, %v857
  %v1428 = vpack.c.b16 %v877, %v858
  %v1429 = vpack.c.b16 %v878, %v859
  %v1430 = vpack.c.b16 %v879, %v860
  %v1431 = vpack.c.b16 %v880, %v861
  %v1432 = vpack.c.b16 %v881, %v862
  %v1433 = vpack.c.b16 %v901, %v882
  %v1434 = vpack.c.b16 %v902, %v883
  %v1435 = vpack.c.b16 %v903, %v884
  %v1436 = vpack.c.b16 %v904, %v885
  %v1437 = vpack.c.b16 %v905, %v886
  %v1438 = vpack.c.b16 %v906, %v887
  %v1439 = vpack.c.b16 %v907, %v888
  %v1440 = vpack.c.b16 %v908, %v889
  %v1441 = vpack.c.b16 %v909, %v890
  %v1442 = vpack.c.b16 %v910, %v891
  %v1443 = vpack.c.b16 %v911, %v892
  %v1444 = vpack.c.b16 %v912, %v893
  %v1445 = vpack.c.b16 %v913, %v894
  %v1446 = vpack.c.b16 %v914, %v895
  %v1447 = vpack.c.b16 %v915, %v896
  %v1448 = vpack.c.b16 %v916, %v897
  %v1449 = vpack.c.b16 %v917, %v898
  %v1450 = vpack.c.b16 %v918, %v899
  %v1451 = vpack.c.b16 %v919, %v900
  %v1452 = vpack.c.b16 %v939, %v920
  %v1453 = vpack.c.b16 %v940, %v921
  %v1454 = vpack.c.b16 %v941, %v922
  %v1455 = vpack.c.b16 %v942, %v923
  %v1456 = vpack.c.b16 %v943, %v924
  %v1457 = vpack.c.b16 %v944, %v925
  %v1458 = vpack.c.b16 %v945, %v926
  %v1459 = vpack.c.b16 %v946, %v927
  %v1460 = vpack.c.b16 %v947, %v928
  %v1461 = vpack.c.b16 %v948, %v929
  %v1462 = vpack.c.b16 %v949, %v930
  %v1463 = vpack.c.b16 %v950, %v931
  %v1464 = vpack.c.b16 %v951, %v932
  %v1465 = vpack.c.b16 %v952, %v933
  %v1466 = vpack.c.b16 %v953, %v934
  %v1467 = vpack.c.b16 %v954, %v935
  %v1468 = vpack.c.b16 %v955, %v936
  %v1469 = vpack.c.b16 %v956, %v937
  %v1470 = vpack.c.b16 %v957, %v938
  %v1471 = vpack.c.b16 %v977, %v958
  %v1472 = vpack.c.b16 %v978, %v959
  %v1473 = vpack.c.b16 %v979, %v960
  %v1474 = vpack.c.b16 %v980, %v961
  %v1475 = vpack.c.b16 %v981, %v962
  %v1476 = vpack.c.b16 %v982, %v963
  %v1477 = vpack.c.b16 %v983, %v964
  %v1478 = vpack.c.b16 %v984, %v965
  %v1479 = vpack.c.b16 %v985, %v966
  %v1480 = vpack.c.b16 %v986, %v967
  %v1481 = vpack.c.b16 %v987, %v968
  %v1482 = vpack.c.b16 %v988, %v969
  %v1483 = vpack.c.b16 %v989, %v970
  %v1484 = vpack.c.b16 %v990, %v971
  %v1485 = vpack.c.b16 %v991, %v972
  %v1486 = vpack.c.b16 %v992, %v973
  %v1487 = vpack.c.b16 %v993, %v974
  %v1488 = vpack.c.b16 %v994, %v975
  %v1489 = vpack.c.b16 %v995, %v976
  %v1490 = vpack.c.b16 %v1015, %v996
  %v1491 = vpack.c.b16 %v1016, %v997
  %v1492 = vpack.c.b16 %v1017, %v998
  %v1493 = vpack.c.b16 %v1018, %v999
  %v1494 = vpack.c.b16 %v1019, %v1000
  %v1495 = vpack.c.b16 %v1020, %v1001
  %v1496 = vpack.c.b16 %v1021, %v1002
  %v1497 = vpack.c.b16 %v1022, %v1003
  %v1498 = vpack.c.b16 %v1023, %v1004
  %v1499 = vpack.c.b16 %v1024, %v1005
  %v1500 = vpack.c.b16 %v1025, %v1006
  %v1501 = vpack.c.b16 %v1026, %v1007
  %v1502 = vpack.c.b16 %v1027, %v1008
  %v1503 = vpack.c.b16 %v1028, %v1009
  %v1504 = vpack.c.b16 %v1029, %v1010
  %v1505 = vpack.c.b16 %v1030, %v1011
  %v1506 = vpack.c.b16 %v1031, %v1012
  %v1507 = vpack.c.b16 %v1032, %v1013
  %v1508 = vpack.c.b16 %v1033, %v1014
  %v1509 = vpack.c.b16 %v1053, %v1034
  %v1510 = vpack.c.b16 %v1054, %v1035
  %v1511 = vpack.c.b16 %v1055, %v1036
  %v1512 = vpack.c.b16 %v1056, %v1037
  %v1513 = vpack.c.b16 %v1057, %v1038
  %v1514 = vpack.c.b16 %v1058, %v1039
  %v1515 = vpack.c.b16 %v1059, %v1040
  %v1516 = vpack.c.b16 %v1060, %v1041
  %v1517 = vpack.c.b16 %v1061, %v1042
  %v1518 = vpack.c.b16 %v1062, %v1043
  %v1519 = vpack.c.b16 %v1063, %v1044
  %v1520 = vpack.c.b16 %v1064, %v1045
  %v1521 = vpack.c.b16 %v1065, %v1046
  %v1522 = vpack.c.b16 %v1066, %v1047
  %v1523 = vpack.c.b16 %v1067, %v1048
  %v1524 = vpack.c.b16 %v1068, %v1049
  %v1525 = vpack.c.b16 %v1069, %v1050
  %v1526 = vpack.c.b16 %v1070, %v1051
  %v1527 = vpack.c.b16 %v1071, %v1052
  %v1528 = vpack.c.b16 %v1091, %v1072
  %v1529 = vpack.c.b16 %v1092, %v1073
  %v1530 = vpack.c.b16 %v1093, %v1074
  %v1531 = vpack.c.b16 %v1094, %v1075
  %v1532 = vpack.c.b16 %v1095, %v1076
  %v1533 = vpack.c.b16 %v1096, %v1077
  %v1534 = vpack.c.b16 %v1097, %v1078
  %v1535 = vpack.c.b16 %v1098, %v1079
  %v1536 = vpack.c.b16 %v1099, %v1080
  %v1537 = vpack.c.b16 %v1100, %v1081
  %v1538 = vpack.c.b16 %v1101, %v1082
  %v1539 = vpack.c.b16 %v1102, %v1083
  %v1540 = vpack.c.b16 %v1103, %v1084
  %v1541 = vpack.c.b16 %v1104, %v1085
  %v1542 = vpack.c.b16 %v1105, %v1086
  %v1543 = vpack.c.b16 %v1106, %v1087
  %v1544 = vpack.c.b16 %v1107, %v1088
  %v1545 = vpack.c.b16 %v1108, %v1089
  %v1546 = vpack.c.b16 %v1109, %v1090
  %v1547 = vpack.c.b16 %v1129, %v1110
  %v1548 = vpack.c.b16 %v1130, %v1111
  %v1549 = vpack.c.b16 %v1131, %v1112
  %v1550 = vpack.c.b16 %v1132, %v1113
  %v1551 = vpack.c.b16 %v1133, %v1114
  %v1552 = vpack.c.b16 %v1134, %v1115
  %v1553 = vpack.c.b16 %v1135, %v1116
  %v1554 = vpack.c.b16 %v1136, %v1117
  %v1555 = vpack.c.b16 %v1137, %v1118
  %v1556 = vpack.c.b16 %v1138, %v1119
  %v1557 = vpack.c.b16 %v1139, %v1120
  %v1558 = vpack.c.b16 %v1140, %v1121
  %v1559 = vpack.c.b16 %v1141, %v1122
  %v1560 = vpack.c.b16 %v1142, %v1123
  %v1561 = vpack.c.b16 %v1143, %v1124
  %v1562 = vpack.c.b16 %v1144, %v1125
  %v1563 = vpack.c.b16 %v1145, %v1126
  %v1564 = vpack.c.b16 %v1146, %v1127
  %v1565 = vpack.c.b16 %v1147, %v1128
  %v1566 = vpack.c.b16 %v1167, %v1148
  %v1567 = vpack.c.b16 %v1168, %v1149
  %v1568 = vpack.c.b16 %v1169, %v1150
  %v1569 = vpack.c.b16 %v1170, %v1151
  %v1570 = vpack.c.b16 %v1171, %v1152
  %v1571 = vpack.c.b16 %v1172, %v1153
  %v1572 = vpack.c.b16 %v1173, %v1154
  %v1573 = vpack.c.b16 %v1174, %v1155
  %v1574 = vpack.c.b16 %v1175, %v1156
  %v1575 = vpack.c.b16 %v1176, %v1157
  %v1576 = vpack.c.b16 %v1177, %v1158
  %v1577 = vpack.c.b16 %v1178, %v1159
  %v1578 = vpack.c.b16 %v1179, %v1160
  %v1579 = vpack.c.b16 %v1180, %v1161
  %v1580 = vpack.c.b16 %v1181, %v1162
  %v1581 = vpack.c.b16 %v1182, %v1163
  %v1582 = vpack.c.b16 %v1183, %v1164
  %v1583 = vpack.c.b16 %v1184, %v1165
  %v1584 = vpack.c.b16 %v1185, %v1166
  %v1585 = vpack.c.b16 %v1205, %v1186
  %v1586 = vpack.c.b16 %v1206, %v1187
  %v1587 = vpack.c.b16 %v1207, %v1188
  %v1588 = vpack.c.b16 %v1208, %v1189
  %v1589 = vpack.c.b16 %v1209, %v1190
  %v1590 = vpack.c.b16 %v1210, %v1191
  %v1591 = vpack.c.b16 %v1211, %v1192
  %v1592 = vpack.c.b16 %v1212, %v1193
  %v1593 = vpack.c.b16 %v1213, %v1194
  %v1594 = vpack.c.b16 %v1214, %v1195
  %v1595 = vpack.c.b16 %v1215, %v1196
  %v1596 = vpack.c.b16 %v1216, %v1197
  %v1597 = vpack.c.b16 %v1217, %v1198
  %v1598 = vpack.c.b16 %v1218, %v1199
  %v1599 = vpack.c.b16 %v1219, %v1200
  %v1600 = vpack.c.b16 %v1220, %v1201
  %v1601 = vpack.c.b16 %v1221, %v1202
  %v1602 = vpack.c.b16 %v1222, %v1203
  %v1603 = vpack.c.b16 %v1223, %v1204
  %v1604 = vpack.c.b16 %v1243, %v1224
  %v1605 = vpack.c.b16 %v1244, %v1225
  %v1606 = vpack.c.b16 %v1245, %v1226
  %v1607 = vpack.c.b16 %v1246, %v1227
  %v1608 = vpack.c.b16 %v1247, %v1228
  %v1609 = vpack.c.b16 %v1248, %v1229
  %v1610 = vpack.c.b16 %v1249, %v1230
  %v1611 = vpack.c.b16 %v1250, %v1231
  %v1612 = vpack.c.b16 %v1251, %v1232
  %v1613 = vpack.c.b16 %v1252, %v1233
  %v1614 = vpack.c.b16 %v1253, %v1234
  %v1615 = vpack.c.b16 %v1254, %v1235
  %v1616 = vpack.c.b16 %v1255, %v1236
  %v1617 = vpack.c.b16 %v1256, %v1237
  %v1618 = vpack.c.b16 %v1257, %v1238
  %v1619 = vpack.c.b16 %v1258, %v1239
  %v1620 = vpack.c.b16 %v1259, %v1240
  %v1621 = vpack.c.b16 %v1260, %v1241
  %v1622 = vpack.c.b16 %v1261, %v1242
  %v1623 = vpack.c.b16 %v1281, %v1262
  %v1624 = vpack.c.b16 %v1282, %v1263
  %v1625 = vpack.c.b16 %v1283, %v1264
  %v1626 = vpack.c.b16 %v1284, %v1265
  %v1627 = vpack.c.b16 %v1285, %v1266
  %v1628 = vpack.c.b16 %v1286, %v1267
  %v1629 = vpack.c.b16 %v1287, %v1268
  %v1630 = vpack.c.b16 %v1288, %v1269
  %v1631 = vpack.c.b16 %v1289, %v1270
  %v1632 = vpack.c.b16 %v1290, %v1271
  %v1633 = vpack.c.b16 %v1291, %v1272
  %v1634 = vpack.c.b16 %v1292, %v1273
  %v1635 = vpack.c.b16 %v1293, %v1274
  %v1636 = vpack.c.b16 %v1294, %v1275
  %v1637 = vpack.c.b16 %v1295, %v1276
  %v1638 = vpack.c.b16 %v1296, %v1277
  %v1639 = vpack.c.b16 %v1297, %v1278
  %v1640 = vpack.c.b16 %v1298, %v1279
  %v1641 = vpack.c.b16 %v1299, %v1280
  %v1642 = vpack.c.b16 %v1319, %v1300
  %v1643 = vpack.c.b16 %v1320, %v1301
  %v1644 = vpack.c.b16 %v1321, %v1302
  %v1645 = vpack.c.b16 %v1322, %v1303
  %v1646 = vpack.c.b16 %v1323, %v1304
  %v1647 = vpack.c.b16 %v1324, %v1305
  %v1648 = vpack.c.b16 %v1325, %v1306
  %v1649 = vpack.c.b16 %v1326, %v1307
  %v1650 = vpack.c.b16 %v1327, %v1308
  %v1651 = vpack.c.b16 %v1328, %v1309
  %v1652 = vpack.c.b16 %v1329, %v1310
  %v1653 = vpack.c.b16 %v1330, %v1311
  %v1654 = vpack.c.b16 %v1331, %v1312
  %v1655 = vpack.c.b16 %v1332, %v1313
  %v1656 = vpack.c.b16 %v1333, %v1314
  %v1657 = vpack.c.b16 %v1334, %v1315
  %v1658 = vpack.c.b16 %v1335, %v1316
  %v1659 = vpack.c.b16 %v1336, %v1317
  %v1660 = vpack.c.b16 %v1337, %v1318
  %v1661 = vpack.c.b16 %v1357, %v1338
  %v1662 = vpack.c.b16 %v1358, %v1339
  %v1663 = vpack.c.b16 %v1359, %v1340
  %v1664 = vpack.c.b16 %v1360, %v1341
  %v1665 = vpack.c.b16 %v1361, %v1342
  %v1666 = vpack.c.b16 %v1362, %v1343
  %v1667 = vpack.c.b16 %v1363, %v1344
  %v1668 = vpack.c.b16 %v1364, %v1345
  %v1669 = vpack.c.b16 %v1365, %v1346
  %v1670 = vpack.c.b16 %v1366, %v1347
  %v1671 = vpack.c.b16 %v1367, %v1348
  %v1672 = vpack.c.b16 %v1368, %v1349
  %v1673 = vpack.c.b16 %v1369, %v1350
  %v1674 = vpack.c.b16 %v1370, %v1351
  %v1675 = vpack.c.b16 %v1371, %v1352
  %v1676 = vpack.c.b16 %v1372, %v1353
  %v1677 = vpack.c.b16 %v1373, %v1354
  %v1678 = vpack.c.b16 %v1374, %v1355
  %v1679 = vpack.c.b16 %v1375, %v1356
  %1984 = vmatprep.subr.bf16.mxu0 %v1377
  %1985 = vmatpush1.bf16.msra.mxu0 %v1376
  %1986 = vmatprep.subr.bf16.mxu0 %v1396
  %1987 = vmatpush1.bf16.msra.mxu0 %v1395
  %1988 = vmatprep.subr.bf16.mxu0 %v1415
  %1989 = vmatpush1.bf16.msra.mxu0 %v1414
  %1990 = vmatprep.subr.bf16.mxu0 %v1434
  %1991 = vmatpush1.bf16.msra.mxu0 %v1433
  %1992 = vmatprep.subr.bf16.mxu0 %v1453
  %1993 = vmatpush1.bf16.msra.mxu0 %v1452
  %1994 = vmatprep.subr.bf16.mxu0 %v1472
  %1995 = vmatpush1.bf16.msra.mxu0 %v1471
  %1996 = vmatprep.subr.bf16.mxu0 %v1491
  %1997 = vmatpush1.bf16.msra.mxu0 %v1490
  %1998 = vmatprep.subr.bf16.mxu0 %v1510
  %1999 = vmatpush1.bf16.msra.mxu0 %v1509
  %2000 = vmatprep.subr.bf16.mxu0 %v1529
  %2001 = vmatpush1.bf16.msra.mxu0 %v1528
  %2002 = vmatprep.subr.bf16.mxu0 %v1548
  %2003 = vmatpush1.bf16.msra.mxu0 %v1547
  %2004 = vmatprep.subr.bf16.mxu0 %v1567
  %2005 = vmatpush1.bf16.msra.mxu0 %v1566
  %2006 = vmatprep.subr.bf16.mxu0 %v1586
  %2007 = vmatpush1.bf16.msra.mxu0 %v1585
  %2008 = vmatprep.subr.bf16.mxu0 %v1605
  %2009 = vmatpush1.bf16.msra.mxu0 %v1604
  %2010 = vmatprep.subr.bf16.mxu0 %v1624
  %2011 = vmatpush1.bf16.msra.mxu0 %v1623
  %2012 = vmatprep.subr.bf16.mxu0 %v1643
  %2013 = vmatpush1.bf16.msra.mxu0 %v1642
  %2014 = vmatprep.subr.bf16.mxu0 %v1662
  %2015 = vmatpush1.bf16.msra.mxu0 %v1661
  %2016 = vmatprep.mubr.bf16.mxu0 %v445
  %2017 = vmatmul.mubr.bf16.gmra.mrb[0].mxu0 %v444
  %v2018 = vpop.f32.mrb[0].mxu0
  %v2019 = vadd.f32 %v346, %v2018
  %v2020 = vpop.f32.mrb[0].mxu0
  %v2021 = vadd.f32 %v350, %v2020
  %v2022 = vpop.f32.mrb[0].mxu0
  %v2023 = vadd.f32 %v346, %v2022
  %v2024 = vpop.f32.mrb[0].mxu0
  %v2025 = vadd.f32 %v350, %v2024
  %2026 = vdwg.mxu0
  %2027 = vmatprep.subr.bf16.mxu0 %v1379
  %2028 = vmatpush1.bf16.msra.mxu0 %v1378
  %2029 = vmatprep.subr.bf16.mxu0 %v1398
  %2030 = vmatpush1.bf16.msra.mxu0 %v1397
  %2031 = vmatprep.subr.bf16.mxu0 %v1417
  %2032 = vmatpush1.bf16.msra.mxu0 %v1416
  %2033 = vmatprep.subr.bf16.mxu0 %v1436
  %2034 = vmatpush1.bf16.msra.mxu0 %v1435
  %2035 = vmatprep.subr.bf16.mxu0 %v1455
  %2036 = vmatpush1.bf16.msra.mxu0 %v1454
  %2037 = vmatprep.subr.bf16.mxu0 %v1474
  %2038 = vmatpush1.bf16.msra.mxu0 %v1473
  %2039 = vmatprep.subr.bf16.mxu0 %v1493
  %2040 = vmatpush1.bf16.msra.mxu0 %v1492
  %2041 = vmatprep.subr.bf16.mxu0 %v1512
  %2042 = vmatpush1.bf16.msra.mxu0 %v1511
  %2043 = vmatprep.subr.bf16.mxu0 %v1531
  %2044 = vmatpush1.bf16.msra.mxu0 %v1530
  %2045 = vmatprep.subr.bf16.mxu0 %v1550
  %2046 = vmatpush1.bf16.msra.mxu0 %v1549
  %2047 = vmatprep.subr.bf16.mxu0 %v1569
  %2048 = vmatpush1.bf16.msra.mxu0 %v1568
  %2049 = vmatprep.subr.bf16.mxu0 %v1588
  %2050 = vmatpush1.bf16.msra.mxu0 %v1587
  %2051 = vmatprep.subr.bf16.mxu0 %v1607
  %2052 = vmatpush1.bf16.msra.mxu0 %v1606
  %2053 = vmatprep.subr.bf16.mxu0 %v1626
  %2054 = vmatpush1.bf16.msra.mxu0 %v1625
  %2055 = vmatprep.subr.bf16.mxu0 %v1645
  %2056 = vmatpush1.bf16.msra.mxu0 %v1644
  %2057 = vmatprep.subr.bf16.mxu0 %v1664
  %2058 = vmatpush1.bf16.msra.mxu0 %v1663
  %2059 = vmatprep.mubr.bf16.mxu0 %v445
  %2060 = vmatmul.mubr.bf16.gmra.mrb[0].mxu0 %v444
  %v2061 = vpop.f32.mrb[0].mxu0
  %v2062 = vadd.f32 %v354, %v2061
  %v2063 = vpop.f32.mrb[0].mxu0
  %v2064 = vadd.f32 %v358, %v2063
  %v2065 = vpop.f32.mrb[0].mxu0
  %v2066 = vadd.f32 %v354, %v2065
  %v2067 = vpop.f32.mrb[0].mxu0
  %v2068 = vadd.f32 %v358, %v2067
  %2069 = vdwg.mxu0
  %2070 = vmatprep.subr.bf16.mxu0 %v1381
  %2071 = vmatpush1.bf16.msra.mxu0 %v1380
  %2072 = vmatprep.subr.bf16.mxu0 %v1400
  %2073 = vmatpush1.bf16.msra.mxu0 %v1399
  %2074 = vmatprep.subr.bf16.mxu0 %v1419
  %2075 = vmatpush1.bf16.msra.mxu0 %v1418
  %2076 = vmatprep.subr.bf16.mxu0 %v1438
  %2077 = vmatpush1.bf16.msra.mxu0 %v1437
  %2078 = vmatprep.subr.bf16.mxu0 %v1457
  %2079 = vmatpush1.bf16.msra.mxu0 %v1456
  %2080 = vmatprep.subr.bf16.mxu0 %v1476
  %2081 = vmatpush1.bf16.msra.mxu0 %v1475
  %2082 = vmatprep.subr.bf16.mxu0 %v1495
  %2083 = vmatpush1.bf16.msra.mxu0 %v1494
  %2084 = vmatprep.subr.bf16.mxu0 %v1514
  %2085 = vmatpush1.bf16.msra.mxu0 %v1513
  %2086 = vmatprep.subr.bf16.mxu0 %v1533
  %2087 = vmatpush1.bf16.msra.mxu0 %v1532
  %2088 = vmatprep.subr.bf16.mxu0 %v1552
  %2089 = vmatpush1.bf16.msra.mxu0 %v1551
  %2090 = vmatprep.subr.bf16.mxu0 %v1571
  %2091 = vmatpush1.bf16.msra.mxu0 %v1570
  %2092 = vmatprep.subr.bf16.mxu0 %v1590
  %2093 = vmatpush1.bf16.msra.mxu0 %v1589
  %2094 = vmatprep.subr.bf16.mxu0 %v1609
  %2095 = vmatpush1.bf16.msra.mxu0 %v1608
  %2096 = vmatprep.subr.bf16.mxu0 %v1628
  %2097 = vmatpush1.bf16.msra.mxu0 %v1627
  %2098 = vmatprep.subr.bf16.mxu0 %v1647
  %2099 = vmatpush1.bf16.msra.mxu0 %v1646
  %2100 = vmatprep.subr.bf16.mxu0 %v1666
  %2101 = vmatpush1.bf16.msra.mxu0 %v1665
  %2102 = vmatprep.mubr.bf16.mxu0 %v445
  %2103 = vmatmul.mubr.bf16.gmra.mrb[0].mxu0 %v444
  %v2104 = vpop.f32.mrb[0].mxu0
  %v2105 = vadd.f32 %v362, %v2104
  %v2106 = vpop.f32.mrb[0].mxu0
  %v2107 = vadd.f32 %v366, %v2106
  %v2108 = vpop.f32.mrb[0].mxu0
  %v2109 = vadd.f32 %v362, %v2108
  %v2110 = vpop.f32.mrb[0].mxu0
  %v2111 = vadd.f32 %v366, %v2110
  %2112 = vdwg.mxu0
  %2113 = vmatprep.subr.bf16.mxu0 %v1383
  %2114 = vmatpush1.bf16.msra.mxu0 %v1382
  %2115 = vmatprep.subr.bf16.mxu0 %v1402
  %2116 = vmatpush1.bf16.msra.mxu0 %v1401
  %2117 = vmatprep.subr.bf16.mxu0 %v1421
  %2118 = vmatpush1.bf16.msra.mxu0 %v1420
  %2119 = vmatprep.subr.bf16.mxu0 %v1440
  %2120 = vmatpush1.bf16.msra.mxu0 %v1439
  %2121 = vmatprep.subr.bf16.mxu0 %v1459
  %2122 = vmatpush1.bf16.msra.mxu0 %v1458
  %2123 = vmatprep.subr.bf16.mxu0 %v1478
  %2124 = vmatpush1.bf16.msra.mxu0 %v1477
  %2125 = vmatprep.subr.bf16.mxu0 %v1497
  %2126 = vmatpush1.bf16.msra.mxu0 %v1496
  %2127 = vmatprep.subr.bf16.mxu0 %v1516
  %2128 = vmatpush1.bf16.msra.mxu0 %v1515
  %2129 = vmatprep.subr.bf16.mxu0 %v1535
  %2130 = vmatpush1.bf16.msra.mxu0 %v1534
  %2131 = vmatprep.subr.bf16.mxu0 %v1554
  %2132 = vmatpush1.bf16.msra.mxu0 %v1553
  %2133 = vmatprep.subr.bf16.mxu0 %v1573
  %2134 = vmatpush1.bf16.msra.mxu0 %v1572
  %2135 = vmatprep.subr.bf16.mxu0 %v1592
  %2136 = vmatpush1.bf16.msra.mxu0 %v1591
  %2137 = vmatprep.subr.bf16.mxu0 %v1611
  %2138 = vmatpush1.bf16.msra.mxu0 %v1610
  %2139 = vmatprep.subr.bf16.mxu0 %v1630
  %2140 = vmatpush1.bf16.msra.mxu0 %v1629
  %2141 = vmatprep.subr.bf16.mxu0 %v1649
  %2142 = vmatpush1.bf16.msra.mxu0 %v1648
  %2143 = vmatprep.subr.bf16.mxu0 %v1668
  %2144 = vmatpush1.bf16.msra.mxu0 %v1667
  %2145 = vmatprep.mubr.bf16.mxu0 %v445
  %2146 = vmatmul.mubr.bf16.gmra.mrb[0].mxu0 %v444
  %v2147 = vpop.f32.mrb[0].mxu0
  %v2148 = vadd.f32 %v370, %v2147
  %v2149 = vpop.f32.mrb[0].mxu0
  %v2150 = vadd.f32 %v374, %v2149
  %v2151 = vpop.f32.mrb[0].mxu0
  %v2152 = vadd.f32 %v370, %v2151
  %v2153 = vpop.f32.mrb[0].mxu0
  %v2154 = vadd.f32 %v374, %v2153
  %2155 = vdwg.mxu0
  %2156 = vmatprep.subr.bf16.mxu0 %v1385
  %2157 = vmatpush1.bf16.msra.mxu0 %v1384
  %2158 = vmatprep.subr.bf16.mxu0 %v1404
  %2159 = vmatpush1.bf16.msra.mxu0 %v1403
  %2160 = vmatprep.subr.bf16.mxu0 %v1423
  %2161 = vmatpush1.bf16.msra.mxu0 %v1422
  %2162 = vmatprep.subr.bf16.mxu0 %v1442
  %2163 = vmatpush1.bf16.msra.mxu0 %v1441
  %2164 = vmatprep.subr.bf16.mxu0 %v1461
  %2165 = vmatpush1.bf16.msra.mxu0 %v1460
  %2166 = vmatprep.subr.bf16.mxu0 %v1480
  %2167 = vmatpush1.bf16.msra.mxu0 %v1479
  %2168 = vmatprep.subr.bf16.mxu0 %v1499
  %2169 = vmatpush1.bf16.msra.mxu0 %v1498
  %2170 = vmatprep.subr.bf16.mxu0 %v1518
  %2171 = vmatpush1.bf16.msra.mxu0 %v1517
  %2172 = vmatprep.subr.bf16.mxu0 %v1537
  %2173 = vmatpush1.bf16.msra.mxu0 %v1536
  %2174 = vmatprep.subr.bf16.mxu0 %v1556
  %2175 = vmatpush1.bf16.msra.mxu0 %v1555
  %2176 = vmatprep.subr.bf16.mxu0 %v1575
  %2177 = vmatpush1.bf16.msra.mxu0 %v1574
  %2178 = vmatprep.subr.bf16.mxu0 %v1594
  %2179 = vmatpush1.bf16.msra.mxu0 %v1593
  %2180 = vmatprep.subr.bf16.mxu0 %v1613
  %2181 = vmatpush1.bf16.msra.mxu0 %v1612
  %2182 = vmatprep.subr.bf16.mxu0 %v1632
  %2183 = vmatpush1.bf16.msra.mxu0 %v1631
  %2184 = vmatprep.subr.bf16.mxu0 %v1651
  %2185 = vmatpush1.bf16.msra.mxu0 %v1650
  %2186 = vmatprep.subr.bf16.mxu0 %v1670
  %2187 = vmatpush1.bf16.msra.mxu0 %v1669
  %2188 = vmatprep.mubr.bf16.mxu0 %v445
  %2189 = vmatmul.mubr.bf16.gmra.mrb[0].mxu0 %v444
  %v2190 = vpop.f32.mrb[0].mxu0
  %v2191 = vadd.f32 %v378, %v2190
  %v2192 = vpop.f32.mrb[0].mxu0
  %v2193 = vadd.f32 %v382, %v2192
  %v2194 = vpop.f32.mrb[0].mxu0
  %v2195 = vadd.f32 %v378, %v2194
  %v2196 = vpop.f32.mrb[0].mxu0
  %v2197 = vadd.f32 %v382, %v2196
  %2198 = vdwg.mxu0
  %2199 = vmatprep.subr.bf16.mxu0 %v1387
  %2200 = vmatpush1.bf16.msra.mxu0 %v1386
  %2201 = vmatprep.subr.bf16.mxu0 %v1406
  %2202 = vmatpush1.bf16.msra.mxu0 %v1405
  %2203 = vmatprep.subr.bf16.mxu0 %v1425
  %2204 = vmatpush1.bf16.msra.mxu0 %v1424
  %2205 = vmatprep.subr.bf16.mxu0 %v1444
  %2206 = vmatpush1.bf16.msra.mxu0 %v1443
  %2207 = vmatprep.subr.bf16.mxu0 %v1463
  %2208 = vmatpush1.bf16.msra.mxu0 %v1462
  %2209 = vmatprep.subr.bf16.mxu0 %v1482
  %2210 = vmatpush1.bf16.msra.mxu0 %v1481
  %2211 = vmatprep.subr.bf16.mxu0 %v1501
  %2212 = vmatpush1.bf16.msra.mxu0 %v1500
  %2213 = vmatprep.subr.bf16.mxu0 %v1520
  %2214 = vmatpush1.bf16.msra.mxu0 %v1519
  %2215 = vmatprep.subr.bf16.mxu0 %v1539
  %2216 = vmatpush1.bf16.msra.mxu0 %v1538
  %2217 = vmatprep.subr.bf16.mxu0 %v1558
  %2218 = vmatpush1.bf16.msra.mxu0 %v1557
  %2219 = vmatprep.subr.bf16.mxu0 %v1577
  %2220 = vmatpush1.bf16.msra.mxu0 %v1576
  %2221 = vmatprep.subr.bf16.mxu0 %v1596
  %2222 = vmatpush1.bf16.msra.mxu0 %v1595
  %2223 = vmatprep.subr.bf16.mxu0 %v1615
  %2224 = vmatpush1.bf16.msra.mxu0 %v1614
  %2225 = vmatprep.subr.bf16.mxu0 %v1634
  %2226 = vmatpush1.bf16.msra.mxu0 %v1633
  %2227 = vmatprep.subr.bf16.mxu0 %v1653
  %2228 = vmatpush1.bf16.msra.mxu0 %v1652
  %2229 = vmatprep.subr.bf16.mxu0 %v1672
  %2230 = vmatpush1.bf16.msra.mxu0 %v1671
  %2231 = vmatprep.mubr.bf16.mxu0 %v445
  %2232 = vmatmul.mubr.bf16.gmra.mrb[0].mxu0 %v444
  %v2233 = vpop.f32.mrb[0].mxu0
  %v2234 = vadd.f32 %v386, %v2233
  %v2235 = vpop.f32.mrb[0].mxu0
  %v2236 = vadd.f32 %v390, %v2235
  %v2237 = vpop.f32.mrb[0].mxu0
  %v2238 = vadd.f32 %v386, %v2237
  %v2239 = vpop.f32.mrb[0].mxu0
  %v2240 = vadd.f32 %v390, %v2239
  %2241 = vdwg.mxu0
  %2242 = vmatprep.subr.bf16.mxu0 %v1389
  %2243 = vmatpush1.bf16.msra.mxu0 %v1388
  %2244 = vmatprep.subr.bf16.mxu0 %v1408
  %2245 = vmatpush1.bf16.msra.mxu0 %v1407
  %2246 = vmatprep.subr.bf16.mxu0 %v1427
  %2247 = vmatpush1.bf16.msra.mxu0 %v1426
  %2248 = vmatprep.subr.bf16.mxu0 %v1446
  %2249 = vmatpush1.bf16.msra.mxu0 %v1445
  %2250 = vmatprep.subr.bf16.mxu0 %v1465
  %2251 = vmatpush1.bf16.msra.mxu0 %v1464
  %2252 = vmatprep.subr.bf16.mxu0 %v1484
  %2253 = vmatpush1.bf16.msra.mxu0 %v1483
  %2254 = vmatprep.subr.bf16.mxu0 %v1503
  %2255 = vmatpush1.bf16.msra.mxu0 %v1502
  %2256 = vmatprep.subr.bf16.mxu0 %v1522
  %2257 = vmatpush1.bf16.msra.mxu0 %v1521
  %2258 = vmatprep.subr.bf16.mxu0 %v1541
  %2259 = vmatpush1.bf16.msra.mxu0 %v1540
  %2260 = vmatprep.subr.bf16.mxu0 %v1560
  %2261 = vmatpush1.bf16.msra.mxu0 %v1559
  %2262 = vmatprep.subr.bf16.mxu0 %v1579
  %2263 = vmatpush1.bf16.msra.mxu0 %v1578
  %2264 = vmatprep.subr.bf16.mxu0 %v1598
  %2265 = vmatpush1.bf16.msra.mxu0 %v1597
  %2266 = vmatprep.subr.bf16.mxu0 %v1617
  %2267 = vmatpush1.bf16.msra.mxu0 %v1616
  %2268 = vmatprep.subr.bf16.mxu0 %v1636
  %2269 = vmatpush1.bf16.msra.mxu0 %v1635
  %2270 = vmatprep.subr.bf16.mxu0 %v1655
  %2271 = vmatpush1.bf16.msra.mxu0 %v1654
  %2272 = vmatprep.subr.bf16.mxu0 %v1674
  %2273 = vmatpush1.bf16.msra.mxu0 %v1673
  %2274 = vmatprep.mubr.bf16.mxu0 %v445
  %2275 = vmatmul.mubr.bf16.gmra.mrb[0].mxu0 %v444
  %v2276 = vpop.f32.mrb[0].mxu0
  %v2277 = vadd.f32 %v394, %v2276
  %v2278 = vpop.f32.mrb[0].mxu0
  %v2279 = vadd.f32 %v398, %v2278
  %v2280 = vpop.f32.mrb[0].mxu0
  %v2281 = vadd.f32 %v394, %v2280
  %v2282 = vpop.f32.mrb[0].mxu0
  %v2283 = vadd.f32 %v398, %v2282
  %2284 = vdwg.mxu0
  %2285 = vmatprep.subr.bf16.mxu0 %v1391
  %2286 = vmatpush1.bf16.msra.mxu0 %v1390
  %2287 = vmatprep.subr.bf16.mxu0 %v1410
  %2288 = vmatpush1.bf16.msra.mxu0 %v1409
  %2289 = vmatprep.subr.bf16.mxu0 %v1429
  %2290 = vmatpush1.bf16.msra.mxu0 %v1428
  %2291 = vmatprep.subr.bf16.mxu0 %v1448
  %2292 = vmatpush1.bf16.msra.mxu0 %v1447
  %2293 = vmatprep.subr.bf16.mxu0 %v1467
  %2294 = vmatpush1.bf16.msra.mxu0 %v1466
  %2295 = vmatprep.subr.bf16.mxu0 %v1486
  %2296 = vmatpush1.bf16.msra.mxu0 %v1485
  %2297 = vmatprep.subr.bf16.mxu0 %v1505
  %2298 = vmatpush1.bf16.msra.mxu0 %v1504
  %2299 = vmatprep.subr.bf16.mxu0 %v1524
  %2300 = vmatpush1.bf16.msra.mxu0 %v1523
  %2301 = vmatprep.subr.bf16.mxu0 %v1543
  %2302 = vmatpush1.bf16.msra.mxu0 %v1542
  %2303 = vmatprep.subr.bf16.mxu0 %v1562
  %2304 = vmatpush1.bf16.msra.mxu0 %v1561
  %2305 = vmatprep.subr.bf16.mxu0 %v1581
  %2306 = vmatpush1.bf16.msra.mxu0 %v1580
  %2307 = vmatprep.subr.bf16.mxu0 %v1600
  %2308 = vmatpush1.bf16.msra.mxu0 %v1599
  %2309 = vmatprep.subr.bf16.mxu0 %v1619
  %2310 = vmatpush1.bf16.msra.mxu0 %v1618
  %2311 = vmatprep.subr.bf16.mxu0 %v1638
  %2312 = vmatpush1.bf16.msra.mxu0 %v1637
  %2313 = vmatprep.subr.bf16.mxu0 %v1657
  %2314 = vmatpush1.bf16.msra.mxu0 %v1656
  %2315 = vmatprep.subr.bf16.mxu0 %v1676
  %2316 = vmatpush1.bf16.msra.mxu0 %v1675
  %2317 = vmatprep.mubr.bf16.mxu0 %v445
  %2318 = vmatmul.mubr.bf16.gmra.mrb[0].mxu0 %v444
  %v2319 = vpop.f32.mrb[0].mxu0
  %v2320 = vadd.f32 %v402, %v2319
  %v2321 = vpop.f32.mrb[0].mxu0
  %v2322 = vadd.f32 %v406, %v2321
  %v2323 = vpop.f32.mrb[0].mxu0
  %v2324 = vadd.f32 %v402, %v2323
  %v2325 = vpop.f32.mrb[0].mxu0
  %v2326 = vadd.f32 %v406, %v2325
  %2327 = vdwg.mxu0
  %2328 = vmatprep.subr.bf16.mxu0 %v1393
  %2329 = vmatpush1.bf16.msra.mxu0 %v1392
  %2330 = vmatprep.subr.bf16.mxu0 %v1412
  %2331 = vmatpush1.bf16.msra.mxu0 %v1411
  %2332 = vmatprep.subr.bf16.mxu0 %v1431
  %2333 = vmatpush1.bf16.msra.mxu0 %v1430
  %2334 = vmatprep.subr.bf16.mxu0 %v1450
  %2335 = vmatpush1.bf16.msra.mxu0 %v1449
  %2336 = vmatprep.subr.bf16.mxu0 %v1469
  %2337 = vmatpush1.bf16.msra.mxu0 %v1468
  %2338 = vmatprep.subr.bf16.mxu0 %v1488
  %2339 = vmatpush1.bf16.msra.mxu0 %v1487
  %2340 = vmatprep.subr.bf16.mxu0 %v1507
  %2341 = vmatpush1.bf16.msra.mxu0 %v1506
  %2342 = vmatprep.subr.bf16.mxu0 %v1526
  %2343 = vmatpush1.bf16.msra.mxu0 %v1525
  %2344 = vmatprep.subr.bf16.mxu0 %v1545
  %2345 = vmatpush1.bf16.msra.mxu0 %v1544
  %2346 = vmatprep.subr.bf16.mxu0 %v1564
  %2347 = vmatpush1.bf16.msra.mxu0 %v1563
  %2348 = vmatprep.subr.bf16.mxu0 %v1583
  %2349 = vmatpush1.bf16.msra.mxu0 %v1582
  %2350 = vmatprep.subr.bf16.mxu0 %v1602
  %2351 = vmatpush1.bf16.msra.mxu0 %v1601
  %2352 = vmatprep.subr.bf16.mxu0 %v1621
  %2353 = vmatpush1.bf16.msra.mxu0 %v1620
  %2354 = vmatprep.subr.bf16.mxu0 %v1640
  %2355 = vmatpush1.bf16.msra.mxu0 %v1639
  %2356 = vmatprep.subr.bf16.mxu0 %v1659
  %2357 = vmatpush1.bf16.msra.mxu0 %v1658
  %2358 = vmatprep.subr.bf16.mxu0 %v1678
  %2359 = vmatpush1.bf16.msra.mxu0 %v1677
  %2360 = vmatprep.mubr.bf16.mxu0 %v445
  %2361 = vmatmul.mubr.bf16.gmra.mrb[0].mxu0 %v444
  %v2362 = vpop.f32.mrb[0].mxu0
  %v2363 = vadd.f32 %v410, %v2362
  %v2364 = vpop.f32.mrb[0].mxu0
  %v2365 = vadd.f32 %v414, %v2364
  %v2366 = vpop.f32.mrb[0].mxu0
  %v2367 = vadd.f32 %v410, %v2366
  %v2368 = vpop.f32.mrb[0].mxu0
  %v2369 = vadd.f32 %v414, %v2368
  %2370 = vdwg.mxu0
  %2371 = vmatprep.subr.bf16.mxu0 0
  %2372 = vmatpush1.bf16.msra.mxu0 %v1394
  %2373 = vmatprep.subr.bf16.mxu0 0
  %2374 = vmatpush1.bf16.msra.mxu0 %v1413
  %2375 = vmatprep.subr.bf16.mxu0 0
  %2376 = vmatpush1.bf16.msra.mxu0 %v1432
  %2377 = vmatprep.subr.bf16.mxu0 0
  %2378 = vmatpush1.bf16.msra.mxu0 %v1451
  %2379 = vmatprep.subr.bf16.mxu0 0
  %2380 = vmatpush1.bf16.msra.mxu0 %v1470
  %2381 = vmatprep.subr.bf16.mxu0 0
  %2382 = vmatpush1.bf16.msra.mxu0 %v1489
  %2383 = vmatprep.subr.bf16.mxu0 0
  %2384 = vmatpush1.bf16.msra.mxu0 %v1508
  %2385 = vmatprep.subr.bf16.mxu0 0
  %2386 = vmatpush1.bf16.msra.mxu0 %v1527
  %2387 = vmatprep.subr.bf16.mxu0 0
  %2388 = vmatpush1.bf16.msra.mxu0 %v1546
  %2389 = vmatprep.subr.bf16.mxu0 0
  %2390 = vmatpush1.bf16.msra.mxu0 %v1565
  %2391 = vmatprep.subr.bf16.mxu0 0
  %2392 = vmatpush1.bf16.msra.mxu0 %v1584
  %2393 = vmatprep.subr.bf16.mxu0 0
  %2394 = vmatpush1.bf16.msra.mxu0 %v1603
  %2395 = vmatprep.subr.bf16.mxu0 0
  %2396 = vmatpush1.bf16.msra.mxu0 %v1622
  %2397 = vmatprep.subr.bf16.mxu0 0
  %2398 = vmatpush1.bf16.msra.mxu0 %v1641
  %2399 = vmatprep.subr.bf16.mxu0 0
  %2400 = vmatpush1.bf16.msra.mxu0 %v1660
  %2401 = vmatprep.subr.bf16.mxu0 0
  %2402 = vmatpush1.bf16.msra.mxu0 %v1679
  %2403 = vmatprep.mubr.bf16.mxu0 %v445
  %2404 = vmatmul.mubr.bf16.gmra.mrb[0].mxu0 %v444
  %v2405 = vpop.f32.mrb[0].mxu0
  %v2406 = vadd.f32 %v418, %v2405
  %v2407 = vpop.f32.mrb[0].mxu0
  %v2408 = vpop.f32.mrb[0].mxu0
  %v2409 = vadd.f32 %v418, %v2408
  %v2410 = vpop.f32.mrb[0].mxu0
  %2411 = vdwg.mxu0
  %2412 = vst [vmem:[%s3] sm:$0xff] %v2019
  %2413 = vst [vmem:[%s3 + $0x8] sm:$0xff] %v2021
  %2414 = vst [vmem:[%s3 + $0x10] sm:$0xff] %v2062
  %2415 = vst [vmem:[%s3 + $0x18] sm:$0xff] %v2064
  %2416 = vst [vmem:[%s3 + $0x20] sm:$0xff] %v2105
  %2417 = vst [vmem:[%s3 + $0x28] sm:$0xff] %v2107
  %2418 = vst [vmem:[%s3 + $0x30] sm:$0xff] %v2148
  %2419 = vst [vmem:[%s3 + $0x38] sm:$0xff] %v2150
  %2420 = vst [vmem:[%s3 + $0x40] sm:$0xff] %v2191
  %2421 = vst [vmem:[%s3 + $0x48] sm:$0xff] %v2193
  %2422 = vst [vmem:[%s3 + $0x50] sm:$0xff] %v2234
  %2423 = vst [vmem:[%s3 + $0x58] sm:$0xff] %v2236
  %2424 = vst [vmem:[%s3 + $0x60] sm:$0xff] %v2277
  %2425 = vst [vmem:[%s3 + $0x68] sm:$0xff] %v2279
  %2426 = vst [vmem:[%s3 + $0x70] sm:$0xff] %v2320
  %2427 = vst [vmem:[%s3 + $0x78] sm:$0xff] %v2322
  %2428 = vst [vmem:[%s3 + $0x80] sm:$0xff] %v2363
  %2429 = vst [vmem:[%s3 + $0x88] sm:$0xff] %v2365
  %2430 = vst [vmem:[%s3 + $0x90] sm:$0xff] %v2406
  %2431 = vst [vmem:[%s3 + $0x98] sm:$0xff] %v2023
  %2432 = vst [vmem:[%s3 + $0xa0] sm:$0xff] %v2025
  %2433 = vst [vmem:[%s3 + $0xa8] sm:$0xff] %v2066
  %2434 = vst [vmem:[%s3 + $0xb0] sm:$0xff] %v2068
  %2435 = vst [vmem:[%s3 + $0xb8] sm:$0xff] %v2109
  %2436 = vst [vmem:[%s3 + $0xc0] sm:$0xff] %v2111
  %2437 = vst [vmem:[%s3 + $0xc8] sm:$0xff] %v2152
  %2438 = vst [vmem:[%s3 + $0xd0] sm:$0xff] %v2154
  %2439 = vst [vmem:[%s3 + $0xd8] sm:$0xff] %v2195
  %2440 = vst [vmem:[%s3 + $0xe0] sm:$0xff] %v2197
  %2441 = vst [vmem:[%s3 + $0xe8] sm:$0xff] %v2238
  %2442 = vst [vmem:[%s3 + $0xf0] sm:$0xff] %v2240
  %2443 = vst [vmem:[%s3 + $0xf8] sm:$0xff] %v2281
  %2444 = vst [vmem:[%s3 + $0x100] sm:$0xff] %v2283
  %2445 = vst [vmem:[%s3 + $0x108] sm:$0xff] %v2324
  %2446 = vst [vmem:[%s3 + $0x110] sm:$0xff] %v2326
  %2447 = vst [vmem:[%s3 + $0x118] sm:$0xff] %v2367
  %2448 = vst [vmem:[%s3 + $0x120] sm:$0xff] %v2369
  %2449 = vst [vmem:[%s3 + $0x128] sm:$0xff] %v2409
  // Predicated region
  $region14: #{model_forward.3} parent=0 // pred_check
    _
  $region15: #{model_forward.3} parent=0 // pred_check_branch
    %2451 = sbr.rel (0) target = $region17
  $region16: #{model_forward.3} parent=0 // pred_region
    _
  $region17: #{model_forward.3} parent=0 // pred_fallthru
    _
  // Predicated region
  $region18: #{model_forward.3} parent=0 // pred_check
    _
  $region19: #{model_forward.3} parent=0 // pred_check_branch
    %2453 = sbr.rel (0) target = $region21
  $region20: #{model_forward.3} parent=0 // pred_region
    _
  $region21: #{model_forward.3} parent=0 // pred_fallthru
    _

// kernel: model_forward.2
$region0: #{model_forward.2}
  #allocation0 [shape = 'u32[]', space=smem, size = 0x4, offset = 0x4, fixed_abs, tag = 'smem constant byte address 0x4 - core index']
  #allocation1 [shape = 'u32[144,128]{1,0:T(1,128)}', space=vmem, size = 0x12000, scoped, tag = 'internal scratch']
  %s0 = inlined_call_operand.vmem [shape: bf16[16,1024], index: 0, kind: input, shape index: {}]
  %s1 = inlined_call_operand.vmem [shape: bf16[1024,1024], index: 1, kind: input, shape index: {}]
  %s2 = inlined_call_operand.vmem [shape: f32[1,1024], index: 2, kind: input, shape index: {}]
  %s3 = inlined_call_operand.vmem [shape: bf16[1024,1536], index: 3, kind: input, shape index: {}]
  %s4 = inlined_call_operand.vmem [shape: bf16[3,128,512], index: 4, kind: input, shape index: {}]
  %s5 = inlined_call_operand.vmem [shape: f32[3,1,512], index: 5, kind: input, shape index: {}]
  %s6 = inlined_call_operand.vmem [shape: bf16[3,512,256], index: 6, kind: input, shape index: {}]
  %s7 = inlined_call_operand.vmem [shape: f32[3,1,256], index: 7, kind: input, shape index: {}]
  %s8 = inlined_call_operand.vmem [shape: bf16[3,256,128], index: 8, kind: input, shape index: {}]
  %s9 = inlined_call_operand.vmem [shape: f32[3,1,128], index: 9, kind: input, shape index: {}, may-alias: {9,11}]
  %s10 = inlined_call_operand.vmem [shape: bf16[3,128,128], index: 10, kind: input, shape index: {}]
  %s11 = inlined_call_operand.vmem [shape: f32[3,1,128], index: 11, kind: input, shape index: {}, may-alias: {9,11}]
  %s12 = inlined_call_operand.vmem [shape: f32[3,16,128], index: 12, kind: output, shape index: {}]
  %s13 = sld [smem:[#allocation0]]
  $region58: #{model_forward.2} parent=0
    _
  %s15 = ssub.s32 1, %s13
  %s16 = scalar_select 0, %s15, %s13
  // Predicated region
  $region2: #{model_forward.2} parent=0 // pred_check
    _
  $region3: #{model_forward.2} parent=0 // pred_check_branch
    %18 = sbr.rel (0) target = $region5
  $region4: #{model_forward.2} parent=0 // pred_region
    _
  $region5: #{model_forward.2} parent=0 // pred_fallthru
    _
  // Predicated region
  $region6: #{model_forward.2} parent=0 // pred_check
    _
  $region7: #{model_forward.2} parent=0 // pred_check_branch
    %20 = sbr.rel (0) target = $region9
  $region8: #{model_forward.2} parent=0 // pred_region
    _
  $region9: #{model_forward.2} parent=0 // pred_fallthru
    _
  // Predicated region
  $region10: #{model_forward.2} parent=0 // pred_check
    _
  $region11: #{model_forward.2} parent=0 // pred_check_branch
    %22 = sbr.rel (0) target = $region13
  $region12: #{model_forward.2} parent=0 // pred_region
    _
  $region13: #{model_forward.2} parent=0 // pred_fallthru
    _
  // Predicated region
  $region14: #{model_forward.2} parent=0 // pred_check
    _
  $region15: #{model_forward.2} parent=0 // pred_check_branch
    %24 = sbr.rel (0) target = $region17
  $region16: #{model_forward.2} parent=0 // pred_region
    _
  $region17: #{model_forward.2} parent=0 // pred_fallthru
    _
  // Predicated region
  $region18: #{model_forward.2} parent=0 // pred_check
    _
  $region19: #{model_forward.2} parent=0 // pred_check_branch
    %26 = sbr.rel (0) target = $region21
  $region20: #{model_forward.2} parent=0 // pred_region
    _
  $region21: #{model_forward.2} parent=0 // pred_fallthru
    _
  // Predicated region
  $region22: #{model_forward.2} parent=0 // pred_check
    _
  $region23: #{model_forward.2} parent=0 // pred_check_branch
    %28 = sbr.rel (0) target = $region25
  $region24: #{model_forward.2} parent=0 // pred_region
    _
  $region25: #{model_forward.2} parent=0 // pred_fallthru
    _
  // Predicated region
  $region26: #{model_forward.2} parent=0 // pred_check
    _
  $region27: #{model_forward.2} parent=0 // pred_check_branch
    %30 = sbr.rel (0) target = $region29
  $region28: #{model_forward.2} parent=0 // pred_region
    _
  $region29: #{model_forward.2} parent=0 // pred_fallthru
    _
  // Predicated region
  $region30: #{model_forward.2} parent=0 // pred_check
    _
  $region31: #{model_forward.2} parent=0 // pred_check_branch
    %32 = sbr.rel (0) target = $region33
  $region32: #{model_forward.2} parent=0 // pred_region
    _
  $region33: #{model_forward.2} parent=0 // pred_fallthru
    _
  // Predicated region
  $region34: #{model_forward.2} parent=0 // pred_check
    _
  $region35: #{model_forward.2} parent=0 // pred_check_branch
    %34 = sbr.rel (0) target = $region37
  $region36: #{model_forward.2} parent=0 // pred_region
    _
  $region37: #{model_forward.2} parent=0 // pred_fallthru
    _
  // Predicated region
  $region38: #{model_forward.2} parent=0 // pred_check
    _
  $region39: #{model_forward.2} parent=0 // pred_check_branch
    %36 = sbr.rel (0) target = $region41
  $region40: #{model_forward.2} parent=0 // pred_region
    _
  $region41: #{model_forward.2} parent=0 // pred_fallthru
    _
  // Predicated region
  $region42: #{model_forward.2} parent=0 // pred_check
    _
  $region43: #{model_forward.2} parent=0 // pred_check_branch
    %38 = sbr.rel (0) target = $region45
  $region44: #{model_forward.2} parent=0 // pred_region
    _
  $region45: #{model_forward.2} parent=0 // pred_fallthru
    _
  // Predicated region
  $region46: #{model_forward.2} parent=0 // pred_check
    _
  $region47: #{model_forward.2} parent=0 // pred_check_branch
    %40 = sbr.rel (0) target = $region49
  $region48: #{model_forward.2} parent=0 // pred_region
    _
  $region49: #{model_forward.2} parent=0 // pred_fallthru
    _
  %v42 = vld [vmem:[%s0] sm:$0xff]
  %v43 = vld [vmem:[%s0 + $0x8] sm:$0xff]
  %v44 = vld [vmem:[%s0 + $0x10] sm:$0xff]
  %v45 = vld [vmem:[%s0 + $0x18] sm:$0xff]
  %v46 = vld [vmem:[%s0 + $0x20] sm:$0xff]
  %v47 = vld [vmem:[%s0 + $0x28] sm:$0xff]
  %v48 = vld [vmem:[%s0 + $0x30] sm:$0xff]
  %v49 = vld [vmem:[%s0 + $0x38] sm:$0xff]
  %v50 = vld [vmem:[%s1] sm:$0xff]
  %v51 = vld [vmem:[%s1 + $0x8] sm:$0xff]
  %v52 = vld [vmem:[%s1 + $0x10] sm:$0xff]
  %v53 = vld [vmem:[%s1 + $0x18] sm:$0xff]
  %v54 = vld [vmem:[%s1 + $0x20] sm:$0xff]
  %v55 = vld [vmem:[%s1 + $0x28] sm:$0xff]
  %v56 = vld [vmem:[%s1 + $0x30] sm:$0xff]
  %v57 = vld [vmem:[%s1 + $0x38] sm:$0xff]
  %v58 = vld [vmem:[%s1 + $0x40] sm:$0xff]
  %v59 = vld [vmem:[%s1 + $0x48] sm:$0xff]
  %v60 = vld [vmem:[%s1 + $0x50] sm:$0xff]
  %v61 = vld [vmem:[%s1 + $0x58] sm:$0xff]
  %v62 = vld [vmem:[%s1 + $0x60] sm:$0xff]
  %v63 = vld [vmem:[%s1 + $0x68] sm:$0xff]
  %v64 = vld [vmem:[%s1 + $0x70] sm:$0xff]
  %v65 = vld [vmem:[%s1 + $0x78] sm:$0xff]
  %v66 = vld [vmem:[%s1 + $0x80] sm:$0xff]
  %v67 = vld [vmem:[%s1 + $0x88] sm:$0xff]
  %v68 = vld [vmem:[%s1 + $0x90] sm:$0xff]
  %v69 = vld [vmem:[%s1 + $0x98] sm:$0xff]
  %v70 = vld [vmem:[%s1 + $0xa0] sm:$0xff]
  %v71 = vld [vmem:[%s1 + $0xa8] sm:$0xff]
  %v72 = vld [vmem:[%s1 + $0xb0] sm:$0xff]
  %v73 = vld [vmem:[%s1 + $0xb8] sm:$0xff]
  %v74 = vld [vmem:[%s1 + $0xc0] sm:$0xff]
  %v75 = vld [vmem:[%s1 + $0xc8] sm:$0xff]
  %v76 = vld [vmem:[%s1 + $0xd0] sm:$0xff]
  %v77 = vld [vmem:[%s1 + $0xd8] sm:$0xff]
  %v78 = vld [vmem:[%s1 + $0xe0] sm:$0xff]
  %v79 = vld [vmem:[%s1 + $0xe8] sm:$0xff]
  %v80 = vld [vmem:[%s1 + $0xf0] sm:$0xff]
  %v81 = vld [vmem:[%s1 + $0xf8] sm:$0xff]
  %v82 = vld [vmem:[%s1 + $0x100] sm:$0xff]
  %v83 = vld [vmem:[%s1 + $0x108] sm:$0xff]
  %v84 = vld [vmem:[%s1 + $0x110] sm:$0xff]
  %v85 = vld [vmem:[%s1 + $0x118] sm:$0xff]
  %v86 = vld [vmem:[%s1 + $0x120] sm:$0xff]
  %v87 = vld [vmem:[%s1 + $0x128] sm:$0xff]
  %v88 = vld [vmem:[%s1 + $0x130] sm:$0xff]
  %v89 = vld [vmem:[%s1 + $0x138] sm:$0xff]
  %v90 = vld [vmem:[%s1 + $0x140] sm:$0xff]
  %v91 = vld [vmem:[%s1 + $0x148] sm:$0xff]
  %v92 = vld [vmem:[%s1 + $0x150] sm:$0xff]
  %v93 = vld [vmem:[%s1 + $0x158] sm:$0xff]
  %v94 = vld [vmem:[%s1 + $0x160] sm:$0xff]
  %v95 = vld [vmem:[%s1 + $0x168] sm:$0xff]
  %v96 = vld [vmem:[%s1 + $0x170] sm:$0xff]
  %v97 = vld [vmem:[%s1 + $0x178] sm:$0xff]
  %v98 = vld [vmem:[%s1 + $0x180] sm:$0xff]
  %v99 = vld [vmem:[%s1 + $0x188] sm:$0xff]
  %v100 = vld [vmem:[%s1 + $0x190] sm:$0xff]
  %v101 = vld [vmem:[%s1 + $0x198] sm:$0xff]
  %v102 = vld [vmem:[%s1 + $0x1a0] sm:$0xff]
  %v103 = vld [vmem:[%s1 + $0x1a8] sm:$0xff]
  %v104 = vld [vmem:[%s1 + $0x1b0] sm:$0xff]
  %v105 = vld [vmem:[%s1 + $0x1b8] sm:$0xff]
  %v106 = vld [vmem:[%s1 + $0x1c0] sm:$0xff]
  %v107 = vld [vmem:[%s1 + $0x1c8] sm:$0xff]
  %v108 = vld [vmem:[%s1 + $0x1d0] sm:$0xff]
  %v109 = vld [vmem:[%s1 + $0x1d8] sm:$0xff]
  %v110 = vld [vmem:[%s1 + $0x1e0] sm:$0xff]
  %v111 = vld [vmem:[%s1 + $0x1e8] sm:$0xff]
  %v112 = vld [vmem:[%s1 + $0x1f0] sm:$0xff]
  %v113 = vld [vmem:[%s1 + $0x1f8] sm:$0xff]
  %v114 = vld [vmem:[%s1 + $0x200] sm:$0xff]
  %v115 = vld [vmem:[%s1 + $0x208] sm:$0xff]
  %v116 = vld [vmem:[%s1 + $0x210] sm:$0xff]
  %v117 = vld [vmem:[%s1 + $0x218] sm:$0xff]
  %v118 = vld [vmem:[%s1 + $0x220] sm:$0xff]
  %v119 = vld [vmem:[%s1 + $0x228] sm:$0xff]
  %v120 = vld [vmem:[%s1 + $0x230] sm:$0xff]
  %v121 = vld [vmem:[%s1 + $0x238] sm:$0xff]
  %v122 = vld [vmem:[%s1 + $0x240] sm:$0xff]
  %v123 = vld [vmem:[%s1 + $0x248] sm:$0xff]
  %v124 = vld [vmem:[%s1 + $0x250] sm:$0xff]
  %v125 = vld [vmem:[%s1 + $0x258] sm:$0xff]
  %v126 = vld [vmem:[%s1 + $0x260] sm:$0xff]
  %v127 = vld [vmem:[%s1 + $0x268] sm:$0xff]
  %v128 = vld [vmem:[%s1 + $0x270] sm:$0xff]
  %v129 = vld [vmem:[%s1 + $0x278] sm:$0xff]
  %v130 = vld [vmem:[%s1 + $0x280] sm:$0xff]
  %v131 = vld [vmem:[%s1 + $0x288] sm:$0xff]
  %v132 = vld [vmem:[%s1 + $0x290] sm:$0xff]
  %v133 = vld [vmem:[%s1 + $0x298] sm:$0xff]
  %v134 = vld [vmem:[%s1 + $0x2a0] sm:$0xff]
  %v135 = vld [vmem:[%s1 + $0x2a8] sm:$0xff]
  %v136 = vld [vmem:[%s1 + $0x2b0] sm:$0xff]
  %v137 = vld [vmem:[%s1 + $0x2b8] sm:$0xff]
  %v138 = vld [vmem:[%s1 + $0x2c0] sm:$0xff]
  %v139 = vld [vmem:[%s1 + $0x2c8] sm:$0xff]
  %v140 = vld [vmem:[%s1 + $0x2d0] sm:$0xff]
  %v141 = vld [vmem:[%s1 + $0x2d8] sm:$0xff]
  %v142 = vld [vmem:[%s1 + $0x2e0] sm:$0xff]
  %v143 = vld [vmem:[%s1 + $0x2e8] sm:$0xff]
  %v144 = vld [vmem:[%s1 + $0x2f0] sm:$0xff]
  %v145 = vld [vmem:[%s1 + $0x2f8] sm:$0xff]
  %v146 = vld [vmem:[%s1 + $0x300] sm:$0xff]
  %v147 = vld [vmem:[%s1 + $0x308] sm:$0xff]
  %v148 = vld [vmem:[%s1 + $0x310] sm:$0xff]
  %v149 = vld [vmem:[%s1 + $0x318] sm:$0xff]
  %v150 = vld [vmem:[%s1 + $0x320] sm:$0xff]
  %v151 = vld [vmem:[%s1 + $0x328] sm:$0xff]
  %v152 = vld [vmem:[%s1 + $0x330] sm:$0xff]
  %v153 = vld [vmem:[%s1 + $0x338] sm:$0xff]
  %v154 = vld [vmem:[%s1 + $0x340] sm:$0xff]
  %v155 = vld [vmem:[%s1 + $0x348] sm:$0xff]
  %v156 = vld [vmem:[%s1 + $0x350] sm:$0xff]
  %v157 = vld [vmem:[%s1 + $0x358] sm:$0xff]
  %v158 = vld [vmem:[%s1 + $0x360] sm:$0xff]
  %v159 = vld [vmem:[%s1 + $0x368] sm:$0xff]
  %v160 = vld [vmem:[%s1 + $0x370] sm:$0xff]
  %v161 = vld [vmem:[%s1 + $0x378] sm:$0xff]
  %v162 = vld [vmem:[%s1 + $0x380] sm:$0xff]
  %v163 = vld [vmem:[%s1 + $0x388] sm:$0xff]
  %v164 = vld [vmem:[%s1 + $0x390] sm:$0xff]
  %v165 = vld [vmem:[%s1 + $0x398] sm:$0xff]
  %v166 = vld [vmem:[%s1 + $0x3a0] sm:$0xff]
  %v167 = vld [vmem:[%s1 + $0x3a8] sm:$0xff]
  %v168 = vld [vmem:[%s1 + $0x3b0] sm:$0xff]
  %v169 = vld [vmem:[%s1 + $0x3b8] sm:$0xff]
  %v170 = vld [vmem:[%s1 + $0x3c0] sm:$0xff]
  %v171 = vld [vmem:[%s1 + $0x3c8] sm:$0xff]
  %v172 = vld [vmem:[%s1 + $0x3d0] sm:$0xff]
  %v173 = vld [vmem:[%s1 + $0x3d8] sm:$0xff]
  %v174 = vld [vmem:[%s1 + $0x3e0] sm:$0xff]
  %v175 = vld [vmem:[%s1 + $0x3e8] sm:$0xff]
  %v176 = vld [vmem:[%s1 + $0x3f0] sm:$0xff]
  %v177 = vld [vmem:[%s1 + $0x3f8] sm:$0xff]
  %v178 = vld [vmem:[%s1 + $0x400] sm:$0xff]
  %v179 = vld [vmem:[%s1 + $0x408] sm:$0xff]
  %v180 = vld [vmem:[%s1 + $0x410] sm:$0xff]
  %v181 = vld [vmem:[%s1 + $0x418] sm:$0xff]
  %v182 = vld [vmem:[%s1 + $0x420] sm:$0xff]
  %v183 = vld [vmem:[%s1 + $0x428] sm:$0xff]
  %v184 = vld [vmem:[%s1 + $0x430] sm:$0xff]
  %v185 = vld [vmem:[%s1 + $0x438] sm:$0xff]
  %v186 = vld [vmem:[%s1 + $0x440] sm:$0xff]
  %v187 = vld [vmem:[%s1 + $0x448] sm:$0xff]
  %v188 = vld [vmem:[%s1 + $0x450] sm:$0xff]
  %v189 = vld [vmem:[%s1 + $0x458] sm:$0xff]
  %v190 = vld [vmem:[%s1 + $0x460] sm:$0xff]
  %v191 = vld [vmem:[%s1 + $0x468] sm:$0xff]
  %v192 = vld [vmem:[%s1 + $0x470] sm:$0xff]
  %v193 = vld [vmem:[%s1 + $0x478] sm:$0xff]
  %v194 = vld [vmem:[%s1 + $0x480] sm:$0xff]
  %v195 = vld [vmem:[%s1 + $0x488] sm:$0xff]
  %v196 = vld [vmem:[%s1 + $0x490] sm:$0xff]
  %v197 = vld [vmem:[%s1 + $0x498] sm:$0xff]
  %v198 = vld [vmem:[%s1 + $0x4a0] sm:$0xff]
  %v199 = vld [vmem:[%s1 + $0x4a8] sm:$0xff]
  %v200 = vld [vmem:[%s1 + $0x4b0] sm:$0xff]
  %v201 = vld [vmem:[%s1 + $0x4b8] sm:$0xff]
  %v202 = vld [vmem:[%s1 + $0x4c0] sm:$0xff]
  %v203 = vld [vmem:[%s1 + $0x4c8] sm:$0xff]
  %v204 = vld [vmem:[%s1 + $0x4d0] sm:$0xff]
  %v205 = vld [vmem:[%s1 + $0x4d8] sm:$0xff]
  %v206 = vld [vmem:[%s1 + $0x4e0] sm:$0xff]
  %v207 = vld [vmem:[%s1 + $0x4e8] sm:$0xff]
  %v208 = vld [vmem:[%s1 + $0x4f0] sm:$0xff]
  %v209 = vld [vmem:[%s1 + $0x4f8] sm:$0xff]
  %v210 = vld [vmem:[%s1 + $0x500] sm:$0xff]
  %v211 = vld [vmem:[%s1 + $0x508] sm:$0xff]
  %v212 = vld [vmem:[%s1 + $0x510] sm:$0xff]
  %v213 = vld [vmem:[%s1 + $0x518] sm:$0xff]
  %v214 = vld [vmem:[%s1 + $0x520] sm:$0xff]
  %v215 = vld [vmem:[%s1 + $0x528] sm:$0xff]
  %v216 = vld [vmem:[%s1 + $0x530] sm:$0xff]
  %v217 = vld [vmem:[%s1 + $0x538] sm:$0xff]
  %v218 = vld [vmem:[%s1 + $0x540] sm:$0xff]
  %v219 = vld [vmem:[%s1 + $0x548] sm:$0xff]
  %v220 = vld [vmem:[%s1 + $0x550] sm:$0xff]
  %v221 = vld [vmem:[%s1 + $0x558] sm:$0xff]
  %v222 = vld [vmem:[%s1 + $0x560] sm:$0xff]
  %v223 = vld [vmem:[%s1 + $0x568] sm:$0xff]
  %v224 = vld [vmem:[%s1 + $0x570] sm:$0xff]
  %v225 = vld [vmem:[%s1 + $0x578] sm:$0xff]
  %v226 = vld [vmem:[%s1 + $0x580] sm:$0xff]
  %v227 = vld [vmem:[%s1 + $0x588] sm:$0xff]
  %v228 = vld [vmem:[%s1 + $0x590] sm:$0xff]
  %v229 = vld [vmem:[%s1 + $0x598] sm:$0xff]
  %v230 = vld [vmem:[%s1 + $0x5a0] sm:$0xff]
  %v231 = vld [vmem:[%s1 + $0x5a8] sm:$0xff]
  %v232 = vld [vmem:[%s1 + $0x5b0] sm:$0xff]
  %v233 = vld [vmem:[%s1 + $0x5b8] sm:$0xff]
  %v234 = vld [vmem:[%s1 + $0x5c0] sm:$0xff]
  %v235 = vld [vmem:[%s1 + $0x5c8] sm:$0xff]
  %v236 = vld [vmem:[%s1 + $0x5d0] sm:$0xff]
  %v237 = vld [vmem:[%s1 + $0x5d8] sm:$0xff]
  %v238 = vld [vmem:[%s1 + $0x5e0] sm:$0xff]
  %v239 = vld [vmem:[%s1 + $0x5e8] sm:$0xff]
  %v240 = vld [vmem:[%s1 + $0x5f0] sm:$0xff]
  %v241 = vld [vmem:[%s1 + $0x5f8] sm:$0xff]
  %v242 = vld [vmem:[%s1 + $0x600] sm:$0xff]
  %v243 = vld [vmem:[%s1 + $0x608] sm:$0xff]
  %v244 = vld [vmem:[%s1 + $0x610] sm:$0xff]
  %v245 = vld [vmem:[%s1 + $0x618] sm:$0xff]
  %v246 = vld [vmem:[%s1 + $0x620] sm:$0xff]
  %v247 = vld [vmem:[%s1 + $0x628] sm:$0xff]
  %v248 = vld [vmem:[%s1 + $0x630] sm:$0xff]
  %v249 = vld [vmem:[%s1 + $0x638] sm:$0xff]
  %v250 = vld [vmem:[%s1 + $0x640] sm:$0xff]
  %v251 = vld [vmem:[%s1 + $0x648] sm:$0xff]
  %v252 = vld [vmem:[%s1 + $0x650] sm:$0xff]
  %v253 = vld [vmem:[%s1 + $0x658] sm:$0xff]
  %v254 = vld [vmem:[%s1 + $0x660] sm:$0xff]
  %v255 = vld [vmem:[%s1 + $0x668] sm:$0xff]
  %v256 = vld [vmem:[%s1 + $0x670] sm:$0xff]
  %v257 = vld [vmem:[%s1 + $0x678] sm:$0xff]
  %v258 = vld [vmem:[%s1 + $0x680] sm:$0xff]
  %v259 = vld [vmem:[%s1 + $0x688] sm:$0xff]
  %v260 = vld [vmem:[%s1 + $0x690] sm:$0xff]
  %v261 = vld [vmem:[%s1 + $0x698] sm:$0xff]
  %v262 = vld [vmem:[%s1 + $0x6a0] sm:$0xff]
  %v263 = vld [vmem:[%s1 + $0x6a8] sm:$0xff]
  %v264 = vld [vmem:[%s1 + $0x6b0] sm:$0xff]
  %v265 = vld [vmem:[%s1 + $0x6b8] sm:$0xff]
  %v266 = vld [vmem:[%s1 + $0x6c0] sm:$0xff]
  %v267 = vld [vmem:[%s1 + $0x6c8] sm:$0xff]
  %v268 = vld [vmem:[%s1 + $0x6d0] sm:$0xff]
  %v269 = vld [vmem:[%s1 + $0x6d8] sm:$0xff]
  %v270 = vld [vmem:[%s1 + $0x6e0] sm:$0xff]
  %v271 = vld [vmem:[%s1 + $0x6e8] sm:$0xff]
  %v272 = vld [vmem:[%s1 + $0x6f0] sm:$0xff]
  %v273 = vld [vmem:[%s1 + $0x6f8] sm:$0xff]
  %v274 = vld [vmem:[%s1 + $0x700] sm:$0xff]
  %v275 = vld [vmem:[%s1 + $0x708] sm:$0xff]
  %v276 = vld [vmem:[%s1 + $0x710] sm:$0xff]
  %v277 = vld [vmem:[%s1 + $0x718] sm:$0xff]
  %v278 = vld [vmem:[%s1 + $0x720] sm:$0xff]
  %v279 = vld [vmem:[%s1 + $0x728] sm:$0xff]
  %v280 = vld [vmem:[%s1 + $0x730] sm:$0xff]
  %v281 = vld [vmem:[%s1 + $0x738] sm:$0xff]
  %v282 = vld [vmem:[%s1 + $0x740] sm:$0xff]
  %v283 = vld [vmem:[%s1 + $0x748] sm:$0xff]
  %v284 = vld [vmem:[%s1 + $0x750] sm:$0xff]
  %v285 = vld [vmem:[%s1 + $0x758] sm:$0xff]
  %v286 = vld [vmem:[%s1 + $0x760] sm:$0xff]
  %v287 = vld [vmem:[%s1 + $0x768] sm:$0xff]
  %v288 = vld [vmem:[%s1 + $0x770] sm:$0xff]
  %v289 = vld [vmem:[%s1 + $0x778] sm:$0xff]
  %v290 = vld [vmem:[%s1 + $0x780] sm:$0xff]
  %v291 = vld [vmem:[%s1 + $0x788] sm:$0xff]
  %v292 = vld [vmem:[%s1 + $0x790] sm:$0xff]
  %v293 = vld [vmem:[%s1 + $0x798] sm:$0xff]
  %v294 = vld [vmem:[%s1 + $0x7a0] sm:$0xff]
  %v295 = vld [vmem:[%s1 + $0x7a8] sm:$0xff]
  %v296 = vld [vmem:[%s1 + $0x7b0] sm:$0xff]
  %v297 = vld [vmem:[%s1 + $0x7b8] sm:$0xff]
  %v298 = vld [vmem:[%s1 + $0x7c0] sm:$0xff]
  %v299 = vld [vmem:[%s1 + $0x7c8] sm:$0xff]
  %v300 = vld [vmem:[%s1 + $0x7d0] sm:$0xff]
  %v301 = vld [vmem:[%s1 + $0x7d8] sm:$0xff]
  %v302 = vld [vmem:[%s1 + $0x7e0] sm:$0xff]
  %v303 = vld [vmem:[%s1 + $0x7e8] sm:$0xff]
  %v304 = vld [vmem:[%s1 + $0x7f0] sm:$0xff]
  %v305 = vld [vmem:[%s1 + $0x7f8] sm:$0xff]
  %v306 = vld [vmem:[%s1 + $0x800] sm:$0xff]
  %v307 = vld [vmem:[%s1 + $0x808] sm:$0xff]
  %v308 = vld [vmem:[%s1 + $0x810] sm:$0xff]
  %v309 = vld [vmem:[%s1 + $0x818] sm:$0xff]
  %v310 = vld [vmem:[%s1 + $0x820] sm:$0xff]
  %v311 = vld [vmem:[%s1 + $0x828] sm:$0xff]
  %v312 = vld [vmem:[%s1 + $0x830] sm:$0xff]
  %v313 = vld [vmem:[%s1 + $0x838] sm:$0xff]
  %v314 = vld [vmem:[%s1 + $0x840] sm:$0xff]
  %v315 = vld [vmem:[%s1 + $0x848] sm:$0xff]
  %v316 = vld [vmem:[%s1 + $0x850] sm:$0xff]
  %v317 = vld [vmem:[%s1 + $0x858] sm:$0xff]
  %v318 = vld [vmem:[%s1 + $0x860] sm:$0xff]
  %v319 = vld [vmem:[%s1 + $0x868] sm:$0xff]
  %v320 = vld [vmem:[%s1 + $0x870] sm:$0xff]
  %v321 = vld [vmem:[%s1 + $0x878] sm:$0xff]
  %v322 = vld [vmem:[%s1 + $0x880] sm:$0xff]
  %v323 = vld [vmem:[%s1 + $0x888] sm:$0xff]
  %v324 = vld [vmem:[%s1 + $0x890] sm:$0xff]
  %v325 = vld [vmem:[%s1 + $0x898] sm:$0xff]
  %v326 = vld [vmem:[%s1 + $0x8a0] sm:$0xff]
  %v327 = vld [vmem:[%s1 + $0x8a8] sm:$0xff]
  %v328 = vld [vmem:[%s1 + $0x8b0] sm:$0xff]
  %v329 = vld [vmem:[%s1 + $0x8b8] sm:$0xff]
  %v330 = vld [vmem:[%s1 + $0x8c0] sm:$0xff]
  %v331 = vld [vmem:[%s1 + $0x8c8] sm:$0xff]
  %v332 = vld [vmem:[%s1 + $0x8d0] sm:$0xff]
  %v333 = vld [vmem:[%s1 + $0x8d8] sm:$0xff]
  %v334 = vld [vmem:[%s1 + $0x8e0] sm:$0xff]
  %v335 = vld [vmem:[%s1 + $0x8e8] sm:$0xff]
  %v336 = vld [vmem:[%s1 + $0x8f0] sm:$0xff]
  %v337 = vld [vmem:[%s1 + $0x8f8] sm:$0xff]
  %v338 = vld [vmem:[%s1 + $0x900] sm:$0xff]
  %v339 = vld [vmem:[%s1 + $0x908] sm:$0xff]
  %v340 = vld [vmem:[%s1 + $0x910] sm:$0xff]
  %v341 = vld [vmem:[%s1 + $0x918] sm:$0xff]
  %v342 = vld [vmem:[%s1 + $0x920] sm:$0xff]
  %v343 = vld [vmem:[%s1 + $0x928] sm:$0xff]
  %v344 = vld [vmem:[%s1 + $0x930] sm:$0xff]
  %v345 = vld [vmem:[%s1 + $0x938] sm:$0xff]
  %v346 = vld [vmem:[%s1 + $0x940] sm:$0xff]
  %v347 = vld [vmem:[%s1 + $0x948] sm:$0xff]
  %v348 = vld [vmem:[%s1 + $0x950] sm:$0xff]
  %v349 = vld [vmem:[%s1 + $0x958] sm:$0xff]
  %v350 = vld [vmem:[%s1 + $0x960] sm:$0xff]
  %v351 = vld [vmem:[%s1 + $0x968] sm:$0xff]
  %v352 = vld [vmem:[%s1 + $0x970] sm:$0xff]
  %v353 = vld [vmem:[%s1 + $0x978] sm:$0xff]
  %v354 = vld [vmem:[%s1 + $0x980] sm:$0xff]
  %v355 = vld [vmem:[%s1 + $0x988] sm:$0xff]
  %v356 = vld [vmem:[%s1 + $0x990] sm:$0xff]
  %v357 = vld [vmem:[%s1 + $0x998] sm:$0xff]
  %v358 = vld [vmem:[%s1 + $0x9a0] sm:$0xff]
  %v359 = vld [vmem:[%s1 + $0x9a8] sm:$0xff]
  %v360 = vld [vmem:[%s1 + $0x9b0] sm:$0xff]
  %v361 = vld [vmem:[%s1 + $0x9b8] sm:$0xff]
  %v362 = vld [vmem:[%s1 + $0x9c0] sm:$0xff]
  %v363 = vld [vmem:[%s1 + $0x9c8] sm:$0xff]
  %v364 = vld [vmem:[%s1 + $0x9d0] sm:$0xff]
  %v365 = vld [vmem:[%s1 + $0x9d8] sm:$0xff]
  %v366 = vld [vmem:[%s1 + $0x9e0] sm:$0xff]
  %v367 = vld [vmem:[%s1 + $0x9e8] sm:$0xff]
  %v368 = vld [vmem:[%s1 + $0x9f0] sm:$0xff]
  %v369 = vld [vmem:[%s1 + $0x9f8] sm:$0xff]
  %v370 = vld [vmem:[%s1 + $0xa00] sm:$0xff]
  %v371 = vld [vmem:[%s1 + $0xa08] sm:$0xff]
  %v372 = vld [vmem:[%s1 + $0xa10] sm:$0xff]
  %v373 = vld [vmem:[%s1 + $0xa18] sm:$0xff]
  %v374 = vld [vmem:[%s1 + $0xa20] sm:$0xff]
  %v375 = vld [vmem:[%s1 + $0xa28] sm:$0xff]
  %v376 = vld [vmem:[%s1 + $0xa30] sm:$0xff]
  %v377 = vld [vmem:[%s1 + $0xa38] sm:$0xff]
  %v378 = vld [vmem:[%s1 + $0xa40] sm:$0xff]
  %v379 = vld [vmem:[%s1 + $0xa48] sm:$0xff]
  %v380 = vld [vmem:[%s1 + $0xa50] sm:$0xff]
  %v381 = vld [vmem:[%s1 + $0xa58] sm:$0xff]
  %v382 = vld [vmem:[%s1 + $0xa60] sm:$0xff]
  %v383 = vld [vmem:[%s1 + $0xa68] sm:$0xff]
  %v384 = vld [vmem:[%s1 + $0xa70] sm:$0xff]
  %v385 = vld [vmem:[%s1 + $0xa78] sm:$0xff]
  %v386 = vld [vmem:[%s1 + $0xa80] sm:$0xff]
  %v387 = vld [vmem:[%s1 + $0xa88] sm:$0xff]
  %v388 = vld [vmem:[%s1 + $0xa90] sm:$0xff]
  %v389 = vld [vmem:[%s1 + $0xa98] sm:$0xff]
  %v390 = vld [vmem:[%s1 + $0xaa0] sm:$0xff]
  %v391 = vld [vmem:[%s1 + $0xaa8] sm:$0xff]
  %v392 = vld [vmem:[%s1 + $0xab0] sm:$0xff]
  %v393 = vld [vmem:[%s1 + $0xab8] sm:$0xff]
  %v394 = vld [vmem:[%s1 + $0xac0] sm:$0xff]
  %v395 = vld [vmem:[%s1 + $0xac8] sm:$0xff]
  %v396 = vld [vmem:[%s1 + $0xad0] sm:$0xff]
  %v397 = vld [vmem:[%s1 + $0xad8] sm:$0xff]
  %v398 = vld [vmem:[%s1 + $0xae0] sm:$0xff]
  %v399 = vld [vmem:[%s1 + $0xae8] sm:$0xff]
  %v400 = vld [vmem:[%s1 + $0xaf0] sm:$0xff]
  %v401 = vld [vmem:[%s1 + $0xaf8] sm:$0xff]
  %v402 = vld [vmem:[%s1 + $0xb00] sm:$0xff]
  %v403 = vld [vmem:[%s1 + $0xb08] sm:$0xff]
  %v404 = vld [vmem:[%s1 + $0xb10] sm:$0xff]
  %v405 = vld [vmem:[%s1 + $0xb18] sm:$0xff]
  %v406 = vld [vmem:[%s1 + $0xb20] sm:$0xff]
  %v407 = vld [vmem:[%s1 + $0xb28] sm:$0xff]
  %v408 = vld [vmem:[%s1 + $0xb30] sm:$0xff]
  %v409 = vld [vmem:[%s1 + $0xb38] sm:$0xff]
  %v410 = vld [vmem:[%s1 + $0xb40] sm:$0xff]
  %v411 = vld [vmem:[%s1 + $0xb48] sm:$0xff]
  %v412 = vld [vmem:[%s1 + $0xb50] sm:$0xff]
  %v413 = vld [vmem:[%s1 + $0xb58] sm:$0xff]
  %v414 = vld [vmem:[%s1 + $0xb60] sm:$0xff]
  %v415 = vld [vmem:[%s1 + $0xb68] sm:$0xff]
  %v416 = vld [vmem:[%s1 + $0xb70] sm:$0xff]
  %v417 = vld [vmem:[%s1 + $0xb78] sm:$0xff]
  %v418 = vld [vmem:[%s1 + $0xb80] sm:$0xff]
  %v419 = vld [vmem:[%s1 + $0xb88] sm:$0xff]
  %v420 = vld [vmem:[%s1 + $0xb90] sm:$0xff]
  %v421 = vld [vmem:[%s1 + $0xb98] sm:$0xff]
  %v422 = vld [vmem:[%s1 + $0xba0] sm:$0xff]
  %v423 = vld [vmem:[%s1 + $0xba8] sm:$0xff]
  %v424 = vld [vmem:[%s1 + $0xbb0] sm:$0xff]
  %v425 = vld [vmem:[%s1 + $0xbb8] sm:$0xff]
  %v426 = vld [vmem:[%s1 + $0xbc0] sm:$0xff]
  %v427 = vld [vmem:[%s1 + $0xbc8] sm:$0xff]
  %v428 = vld [vmem:[%s1 + $0xbd0] sm:$0xff]
  %v429 = vld [vmem:[%s1 + $0xbd8] sm:$0xff]
  %v430 = vld [vmem:[%s1 + $0xbe0] sm:$0xff]
  %v431 = vld [vmem:[%s1 + $0xbe8] sm:$0xff]
  %v432 = vld [vmem:[%s1 + $0xbf0] sm:$0xff]
  %v433 = vld [vmem:[%s1 + $0xbf8] sm:$0xff]
  %v434 = vld [vmem:[%s1 + $0xc00] sm:$0xff]
  %v435 = vld [vmem:[%s1 + $0xc08] sm:$0xff]
  %v436 = vld [vmem:[%s1 + $0xc10] sm:$0xff]
  %v437 = vld [vmem:[%s1 + $0xc18] sm:$0xff]
  %v438 = vld [vmem:[%s1 + $0xc20] sm:$0xff]
  %v439 = vld [vmem:[%s1 + $0xc28] sm:$0xff]
  %v440 = vld [vmem:[%s1 + $0xc30] sm:$0xff]
  %v441 = vld [vmem:[%s1 + $0xc38] sm:$0xff]
  %v442 = vld [vmem:[%s1 + $0xc40] sm:$0xff]
  %v443 = vld [vmem:[%s1 + $0xc48] sm:$0xff]
  %v444 = vld [vmem:[%s1 + $0xc50] sm:$0xff]
  %v445 = vld [vmem:[%s1 + $0xc58] sm:$0xff]
  %v446 = vld [vmem:[%s1 + $0xc60] sm:$0xff]
  %v447 = vld [vmem:[%s1 + $0xc68] sm:$0xff]
  %v448 = vld [vmem:[%s1 + $0xc70] sm:$0xff]
  %v449 = vld [vmem:[%s1 + $0xc78] sm:$0xff]
  %v450 = vld [vmem:[%s1 + $0xc80] sm:$0xff]
  %v451 = vld [vmem:[%s1 + $0xc88] sm:$0xff]
  %v452 = vld [vmem:[%s1 + $0xc90] sm:$0xff]
  %v453 = vld [vmem:[%s1 + $0xc98] sm:$0xff]
  %v454 = vld [vmem:[%s1 + $0xca0] sm:$0xff]
  %v455 = vld [vmem:[%s1 + $0xca8] sm:$0xff]
  %v456 = vld [vmem:[%s1 + $0xcb0] sm:$0xff]
  %v457 = vld [vmem:[%s1 + $0xcb8] sm:$0xff]
  %v458 = vld [vmem:[%s1 + $0xcc0] sm:$0xff]
  %v459 = vld [vmem:[%s1 + $0xcc8] sm:$0xff]
  %v460 = vld [vmem:[%s1 + $0xcd0] sm:$0xff]
  %v461 = vld [vmem:[%s1 + $0xcd8] sm:$0xff]
  %v462 = vld [vmem:[%s1 + $0xce0] sm:$0xff]
  %v463 = vld [vmem:[%s1 + $0xce8] sm:$0xff]
  %v464 = vld [vmem:[%s1 + $0xcf0] sm:$0xff]
  %v465 = vld [vmem:[%s1 + $0xcf8] sm:$0xff]
  %v466 = vld [vmem:[%s1 + $0xd00] sm:$0xff]
  %v467 = vld [vmem:[%s1 + $0xd08] sm:$0xff]
  %v468 = vld [vmem:[%s1 + $0xd10] sm:$0xff]
  %v469 = vld [vmem:[%s1 + $0xd18] sm:$0xff]
  %v470 = vld [vmem:[%s1 + $0xd20] sm:$0xff]
  %v471 = vld [vmem:[%s1 + $0xd28] sm:$0xff]
  %v472 = vld [vmem:[%s1 + $0xd30] sm:$0xff]
  %v473 = vld [vmem:[%s1 + $0xd38] sm:$0xff]
  %v474 = vld [vmem:[%s1 + $0xd40] sm:$0xff]
  %v475 = vld [vmem:[%s1 + $0xd48] sm:$0xff]
  %v476 = vld [vmem:[%s1 + $0xd50] sm:$0xff]
  %v477 = vld [vmem:[%s1 + $0xd58] sm:$0xff]
  %v478 = vld [vmem:[%s1 + $0xd60] sm:$0xff]
  %v479 = vld [vmem:[%s1 + $0xd68] sm:$0xff]
  %v480 = vld [vmem:[%s1 + $0xd70] sm:$0xff]
  %v481 = vld [vmem:[%s1 + $0xd78] sm:$0xff]
  %v482 = vld [vmem:[%s1 + $0xd80] sm:$0xff]
  %v483 = vld [vmem:[%s1 + $0xd88] sm:$0xff]
  %v484 = vld [vmem:[%s1 + $0xd90] sm:$0xff]
  %v485 = vld [vmem:[%s1 + $0xd98] sm:$0xff]
  %v486 = vld [vmem:[%s1 + $0xda0] sm:$0xff]
  %v487 = vld [vmem:[%s1 + $0xda8] sm:$0xff]
  %v488 = vld [vmem:[%s1 + $0xdb0] sm:$0xff]
  %v489 = vld [vmem:[%s1 + $0xdb8] sm:$0xff]
  %v490 = vld [vmem:[%s1 + $0xdc0] sm:$0xff]
  %v491 = vld [vmem:[%s1 + $0xdc8] sm:$0xff]
  %v492 = vld [vmem:[%s1 + $0xdd0] sm:$0xff]
  %v493 = vld [vmem:[%s1 + $0xdd8] sm:$0xff]
  %v494 = vld [vmem:[%s1 + $0xde0] sm:$0xff]
  %v495 = vld [vmem:[%s1 + $0xde8] sm:$0xff]
  %v496 = vld [vmem:[%s1 + $0xdf0] sm:$0xff]
  %v497 = vld [vmem:[%s1 + $0xdf8] sm:$0xff]
  %v498 = vld [vmem:[%s1 + $0xe00] sm:$0xff]
  %v499 = vld [vmem:[%s1 + $0xe08] sm:$0xff]
  %v500 = vld [vmem:[%s1 + $0xe10] sm:$0xff]
  %v501 = vld [vmem:[%s1 + $0xe18] sm:$0xff]
  %v502 = vld [vmem:[%s1 + $0xe20] sm:$0xff]
  %v503 = vld [vmem:[%s1 + $0xe28] sm:$0xff]
  %v504 = vld [vmem:[%s1 + $0xe30] sm:$0xff]
  %v505 = vld [vmem:[%s1 + $0xe38] sm:$0xff]
  %v506 = vld [vmem:[%s1 + $0xe40] sm:$0xff]
  %v507 = vld [vmem:[%s1 + $0xe48] sm:$0xff]
  %v508 = vld [vmem:[%s1 + $0xe50] sm:$0xff]
  %v509 = vld [vmem:[%s1 + $0xe58] sm:$0xff]
  %v510 = vld [vmem:[%s1 + $0xe60] sm:$0xff]
  %v511 = vld [vmem:[%s1 + $0xe68] sm:$0xff]
  %v512 = vld [vmem:[%s1 + $0xe70] sm:$0xff]
  %v513 = vld [vmem:[%s1 + $0xe78] sm:$0xff]
  %v514 = vld [vmem:[%s1 + $0xe80] sm:$0xff]
  %v515 = vld [vmem:[%s1 + $0xe88] sm:$0xff]
  %v516 = vld [vmem:[%s1 + $0xe90] sm:$0xff]
  %v517 = vld [vmem:[%s1 + $0xe98] sm:$0xff]
  %v518 = vld [vmem:[%s1 + $0xea0] sm:$0xff]
  %v519 = vld [vmem:[%s1 + $0xea8] sm:$0xff]
  %v520 = vld [vmem:[%s1 + $0xeb0] sm:$0xff]
  %v521 = vld [vmem:[%s1 + $0xeb8] sm:$0xff]
  %v522 = vld [vmem:[%s1 + $0xec0] sm:$0xff]
  %v523 = vld [vmem:[%s1 + $0xec8] sm:$0xff]
  %v524 = vld [vmem:[%s1 + $0xed0] sm:$0xff]
  %v525 = vld [vmem:[%s1 + $0xed8] sm:$0xff]
  %v526 = vld [vmem:[%s1 + $0xee0] sm:$0xff]
  %v527 = vld [vmem:[%s1 + $0xee8] sm:$0xff]
  %v528 = vld [vmem:[%s1 + $0xef0] sm:$0xff]
  %v529 = vld [vmem:[%s1 + $0xef8] sm:$0xff]
  %v530 = vld [vmem:[%s1 + $0xf00] sm:$0xff]
  %v531 = vld [vmem:[%s1 + $0xf08] sm:$0xff]
  %v532 = vld [vmem:[%s1 + $0xf10] sm:$0xff]
  %v533 = vld [vmem:[%s1 + $0xf18] sm:$0xff]
  %v534 = vld [vmem:[%s1 + $0xf20] sm:$0xff]
  %v535 = vld [vmem:[%s1 + $0xf28] sm:$0xff]
  %v536 = vld [vmem:[%s1 + $0xf30] sm:$0xff]
  %v537 = vld [vmem:[%s1 + $0xf38] sm:$0xff]
  %v538 = vld [vmem:[%s1 + $0xf40] sm:$0xff]
  %v539 = vld [vmem:[%s1 + $0xf48] sm:$0xff]
  %v540 = vld [vmem:[%s1 + $0xf50] sm:$0xff]
  %v541 = vld [vmem:[%s1 + $0xf58] sm:$0xff]
  %v542 = vld [vmem:[%s1 + $0xf60] sm:$0xff]
  %v543 = vld [vmem:[%s1 + $0xf68] sm:$0xff]
  %v544 = vld [vmem:[%s1 + $0xf70] sm:$0xff]
  %v545 = vld [vmem:[%s1 + $0xf78] sm:$0xff]
  %v546 = vld [vmem:[%s1 + $0xf80] sm:$0xff]
  %v547 = vld [vmem:[%s1 + $0xf88] sm:$0xff]
  %v548 = vld [vmem:[%s1 + $0xf90] sm:$0xff]
  %v549 = vld [vmem:[%s1 + $0xf98] sm:$0xff]
  %v550 = vld [vmem:[%s1 + $0xfa0] sm:$0xff]
  %v551 = vld [vmem:[%s1 + $0xfa8] sm:$0xff]
  %v552 = vld [vmem:[%s1 + $0xfb0] sm:$0xff]
  %v553 = vld [vmem:[%s1 + $0xfb8] sm:$0xff]
  %v554 = vld [vmem:[%s1 + $0xfc0] sm:$0xff]
  %v555 = vld [vmem:[%s1 + $0xfc8] sm:$0xff]
  %v556 = vld [vmem:[%s1 + $0xfd0] sm:$0xff]
  %v557 = vld [vmem:[%s1 + $0xfd8] sm:$0xff]
  %v558 = vld [vmem:[%s1 + $0xfe0] sm:$0xff]
  %v559 = vld [vmem:[%s1 + $0xfe8] sm:$0xff]
  %v560 = vld [vmem:[%s1 + $0xff0] sm:$0xff]
  %v561 = vld [vmem:[%s1 + $0xff8] sm:$0xff]
  %v562 = vld [vmem:[%s2] sm:$0xff]
  %v564 = vlaneseq
  %v565 = vshrl.u32 %v564, 7
  %v566 = vsub.s32 0, %v565
  %v567 = vrot.slane %v562, %v566
  %v568 = vlaneseq
  %v569 = vshrl.u32 %v568, 7
  %v570 = vsub.s32 1, %v569
  %v571 = vrot.slane %v562, %v570
  %v572 = vlaneseq
  %v573 = vshrl.u32 %v572, 7
  %v574 = vsub.s32 2, %v573
  %v575 = vrot.slane %v562, %v574
  %v576 = vlaneseq
  %v577 = vshrl.u32 %v576, 7
  %v578 = vsub.s32 3, %v577
  %v579 = vrot.slane %v562, %v578
  %v580 = vlaneseq
  %v581 = vshrl.u32 %v580, 7
  %v582 = vsub.s32 4, %v581
  %v583 = vrot.slane %v562, %v582
  %v584 = vlaneseq
  %v585 = vshrl.u32 %v584, 7
  %v586 = vsub.s32 5, %v585
  %v587 = vrot.slane %v562, %v586
  %v588 = vlaneseq
  %v589 = vshrl.u32 %v588, 7
  %v590 = vsub.s32 6, %v589
  %v591 = vrot.slane %v562, %v590
  %v592 = vlaneseq
  %v593 = vshrl.u32 %v592, 7
  %v594 = vsub.s32 7, %v593
  %v595 = vrot.slane %v562, %v594
  %v612 = vunpack.c.l.b16 %v42
  %v613 = vunpack.c.h.b16 %v42
  %v614 = vunpack.c.l.b16 %v43
  %v615 = vunpack.c.h.b16 %v43
  %v616 = vunpack.c.l.b16 %v44
  %v617 = vunpack.c.h.b16 %v44
  %v618 = vunpack.c.l.b16 %v45
  %v619 = vunpack.c.h.b16 %v45
  %v620 = vunpack.c.l.b16 %v46
  %v621 = vunpack.c.h.b16 %v46
  %v622 = vunpack.c.l.b16 %v47
  %v623 = vunpack.c.h.b16 %v47
  %v624 = vunpack.c.l.b16 %v48
  %v625 = vunpack.c.h.b16 %v48
  %v626 = vunpack.c.l.b16 %v49
  %v627 = vunpack.c.h.b16 %v49
  %v628 = vpack.c.b16 %v620, %v612
  %v629 = vpack.c.b16 %v621, %v613
  %v630 = vpack.c.b16 %v622, %v614
  %v631 = vpack.c.b16 %v623, %v615
  %v632 = vpack.c.b16 %v624, %v616
  %v633 = vpack.c.b16 %v625, %v617
  %v634 = vpack.c.b16 %v626, %v618
  %v635 = vpack.c.b16 %v627, %v619
  %v1156 = vunpack.c.l.b16 %v50
  %v1157 = vunpack.c.h.b16 %v50
  %v1158 = vunpack.c.l.b16 %v51
  %v1159 = vunpack.c.h.b16 %v51
  %v1160 = vunpack.c.l.b16 %v52
  %v1161 = vunpack.c.h.b16 %v52
  %v1162 = vunpack.c.l.b16 %v53
  %v1163 = vunpack.c.h.b16 %v53
  %v1164 = vunpack.c.l.b16 %v54
  %v1165 = vunpack.c.h.b16 %v54
  %v1166 = vunpack.c.l.b16 %v55
  %v1167 = vunpack.c.h.b16 %v55
  %v1168 = vunpack.c.l.b16 %v56
  %v1169 = vunpack.c.h.b16 %v56
  %v1170 = vunpack.c.l.b16 %v57
  %v1171 = vunpack.c.h.b16 %v57
  %v1172 = vunpack.c.l.b16 %v58
  %v1173 = vunpack.c.h.b16 %v58
  %v1174 = vunpack.c.l.b16 %v59
  %v1175 = vunpack.c.h.b16 %v59
  %v1176 = vunpack.c.l.b16 %v60
  %v1177 = vunpack.c.h.b16 %v60
  %v1178 = vunpack.c.l.b16 %v61
  %v1179 = vunpack.c.h.b16 %v61
  %v1180 = vunpack.c.l.b16 %v62
  %v1181 = vunpack.c.h.b16 %v62
  %v1182 = vunpack.c.l.b16 %v63
  %v1183 = vunpack.c.h.b16 %v63
  %v1184 = vunpack.c.l.b16 %v64
  %v1185 = vunpack.c.h.b16 %v64
  %v1186 = vunpack.c.l.b16 %v65
  %v1187 = vunpack.c.h.b16 %v65
  %v1188 = vunpack.c.l.b16 %v66
  %v1189 = vunpack.c.h.b16 %v66
  %v1190 = vunpack.c.l.b16 %v67
  %v1191 = vunpack.c.h.b16 %v67
  %v1192 = vunpack.c.l.b16 %v68
  %v1193 = vunpack.c.h.b16 %v68
  %v1194 = vunpack.c.l.b16 %v69
  %v1195 = vunpack.c.h.b16 %v69
  %v1196 = vunpack.c.l.b16 %v70
  %v1197 = vunpack.c.h.b16 %v70
  %v1198 = vunpack.c.l.b16 %v71
  %v1199 = vunpack.c.h.b16 %v71
  %v1200 = vunpack.c.l.b16 %v72
  %v1201 = vunpack.c.h.b16 %v72
  %v1202 = vunpack.c.l.b16 %v73
  %v1203 = vunpack.c.h.b16 %v73
  %v1204 = vunpack.c.l.b16 %v74
  %v1205 = vunpack.c.h.b16 %v74
  %v1206 = vunpack.c.l.b16 %v75
  %v1207 = vunpack.c.h.b16 %v75
  %v1208 = vunpack.c.l.b16 %v76
  %v1209 = vunpack.c.h.b16 %v76
  %v1210 = vunpack.c.l.b16 %v77
  %v1211 = vunpack.c.h.b16 %v77
  %v1212 = vunpack.c.l.b16 %v78
  %v1213 = vunpack.c.h.b16 %v78
  %v1214 = vunpack.c.l.b16 %v79
  %v1215 = vunpack.c.h.b16 %v79
  %v1216 = vunpack.c.l.b16 %v80
  %v1217 = vunpack.c.h.b16 %v80
  %v1218 = vunpack.c.l.b16 %v81
  %v1219 = vunpack.c.h.b16 %v81
  %v1220 = vunpack.c.l.b16 %v82
  %v1221 = vunpack.c.h.b16 %v82
  %v1222 = vunpack.c.l.b16 %v83
  %v1223 = vunpack.c.h.b16 %v83
  %v1224 = vunpack.c.l.b16 %v84
  %v1225 = vunpack.c.h.b16 %v84
  %v1226 = vunpack.c.l.b16 %v85
  %v1227 = vunpack.c.h.b16 %v85
  %v1228 = vunpack.c.l.b16 %v86
  %v1229 = vunpack.c.h.b16 %v86
  %v1230 = vunpack.c.l.b16 %v87
  %v1231 = vunpack.c.h.b16 %v87
  %v1232 = vunpack.c.l.b16 %v88
  %v1233 = vunpack.c.h.b16 %v88
  %v1234 = vunpack.c.l.b16 %v89
  %v1235 = vunpack.c.h.b16 %v89
  %v1236 = vunpack.c.l.b16 %v90
  %v1237 = vunpack.c.h.b16 %v90
  %v1238 = vunpack.c.l.b16 %v91
  %v1239 = vunpack.c.h.b16 %v91
  %v1240 = vunpack.c.l.b16 %v92
  %v1241 = vunpack.c.h.b16 %v92
  %v1242 = vunpack.c.l.b16 %v93
  %v1243 = vunpack.c.h.b16 %v93
  %v1244 = vunpack.c.l.b16 %v94
  %v1245 = vunpack.c.h.b16 %v94
  %v1246 = vunpack.c.l.b16 %v95
  %v1247 = vunpack.c.h.b16 %v95
  %v1248 = vunpack.c.l.b16 %v96
  %v1249 = vunpack.c.h.b16 %v96
  %v1250 = vunpack.c.l.b16 %v97
  %v1251 = vunpack.c.h.b16 %v97
  %v1252 = vunpack.c.l.b16 %v98
  %v1253 = vunpack.c.h.b16 %v98
  %v1254 = vunpack.c.l.b16 %v99
  %v1255 = vunpack.c.h.b16 %v99
  %v1256 = vunpack.c.l.b16 %v100
  %v1257 = vunpack.c.h.b16 %v100
  %v1258 = vunpack.c.l.b16 %v101
  %v1259 = vunpack.c.h.b16 %v101
  %v1260 = vunpack.c.l.b16 %v102
  %v1261 = vunpack.c.h.b16 %v102
  %v1262 = vunpack.c.l.b16 %v103
  %v1263 = vunpack.c.h.b16 %v103
  %v1264 = vunpack.c.l.b16 %v104
  %v1265 = vunpack.c.h.b16 %v104
  %v1266 = vunpack.c.l.b16 %v105
  %v1267 = vunpack.c.h.b16 %v105
  %v1268 = vunpack.c.l.b16 %v106
  %v1269 = vunpack.c.h.b16 %v106
  %v1270 = vunpack.c.l.b16 %v107
  %v1271 = vunpack.c.h.b16 %v107
  %v1272 = vunpack.c.l.b16 %v108
  %v1273 = vunpack.c.h.b16 %v108
  %v1274 = vunpack.c.l.b16 %v109
  %v1275 = vunpack.c.h.b16 %v109
  %v1276 = vunpack.c.l.b16 %v110
  %v1277 = vunpack.c.h.b16 %v110
  %v1278 = vunpack.c.l.b16 %v111
  %v1279 = vunpack.c.h.b16 %v111
  %v1280 = vunpack.c.l.b16 %v112
  %v1281 = vunpack.c.h.b16 %v112
  %v1282 = vunpack.c.l.b16 %v113
  %v1283 = vunpack.c.h.b16 %v113
  %v1284 = vunpack.c.l.b16 %v114
  %v1285 = vunpack.c.h.b16 %v114
  %v1286 = vunpack.c.l.b16 %v115
  %v1287 = vunpack.c.h.b16 %v115
  %v1288 = vunpack.c.l.b16 %v116
  %v1289 = vunpack.c.h.b16 %v116
  %v1290 = vunpack.c.l.b16 %v117
  %v1291 = vunpack.c.h.b16 %v117
  %v1292 = vunpack.c.l.b16 %v118
  %v1293 = vunpack.c.h.b16 %v118
  %v1294 = vunpack.c.l.b16 %v119
  %v1295 = vunpack.c.h.b16 %v119
  %v1296 = vunpack.c.l.b16 %v120
  %v1297 = vunpack.c.h.b16 %v120
  %v1298 = vunpack.c.l.b16 %v121
  %v1299 = vunpack.c.h.b16 %v121
  %v1300 = vunpack.c.l.b16 %v122
  %v1301 = vunpack.c.h.b16 %v122
  %v1302 = vunpack.c.l.b16 %v123
  %v1303 = vunpack.c.h.b16 %v123
  %v1304 = vunpack.c.l.b16 %v124
  %v1305 = vunpack.c.h.b16 %v124
  %v1306 = vunpack.c.l.b16 %v125
  %v1307 = vunpack.c.h.b16 %v125
  %v1308 = vunpack.c.l.b16 %v126
  %v1309 = vunpack.c.h.b16 %v126
  %v1310 = vunpack.c.l.b16 %v127
  %v1311 = vunpack.c.h.b16 %v127
  %v1312 = vunpack.c.l.b16 %v128
  %v1313 = vunpack.c.h.b16 %v128
  %v1314 = vunpack.c.l.b16 %v129
  %v1315 = vunpack.c.h.b16 %v129
  %v1316 = vunpack.c.l.b16 %v130
  %v1317 = vunpack.c.h.b16 %v130
  %v1318 = vunpack.c.l.b16 %v131
  %v1319 = vunpack.c.h.b16 %v131
  %v1320 = vunpack.c.l.b16 %v132
  %v1321 = vunpack.c.h.b16 %v132
  %v1322 = vunpack.c.l.b16 %v133
  %v1323 = vunpack.c.h.b16 %v133
  %v1324 = vunpack.c.l.b16 %v134
  %v1325 = vunpack.c.h.b16 %v134
  %v1326 = vunpack.c.l.b16 %v135
  %v1327 = vunpack.c.h.b16 %v135
  %v1328 = vunpack.c.l.b16 %v136
  %v1329 = vunpack.c.h.b16 %v136
  %v1330 = vunpack.c.l.b16 %v137
  %v1331 = vunpack.c.h.b16 %v137
  %v1332 = vunpack.c.l.b16 %v138
  %v1333 = vunpack.c.h.b16 %v138
  %v1334 = vunpack.c.l.b16 %v139
  %v1335 = vunpack.c.h.b16 %v139
  %v1336 = vunpack.c.l.b16 %v140
  %v1337 = vunpack.c.h.b16 %v140
  %v1338 = vunpack.c.l.b16 %v141
  %v1339 = vunpack.c.h.b16 %v141
  %v1340 = vunpack.c.l.b16 %v142
  %v1341 = vunpack.c.h.b16 %v142
  %v1342 = vunpack.c.l.b16 %v143
  %v1343 = vunpack.c.h.b16 %v143
  %v1344 = vunpack.c.l.b16 %v144
  %v1345 = vunpack.c.h.b16 %v144
  %v1346 = vunpack.c.l.b16 %v145
  %v1347 = vunpack.c.h.b16 %v145
  %v1348 = vunpack.c.l.b16 %v146
  %v1349 = vunpack.c.h.b16 %v146
  %v1350 = vunpack.c.l.b16 %v147
  %v1351 = vunpack.c.h.b16 %v147
  %v1352 = vunpack.c.l.b16 %v148
  %v1353 = vunpack.c.h.b16 %v148
  %v1354 = vunpack.c.l.b16 %v149
  %v1355 = vunpack.c.h.b16 %v149
  %v1356 = vunpack.c.l.b16 %v150
  %v1357 = vunpack.c.h.b16 %v150
  %v1358 = vunpack.c.l.b16 %v151
  %v1359 = vunpack.c.h.b16 %v151
  %v1360 = vunpack.c.l.b16 %v152
  %v1361 = vunpack.c.h.b16 %v152
  %v1362 = vunpack.c.l.b16 %v153
  %v1363 = vunpack.c.h.b16 %v153
  %v1364 = vunpack.c.l.b16 %v154
  %v1365 = vunpack.c.h.b16 %v154
  %v1366 = vunpack.c.l.b16 %v155
  %v1367 = vunpack.c.h.b16 %v155
  %v1368 = vunpack.c.l.b16 %v156
  %v1369 = vunpack.c.h.b16 %v156
  %v1370 = vunpack.c.l.b16 %v157
  %v1371 = vunpack.c.h.b16 %v157
  %v1372 = vunpack.c.l.b16 %v158
  %v1373 = vunpack.c.h.b16 %v158
  %v1374 = vunpack.c.l.b16 %v159
  %v1375 = vunpack.c.h.b16 %v159
  %v1376 = vunpack.c.l.b16 %v160
  %v1377 = vunpack.c.h.b16 %v160
  %v1378 = vunpack.c.l.b16 %v161
  %v1379 = vunpack.c.h.b16 %v161
  %v1380 = vunpack.c.l.b16 %v162
  %v1381 = vunpack.c.h.b16 %v162
  %v1382 = vunpack.c.l.b16 %v163
  %v1383 = vunpack.c.h.b16 %v163
  %v1384 = vunpack.c.l.b16 %v164
  %v1385 = vunpack.c.h.b16 %v164
  %v1386 = vunpack.c.l.b16 %v165
  %v1387 = vunpack.c.h.b16 %v165
  %v1388 = vunpack.c.l.b16 %v166
  %v1389 = vunpack.c.h.b16 %v166
  %v1390 = vunpack.c.l.b16 %v167
  %v1391 = vunpack.c.h.b16 %v167
  %v1392 = vunpack.c.l.b16 %v168
  %v1393 = vunpack.c.h.b16 %v168
  %v1394 = vunpack.c.l.b16 %v169
  %v1395 = vunpack.c.h.b16 %v169
  %v1396 = vunpack.c.l.b16 %v170
  %v1397 = vunpack.c.h.b16 %v170
  %v1398 = vunpack.c.l.b16 %v171
  %v1399 = vunpack.c.h.b16 %v171
  %v1400 = vunpack.c.l.b16 %v172
  %v1401 = vunpack.c.h.b16 %v172
  %v1402 = vunpack.c.l.b16 %v173
  %v1403 = vunpack.c.h.b16 %v173
  %v1404 = vunpack.c.l.b16 %v174
  %v1405 = vunpack.c.h.b16 %v174
  %v1406 = vunpack.c.l.b16 %v175
  %v1407 = vunpack.c.h.b16 %v175
  %v1408 = vunpack.c.l.b16 %v176
  %v1409 = vunpack.c.h.b16 %v176
  %v1410 = vunpack.c.l.b16 %v177
  %v1411 = vunpack.c.h.b16 %v177
  %v1412 = vunpack.c.l.b16 %v178
  %v1413 = vunpack.c.h.b16 %v178
  %v1414 = vunpack.c.l.b16 %v179
  %v1415 = vunpack.c.h.b16 %v179
  %v1416 = vunpack.c.l.b16 %v180
  %v1417 = vunpack.c.h.b16 %v180
  %v1418 = vunpack.c.l.b16 %v181
  %v1419 = vunpack.c.h.b16 %v181
  %v1420 = vunpack.c.l.b16 %v182
  %v1421 = vunpack.c.h.b16 %v182
  %v1422 = vunpack.c.l.b16 %v183
  %v1423 = vunpack.c.h.b16 %v183
  %v1424 = vunpack.c.l.b16 %v184
  %v1425 = vunpack.c.h.b16 %v184
  %v1426 = vunpack.c.l.b16 %v185
  %v1427 = vunpack.c.h.b16 %v185
  %v1428 = vunpack.c.l.b16 %v186
  %v1429 = vunpack.c.h.b16 %v186
  %v1430 = vunpack.c.l.b16 %v187
  %v1431 = vunpack.c.h.b16 %v187
  %v1432 = vunpack.c.l.b16 %v188
  %v1433 = vunpack.c.h.b16 %v188
  %v1434 = vunpack.c.l.b16 %v189
  %v1435 = vunpack.c.h.b16 %v189
  %v1436 = vunpack.c.l.b16 %v190
  %v1437 = vunpack.c.h.b16 %v190
  %v1438 = vunpack.c.l.b16 %v191
  %v1439 = vunpack.c.h.b16 %v191
  %v1440 = vunpack.c.l.b16 %v192
  %v1441 = vunpack.c.h.b16 %v192
  %v1442 = vunpack.c.l.b16 %v193
  %v1443 = vunpack.c.h.b16 %v193
  %v1444 = vunpack.c.l.b16 %v194
  %v1445 = vunpack.c.h.b16 %v194
  %v1446 = vunpack.c.l.b16 %v195
  %v1447 = vunpack.c.h.b16 %v195
  %v1448 = vunpack.c.l.b16 %v196
  %v1449 = vunpack.c.h.b16 %v196
  %v1450 = vunpack.c.l.b16 %v197
  %v1451 = vunpack.c.h.b16 %v197
  %v1452 = vunpack.c.l.b16 %v198
  %v1453 = vunpack.c.h.b16 %v198
  %v1454 = vunpack.c.l.b16 %v199
  %v1455 = vunpack.c.h.b16 %v199
  %v1456 = vunpack.c.l.b16 %v200
  %v1457 = vunpack.c.h.b16 %v200
  %v1458 = vunpack.c.l.b16 %v201
  %v1459 = vunpack.c.h.b16 %v201
  %v1460 = vunpack.c.l.b16 %v202
  %v1461 = vunpack.c.h.b16 %v202
  %v1462 = vunpack.c.l.b16 %v203
  %v1463 = vunpack.c.h.b16 %v203
  %v1464 = vunpack.c.l.b16 %v204
  %v1465 = vunpack.c.h.b16 %v204
  %v1466 = vunpack.c.l.b16 %v205
  %v1467 = vunpack.c.h.b16 %v205
  %v1468 = vunpack.c.l.b16 %v206
  %v1469 = vunpack.c.h.b16 %v206
  %v1470 = vunpack.c.l.b16 %v207
  %v1471 = vunpack.c.h.b16 %v207
  %v1472 = vunpack.c.l.b16 %v208
  %v1473 = vunpack.c.h.b16 %v208
  %v1474 = vunpack.c.l.b16 %v209
  %v1475 = vunpack.c.h.b16 %v209
  %v1476 = vunpack.c.l.b16 %v210
  %v1477 = vunpack.c.h.b16 %v210
  %v1478 = vunpack.c.l.b16 %v211
  %v1479 = vunpack.c.h.b16 %v211
  %v1480 = vunpack.c.l.b16 %v212
  %v1481 = vunpack.c.h.b16 %v212
  %v1482 = vunpack.c.l.b16 %v213
  %v1483 = vunpack.c.h.b16 %v213
  %v1484 = vunpack.c.l.b16 %v214
  %v1485 = vunpack.c.h.b16 %v214
  %v1486 = vunpack.c.l.b16 %v215
  %v1487 = vunpack.c.h.b16 %v215
  %v1488 = vunpack.c.l.b16 %v216
  %v1489 = vunpack.c.h.b16 %v216
  %v1490 = vunpack.c.l.b16 %v217
  %v1491 = vunpack.c.h.b16 %v217
  %v1492 = vunpack.c.l.b16 %v218
  %v1493 = vunpack.c.h.b16 %v218
  %v1494 = vunpack.c.l.b16 %v219
  %v1495 = vunpack.c.h.b16 %v219
  %v1496 = vunpack.c.l.b16 %v220
  %v1497 = vunpack.c.h.b16 %v220
  %v1498 = vunpack.c.l.b16 %v221
  %v1499 = vunpack.c.h.b16 %v221
  %v1500 = vunpack.c.l.b16 %v222
  %v1501 = vunpack.c.h.b16 %v222
  %v1502 = vunpack.c.l.b16 %v223
  %v1503 = vunpack.c.h.b16 %v223
  %v1504 = vunpack.c.l.b16 %v224
  %v1505 = vunpack.c.h.b16 %v224
  %v1506 = vunpack.c.l.b16 %v225
  %v1507 = vunpack.c.h.b16 %v225
  %v1508 = vunpack.c.l.b16 %v226
  %v1509 = vunpack.c.h.b16 %v226
  %v1510 = vunpack.c.l.b16 %v227
  %v1511 = vunpack.c.h.b16 %v227
  %v1512 = vunpack.c.l.b16 %v228
  %v1513 = vunpack.c.h.b16 %v228
  %v1514 = vunpack.c.l.b16 %v229
  %v1515 = vunpack.c.h.b16 %v229
  %v1516 = vunpack.c.l.b16 %v230
  %v1517 = vunpack.c.h.b16 %v230
  %v1518 = vunpack.c.l.b16 %v231
  %v1519 = vunpack.c.h.b16 %v231
  %v1520 = vunpack.c.l.b16 %v232
  %v1521 = vunpack.c.h.b16 %v232
  %v1522 = vunpack.c.l.b16 %v233
  %v1523 = vunpack.c.h.b16 %v233
  %v1524 = vunpack.c.l.b16 %v234
  %v1525 = vunpack.c.h.b16 %v234
  %v1526 = vunpack.c.l.b16 %v235
  %v1527 = vunpack.c.h.b16 %v235
  %v1528 = vunpack.c.l.b16 %v236
  %v1529 = vunpack.c.h.b16 %v236
  %v1530 = vunpack.c.l.b16 %v237
  %v1531 = vunpack.c.h.b16 %v237
  %v1532 = vunpack.c.l.b16 %v238
  %v1533 = vunpack.c.h.b16 %v238
  %v1534 = vunpack.c.l.b16 %v239
  %v1535 = vunpack.c.h.b16 %v239
  %v1536 = vunpack.c.l.b16 %v240
  %v1537 = vunpack.c.h.b16 %v240
  %v1538 = vunpack.c.l.b16 %v241
  %v1539 = vunpack.c.h.b16 %v241
  %v1540 = vunpack.c.l.b16 %v242
  %v1541 = vunpack.c.h.b16 %v242
  %v1542 = vunpack.c.l.b16 %v243
  %v1543 = vunpack.c.h.b16 %v243
  %v1544 = vunpack.c.l.b16 %v244
  %v1545 = vunpack.c.h.b16 %v244
  %v1546 = vunpack.c.l.b16 %v245
  %v1547 = vunpack.c.h.b16 %v245
  %v1548 = vunpack.c.l.b16 %v246
  %v1549 = vunpack.c.h.b16 %v246
  %v1550 = vunpack.c.l.b16 %v247
  %v1551 = vunpack.c.h.b16 %v247
  %v1552 = vunpack.c.l.b16 %v248
  %v1553 = vunpack.c.h.b16 %v248
  %v1554 = vunpack.c.l.b16 %v249
  %v1555 = vunpack.c.h.b16 %v249
  %v1556 = vunpack.c.l.b16 %v250
  %v1557 = vunpack.c.h.b16 %v250
  %v1558 = vunpack.c.l.b16 %v251
  %v1559 = vunpack.c.h.b16 %v251
  %v1560 = vunpack.c.l.b16 %v252
  %v1561 = vunpack.c.h.b16 %v252
  %v1562 = vunpack.c.l.b16 %v253
  %v1563 = vunpack.c.h.b16 %v253
  %v1564 = vunpack.c.l.b16 %v254
  %v1565 = vunpack.c.h.b16 %v254
  %v1566 = vunpack.c.l.b16 %v255
  %v1567 = vunpack.c.h.b16 %v255
  %v1568 = vunpack.c.l.b16 %v256
  %v1569 = vunpack.c.h.b16 %v256
  %v1570 = vunpack.c.l.b16 %v257
  %v1571 = vunpack.c.h.b16 %v257
  %v1572 = vunpack.c.l.b16 %v258
  %v1573 = vunpack.c.h.b16 %v258
  %v1574 = vunpack.c.l.b16 %v259
  %v1575 = vunpack.c.h.b16 %v259
  %v1576 = vunpack.c.l.b16 %v260
  %v1577 = vunpack.c.h.b16 %v260
  %v1578 = vunpack.c.l.b16 %v261
  %v1579 = vunpack.c.h.b16 %v261
  %v1580 = vunpack.c.l.b16 %v262
  %v1581 = vunpack.c.h.b16 %v262
  %v1582 = vunpack.c.l.b16 %v263
  %v1583 = vunpack.c.h.b16 %v263
  %v1584 = vunpack.c.l.b16 %v264
  %v1585 = vunpack.c.h.b16 %v264
  %v1586 = vunpack.c.l.b16 %v265
  %v1587 = vunpack.c.h.b16 %v265
  %v1588 = vunpack.c.l.b16 %v266
  %v1589 = vunpack.c.h.b16 %v266
  %v1590 = vunpack.c.l.b16 %v267
  %v1591 = vunpack.c.h.b16 %v267
  %v1592 = vunpack.c.l.b16 %v268
  %v1593 = vunpack.c.h.b16 %v268
  %v1594 = vunpack.c.l.b16 %v269
  %v1595 = vunpack.c.h.b16 %v269
  %v1596 = vunpack.c.l.b16 %v270
  %v1597 = vunpack.c.h.b16 %v270
  %v1598 = vunpack.c.l.b16 %v271
  %v1599 = vunpack.c.h.b16 %v271
  %v1600 = vunpack.c.l.b16 %v272
  %v1601 = vunpack.c.h.b16 %v272
  %v1602 = vunpack.c.l.b16 %v273
  %v1603 = vunpack.c.h.b16 %v273
  %v1604 = vunpack.c.l.b16 %v274
  %v1605 = vunpack.c.h.b16 %v274
  %v1606 = vunpack.c.l.b16 %v275
  %v1607 = vunpack.c.h.b16 %v275
  %v1608 = vunpack.c.l.b16 %v276
  %v1609 = vunpack.c.h.b16 %v276
  %v1610 = vunpack.c.l.b16 %v277
  %v1611 = vunpack.c.h.b16 %v277
  %v1612 = vunpack.c.l.b16 %v278
  %v1613 = vunpack.c.h.b16 %v278
  %v1614 = vunpack.c.l.b16 %v279
  %v1615 = vunpack.c.h.b16 %v279
  %v1616 = vunpack.c.l.b16 %v280
  %v1617 = vunpack.c.h.b16 %v280
  %v1618 = vunpack.c.l.b16 %v281
  %v1619 = vunpack.c.h.b16 %v281
  %v1620 = vunpack.c.l.b16 %v282
  %v1621 = vunpack.c.h.b16 %v282
  %v1622 = vunpack.c.l.b16 %v283
  %v1623 = vunpack.c.h.b16 %v283
  %v1624 = vunpack.c.l.b16 %v284
  %v1625 = vunpack.c.h.b16 %v284
  %v1626 = vunpack.c.l.b16 %v285
  %v1627 = vunpack.c.h.b16 %v285
  %v1628 = vunpack.c.l.b16 %v286
  %v1629 = vunpack.c.h.b16 %v286
  %v1630 = vunpack.c.l.b16 %v287
  %v1631 = vunpack.c.h.b16 %v287
  %v1632 = vunpack.c.l.b16 %v288
  %v1633 = vunpack.c.h.b16 %v288
  %v1634 = vunpack.c.l.b16 %v289
  %v1635 = vunpack.c.h.b16 %v289
  %v1636 = vunpack.c.l.b16 %v290
  %v1637 = vunpack.c.h.b16 %v290
  %v1638 = vunpack.c.l.b16 %v291
  %v1639 = vunpack.c.h.b16 %v291
  %v1640 = vunpack.c.l.b16 %v292
  %v1641 = vunpack.c.h.b16 %v292
  %v1642 = vunpack.c.l.b16 %v293
  %v1643 = vunpack.c.h.b16 %v293
  %v1644 = vunpack.c.l.b16 %v294
  %v1645 = vunpack.c.h.b16 %v294
  %v1646 = vunpack.c.l.b16 %v295
  %v1647 = vunpack.c.h.b16 %v295
  %v1648 = vunpack.c.l.b16 %v296
  %v1649 = vunpack.c.h.b16 %v296
  %v1650 = vunpack.c.l.b16 %v297
  %v1651 = vunpack.c.h.b16 %v297
  %v1652 = vunpack.c.l.b16 %v298
  %v1653 = vunpack.c.h.b16 %v298
  %v1654 = vunpack.c.l.b16 %v299
  %v1655 = vunpack.c.h.b16 %v299
  %v1656 = vunpack.c.l.b16 %v300
  %v1657 = vunpack.c.h.b16 %v300
  %v1658 = vunpack.c.l.b16 %v301
  %v1659 = vunpack.c.h.b16 %v301
  %v1660 = vunpack.c.l.b16 %v302
  %v1661 = vunpack.c.h.b16 %v302
  %v1662 = vunpack.c.l.b16 %v303
  %v1663 = vunpack.c.h.b16 %v303
  %v1664 = vunpack.c.l.b16 %v304
  %v1665 = vunpack.c.h.b16 %v304
  %v1666 = vunpack.c.l.b16 %v305
  %v1667 = vunpack.c.h.b16 %v305
  %v1668 = vunpack.c.l.b16 %v306
  %v1669 = vunpack.c.h.b16 %v306
  %v1670 = vunpack.c.l.b16 %v307
  %v1671 = vunpack.c.h.b16 %v307
  %v1672 = vunpack.c.l.b16 %v308
  %v1673 = vunpack.c.h.b16 %v308
  %v1674 = vunpack.c.l.b16 %v309
  %v1675 = vunpack.c.h.b16 %v309
  %v1676 = vunpack.c.l.b16 %v310
  %v1677 = vunpack.c.h.b16 %v310
  %v1678 = vunpack.c.l.b16 %v311
  %v1679 = vunpack.c.h.b16 %v311
  %v1680 = vunpack.c.l.b16 %v312
  %v1681 = vunpack.c.h.b16 %v312
  %v1682 = vunpack.c.l.b16 %v313
  %v1683 = vunpack.c.h.b16 %v313
  %v1684 = vunpack.c.l.b16 %v314
  %v1685 = vunpack.c.h.b16 %v314
  %v1686 = vunpack.c.l.b16 %v315
  %v1687 = vunpack.c.h.b16 %v315
  %v1688 = vunpack.c.l.b16 %v316
  %v1689 = vunpack.c.h.b16 %v316
  %v1690 = vunpack.c.l.b16 %v317
  %v1691 = vunpack.c.h.b16 %v317
  %v1692 = vunpack.c.l.b16 %v318
  %v1693 = vunpack.c.h.b16 %v318
  %v1694 = vunpack.c.l.b16 %v319
  %v1695 = vunpack.c.h.b16 %v319
  %v1696 = vunpack.c.l.b16 %v320
  %v1697 = vunpack.c.h.b16 %v320
  %v1698 = vunpack.c.l.b16 %v321
  %v1699 = vunpack.c.h.b16 %v321
  %v1700 = vunpack.c.l.b16 %v322
  %v1701 = vunpack.c.h.b16 %v322
  %v1702 = vunpack.c.l.b16 %v323
  %v1703 = vunpack.c.h.b16 %v323
  %v1704 = vunpack.c.l.b16 %v324
  %v1705 = vunpack.c.h.b16 %v324
  %v1706 = vunpack.c.l.b16 %v325
  %v1707 = vunpack.c.h.b16 %v325
  %v1708 = vunpack.c.l.b16 %v326
  %v1709 = vunpack.c.h.b16 %v326
  %v1710 = vunpack.c.l.b16 %v327
  %v1711 = vunpack.c.h.b16 %v327
  %v1712 = vunpack.c.l.b16 %v328
  %v1713 = vunpack.c.h.b16 %v328
  %v1714 = vunpack.c.l.b16 %v329
  %v1715 = vunpack.c.h.b16 %v329
  %v1716 = vunpack.c.l.b16 %v330
  %v1717 = vunpack.c.h.b16 %v330
  %v1718 = vunpack.c.l.b16 %v331
  %v1719 = vunpack.c.h.b16 %v331
  %v1720 = vunpack.c.l.b16 %v332
  %v1721 = vunpack.c.h.b16 %v332
  %v1722 = vunpack.c.l.b16 %v333
  %v1723 = vunpack.c.h.b16 %v333
  %v1724 = vunpack.c.l.b16 %v334
  %v1725 = vunpack.c.h.b16 %v334
  %v1726 = vunpack.c.l.b16 %v335
  %v1727 = vunpack.c.h.b16 %v335
  %v1728 = vunpack.c.l.b16 %v336
  %v1729 = vunpack.c.h.b16 %v336
  %v1730 = vunpack.c.l.b16 %v337
  %v1731 = vunpack.c.h.b16 %v337
  %v1732 = vunpack.c.l.b16 %v338
  %v1733 = vunpack.c.h.b16 %v338
  %v1734 = vunpack.c.l.b16 %v339
  %v1735 = vunpack.c.h.b16 %v339
  %v1736 = vunpack.c.l.b16 %v340
  %v1737 = vunpack.c.h.b16 %v340
  %v1738 = vunpack.c.l.b16 %v341
  %v1739 = vunpack.c.h.b16 %v341
  %v1740 = vunpack.c.l.b16 %v342
  %v1741 = vunpack.c.h.b16 %v342
  %v1742 = vunpack.c.l.b16 %v343
  %v1743 = vunpack.c.h.b16 %v343
  %v1744 = vunpack.c.l.b16 %v344
  %v1745 = vunpack.c.h.b16 %v344
  %v1746 = vunpack.c.l.b16 %v345
  %v1747 = vunpack.c.h.b16 %v345
  %v1748 = vunpack.c.l.b16 %v346
  %v1749 = vunpack.c.h.b16 %v346
  %v1750 = vunpack.c.l.b16 %v347
  %v1751 = vunpack.c.h.b16 %v347
  %v1752 = vunpack.c.l.b16 %v348
  %v1753 = vunpack.c.h.b16 %v348
  %v1754 = vunpack.c.l.b16 %v349
  %v1755 = vunpack.c.h.b16 %v349
  %v1756 = vunpack.c.l.b16 %v350
  %v1757 = vunpack.c.h.b16 %v350
  %v1758 = vunpack.c.l.b16 %v351
  %v1759 = vunpack.c.h.b16 %v351
  %v1760 = vunpack.c.l.b16 %v352
  %v1761 = vunpack.c.h.b16 %v352
  %v1762 = vunpack.c.l.b16 %v353
  %v1763 = vunpack.c.h.b16 %v353
  %v1764 = vunpack.c.l.b16 %v354
  %v1765 = vunpack.c.h.b16 %v354
  %v1766 = vunpack.c.l.b16 %v355
  %v1767 = vunpack.c.h.b16 %v355
  %v1768 = vunpack.c.l.b16 %v356
  %v1769 = vunpack.c.h.b16 %v356
  %v1770 = vunpack.c.l.b16 %v357
  %v1771 = vunpack.c.h.b16 %v357
  %v1772 = vunpack.c.l.b16 %v358
  %v1773 = vunpack.c.h.b16 %v358
  %v1774 = vunpack.c.l.b16 %v359
  %v1775 = vunpack.c.h.b16 %v359
  %v1776 = vunpack.c.l.b16 %v360
  %v1777 = vunpack.c.h.b16 %v360
  %v1778 = vunpack.c.l.b16 %v361
  %v1779 = vunpack.c.h.b16 %v361
  %v1780 = vunpack.c.l.b16 %v362
  %v1781 = vunpack.c.h.b16 %v362
  %v1782 = vunpack.c.l.b16 %v363
  %v1783 = vunpack.c.h.b16 %v363
  %v1784 = vunpack.c.l.b16 %v364
  %v1785 = vunpack.c.h.b16 %v364
  %v1786 = vunpack.c.l.b16 %v365
  %v1787 = vunpack.c.h.b16 %v365
  %v1788 = vunpack.c.l.b16 %v366
  %v1789 = vunpack.c.h.b16 %v366
  %v1790 = vunpack.c.l.b16 %v367
  %v1791 = vunpack.c.h.b16 %v367
  %v1792 = vunpack.c.l.b16 %v368
  %v1793 = vunpack.c.h.b16 %v368
  %v1794 = vunpack.c.l.b16 %v369
  %v1795 = vunpack.c.h.b16 %v369
  %v1796 = vunpack.c.l.b16 %v370
  %v1797 = vunpack.c.h.b16 %v370
  %v1798 = vunpack.c.l.b16 %v371
  %v1799 = vunpack.c.h.b16 %v371
  %v1800 = vunpack.c.l.b16 %v372
  %v1801 = vunpack.c.h.b16 %v372
  %v1802 = vunpack.c.l.b16 %v373
  %v1803 = vunpack.c.h.b16 %v373
  %v1804 = vunpack.c.l.b16 %v374
  %v1805 = vunpack.c.h.b16 %v374
  %v1806 = vunpack.c.l.b16 %v375
  %v1807 = vunpack.c.h.b16 %v375
  %v1808 = vunpack.c.l.b16 %v376
  %v1809 = vunpack.c.h.b16 %v376
  %v1810 = vunpack.c.l.b16 %v377
  %v1811 = vunpack.c.h.b16 %v377
  %v1812 = vunpack.c.l.b16 %v378
  %v1813 = vunpack.c.h.b16 %v378
  %v1814 = vunpack.c.l.b16 %v379
  %v1815 = vunpack.c.h.b16 %v379
  %v1816 = vunpack.c.l.b16 %v380
  %v1817 = vunpack.c.h.b16 %v380
  %v1818 = vunpack.c.l.b16 %v381
  %v1819 = vunpack.c.h.b16 %v381
  %v1820 = vunpack.c.l.b16 %v382
  %v1821 = vunpack.c.h.b16 %v382
  %v1822 = vunpack.c.l.b16 %v383
  %v1823 = vunpack.c.h.b16 %v383
  %v1824 = vunpack.c.l.b16 %v384
  %v1825 = vunpack.c.h.b16 %v384
  %v1826 = vunpack.c.l.b16 %v385
  %v1827 = vunpack.c.h.b16 %v385
  %v1828 = vunpack.c.l.b16 %v386
  %v1829 = vunpack.c.h.b16 %v386
  %v1830 = vunpack.c.l.b16 %v387
  %v1831 = vunpack.c.h.b16 %v387
  %v1832 = vunpack.c.l.b16 %v388
  %v1833 = vunpack.c.h.b16 %v388
  %v1834 = vunpack.c.l.b16 %v389
  %v1835 = vunpack.c.h.b16 %v389
  %v1836 = vunpack.c.l.b16 %v390
  %v1837 = vunpack.c.h.b16 %v390
  %v1838 = vunpack.c.l.b16 %v391
  %v1839 = vunpack.c.h.b16 %v391
  %v1840 = vunpack.c.l.b16 %v392
  %v1841 = vunpack.c.h.b16 %v392
  %v1842 = vunpack.c.l.b16 %v393
  %v1843 = vunpack.c.h.b16 %v393
  %v1844 = vunpack.c.l.b16 %v394
  %v1845 = vunpack.c.h.b16 %v394
  %v1846 = vunpack.c.l.b16 %v395
  %v1847 = vunpack.c.h.b16 %v395
  %v1848 = vunpack.c.l.b16 %v396
  %v1849 = vunpack.c.h.b16 %v396
  %v1850 = vunpack.c.l.b16 %v397
  %v1851 = vunpack.c.h.b16 %v397
  %v1852 = vunpack.c.l.b16 %v398
  %v1853 = vunpack.c.h.b16 %v398
  %v1854 = vunpack.c.l.b16 %v399
  %v1855 = vunpack.c.h.b16 %v399
  %v1856 = vunpack.c.l.b16 %v400
  %v1857 = vunpack.c.h.b16 %v400
  %v1858 = vunpack.c.l.b16 %v401
  %v1859 = vunpack.c.h.b16 %v401
  %v1860 = vunpack.c.l.b16 %v402
  %v1861 = vunpack.c.h.b16 %v402
  %v1862 = vunpack.c.l.b16 %v403
  %v1863 = vunpack.c.h.b16 %v403
  %v1864 = vunpack.c.l.b16 %v404
  %v1865 = vunpack.c.h.b16 %v404
  %v1866 = vunpack.c.l.b16 %v405
  %v1867 = vunpack.c.h.b16 %v405
  %v1868 = vunpack.c.l.b16 %v406
  %v1869 = vunpack.c.h.b16 %v406
  %v1870 = vunpack.c.l.b16 %v407
  %v1871 = vunpack.c.h.b16 %v407
  %v1872 = vunpack.c.l.b16 %v408
  %v1873 = vunpack.c.h.b16 %v408
  %v1874 = vunpack.c.l.b16 %v409
  %v1875 = vunpack.c.h.b16 %v409
  %v1876 = vunpack.c.l.b16 %v410
  %v1877 = vunpack.c.h.b16 %v410
  %v1878 = vunpack.c.l.b16 %v411
  %v1879 = vunpack.c.h.b16 %v411
  %v1880 = vunpack.c.l.b16 %v412
  %v1881 = vunpack.c.h.b16 %v412
  %v1882 = vunpack.c.l.b16 %v413
  %v1883 = vunpack.c.h.b16 %v413
  %v1884 = vunpack.c.l.b16 %v414
  %v1885 = vunpack.c.h.b16 %v414
  %v1886 = vunpack.c.l.b16 %v415
  %v1887 = vunpack.c.h.b16 %v415
  %v1888 = vunpack.c.l.b16 %v416
  %v1889 = vunpack.c.h.b16 %v416
  %v1890 = vunpack.c.l.b16 %v417
  %v1891 = vunpack.c.h.b16 %v417
  %v1892 = vunpack.c.l.b16 %v418
  %v1893 = vunpack.c.h.b16 %v418
  %v1894 = vunpack.c.l.b16 %v419
  %v1895 = vunpack.c.h.b16 %v419
  %v1896 = vunpack.c.l.b16 %v420
  %v1897 = vunpack.c.h.b16 %v420
  %v1898 = vunpack.c.l.b16 %v421
  %v1899 = vunpack.c.h.b16 %v421
  %v1900 = vunpack.c.l.b16 %v422
  %v1901 = vunpack.c.h.b16 %v422
  %v1902 = vunpack.c.l.b16 %v423
  %v1903 = vunpack.c.h.b16 %v423
  %v1904 = vunpack.c.l.b16 %v424
  %v1905 = vunpack.c.h.b16 %v424
  %v1906 = vunpack.c.l.b16 %v425
  %v1907 = vunpack.c.h.b16 %v425
  %v1908 = vunpack.c.l.b16 %v426
  %v1909 = vunpack.c.h.b16 %v426
  %v1910 = vunpack.c.l.b16 %v427
  %v1911 = vunpack.c.h.b16 %v427
  %v1912 = vunpack.c.l.b16 %v428
  %v1913 = vunpack.c.h.b16 %v428
  %v1914 = vunpack.c.l.b16 %v429
  %v1915 = vunpack.c.h.b16 %v429
  %v1916 = vunpack.c.l.b16 %v430
  %v1917 = vunpack.c.h.b16 %v430
  %v1918 = vunpack.c.l.b16 %v431
  %v1919 = vunpack.c.h.b16 %v431
  %v1920 = vunpack.c.l.b16 %v432
  %v1921 = vunpack.c.h.b16 %v432
  %v1922 = vunpack.c.l.b16 %v433
  %v1923 = vunpack.c.h.b16 %v433
  %v1924 = vunpack.c.l.b16 %v434
  %v1925 = vunpack.c.h.b16 %v434
  %v1926 = vunpack.c.l.b16 %v435
  %v1927 = vunpack.c.h.b16 %v435
  %v1928 = vunpack.c.l.b16 %v436
  %v1929 = vunpack.c.h.b16 %v436
  %v1930 = vunpack.c.l.b16 %v437
  %v1931 = vunpack.c.h.b16 %v437
  %v1932 = vunpack.c.l.b16 %v438
  %v1933 = vunpack.c.h.b16 %v438
  %v1934 = vunpack.c.l.b16 %v439
  %v1935 = vunpack.c.h.b16 %v439
  %v1936 = vunpack.c.l.b16 %v440
  %v1937 = vunpack.c.h.b16 %v440
  %v1938 = vunpack.c.l.b16 %v441
  %v1939 = vunpack.c.h.b16 %v441
  %v1940 = vunpack.c.l.b16 %v442
  %v1941 = vunpack.c.h.b16 %v442
  %v1942 = vunpack.c.l.b16 %v443
  %v1943 = vunpack.c.h.b16 %v443
  %v1944 = vunpack.c.l.b16 %v444
  %v1945 = vunpack.c.h.b16 %v444
  %v1946 = vunpack.c.l.b16 %v445
  %v1947 = vunpack.c.h.b16 %v445
  %v1948 = vunpack.c.l.b16 %v446
  %v1949 = vunpack.c.h.b16 %v446
  %v1950 = vunpack.c.l.b16 %v447
  %v1951 = vunpack.c.h.b16 %v447
  %v1952 = vunpack.c.l.b16 %v448
  %v1953 = vunpack.c.h.b16 %v448
  %v1954 = vunpack.c.l.b16 %v449
  %v1955 = vunpack.c.h.b16 %v449
  %v1956 = vunpack.c.l.b16 %v450
  %v1957 = vunpack.c.h.b16 %v450
  %v1958 = vunpack.c.l.b16 %v451
  %v1959 = vunpack.c.h.b16 %v451
  %v1960 = vunpack.c.l.b16 %v452
  %v1961 = vunpack.c.h.b16 %v452
  %v1962 = vunpack.c.l.b16 %v453
  %v1963 = vunpack.c.h.b16 %v453
  %v1964 = vunpack.c.l.b16 %v454
  %v1965 = vunpack.c.h.b16 %v454
  %v1966 = vunpack.c.l.b16 %v455
  %v1967 = vunpack.c.h.b16 %v455
  %v1968 = vunpack.c.l.b16 %v456
  %v1969 = vunpack.c.h.b16 %v456
  %v1970 = vunpack.c.l.b16 %v457
  %v1971 = vunpack.c.h.b16 %v457
  %v1972 = vunpack.c.l.b16 %v458
  %v1973 = vunpack.c.h.b16 %v458
  %v1974 = vunpack.c.l.b16 %v459
  %v1975 = vunpack.c.h.b16 %v459
  %v1976 = vunpack.c.l.b16 %v460
  %v1977 = vunpack.c.h.b16 %v460
  %v1978 = vunpack.c.l.b16 %v461
  %v1979 = vunpack.c.h.b16 %v461
  %v1980 = vunpack.c.l.b16 %v462
  %v1981 = vunpack.c.h.b16 %v462
  %v1982 = vunpack.c.l.b16 %v463
  %v1983 = vunpack.c.h.b16 %v463
  %v1984 = vunpack.c.l.b16 %v464
  %v1985 = vunpack.c.h.b16 %v464
  %v1986 = vunpack.c.l.b16 %v465
  %v1987 = vunpack.c.h.b16 %v465
  %v1988 = vunpack.c.l.b16 %v466
  %v1989 = vunpack.c.h.b16 %v466
  %v1990 = vunpack.c.l.b16 %v467
  %v1991 = vunpack.c.h.b16 %v467
  %v1992 = vunpack.c.l.b16 %v468
  %v1993 = vunpack.c.h.b16 %v468
  %v1994 = vunpack.c.l.b16 %v469
  %v1995 = vunpack.c.h.b16 %v469
  %v1996 = vunpack.c.l.b16 %v470
  %v1997 = vunpack.c.h.b16 %v470
  %v1998 = vunpack.c.l.b16 %v471
  %v1999 = vunpack.c.h.b16 %v471
  %v2000 = vunpack.c.l.b16 %v472
  %v2001 = vunpack.c.h.b16 %v472
  %v2002 = vunpack.c.l.b16 %v473
  %v2003 = vunpack.c.h.b16 %v473
  %v2004 = vunpack.c.l.b16 %v474
  %v2005 = vunpack.c.h.b16 %v474
  %v2006 = vunpack.c.l.b16 %v475
  %v2007 = vunpack.c.h.b16 %v475
  %v2008 = vunpack.c.l.b16 %v476
  %v2009 = vunpack.c.h.b16 %v476
  %v2010 = vunpack.c.l.b16 %v477
  %v2011 = vunpack.c.h.b16 %v477
  %v2012 = vunpack.c.l.b16 %v478
  %v2013 = vunpack.c.h.b16 %v478
  %v2014 = vunpack.c.l.b16 %v479
  %v2015 = vunpack.c.h.b16 %v479
  %v2016 = vunpack.c.l.b16 %v480
  %v2017 = vunpack.c.h.b16 %v480
  %v2018 = vunpack.c.l.b16 %v481
  %v2019 = vunpack.c.h.b16 %v481
  %v2020 = vunpack.c.l.b16 %v482
  %v2021 = vunpack.c.h.b16 %v482
  %v2022 = vunpack.c.l.b16 %v483
  %v2023 = vunpack.c.h.b16 %v483
  %v2024 = vunpack.c.l.b16 %v484
  %v2025 = vunpack.c.h.b16 %v484
  %v2026 = vunpack.c.l.b16 %v485
  %v2027 = vunpack.c.h.b16 %v485
  %v2028 = vunpack.c.l.b16 %v486
  %v2029 = vunpack.c.h.b16 %v486
  %v2030 = vunpack.c.l.b16 %v487
  %v2031 = vunpack.c.h.b16 %v487
  %v2032 = vunpack.c.l.b16 %v488
  %v2033 = vunpack.c.h.b16 %v488
  %v2034 = vunpack.c.l.b16 %v489
  %v2035 = vunpack.c.h.b16 %v489
  %v2036 = vunpack.c.l.b16 %v490
  %v2037 = vunpack.c.h.b16 %v490
  %v2038 = vunpack.c.l.b16 %v491
  %v2039 = vunpack.c.h.b16 %v491
  %v2040 = vunpack.c.l.b16 %v492
  %v2041 = vunpack.c.h.b16 %v492
  %v2042 = vunpack.c.l.b16 %v493
  %v2043 = vunpack.c.h.b16 %v493
  %v2044 = vunpack.c.l.b16 %v494
  %v2045 = vunpack.c.h.b16 %v494
  %v2046 = vunpack.c.l.b16 %v495
  %v2047 = vunpack.c.h.b16 %v495
  %v2048 = vunpack.c.l.b16 %v496
  %v2049 = vunpack.c.h.b16 %v496
  %v2050 = vunpack.c.l.b16 %v497
  %v2051 = vunpack.c.h.b16 %v497
  %v2052 = vunpack.c.l.b16 %v498
  %v2053 = vunpack.c.h.b16 %v498
  %v2054 = vunpack.c.l.b16 %v499
  %v2055 = vunpack.c.h.b16 %v499
  %v2056 = vunpack.c.l.b16 %v500
  %v2057 = vunpack.c.h.b16 %v500
  %v2058 = vunpack.c.l.b16 %v501
  %v2059 = vunpack.c.h.b16 %v501
  %v2060 = vunpack.c.l.b16 %v502
  %v2061 = vunpack.c.h.b16 %v502
  %v2062 = vunpack.c.l.b16 %v503
  %v2063 = vunpack.c.h.b16 %v503
  %v2064 = vunpack.c.l.b16 %v504
  %v2065 = vunpack.c.h.b16 %v504
  %v2066 = vunpack.c.l.b16 %v505
  %v2067 = vunpack.c.h.b16 %v505
  %v2068 = vunpack.c.l.b16 %v506
  %v2069 = vunpack.c.h.b16 %v506
  %v2070 = vunpack.c.l.b16 %v507
  %v2071 = vunpack.c.h.b16 %v507
  %v2072 = vunpack.c.l.b16 %v508
  %v2073 = vunpack.c.h.b16 %v508
  %v2074 = vunpack.c.l.b16 %v509
  %v2075 = vunpack.c.h.b16 %v509
  %v2076 = vunpack.c.l.b16 %v510
  %v2077 = vunpack.c.h.b16 %v510
  %v2078 = vunpack.c.l.b16 %v511
  %v2079 = vunpack.c.h.b16 %v511
  %v2080 = vunpack.c.l.b16 %v512
  %v2081 = vunpack.c.h.b16 %v512
  %v2082 = vunpack.c.l.b16 %v513
  %v2083 = vunpack.c.h.b16 %v513
  %v2084 = vunpack.c.l.b16 %v514
  %v2085 = vunpack.c.h.b16 %v514
  %v2086 = vunpack.c.l.b16 %v515
  %v2087 = vunpack.c.h.b16 %v515
  %v2088 = vunpack.c.l.b16 %v516
  %v2089 = vunpack.c.h.b16 %v516
  %v2090 = vunpack.c.l.b16 %v517
  %v2091 = vunpack.c.h.b16 %v517
  %v2092 = vunpack.c.l.b16 %v518
  %v2093 = vunpack.c.h.b16 %v518
  %v2094 = vunpack.c.l.b16 %v519
  %v2095 = vunpack.c.h.b16 %v519
  %v2096 = vunpack.c.l.b16 %v520
  %v2097 = vunpack.c.h.b16 %v520
  %v2098 = vunpack.c.l.b16 %v521
  %v2099 = vunpack.c.h.b16 %v521
  %v2100 = vunpack.c.l.b16 %v522
  %v2101 = vunpack.c.h.b16 %v522
  %v2102 = vunpack.c.l.b16 %v523
  %v2103 = vunpack.c.h.b16 %v523
  %v2104 = vunpack.c.l.b16 %v524
  %v2105 = vunpack.c.h.b16 %v524
  %v2106 = vunpack.c.l.b16 %v525
  %v2107 = vunpack.c.h.b16 %v525
  %v2108 = vunpack.c.l.b16 %v526
  %v2109 = vunpack.c.h.b16 %v526
  %v2110 = vunpack.c.l.b16 %v527
  %v2111 = vunpack.c.h.b16 %v527
  %v2112 = vunpack.c.l.b16 %v528
  %v2113 = vunpack.c.h.b16 %v528
  %v2114 = vunpack.c.l.b16 %v529
  %v2115 = vunpack.c.h.b16 %v529
  %v2116 = vunpack.c.l.b16 %v530
  %v2117 = vunpack.c.h.b16 %v530
  %v2118 = vunpack.c.l.b16 %v531
  %v2119 = vunpack.c.h.b16 %v531
  %v2120 = vunpack.c.l.b16 %v532
  %v2121 = vunpack.c.h.b16 %v532
  %v2122 = vunpack.c.l.b16 %v533
  %v2123 = vunpack.c.h.b16 %v533
  %v2124 = vunpack.c.l.b16 %v534
  %v2125 = vunpack.c.h.b16 %v534
  %v2126 = vunpack.c.l.b16 %v535
  %v2127 = vunpack.c.h.b16 %v535
  %v2128 = vunpack.c.l.b16 %v536
  %v2129 = vunpack.c.h.b16 %v536
  %v2130 = vunpack.c.l.b16 %v537
  %v2131 = vunpack.c.h.b16 %v537
  %v2132 = vunpack.c.l.b16 %v538
  %v2133 = vunpack.c.h.b16 %v538
  %v2134 = vunpack.c.l.b16 %v539
  %v2135 = vunpack.c.h.b16 %v539
  %v2136 = vunpack.c.l.b16 %v540
  %v2137 = vunpack.c.h.b16 %v540
  %v2138 = vunpack.c.l.b16 %v541
  %v2139 = vunpack.c.h.b16 %v541
  %v2140 = vunpack.c.l.b16 %v542
  %v2141 = vunpack.c.h.b16 %v542
  %v2142 = vunpack.c.l.b16 %v543
  %v2143 = vunpack.c.h.b16 %v543
  %v2144 = vunpack.c.l.b16 %v544
  %v2145 = vunpack.c.h.b16 %v544
  %v2146 = vunpack.c.l.b16 %v545
  %v2147 = vunpack.c.h.b16 %v545
  %v2148 = vunpack.c.l.b16 %v546
  %v2149 = vunpack.c.h.b16 %v546
  %v2150 = vunpack.c.l.b16 %v547
  %v2151 = vunpack.c.h.b16 %v547
  %v2152 = vunpack.c.l.b16 %v548
  %v2153 = vunpack.c.h.b16 %v548
  %v2154 = vunpack.c.l.b16 %v549
  %v2155 = vunpack.c.h.b16 %v549
  %v2156 = vunpack.c.l.b16 %v550
  %v2157 = vunpack.c.h.b16 %v550
  %v2158 = vunpack.c.l.b16 %v551
  %v2159 = vunpack.c.h.b16 %v551
  %v2160 = vunpack.c.l.b16 %v552
  %v2161 = vunpack.c.h.b16 %v552
  %v2162 = vunpack.c.l.b16 %v553
  %v2163 = vunpack.c.h.b16 %v553
  %v2164 = vunpack.c.l.b16 %v554
  %v2165 = vunpack.c.h.b16 %v554
  %v2166 = vunpack.c.l.b16 %v555
  %v2167 = vunpack.c.h.b16 %v555
  %v2168 = vunpack.c.l.b16 %v556
  %v2169 = vunpack.c.h.b16 %v556
  %v2170 = vunpack.c.l.b16 %v557
  %v2171 = vunpack.c.h.b16 %v557
  %v2172 = vunpack.c.l.b16 %v558
  %v2173 = vunpack.c.h.b16 %v558
  %v2174 = vunpack.c.l.b16 %v559
  %v2175 = vunpack.c.h.b16 %v559
  %v2176 = vunpack.c.l.b16 %v560
  %v2177 = vunpack.c.h.b16 %v560
  %v2178 = vunpack.c.l.b16 %v561
  %v2179 = vunpack.c.h.b16 %v561
  %v2180 = vpack.c.b16 %v1164, %v1156
  %v2181 = vpack.c.b16 %v1165, %v1157
  %v2182 = vpack.c.b16 %v1166, %v1158
  %v2183 = vpack.c.b16 %v1167, %v1159
  %v2184 = vpack.c.b16 %v1168, %v1160
  %v2185 = vpack.c.b16 %v1169, %v1161
  %v2186 = vpack.c.b16 %v1170, %v1162
  %v2187 = vpack.c.b16 %v1171, %v1163
  %v2188 = vpack.c.b16 %v1180, %v1172
  %v2189 = vpack.c.b16 %v1181, %v1173
  %v2190 = vpack.c.b16 %v1182, %v1174
  %v2191 = vpack.c.b16 %v1183, %v1175
  %v2192 = vpack.c.b16 %v1184, %v1176
  %v2193 = vpack.c.b16 %v1185, %v1177
  %v2194 = vpack.c.b16 %v1186, %v1178
  %v2195 = vpack.c.b16 %v1187, %v1179
  %v2196 = vpack.c.b16 %v1196, %v1188
  %v2197 = vpack.c.b16 %v1197, %v1189
  %v2198 = vpack.c.b16 %v1198, %v1190
  %v2199 = vpack.c.b16 %v1199, %v1191
  %v2200 = vpack.c.b16 %v1200, %v1192
  %v2201 = vpack.c.b16 %v1201, %v1193
  %v2202 = vpack.c.b16 %v1202, %v1194
  %v2203 = vpack.c.b16 %v1203, %v1195
  %v2204 = vpack.c.b16 %v1212, %v1204
  %v2205 = vpack.c.b16 %v1213, %v1205
  %v2206 = vpack.c.b16 %v1214, %v1206
  %v2207 = vpack.c.b16 %v1215, %v1207
  %v2208 = vpack.c.b16 %v1216, %v1208
  %v2209 = vpack.c.b16 %v1217, %v1209
  %v2210 = vpack.c.b16 %v1218, %v1210
  %v2211 = vpack.c.b16 %v1219, %v1211
  %v2212 = vpack.c.b16 %v1228, %v1220
  %v2213 = vpack.c.b16 %v1229, %v1221
  %v2214 = vpack.c.b16 %v1230, %v1222
  %v2215 = vpack.c.b16 %v1231, %v1223
  %v2216 = vpack.c.b16 %v1232, %v1224
  %v2217 = vpack.c.b16 %v1233, %v1225
  %v2218 = vpack.c.b16 %v1234, %v1226
  %v2219 = vpack.c.b16 %v1235, %v1227
  %v2220 = vpack.c.b16 %v1244, %v1236
  %v2221 = vpack.c.b16 %v1245, %v1237
  %v2222 = vpack.c.b16 %v1246, %v1238
  %v2223 = vpack.c.b16 %v1247, %v1239
  %v2224 = vpack.c.b16 %v1248, %v1240
  %v2225 = vpack.c.b16 %v1249, %v1241
  %v2226 = vpack.c.b16 %v1250, %v1242
  %v2227 = vpack.c.b16 %v1251, %v1243
  %v2228 = vpack.c.b16 %v1260, %v1252
  %v2229 = vpack.c.b16 %v1261, %v1253
  %v2230 = vpack.c.b16 %v1262, %v1254
  %v2231 = vpack.c.b16 %v1263, %v1255
  %v2232 = vpack.c.b16 %v1264, %v1256
  %v2233 = vpack.c.b16 %v1265, %v1257
  %v2234 = vpack.c.b16 %v1266, %v1258
  %v2235 = vpack.c.b16 %v1267, %v1259
  %v2236 = vpack.c.b16 %v1276, %v1268
  %v2237 = vpack.c.b16 %v1277, %v1269
  %v2238 = vpack.c.b16 %v1278, %v1270
  %v2239 = vpack.c.b16 %v1279, %v1271
  %v2240 = vpack.c.b16 %v1280, %v1272
  %v2241 = vpack.c.b16 %v1281, %v1273
  %v2242 = vpack.c.b16 %v1282, %v1274
  %v2243 = vpack.c.b16 %v1283, %v1275
  %v2244 = vpack.c.b16 %v1292, %v1284
  %v2245 = vpack.c.b16 %v1293, %v1285
  %v2246 = vpack.c.b16 %v1294, %v1286
  %v2247 = vpack.c.b16 %v1295, %v1287
  %v2248 = vpack.c.b16 %v1296, %v1288
  %v2249 = vpack.c.b16 %v1297, %v1289
  %v2250 = vpack.c.b16 %v1298, %v1290
  %v2251 = vpack.c.b16 %v1299, %v1291
  %v2252 = vpack.c.b16 %v1308, %v1300
  %v2253 = vpack.c.b16 %v1309, %v1301
  %v2254 = vpack.c.b16 %v1310, %v1302
  %v2255 = vpack.c.b16 %v1311, %v1303
  %v2256 = vpack.c.b16 %v1312, %v1304
  %v2257 = vpack.c.b16 %v1313, %v1305
  %v2258 = vpack.c.b16 %v1314, %v1306
  %v2259 = vpack.c.b16 %v1315, %v1307
  %v2260 = vpack.c.b16 %v1324, %v1316
  %v2261 = vpack.c.b16 %v1325, %v1317
  %v2262 = vpack.c.b16 %v1326, %v1318
  %v2263 = vpack.c.b16 %v1327, %v1319
  %v2264 = vpack.c.b16 %v1328, %v1320
  %v2265 = vpack.c.b16 %v1329, %v1321
  %v2266 = vpack.c.b16 %v1330, %v1322
  %v2267 = vpack.c.b16 %v1331, %v1323
  %v2268 = vpack.c.b16 %v1340, %v1332
  %v2269 = vpack.c.b16 %v1341, %v1333
  %v2270 = vpack.c.b16 %v1342, %v1334
  %v2271 = vpack.c.b16 %v1343, %v1335
  %v2272 = vpack.c.b16 %v1344, %v1336
  %v2273 = vpack.c.b16 %v1345, %v1337
  %v2274 = vpack.c.b16 %v1346, %v1338
  %v2275 = vpack.c.b16 %v1347, %v1339
  %v2276 = vpack.c.b16 %v1356, %v1348
  %v2277 = vpack.c.b16 %v1357, %v1349
  %v2278 = vpack.c.b16 %v1358, %v1350
  %v2279 = vpack.c.b16 %v1359, %v1351
  %v2280 = vpack.c.b16 %v1360, %v1352
  %v2281 = vpack.c.b16 %v1361, %v1353
  %v2282 = vpack.c.b16 %v1362, %v1354
  %v2283 = vpack.c.b16 %v1363, %v1355
  %v2284 = vpack.c.b16 %v1372, %v1364
  %v2285 = vpack.c.b16 %v1373, %v1365
  %v2286 = vpack.c.b16 %v1374, %v1366
  %v2287 = vpack.c.b16 %v1375, %v1367
  %v2288 = vpack.c.b16 %v1376, %v1368
  %v2289 = vpack.c.b16 %v1377, %v1369
  %v2290 = vpack.c.b16 %v1378, %v1370
  %v2291 = vpack.c.b16 %v1379, %v1371
  %v2292 = vpack.c.b16 %v1388, %v1380
  %v2293 = vpack.c.b16 %v1389, %v1381
  %v2294 = vpack.c.b16 %v1390, %v1382
  %v2295 = vpack.c.b16 %v1391, %v1383
  %v2296 = vpack.c.b16 %v1392, %v1384
  %v2297 = vpack.c.b16 %v1393, %v1385
  %v2298 = vpack.c.b16 %v1394, %v1386
  %v2299 = vpack.c.b16 %v1395, %v1387
  %v2300 = vpack.c.b16 %v1404, %v1396
  %v2301 = vpack.c.b16 %v1405, %v1397
  %v2302 = vpack.c.b16 %v1406, %v1398
  %v2303 = vpack.c.b16 %v1407, %v1399
  %v2304 = vpack.c.b16 %v1408, %v1400
  %v2305 = vpack.c.b16 %v1409, %v1401
  %v2306 = vpack.c.b16 %v1410, %v1402
  %v2307 = vpack.c.b16 %v1411, %v1403
  %v2308 = vpack.c.b16 %v1420, %v1412
  %v2309 = vpack.c.b16 %v1421, %v1413
  %v2310 = vpack.c.b16 %v1422, %v1414
  %v2311 = vpack.c.b16 %v1423, %v1415
  %v2312 = vpack.c.b16 %v1424, %v1416
  %v2313 = vpack.c.b16 %v1425, %v1417
  %v2314 = vpack.c.b16 %v1426, %v1418
  %v2315 = vpack.c.b16 %v1427, %v1419
  %v2316 = vpack.c.b16 %v1436, %v1428
  %v2317 = vpack.c.b16 %v1437, %v1429
  %v2318 = vpack.c.b16 %v1438, %v1430
  %v2319 = vpack.c.b16 %v1439, %v1431
  %v2320 = vpack.c.b16 %v1440, %v1432
  %v2321 = vpack.c.b16 %v1441, %v1433
  %v2322 = vpack.c.b16 %v1442, %v1434
  %v2323 = vpack.c.b16 %v1443, %v1435
  %v2324 = vpack.c.b16 %v1452, %v1444
  %v2325 = vpack.c.b16 %v1453, %v1445
  %v2326 = vpack.c.b16 %v1454, %v1446
  %v2327 = vpack.c.b16 %v1455, %v1447
  %v2328 = vpack.c.b16 %v1456, %v1448
  %v2329 = vpack.c.b16 %v1457, %v1449
  %v2330 = vpack.c.b16 %v1458, %v1450
  %v2331 = vpack.c.b16 %v1459, %v1451
  %v2332 = vpack.c.b16 %v1468, %v1460
  %v2333 = vpack.c.b16 %v1469, %v1461
  %v2334 = vpack.c.b16 %v1470, %v1462
  %v2335 = vpack.c.b16 %v1471, %v1463
  %v2336 = vpack.c.b16 %v1472, %v1464
  %v2337 = vpack.c.b16 %v1473, %v1465
  %v2338 = vpack.c.b16 %v1474, %v1466
  %v2339 = vpack.c.b16 %v1475, %v1467
  %v2340 = vpack.c.b16 %v1484, %v1476
  %v2341 = vpack.c.b16 %v1485, %v1477
  %v2342 = vpack.c.b16 %v1486, %v1478
  %v2343 = vpack.c.b16 %v1487, %v1479
  %v2344 = vpack.c.b16 %v1488, %v1480
  %v2345 = vpack.c.b16 %v1489, %v1481
  %v2346 = vpack.c.b16 %v1490, %v1482
  %v2347 = vpack.c.b16 %v1491, %v1483
  %v2348 = vpack.c.b16 %v1500, %v1492
  %v2349 = vpack.c.b16 %v1501, %v1493
  %v2350 = vpack.c.b16 %v1502, %v1494
  %v2351 = vpack.c.b16 %v1503, %v1495
  %v2352 = vpack.c.b16 %v1504, %v1496
  %v2353 = vpack.c.b16 %v1505, %v1497
  %v2354 = vpack.c.b16 %v1506, %v1498
  %v2355 = vpack.c.b16 %v1507, %v1499
  %v2356 = vpack.c.b16 %v1516, %v1508
  %v2357 = vpack.c.b16 %v1517, %v1509
  %v2358 = vpack.c.b16 %v1518, %v1510
  %v2359 = vpack.c.b16 %v1519, %v1511
  %v2360 = vpack.c.b16 %v1520, %v1512
  %v2361 = vpack.c.b16 %v1521, %v1513
  %v2362 = vpack.c.b16 %v1522, %v1514
  %v2363 = vpack.c.b16 %v1523, %v1515
  %v2364 = vpack.c.b16 %v1532, %v1524
  %v2365 = vpack.c.b16 %v1533, %v1525
  %v2366 = vpack.c.b16 %v1534, %v1526
  %v2367 = vpack.c.b16 %v1535, %v1527
  %v2368 = vpack.c.b16 %v1536, %v1528
  %v2369 = vpack.c.b16 %v1537, %v1529
  %v2370 = vpack.c.b16 %v1538, %v1530
  %v2371 = vpack.c.b16 %v1539, %v1531
  %v2372 = vpack.c.b16 %v1548, %v1540
  %v2373 = vpack.c.b16 %v1549, %v1541
  %v2374 = vpack.c.b16 %v1550, %v1542
  %v2375 = vpack.c.b16 %v1551, %v1543
  %v2376 = vpack.c.b16 %v1552, %v1544
  %v2377 = vpack.c.b16 %v1553, %v1545
  %v2378 = vpack.c.b16 %v1554, %v1546
  %v2379 = vpack.c.b16 %v1555, %v1547
  %v2380 = vpack.c.b16 %v1564, %v1556
  %v2381 = vpack.c.b16 %v1565, %v1557
  %v2382 = vpack.c.b16 %v1566, %v1558
  %v2383 = vpack.c.b16 %v1567, %v1559
  %v2384 = vpack.c.b16 %v1568, %v1560
  %v2385 = vpack.c.b16 %v1569, %v1561
  %v2386 = vpack.c.b16 %v1570, %v1562
  %v2387 = vpack.c.b16 %v1571, %v1563
  %v2388 = vpack.c.b16 %v1580, %v1572
  %v2389 = vpack.c.b16 %v1581, %v1573
  %v2390 = vpack.c.b16 %v1582, %v1574
  %v2391 = vpack.c.b16 %v1583, %v1575
  %v2392 = vpack.c.b16 %v1584, %v1576
  %v2393 = vpack.c.b16 %v1585, %v1577
  %v2394 = vpack.c.b16 %v1586, %v1578
  %v2395 = vpack.c.b16 %v1587, %v1579
  %v2396 = vpack.c.b16 %v1596, %v1588
  %v2397 = vpack.c.b16 %v1597, %v1589
  %v2398 = vpack.c.b16 %v1598, %v1590
  %v2399 = vpack.c.b16 %v1599, %v1591
  %v2400 = vpack.c.b16 %v1600, %v1592
  %v2401 = vpack.c.b16 %v1601, %v1593
  %v2402 = vpack.c.b16 %v1602, %v1594
  %v2403 = vpack.c.b16 %v1603, %v1595
  %v2404 = vpack.c.b16 %v1612, %v1604
  %v2405 = vpack.c.b16 %v1613, %v1605
  %v2406 = vpack.c.b16 %v1614, %v1606
  %v2407 = vpack.c.b16 %v1615, %v1607
  %v2408 = vpack.c.b16 %v1616, %v1608
  %v2409 = vpack.c.b16 %v1617, %v1609
  %v2410 = vpack.c.b16 %v1618, %v1610
  %v2411 = vpack.c.b16 %v1619, %v1611
  %v2412 = vpack.c.b16 %v1628, %v1620
  %v2413 = vpack.c.b16 %v1629, %v1621
  %v2414 = vpack.c.b16 %v1630, %v1622
  %v2415 = vpack.c.b16 %v1631, %v1623
  %v2416 = vpack.c.b16 %v1632, %v1624
  %v2417 = vpack.c.b16 %v1633, %v1625
  %v2418 = vpack.c.b16 %v1634, %v1626
  %v2419 = vpack.c.b16 %v1635, %v1627
  %v2420 = vpack.c.b16 %v1644, %v1636
  %v2421 = vpack.c.b16 %v1645, %v1637
  %v2422 = vpack.c.b16 %v1646, %v1638
  %v2423 = vpack.c.b16 %v1647, %v1639
  %v2424 = vpack.c.b16 %v1648, %v1640
  %v2425 = vpack.c.b16 %v1649, %v1641
  %v2426 = vpack.c.b16 %v1650, %v1642
  %v2427 = vpack.c.b16 %v1651, %v1643
  %v2428 = vpack.c.b16 %v1660, %v1652
  %v2429 = vpack.c.b16 %v1661, %v1653
  %v2430 = vpack.c.b16 %v1662, %v1654
  %v2431 = vpack.c.b16 %v1663, %v1655
  %v2432 = vpack.c.b16 %v1664, %v1656
  %v2433 = vpack.c.b16 %v1665, %v1657
  %v2434 = vpack.c.b16 %v1666, %v1658
  %v2435 = vpack.c.b16 %v1667, %v1659
  %v2436 = vpack.c.b16 %v1676, %v1668
  %v2437 = vpack.c.b16 %v1677, %v1669
  %v2438 = vpack.c.b16 %v1678, %v1670
  %v2439 = vpack.c.b16 %v1679, %v1671
  %v2440 = vpack.c.b16 %v1680, %v1672
  %v2441 = vpack.c.b16 %v1681, %v1673
  %v2442 = vpack.c.b16 %v1682, %v1674
  %v2443 = vpack.c.b16 %v1683, %v1675
  %v2444 = vpack.c.b16 %v1692, %v1684
  %v2445 = vpack.c.b16 %v1693, %v1685
  %v2446 = vpack.c.b16 %v1694, %v1686
  %v2447 = vpack.c.b16 %v1695, %v1687
  %v2448 = vpack.c.b16 %v1696, %v1688
  %v2449 = vpack.c.b16 %v1697, %v1689
  %v2450 = vpack.c.b16 %v1698, %v1690
  %v2451 = vpack.c.b16 %v1699, %v1691
  %v2452 = vpack.c.b16 %v1708, %v1700
  %v2453 = vpack.c.b16 %v1709, %v1701
  %v2454 = vpack.c.b16 %v1710, %v1702
  %v2455 = vpack.c.b16 %v1711, %v1703
  %v2456 = vpack.c.b16 %v1712, %v1704
  %v2457 = vpack.c.b16 %v1713, %v1705
  %v2458 = vpack.c.b16 %v1714, %v1706
  %v2459 = vpack.c.b16 %v1715, %v1707
  %v2460 = vpack.c.b16 %v1724, %v1716
  %v2461 = vpack.c.b16 %v1725, %v1717
  %v2462 = vpack.c.b16 %v1726, %v1718
  %v2463 = vpack.c.b16 %v1727, %v1719
  %v2464 = vpack.c.b16 %v1728, %v1720
  %v2465 = vpack.c.b16 %v1729, %v1721
  %v2466 = vpack.c.b16 %v1730, %v1722
  %v2467 = vpack.c.b16 %v1731, %v1723
  %v2468 = vpack.c.b16 %v1740, %v1732
  %v2469 = vpack.c.b16 %v1741, %v1733
  %v2470 = vpack.c.b16 %v1742, %v1734
  %v2471 = vpack.c.b16 %v1743, %v1735
  %v2472 = vpack.c.b16 %v1744, %v1736
  %v2473 = vpack.c.b16 %v1745, %v1737
  %v2474 = vpack.c.b16 %v1746, %v1738
  %v2475 = vpack.c.b16 %v1747, %v1739
  %v2476 = vpack.c.b16 %v1756, %v1748
  %v2477 = vpack.c.b16 %v1757, %v1749
  %v2478 = vpack.c.b16 %v1758, %v1750
  %v2479 = vpack.c.b16 %v1759, %v1751
  %v2480 = vpack.c.b16 %v1760, %v1752
  %v2481 = vpack.c.b16 %v1761, %v1753
  %v2482 = vpack.c.b16 %v1762, %v1754
  %v2483 = vpack.c.b16 %v1763, %v1755
  %v2484 = vpack.c.b16 %v1772, %v1764
  %v2485 = vpack.c.b16 %v1773, %v1765
  %v2486 = vpack.c.b16 %v1774, %v1766
  %v2487 = vpack.c.b16 %v1775, %v1767
  %v2488 = vpack.c.b16 %v1776, %v1768
  %v2489 = vpack.c.b16 %v1777, %v1769
  %v2490 = vpack.c.b16 %v1778, %v1770
  %v2491 = vpack.c.b16 %v1779, %v1771
  %v2492 = vpack.c.b16 %v1788, %v1780
  %v2493 = vpack.c.b16 %v1789, %v1781
  %v2494 = vpack.c.b16 %v1790, %v1782
  %v2495 = vpack.c.b16 %v1791, %v1783
  %v2496 = vpack.c.b16 %v1792, %v1784
  %v2497 = vpack.c.b16 %v1793, %v1785
  %v2498 = vpack.c.b16 %v1794, %v1786
  %v2499 = vpack.c.b16 %v1795, %v1787
  %v2500 = vpack.c.b16 %v1804, %v1796
  %v2501 = vpack.c.b16 %v1805, %v1797
  %v2502 = vpack.c.b16 %v1806, %v1798
  %v2503 = vpack.c.b16 %v1807, %v1799
  %v2504 = vpack.c.b16 %v1808, %v1800
  %v2505 = vpack.c.b16 %v1809, %v1801
  %v2506 = vpack.c.b16 %v1810, %v1802
  %v2507 = vpack.c.b16 %v1811, %v1803
  %v2508 = vpack.c.b16 %v1820, %v1812
  %v2509 = vpack.c.b16 %v1821, %v1813
  %v2510 = vpack.c.b16 %v1822, %v1814
  %v2511 = vpack.c.b16 %v1823, %v1815
  %v2512 = vpack.c.b16 %v1824, %v1816
  %v2513 = vpack.c.b16 %v1825, %v1817
  %v2514 = vpack.c.b16 %v1826, %v1818
  %v2515 = vpack.c.b16 %v1827, %v1819
  %v2516 = vpack.c.b16 %v1836, %v1828
  %v2517 = vpack.c.b16 %v1837, %v1829
  %v2518 = vpack.c.b16 %v1838, %v1830
  %v2519 = vpack.c.b16 %v1839, %v1831
  %v2520 = vpack.c.b16 %v1840, %v1832
  %v2521 = vpack.c.b16 %v1841, %v1833
  %v2522 = vpack.c.b16 %v1842, %v1834
  %v2523 = vpack.c.b16 %v1843, %v1835
  %v2524 = vpack.c.b16 %v1852, %v1844
  %v2525 = vpack.c.b16 %v1853, %v1845
  %v2526 = vpack.c.b16 %v1854, %v1846
  %v2527 = vpack.c.b16 %v1855, %v1847
  %v2528 = vpack.c.b16 %v1856, %v1848
  %v2529 = vpack.c.b16 %v1857, %v1849
  %v2530 = vpack.c.b16 %v1858, %v1850
  %v2531 = vpack.c.b16 %v1859, %v1851
  %v2532 = vpack.c.b16 %v1868, %v1860
  %v2533 = vpack.c.b16 %v1869, %v1861
  %v2534 = vpack.c.b16 %v1870, %v1862
  %v2535 = vpack.c.b16 %v1871, %v1863
  %v2536 = vpack.c.b16 %v1872, %v1864
  %v2537 = vpack.c.b16 %v1873, %v1865
  %v2538 = vpack.c.b16 %v1874, %v1866
  %v2539 = vpack.c.b16 %v1875, %v1867
  %v2540 = vpack.c.b16 %v1884, %v1876
  %v2541 = vpack.c.b16 %v1885, %v1877
  %v2542 = vpack.c.b16 %v1886, %v1878
  %v2543 = vpack.c.b16 %v1887, %v1879
  %v2544 = vpack.c.b16 %v1888, %v1880
  %v2545 = vpack.c.b16 %v1889, %v1881
  %v2546 = vpack.c.b16 %v1890, %v1882
  %v2547 = vpack.c.b16 %v1891, %v1883
  %v2548 = vpack.c.b16 %v1900, %v1892
  %v2549 = vpack.c.b16 %v1901, %v1893
  %v2550 = vpack.c.b16 %v1902, %v1894
  %v2551 = vpack.c.b16 %v1903, %v1895
  %v2552 = vpack.c.b16 %v1904, %v1896
  %v2553 = vpack.c.b16 %v1905, %v1897
  %v2554 = vpack.c.b16 %v1906, %v1898
  %v2555 = vpack.c.b16 %v1907, %v1899
  %v2556 = vpack.c.b16 %v1916, %v1908
  %v2557 = vpack.c.b16 %v1917, %v1909
  %v2558 = vpack.c.b16 %v1918, %v1910
  %v2559 = vpack.c.b16 %v1919, %v1911
  %v2560 = vpack.c.b16 %v1920, %v1912
  %v2561 = vpack.c.b16 %v1921, %v1913
  %v2562 = vpack.c.b16 %v1922, %v1914
  %v2563 = vpack.c.b16 %v1923, %v1915
  %v2564 = vpack.c.b16 %v1932, %v1924
  %v2565 = vpack.c.b16 %v1933, %v1925
  %v2566 = vpack.c.b16 %v1934, %v1926
  %v2567 = vpack.c.b16 %v1935, %v1927
  %v2568 = vpack.c.b16 %v1936, %v1928
  %v2569 = vpack.c.b16 %v1937, %v1929
  %v2570 = vpack.c.b16 %v1938, %v1930
  %v2571 = vpack.c.b16 %v1939, %v1931
  %v2572 = vpack.c.b16 %v1948, %v1940
  %v2573 = vpack.c.b16 %v1949, %v1941
  %v2574 = vpack.c.b16 %v1950, %v1942
  %v2575 = vpack.c.b16 %v1951, %v1943
  %v2576 = vpack.c.b16 %v1952, %v1944
  %v2577 = vpack.c.b16 %v1953, %v1945
  %v2578 = vpack.c.b16 %v1954, %v1946
  %v2579 = vpack.c.b16 %v1955, %v1947
  %v2580 = vpack.c.b16 %v1964, %v1956
  %v2581 = vpack.c.b16 %v1965, %v1957
  %v2582 = vpack.c.b16 %v1966, %v1958
  %v2583 = vpack.c.b16 %v1967, %v1959
  %v2584 = vpack.c.b16 %v1968, %v1960
  %v2585 = vpack.c.b16 %v1969, %v1961
  %v2586 = vpack.c.b16 %v1970, %v1962
  %v2587 = vpack.c.b16 %v1971, %v1963
  %v2588 = vpack.c.b16 %v1980, %v1972
  %v2589 = vpack.c.b16 %v1981, %v1973
  %v2590 = vpack.c.b16 %v1982, %v1974
  %v2591 = vpack.c.b16 %v1983, %v1975
  %v2592 = vpack.c.b16 %v1984, %v1976
  %v2593 = vpack.c.b16 %v1985, %v1977
  %v2594 = vpack.c.b16 %v1986, %v1978
  %v2595 = vpack.c.b16 %v1987, %v1979
  %v2596 = vpack.c.b16 %v1996, %v1988
  %v2597 = vpack.c.b16 %v1997, %v1989
  %v2598 = vpack.c.b16 %v1998, %v1990
  %v2599 = vpack.c.b16 %v1999, %v1991
  %v2600 = vpack.c.b16 %v2000, %v1992
  %v2601 = vpack.c.b16 %v2001, %v1993
  %v2602 = vpack.c.b16 %v2002, %v1994
  %v2603 = vpack.c.b16 %v2003, %v1995
  %v2604 = vpack.c.b16 %v2012, %v2004
  %v2605 = vpack.c.b16 %v2013, %v2005
  %v2606 = vpack.c.b16 %v2014, %v2006
  %v2607 = vpack.c.b16 %v2015, %v2007
  %v2608 = vpack.c.b16 %v2016, %v2008
  %v2609 = vpack.c.b16 %v2017, %v2009
  %v2610 = vpack.c.b16 %v2018, %v2010
  %v2611 = vpack.c.b16 %v2019, %v2011
  %v2612 = vpack.c.b16 %v2028, %v2020
  %v2613 = vpack.c.b16 %v2029, %v2021
  %v2614 = vpack.c.b16 %v2030, %v2022
  %v2615 = vpack.c.b16 %v2031, %v2023
  %v2616 = vpack.c.b16 %v2032, %v2024
  %v2617 = vpack.c.b16 %v2033, %v2025
  %v2618 = vpack.c.b16 %v2034, %v2026
  %v2619 = vpack.c.b16 %v2035, %v2027
  %v2620 = vpack.c.b16 %v2044, %v2036
  %v2621 = vpack.c.b16 %v2045, %v2037
  %v2622 = vpack.c.b16 %v2046, %v2038
  %v2623 = vpack.c.b16 %v2047, %v2039
  %v2624 = vpack.c.b16 %v2048, %v2040
  %v2625 = vpack.c.b16 %v2049, %v2041
  %v2626 = vpack.c.b16 %v2050, %v2042
  %v2627 = vpack.c.b16 %v2051, %v2043
  %v2628 = vpack.c.b16 %v2060, %v2052
  %v2629 = vpack.c.b16 %v2061, %v2053
  %v2630 = vpack.c.b16 %v2062, %v2054
  %v2631 = vpack.c.b16 %v2063, %v2055
  %v2632 = vpack.c.b16 %v2064, %v2056
  %v2633 = vpack.c.b16 %v2065, %v2057
  %v2634 = vpack.c.b16 %v2066, %v2058
  %v2635 = vpack.c.b16 %v2067, %v2059
  %v2636 = vpack.c.b16 %v2076, %v2068
  %v2637 = vpack.c.b16 %v2077, %v2069
  %v2638 = vpack.c.b16 %v2078, %v2070
  %v2639 = vpack.c.b16 %v2079, %v2071
  %v2640 = vpack.c.b16 %v2080, %v2072
  %v2641 = vpack.c.b16 %v2081, %v2073
  %v2642 = vpack.c.b16 %v2082, %v2074
  %v2643 = vpack.c.b16 %v2083, %v2075
  %v2644 = vpack.c.b16 %v2092, %v2084
  %v2645 = vpack.c.b16 %v2093, %v2085
  %v2646 = vpack.c.b16 %v2094, %v2086
  %v2647 = vpack.c.b16 %v2095, %v2087
  %v2648 = vpack.c.b16 %v2096, %v2088
  %v2649 = vpack.c.b16 %v2097, %v2089
  %v2650 = vpack.c.b16 %v2098, %v2090
  %v2651 = vpack.c.b16 %v2099, %v2091
  %v2652 = vpack.c.b16 %v2108, %v2100
  %v2653 = vpack.c.b16 %v2109, %v2101
  %v2654 = vpack.c.b16 %v2110, %v2102
  %v2655 = vpack.c.b16 %v2111, %v2103
  %v2656 = vpack.c.b16 %v2112, %v2104
  %v2657 = vpack.c.b16 %v2113, %v2105
  %v2658 = vpack.c.b16 %v2114, %v2106
  %v2659 = vpack.c.b16 %v2115, %v2107
  %v2660 = vpack.c.b16 %v2124, %v2116
  %v2661 = vpack.c.b16 %v2125, %v2117
  %v2662 = vpack.c.b16 %v2126, %v2118
  %v2663 = vpack.c.b16 %v2127, %v2119
  %v2664 = vpack.c.b16 %v2128, %v2120
  %v2665 = vpack.c.b16 %v2129, %v2121
  %v2666 = vpack.c.b16 %v2130, %v2122
  %v2667 = vpack.c.b16 %v2131, %v2123
  %v2668 = vpack.c.b16 %v2140, %v2132
  %v2669 = vpack.c.b16 %v2141, %v2133
  %v2670 = vpack.c.b16 %v2142, %v2134
  %v2671 = vpack.c.b16 %v2143, %v2135
  %v2672 = vpack.c.b16 %v2144, %v2136
  %v2673 = vpack.c.b16 %v2145, %v2137
  %v2674 = vpack.c.b16 %v2146, %v2138
  %v2675 = vpack.c.b16 %v2147, %v2139
  %v2676 = vpack.c.b16 %v2156, %v2148
  %v2677 = vpack.c.b16 %v2157, %v2149
  %v2678 = vpack.c.b16 %v2158, %v2150
  %v2679 = vpack.c.b16 %v2159, %v2151
  %v2680 = vpack.c.b16 %v2160, %v2152
  %v2681 = vpack.c.b16 %v2161, %v2153
  %v2682 = vpack.c.b16 %v2162, %v2154
  %v2683 = vpack.c.b16 %v2163, %v2155
  %v2684 = vpack.c.b16 %v2172, %v2164
  %v2685 = vpack.c.b16 %v2173, %v2165
  %v2686 = vpack.c.b16 %v2174, %v2166
  %v2687 = vpack.c.b16 %v2175, %v2167
  %v2688 = vpack.c.b16 %v2176, %v2168
  %v2689 = vpack.c.b16 %v2177, %v2169
  %v2690 = vpack.c.b16 %v2178, %v2170
  %v2691 = vpack.c.b16 %v2179, %v2171
  %3204 = vmatprep.subr.bf16.mxu0 %v2181
  %3205 = vmatpush1.bf16.msra.mxu0 %v2180
  %3206 = vmatprep.subr.bf16.mxu0 %v2189
  %3207 = vmatpush1.bf16.msra.mxu0 %v2188
  %3208 = vmatprep.subr.bf16.mxu0 %v2197
  %3209 = vmatpush1.bf16.msra.mxu0 %v2196
  %3210 = vmatprep.subr.bf16.mxu0 %v2205
  %3211 = vmatpush1.bf16.msra.mxu0 %v2204
  %3212 = vmatprep.subr.bf16.mxu0 %v2213
  %3213 = vmatpush1.bf16.msra.mxu0 %v2212
  %3214 = vmatprep.subr.bf16.mxu0 %v2221
  %3215 = vmatpush1.bf16.msra.mxu0 %v2220
  %3216 = vmatprep.subr.bf16.mxu0 %v2229
  %3217 = vmatpush1.bf16.msra.mxu0 %v2228
  %3218 = vmatprep.subr.bf16.mxu0 %v2237
  %3219 = vmatpush1.bf16.msra.mxu0 %v2236
  %3220 = vmatprep.subr.bf16.mxu0 %v2245
  %3221 = vmatpush1.bf16.msra.mxu0 %v2244
  %3222 = vmatprep.subr.bf16.mxu0 %v2253
  %3223 = vmatpush1.bf16.msra.mxu0 %v2252
  %3224 = vmatprep.subr.bf16.mxu0 %v2261
  %3225 = vmatpush1.bf16.msra.mxu0 %v2260
  %3226 = vmatprep.subr.bf16.mxu0 %v2269
  %3227 = vmatpush1.bf16.msra.mxu0 %v2268
  %3228 = vmatprep.subr.bf16.mxu0 %v2277
  %3229 = vmatpush1.bf16.msra.mxu0 %v2276
  %3230 = vmatprep.subr.bf16.mxu0 %v2285
  %3231 = vmatpush1.bf16.msra.mxu0 %v2284
  %3232 = vmatprep.subr.bf16.mxu0 %v2293
  %3233 = vmatpush1.bf16.msra.mxu0 %v2292
  %3234 = vmatprep.subr.bf16.mxu0 %v2301
  %3235 = vmatpush1.bf16.msra.mxu0 %v2300
  %3236 = vmatprep.mubr.bf16.mxu0 %v629
  %3237 = vmatmul.mubr.bf16.gmra.mrb[0].mxu0 %v628
  %v3238 = vpop.f32.mrb[0].mxu0
  %v3239 = vadd.f32 %v567, %v3238
  %v3240 = vpop.f32.mrb[0].mxu0
  %v3241 = vadd.f32 %v571, %v3240
  %v3242 = vpop.f32.mrb[0].mxu0
  %v3243 = vadd.f32 %v567, %v3242
  %v3244 = vpop.f32.mrb[0].mxu0
  %v3245 = vadd.f32 %v571, %v3244
  %3246 = vdwg.mxu0
  %3247 = vmatprep.subr.bf16.mxu0 %v2309
  %3248 = vmatpush1.bf16.msra.mxu0 %v2308
  %3249 = vmatprep.subr.bf16.mxu0 %v2317
  %3250 = vmatpush1.bf16.msra.mxu0 %v2316
  %3251 = vmatprep.subr.bf16.mxu0 %v2325
  %3252 = vmatpush1.bf16.msra.mxu0 %v2324
  %3253 = vmatprep.subr.bf16.mxu0 %v2333
  %3254 = vmatpush1.bf16.msra.mxu0 %v2332
  %3255 = vmatprep.subr.bf16.mxu0 %v2341
  %3256 = vmatpush1.bf16.msra.mxu0 %v2340
  %3257 = vmatprep.subr.bf16.mxu0 %v2349
  %3258 = vmatpush1.bf16.msra.mxu0 %v2348
  %3259 = vmatprep.subr.bf16.mxu0 %v2357
  %3260 = vmatpush1.bf16.msra.mxu0 %v2356
  %3261 = vmatprep.subr.bf16.mxu0 %v2365
  %3262 = vmatpush1.bf16.msra.mxu0 %v2364
  %3263 = vmatprep.subr.bf16.mxu0 %v2373
  %3264 = vmatpush1.bf16.msra.mxu0 %v2372
  %3265 = vmatprep.subr.bf16.mxu0 %v2381
  %3266 = vmatpush1.bf16.msra.mxu0 %v2380
  %3267 = vmatprep.subr.bf16.mxu0 %v2389
  %3268 = vmatpush1.bf16.msra.mxu0 %v2388
  %3269 = vmatprep.subr.bf16.mxu0 %v2397
  %3270 = vmatpush1.bf16.msra.mxu0 %v2396
  %3271 = vmatprep.subr.bf16.mxu0 %v2405
  %3272 = vmatpush1.bf16.msra.mxu0 %v2404
  %3273 = vmatprep.subr.bf16.mxu0 %v2413
  %3274 = vmatpush1.bf16.msra.mxu0 %v2412
  %3275 = vmatprep.subr.bf16.mxu0 %v2421
  %3276 = vmatpush1.bf16.msra.mxu0 %v2420
  %3277 = vmatprep.subr.bf16.mxu0 %v2429
  %3278 = vmatpush1.bf16.msra.mxu0 %v2428
  %3279 = vmatprep.mubr.bf16.mxu0 %v631
  %3280 = vmatmul.mubr.bf16.gmra.mrb[0].mxu0 %v630
  %v3281 = vpop.f32.mrb[0].mxu0
  %v3282 = vadd.f32 %v3239, %v3281
  %v3283 = vpop.f32.mrb[0].mxu0
  %v3284 = vadd.f32 %v3241, %v3283
  %v3285 = vpop.f32.mrb[0].mxu0
  %v3286 = vadd.f32 %v3243, %v3285
  %v3287 = vpop.f32.mrb[0].mxu0
  %v3288 = vadd.f32 %v3245, %v3287
  %3289 = vdwg.mxu0
  %3290 = vmatprep.subr.bf16.mxu0 %v2437
  %3291 = vmatpush1.bf16.msra.mxu0 %v2436
  %3292 = vmatprep.subr.bf16.mxu0 %v2445
  %3293 = vmatpush1.bf16.msra.mxu0 %v2444
  %3294 = vmatprep.subr.bf16.mxu0 %v2453
  %3295 = vmatpush1.bf16.msra.mxu0 %v2452
  %3296 = vmatprep.subr.bf16.mxu0 %v2461
  %3297 = vmatpush1.bf16.msra.mxu0 %v2460
  %3298 = vmatprep.subr.bf16.mxu0 %v2469
  %3299 = vmatpush1.bf16.msra.mxu0 %v2468
  %3300 = vmatprep.subr.bf16.mxu0 %v2477
  %3301 = vmatpush1.bf16.msra.mxu0 %v2476
  %3302 = vmatprep.subr.bf16.mxu0 %v2485
  %3303 = vmatpush1.bf16.msra.mxu0 %v2484
  %3304 = vmatprep.subr.bf16.mxu0 %v2493
  %3305 = vmatpush1.bf16.msra.mxu0 %v2492
  %3306 = vmatprep.subr.bf16.mxu0 %v2501
  %3307 = vmatpush1.bf16.msra.mxu0 %v2500
  %3308 = vmatprep.subr.bf16.mxu0 %v2509
  %3309 = vmatpush1.bf16.msra.mxu0 %v2508
  %3310 = vmatprep.subr.bf16.mxu0 %v2517
  %3311 = vmatpush1.bf16.msra.mxu0 %v2516
  %3312 = vmatprep.subr.bf16.mxu0 %v2525
  %3313 = vmatpush1.bf16.msra.mxu0 %v2524
  %3314 = vmatprep.subr.bf16.mxu0 %v2533
  %3315 = vmatpush1.bf16.msra.mxu0 %v2532
  %3316 = vmatprep.subr.bf16.mxu0 %v2541
  %3317 = vmatpush1.bf16.msra.mxu0 %v2540
  %3318 = vmatprep.subr.bf16.mxu0 %v2549
  %3319 = vmatpush1.bf16.msra.mxu0 %v2548
  %3320 = vmatprep.subr.bf16.mxu0 %v2557
  %3321 = vmatpush1.bf16.msra.mxu0 %v2556
  %3322 = vmatprep.mubr.bf16.mxu0 %v633
  %3323 = vmatmul.mubr.bf16.gmra.mrb[0].mxu0 %v632
  %v3324 = vpop.f32.mrb[0].mxu0
  %v3325 = vadd.f32 %v3282, %v3324
  %v3326 = vpop.f32.mrb[0].mxu0
  %v3327 = vadd.f32 %v3284, %v3326
  %v3328 = vpop.f32.mrb[0].mxu0
  %v3329 = vadd.f32 %v3286, %v3328
  %v3330 = vpop.f32.mrb[0].mxu0
  %v3331 = vadd.f32 %v3288, %v3330
  %3332 = vdwg.mxu0
  %3333 = vmatprep.subr.bf16.mxu0 %v2565
  %3334 = vmatpush1.bf16.msra.mxu0 %v2564
  %3335 = vmatprep.subr.bf16.mxu0 %v2573
  %3336 = vmatpush1.bf16.msra.mxu0 %v2572
  %3337 = vmatprep.subr.bf16.mxu0 %v2581
  %3338 = vmatpush1.bf16.msra.mxu0 %v2580
  %3339 = vmatprep.subr.bf16.mxu0 %v2589
  %3340 = vmatpush1.bf16.msra.mxu0 %v2588
  %3341 = vmatprep.subr.bf16.mxu0 %v2597
  %3342 = vmatpush1.bf16.msra.mxu0 %v2596
  %3343 = vmatprep.subr.bf16.mxu0 %v2605
  %3344 = vmatpush1.bf16.msra.mxu0 %v2604
  %3345 = vmatprep.subr.bf16.mxu0 %v2613
  %3346 = vmatpush1.bf16.msra.mxu0 %v2612
  %3347 = vmatprep.subr.bf16.mxu0 %v2621
  %3348 = vmatpush1.bf16.msra.mxu0 %v2620
  %3349 = vmatprep.subr.bf16.mxu0 %v2629
  %3350 = vmatpush1.bf16.msra.mxu0 %v2628
  %3351 = vmatprep.subr.bf16.mxu0 %v2637
  %3352 = vmatpush1.bf16.msra.mxu0 %v2636
  %3353 = vmatprep.subr.bf16.mxu0 %v2645
  %3354 = vmatpush1.bf16.msra.mxu0 %v2644
  %3355 = vmatprep.subr.bf16.mxu0 %v2653
  %3356 = vmatpush1.bf16.msra.mxu0 %v2652
  %3357 = vmatprep.subr.bf16.mxu0 %v2661
  %3358 = vmatpush1.bf16.msra.mxu0 %v2660
  %3359 = vmatprep.subr.bf16.mxu0 %v2669
  %3360 = vmatpush1.bf16.msra.mxu0 %v2668
  %3361 = vmatprep.subr.bf16.mxu0 %v2677
  %3362 = vmatpush1.bf16.msra.mxu0 %v2676
  %3363 = vmatprep.subr.bf16.mxu0 %v2685
  %3364 = vmatpush1.bf16.msra.mxu0 %v2684
  %3365 = vmatprep.mubr.bf16.mxu0 %v635
  %3366 = vmatmul.mubr.bf16.gmra.mrb[0].mxu0 %v634
  %v3367 = vpop.f32.mrb[0].mxu0
  %v3368 = vadd.f32 %v3325, %v3367
  %v3369 = vpop.f32.mrb[0].mxu0
  %v3370 = vadd.f32 %v3327, %v3369
  %v3371 = vpop.f32.mrb[0].mxu0
  %v3372 = vadd.f32 %v3329, %v3371
  %v3373 = vpop.f32.mrb[0].mxu0
  %v3374 = vadd.f32 %v3331, %v3373
  %3375 = vdwg.mxu0
  %3376 = vmatprep.subr.bf16.mxu0 %v2183
  %3377 = vmatpush1.bf16.msra.mxu0 %v2182
  %3378 = vmatprep.subr.bf16.mxu0 %v2191
  %3379 = vmatpush1.bf16.msra.mxu0 %v2190
  %3380 = vmatprep.subr.bf16.mxu0 %v2199
  %3381 = vmatpush1.bf16.msra.mxu0 %v2198
  %3382 = vmatprep.subr.bf16.mxu0 %v2207
  %3383 = vmatpush1.bf16.msra.mxu0 %v2206
  %3384 = vmatprep.subr.bf16.mxu0 %v2215
  %3385 = vmatpush1.bf16.msra.mxu0 %v2214
  %3386 = vmatprep.subr.bf16.mxu0 %v2223
  %3387 = vmatpush1.bf16.msra.mxu0 %v2222
  %3388 = vmatprep.subr.bf16.mxu0 %v2231
  %3389 = vmatpush1.bf16.msra.mxu0 %v2230
  %3390 = vmatprep.subr.bf16.mxu0 %v2239
  %3391 = vmatpush1.bf16.msra.mxu0 %v2238
  %3392 = vmatprep.subr.bf16.mxu0 %v2247
  %3393 = vmatpush1.bf16.msra.mxu0 %v2246
  %3394 = vmatprep.subr.bf16.mxu0 %v2255
  %3395 = vmatpush1.bf16.msra.mxu0 %v2254
  %3396 = vmatprep.subr.bf16.mxu0 %v2263
  %3397 = vmatpush1.bf16.msra.mxu0 %v2262
  %3398 = vmatprep.subr.bf16.mxu0 %v2271
  %3399 = vmatpush1.bf16.msra.mxu0 %v2270
  %3400 = vmatprep.subr.bf16.mxu0 %v2279
  %3401 = vmatpush1.bf16.msra.mxu0 %v2278
  %3402 = vmatprep.subr.bf16.mxu0 %v2287
  %3403 = vmatpush1.bf16.msra.mxu0 %v2286
  %3404 = vmatprep.subr.bf16.mxu0 %v2295
  %3405 = vmatpush1.bf16.msra.mxu0 %v2294
  %3406 = vmatprep.subr.bf16.mxu0 %v2303
  %3407 = vmatpush1.bf16.msra.mxu0 %v2302
  %3408 = vmatprep.mubr.bf16.mxu0 %v629
  %3409 = vmatmul.mubr.bf16.gmra.mrb[0].mxu0 %v628
  %v3410 = vpop.f32.mrb[0].mxu0
  %v3411 = vadd.f32 %v575, %v3410
  %v3412 = vpop.f32.mrb[0].mxu0
  %v3413 = vadd.f32 %v579, %v3412
  %v3414 = vpop.f32.mrb[0].mxu0
  %v3415 = vadd.f32 %v575, %v3414
  %v3416 = vpop.f32.mrb[0].mxu0
  %v3417 = vadd.f32 %v579, %v3416
  %3418 = vdwg.mxu0
  %3419 = vmatprep.subr.bf16.mxu0 %v2311
  %3420 = vmatpush1.bf16.msra.mxu0 %v2310
  %3421 = vmatprep.subr.bf16.mxu0 %v2319
  %3422 = vmatpush1.bf16.msra.mxu0 %v2318
  %3423 = vmatprep.subr.bf16.mxu0 %v2327
  %3424 = vmatpush1.bf16.msra.mxu0 %v2326
  %3425 = vmatprep.subr.bf16.mxu0 %v2335
  %3426 = vmatpush1.bf16.msra.mxu0 %v2334
  %3427 = vmatprep.subr.bf16.mxu0 %v2343
  %3428 = vmatpush1.bf16.msra.mxu0 %v2342
  %3429 = vmatprep.subr.bf16.mxu0 %v2351
  %3430 = vmatpush1.bf16.msra.mxu0 %v2350
  %3431 = vmatprep.subr.bf16.mxu0 %v2359
  %3432 = vmatpush1.bf16.msra.mxu0 %v2358
  %3433 = vmatprep.subr.bf16.mxu0 %v2367
  %3434 = vmatpush1.bf16.msra.mxu0 %v2366
  %3435 = vmatprep.subr.bf16.mxu0 %v2375
  %3436 = vmatpush1.bf16.msra.mxu0 %v2374
  %3437 = vmatprep.subr.bf16.mxu0 %v2383
  %3438 = vmatpush1.bf16.msra.mxu0 %v2382
  %3439 = vmatprep.subr.bf16.mxu0 %v2391
  %3440 = vmatpush1.bf16.msra.mxu0 %v2390
  %3441 = vmatprep.subr.bf16.mxu0 %v2399
  %3442 = vmatpush1.bf16.msra.mxu0 %v2398
  %3443 = vmatprep.subr.bf16.mxu0 %v2407
  %3444 = vmatpush1.bf16.msra.mxu0 %v2406
  %3445 = vmatprep.subr.bf16.mxu0 %v2415
  %3446 = vmatpush1.bf16.msra.mxu0 %v2414
  %3447 = vmatprep.subr.bf16.mxu0 %v2423
  %3448 = vmatpush1.bf16.msra.mxu0 %v2422
  %3449 = vmatprep.subr.bf16.mxu0 %v2431
  %3450 = vmatpush1.bf16.msra.mxu0 %v2430
  %3451 = vmatprep.mubr.bf16.mxu0 %v631
  %3452 = vmatmul.mubr.bf16.gmra.mrb[0].mxu0 %v630
  %v3453 = vpop.f32.mrb[0].mxu0
  %v3454 = vadd.f32 %v3411, %v3453
  %v3455 = vpop.f32.mrb[0].mxu0
  %v3456 = vadd.f32 %v3413, %v3455
  %v3457 = vpop.f32.mrb[0].mxu0
  %v3458 = vadd.f32 %v3415, %v3457
  %v3459 = vpop.f32.mrb[0].mxu0
  %v3460 = vadd.f32 %v3417, %v3459
  %3461 = vdwg.mxu0
  %3462 = vmatprep.subr.bf16.mxu0 %v2439
  %3463 = vmatpush1.bf16.msra.mxu0 %v2438
  %3464 = vmatprep.subr.bf16.mxu0 %v2447
  %3465 = vmatpush1.bf16.msra.mxu0 %v2446
  %3466 = vmatprep.subr.bf16.mxu0 %v2455
  %3467 = vmatpush1.bf16.msra.mxu0 %v2454
  %3468 = vmatprep.subr.bf16.mxu0 %v2463
  %3469 = vmatpush1.bf16.msra.mxu0 %v2462
  %3470 = vmatprep.subr.bf16.mxu0 %v2471
  %3471 = vmatpush1.bf16.msra.mxu0 %v2470
  %3472 = vmatprep.subr.bf16.mxu0 %v2479
  %3473 = vmatpush1.bf16.msra.mxu0 %v2478
  %3474 = vmatprep.subr.bf16.mxu0 %v2487
  %3475 = vmatpush1.bf16.msra.mxu0 %v2486
  %3476 = vmatprep.subr.bf16.mxu0 %v2495
  %3477 = vmatpush1.bf16.msra.mxu0 %v2494
  %3478 = vmatprep.subr.bf16.mxu0 %v2503
  %3479 = vmatpush1.bf16.msra.mxu0 %v2502
  %3480 = vmatprep.subr.bf16.mxu0 %v2511
  %3481 = vmatpush1.bf16.msra.mxu0 %v2510
  %3482 = vmatprep.subr.bf16.mxu0 %v2519
  %3483 = vmatpush1.bf16.msra.mxu0 %v2518
  %3484 = vmatprep.subr.bf16.mxu0 %v2527
  %3485 = vmatpush1.bf16.msra.mxu0 %v2526
  %3486 = vmatprep.subr.bf16.mxu0 %v2535
  %3487 = vmatpush1.bf16.msra.mxu0 %v2534
  %3488 = vmatprep.subr.bf16.mxu0 %v2543
  %3489 = vmatpush1.bf16.msra.mxu0 %v2542
  %3490 = vmatprep.subr.bf16.mxu0 %v2551
  %3491 = vmatpush1.bf16.msra.mxu0 %v2550
  %3492 = vmatprep.subr.bf16.mxu0 %v2559
  %3493 = vmatpush1.bf16.msra.mxu0 %v2558
  %3494 = vmatprep.mubr.bf16.mxu0 %v633
  %3495 = vmatmul.mubr.bf16.gmra.mrb[0].mxu0 %v632
  %v3496 = vpop.f32.mrb[0].mxu0
  %v3497 = vadd.f32 %v3454, %v3496
  %v3498 = vpop.f32.mrb[0].mxu0
  %v3499 = vadd.f32 %v3456, %v3498
  %v3500 = vpop.f32.mrb[0].mxu0
  %v3501 = vadd.f32 %v3458, %v3500
  %v3502 = vpop.f32.mrb[0].mxu0
  %v3503 = vadd.f32 %v3460, %v3502
  %3504 = vdwg.mxu0
  %3505 = vmatprep.subr.bf16.mxu0 %v2567
  %3506 = vmatpush1.bf16.msra.mxu0 %v2566
  %3507 = vmatprep.subr.bf16.mxu0 %v2575
  %3508 = vmatpush1.bf16.msra.mxu0 %v2574
  %3509 = vmatprep.subr.bf16.mxu0 %v2583
  %3510 = vmatpush1.bf16.msra.mxu0 %v2582
  %3511 = vmatprep.subr.bf16.mxu0 %v2591
  %3512 = vmatpush1.bf16.msra.mxu0 %v2590
  %3513 = vmatprep.subr.bf16.mxu0 %v2599
  %3514 = vmatpush1.bf16.msra.mxu0 %v2598
  %3515 = vmatprep.subr.bf16.mxu0 %v2607
  %3516 = vmatpush1.bf16.msra.mxu0 %v2606
  %3517 = vmatprep.subr.bf16.mxu0 %v2615
  %3518 = vmatpush1.bf16.msra.mxu0 %v2614
  %3519 = vmatprep.subr.bf16.mxu0 %v2623
  %3520 = vmatpush1.bf16.msra.mxu0 %v2622
  %3521 = vmatprep.subr.bf16.mxu0 %v2631
  %3522 = vmatpush1.bf16.msra.mxu0 %v2630
  %3523 = vmatprep.subr.bf16.mxu0 %v2639
  %3524 = vmatpush1.bf16.msra.mxu0 %v2638
  %3525 = vmatprep.subr.bf16.mxu0 %v2647
  %3526 = vmatpush1.bf16.msra.mxu0 %v2646
  %3527 = vmatprep.subr.bf16.mxu0 %v2655
  %3528 = vmatpush1.bf16.msra.mxu0 %v2654
  %3529 = vmatprep.subr.bf16.mxu0 %v2663
  %3530 = vmatpush1.bf16.msra.mxu0 %v2662
  %3531 = vmatprep.subr.bf16.mxu0 %v2671
  %3532 = vmatpush1.bf16.msra.mxu0 %v2670
  %3533 = vmatprep.subr.bf16.mxu0 %v2679
  %3534 = vmatpush1.bf16.msra.mxu0 %v2678
  %3535 = vmatprep.subr.bf16.mxu0 %v2687
  %3536 = vmatpush1.bf16.msra.mxu0 %v2686
  %3537 = vmatprep.mubr.bf16.mxu0 %v635
  %3538 = vmatmul.mubr.bf16.gmra.mrb[0].mxu0 %v634
  %v3539 = vpop.f32.mrb[0].mxu0
  %v3540 = vadd.f32 %v3497, %v3539
  %v3541 = vpop.f32.mrb[0].mxu0
  %v3542 = vadd.f32 %v3499, %v3541
  %v3543 = vpop.f32.mrb[0].mxu0
  %v3544 = vadd.f32 %v3501, %v3543
  %v3545 = vpop.f32.mrb[0].mxu0
  %v3546 = vadd.f32 %v3503, %v3545
  %3547 = vdwg.mxu0
  %3548 = vmatprep.subr.bf16.mxu0 %v2185
  %3549 = vmatpush1.bf16.msra.mxu0 %v2184
  %3550 = vmatprep.subr.bf16.mxu0 %v2193
  %3551 = vmatpush1.bf16.msra.mxu0 %v2192
  %3552 = vmatprep.subr.bf16.mxu0 %v2201
  %3553 = vmatpush1.bf16.msra.mxu0 %v2200
  %3554 = vmatprep.subr.bf16.mxu0 %v2209
  %3555 = vmatpush1.bf16.msra.mxu0 %v2208
  %3556 = vmatprep.subr.bf16.mxu0 %v2217
  %3557 = vmatpush1.bf16.msra.mxu0 %v2216
  %3558 = vmatprep.subr.bf16.mxu0 %v2225
  %3559 = vmatpush1.bf16.msra.mxu0 %v2224
  %3560 = vmatprep.subr.bf16.mxu0 %v2233
  %3561 = vmatpush1.bf16.msra.mxu0 %v2232
  %3562 = vmatprep.subr.bf16.mxu0 %v2241
  %3563 = vmatpush1.bf16.msra.mxu0 %v2240
  %3564 = vmatprep.subr.bf16.mxu0 %v2249
  %3565 = vmatpush1.bf16.msra.mxu0 %v2248
  %3566 = vmatprep.subr.bf16.mxu0 %v2257
  %3567 = vmatpush1.bf16.msra.mxu0 %v2256
  %3568 = vmatprep.subr.bf16.mxu0 %v2265
  %3569 = vmatpush1.bf16.msra.mxu0 %v2264
  %3570 = vmatprep.subr.bf16.mxu0 %v2273
  %3571 = vmatpush1.bf16.msra.mxu0 %v2272
  %3572 = vmatprep.subr.bf16.mxu0 %v2281
  %3573 = vmatpush1.bf16.msra.mxu0 %v2280
  %3574 = vmatprep.subr.bf16.mxu0 %v2289
  %3575 = vmatpush1.bf16.msra.mxu0 %v2288
  %3576 = vmatprep.subr.bf16.mxu0 %v2297
  %3577 = vmatpush1.bf16.msra.mxu0 %v2296
  %3578 = vmatprep.subr.bf16.mxu0 %v2305
  %3579 = vmatpush1.bf16.msra.mxu0 %v2304
  %3580 = vmatprep.mubr.bf16.mxu0 %v629
  %3581 = vmatmul.mubr.bf16.gmra.mrb[0].mxu0 %v628
  %v3582 = vpop.f32.mrb[0].mxu0
  %v3583 = vadd.f32 %v583, %v3582
  %v3584 = vpop.f32.mrb[0].mxu0
  %v3585 = vadd.f32 %v587, %v3584
  %v3586 = vpop.f32.mrb[0].mxu0
  %v3587 = vadd.f32 %v583, %v3586
  %v3588 = vpop.f32.mrb[0].mxu0
  %v3589 = vadd.f32 %v587, %v3588
  %3590 = vdwg.mxu0
  %3591 = vmatprep.subr.bf16.mxu0 %v2313
  %3592 = vmatpush1.bf16.msra.mxu0 %v2312
  %3593 = vmatprep.subr.bf16.mxu0 %v2321
  %3594 = vmatpush1.bf16.msra.mxu0 %v2320
  %3595 = vmatprep.subr.bf16.mxu0 %v2329
  %3596 = vmatpush1.bf16.msra.mxu0 %v2328
  %3597 = vmatprep.subr.bf16.mxu0 %v2337
  %3598 = vmatpush1.bf16.msra.mxu0 %v2336
  %3599 = vmatprep.subr.bf16.mxu0 %v2345
  %3600 = vmatpush1.bf16.msra.mxu0 %v2344
  %3601 = vmatprep.subr.bf16.mxu0 %v2353
  %3602 = vmatpush1.bf16.msra.mxu0 %v2352
  %3603 = vmatprep.subr.bf16.mxu0 %v2361
  %3604 = vmatpush1.bf16.msra.mxu0 %v2360
  %3605 = vmatprep.subr.bf16.mxu0 %v2369
  %3606 = vmatpush1.bf16.msra.mxu0 %v2368
  %3607 = vmatprep.subr.bf16.mxu0 %v2377
  %3608 = vmatpush1.bf16.msra.mxu0 %v2376
  %3609 = vmatprep.subr.bf16.mxu0 %v2385
  %3610 = vmatpush1.bf16.msra.mxu0 %v2384
  %3611 = vmatprep.subr.bf16.mxu0 %v2393
  %3612 = vmatpush1.bf16.msra.mxu0 %v2392
  %3613 = vmatprep.subr.bf16.mxu0 %v2401
  %3614 = vmatpush1.bf16.msra.mxu0 %v2400
  %3615 = vmatprep.subr.bf16.mxu0 %v2409
  %3616 = vmatpush1.bf16.msra.mxu0 %v2408
  %3617 = vmatprep.subr.bf16.mxu0 %v2417
  %3618 = vmatpush1.bf16.msra.mxu0 %v2416
  %3619 = vmatprep.subr.bf16.mxu0 %v2425
  %3620 = vmatpush1.bf16.msra.mxu0 %v2424
  %3621 = vmatprep.subr.bf16.mxu0 %v2433
  %3622 = vmatpush1.bf16.msra.mxu0 %v2432
  %3623 = vmatprep.mubr.bf16.mxu0 %v631
  %3624 = vmatmul.mubr.bf16.gmra.mrb[0].mxu0 %v630
  %v3625 = vpop.f32.mrb[0].mxu0
  %v3626 = vadd.f32 %v3583, %v3625
  %v3627 = vpop.f32.mrb[0].mxu0
  %v3628 = vadd.f32 %v3585, %v3627
  %v3629 = vpop.f32.mrb[0].mxu0
  %v3630 = vadd.f32 %v3587, %v3629
  %v3631 = vpop.f32.mrb[0].mxu0
  %v3632 = vadd.f32 %v3589, %v3631
  %3633 = vdwg.mxu0
  %3634 = vmatprep.subr.bf16.mxu0 %v2441
  %3635 = vmatpush1.bf16.msra.mxu0 %v2440
  %3636 = vmatprep.subr.bf16.mxu0 %v2449
  %3637 = vmatpush1.bf16.msra.mxu0 %v2448
  %3638 = vmatprep.subr.bf16.mxu0 %v2457
  %3639 = vmatpush1.bf16.msra.mxu0 %v2456
  %3640 = vmatprep.subr.bf16.mxu0 %v2465
  %3641 = vmatpush1.bf16.msra.mxu0 %v2464
  %3642 = vmatprep.subr.bf16.mxu0 %v2473
  %3643 = vmatpush1.bf16.msra.mxu0 %v2472
  %3644 = vmatprep.subr.bf16.mxu0 %v2481
  %3645 = vmatpush1.bf16.msra.mxu0 %v2480
  %3646 = vmatprep.subr.bf16.mxu0 %v2489
  %3647 = vmatpush1.bf16.msra.mxu0 %v2488
  %3648 = vmatprep.subr.bf16.mxu0 %v2497
  %3649 = vmatpush1.bf16.msra.mxu0 %v2496
  %3650 = vmatprep.subr.bf16.mxu0 %v2505
  %3651 = vmatpush1.bf16.msra.mxu0 %v2504
  %3652 = vmatprep.subr.bf16.mxu0 %v2513
  %3653 = vmatpush1.bf16.msra.mxu0 %v2512
  %3654 = vmatprep.subr.bf16.mxu0 %v2521
  %3655 = vmatpush1.bf16.msra.mxu0 %v2520
  %3656 = vmatprep.subr.bf16.mxu0 %v2529
  %3657 = vmatpush1.bf16.msra.mxu0 %v2528
  %3658 = vmatprep.subr.bf16.mxu0 %v2537
  %3659 = vmatpush1.bf16.msra.mxu0 %v2536
  %3660 = vmatprep.subr.bf16.mxu0 %v2545
  %3661 = vmatpush1.bf16.msra.mxu0 %v2544
  %3662 = vmatprep.subr.bf16.mxu0 %v2553
  %3663 = vmatpush1.bf16.msra.mxu0 %v2552
  %3664 = vmatprep.subr.bf16.mxu0 %v2561
  %3665 = vmatpush1.bf16.msra.mxu0 %v2560
  %3666 = vmatprep.mubr.bf16.mxu0 %v633
  %3667 = vmatmul.mubr.bf16.gmra.mrb[0].mxu0 %v632
  %v3668 = vpop.f32.mrb[0].mxu0
  %v3669 = vadd.f32 %v3626, %v3668
  %v3670 = vpop.f32.mrb[0].mxu0
  %v3671 = vadd.f32 %v3628, %v3670
  %v3672 = vpop.f32.mrb[0].mxu0
  %v3673 = vadd.f32 %v3630, %v3672
  %v3674 = vpop.f32.mrb[0].mxu0
  %v3675 = vadd.f32 %v3632, %v3674
  %3676 = vdwg.mxu0
  %3677 = vmatprep.subr.bf16.mxu0 %v2569
  %3678 = vmatpush1.bf16.msra.mxu0 %v2568
  %3679 = vmatprep.subr.bf16.mxu0 %v2577
  %3680 = vmatpush1.bf16.msra.mxu0 %v2576
  %3681 = vmatprep.subr.bf16.mxu0 %v2585
  %3682 = vmatpush1.bf16.msra.mxu0 %v2584
  %3683 = vmatprep.subr.bf16.mxu0 %v2593
  %3684 = vmatpush1.bf16.msra.mxu0 %v2592
  %3685 = vmatprep.subr.bf16.mxu0 %v2601
  %3686 = vmatpush1.bf16.msra.mxu0 %v2600
  %3687 = vmatprep.subr.bf16.mxu0 %v2609
  %3688 = vmatpush1.bf16.msra.mxu0 %v2608
  %3689 = vmatprep.subr.bf16.mxu0 %v2617
  %3690 = vmatpush1.bf16.msra.mxu0 %v2616
  %3691 = vmatprep.subr.bf16.mxu0 %v2625
  %3692 = vmatpush1.bf16.msra.mxu0 %v2624
  %3693 = vmatprep.subr.bf16.mxu0 %v2633
  %3694 = vmatpush1.bf16.msra.mxu0 %v2632
  %3695 = vmatprep.subr.bf16.mxu0 %v2641
  %3696 = vmatpush1.bf16.msra.mxu0 %v2640
  %3697 = vmatprep.subr.bf16.mxu0 %v2649
  %3698 = vmatpush1.bf16.msra.mxu0 %v2648
  %3699 = vmatprep.subr.bf16.mxu0 %v2657
  %3700 = vmatpush1.bf16.msra.mxu0 %v2656
  %3701 = vmatprep.subr.bf16.mxu0 %v2665
  %3702 = vmatpush1.bf16.msra.mxu0 %v2664
  %3703 = vmatprep.subr.bf16.mxu0 %v2673
  %3704 = vmatpush1.bf16.msra.mxu0 %v2672
  %3705 = vmatprep.subr.bf16.mxu0 %v2681
  %3706 = vmatpush1.bf16.msra.mxu0 %v2680
  %3707 = vmatprep.subr.bf16.mxu0 %v2689
  %3708 = vmatpush1.bf16.msra.mxu0 %v2688
  %3709 = vmatprep.mubr.bf16.mxu0 %v635
  %3710 = vmatmul.mubr.bf16.gmra.mrb[0].mxu0 %v634
  %v3711 = vpop.f32.mrb[0].mxu0
  %v3712 = vadd.f32 %v3669, %v3711
  %v3713 = vpop.f32.mrb[0].mxu0
  %v3714 = vadd.f32 %v3671, %v3713
  %v3715 = vpop.f32.mrb[0].mxu0
  %v3716 = vadd.f32 %v3673, %v3715
  %v3717 = vpop.f32.mrb[0].mxu0
  %v3718 = vadd.f32 %v3675, %v3717
  %3719 = vdwg.mxu0
  %3720 = vmatprep.subr.bf16.mxu0 %v2187
  %3721 = vmatpush1.bf16.msra.mxu0 %v2186
  %3722 = vmatprep.subr.bf16.mxu0 %v2195
  %3723 = vmatpush1.bf16.msra.mxu0 %v2194
  %3724 = vmatprep.subr.bf16.mxu0 %v2203
  %3725 = vmatpush1.bf16.msra.mxu0 %v2202
  %3726 = vmatprep.subr.bf16.mxu0 %v2211
  %3727 = vmatpush1.bf16.msra.mxu0 %v2210
  %3728 = vmatprep.subr.bf16.mxu0 %v2219
  %3729 = vmatpush1.bf16.msra.mxu0 %v2218
  %3730 = vmatprep.subr.bf16.mxu0 %v2227
  %3731 = vmatpush1.bf16.msra.mxu0 %v2226
  %3732 = vmatprep.subr.bf16.mxu0 %v2235
  %3733 = vmatpush1.bf16.msra.mxu0 %v2234
  %3734 = vmatprep.subr.bf16.mxu0 %v2243
  %3735 = vmatpush1.bf16.msra.mxu0 %v2242
  %3736 = vmatprep.subr.bf16.mxu0 %v2251
  %3737 = vmatpush1.bf16.msra.mxu0 %v2250
  %3738 = vmatprep.subr.bf16.mxu0 %v2259
  %3739 = vmatpush1.bf16.msra.mxu0 %v2258
  %3740 = vmatprep.subr.bf16.mxu0 %v2267
  %3741 = vmatpush1.bf16.msra.mxu0 %v2266
  %3742 = vmatprep.subr.bf16.mxu0 %v2275
  %3743 = vmatpush1.bf16.msra.mxu0 %v2274
  %3744 = vmatprep.subr.bf16.mxu0 %v2283
  %3745 = vmatpush1.bf16.msra.mxu0 %v2282
  %3746 = vmatprep.subr.bf16.mxu0 %v2291
  %3747 = vmatpush1.bf16.msra.mxu0 %v2290
  %3748 = vmatprep.subr.bf16.mxu0 %v2299
  %3749 = vmatpush1.bf16.msra.mxu0 %v2298
  %3750 = vmatprep.subr.bf16.mxu0 %v2307
  %3751 = vmatpush1.bf16.msra.mxu0 %v2306
  %3752 = vmatprep.mubr.bf16.mxu0 %v629
  %3753 = vmatmul.mubr.bf16.gmra.mrb[0].mxu0 %v628
  %v3754 = vpop.f32.mrb[0].mxu0
  %v3755 = vadd.f32 %v591, %v3754
  %v3756 = vpop.f32.mrb[0].mxu0
  %v3757 = vadd.f32 %v595, %v3756
  %v3758 = vpop.f32.mrb[0].mxu0
  %v3759 = vadd.f32 %v591, %v3758
  %v3760 = vpop.f32.mrb[0].mxu0
  %v3761 = vadd.f32 %v595, %v3760
  %3762 = vdwg.mxu0
  %3763 = vmatprep.subr.bf16.mxu0 %v2315
  %3764 = vmatpush1.bf16.msra.mxu0 %v2314
  %3765 = vmatprep.subr.bf16.mxu0 %v2323
  %3766 = vmatpush1.bf16.msra.mxu0 %v2322
  %3767 = vmatprep.subr.bf16.mxu0 %v2331
  %3768 = vmatpush1.bf16.msra.mxu0 %v2330
  %3769 = vmatprep.subr.bf16.mxu0 %v2339
  %3770 = vmatpush1.bf16.msra.mxu0 %v2338
  %3771 = vmatprep.subr.bf16.mxu0 %v2347
  %3772 = vmatpush1.bf16.msra.mxu0 %v2346
  %3773 = vmatprep.subr.bf16.mxu0 %v2355
  %3774 = vmatpush1.bf16.msra.mxu0 %v2354
  %3775 = vmatprep.subr.bf16.mxu0 %v2363
  %3776 = vmatpush1.bf16.msra.mxu0 %v2362
  %3777 = vmatprep.subr.bf16.mxu0 %v2371
  %3778 = vmatpush1.bf16.msra.mxu0 %v2370
  %3779 = vmatprep.subr.bf16.mxu0 %v2379
  %3780 = vmatpush1.bf16.msra.mxu0 %v2378
  %3781 = vmatprep.subr.bf16.mxu0 %v2387
  %3782 = vmatpush1.bf16.msra.mxu0 %v2386
  %3783 = vmatprep.subr.bf16.mxu0 %v2395
  %3784 = vmatpush1.bf16.msra.mxu0 %v2394
  %3785 = vmatprep.subr.bf16.mxu0 %v2403
  %3786 = vmatpush1.bf16.msra.mxu0 %v2402
  %3787 = vmatprep.subr.bf16.mxu0 %v2411
  %3788 = vmatpush1.bf16.msra.mxu0 %v2410
  %3789 = vmatprep.subr.bf16.mxu0 %v2419
  %3790 = vmatpush1.bf16.msra.mxu0 %v2418
  %3791 = vmatprep.subr.bf16.mxu0 %v2427
  %3792 = vmatpush1.bf16.msra.mxu0 %v2426
  %3793 = vmatprep.subr.bf16.mxu0 %v2435
  %3794 = vmatpush1.bf16.msra.mxu0 %v2434
  %3795 = vmatprep.mubr.bf16.mxu0 %v631
  %3796 = vmatmul.mubr.bf16.gmra.mrb[0].mxu0 %v630
  %v3797 = vpop.f32.mrb[0].mxu0
  %v3798 = vadd.f32 %v3755, %v3797
  %v3799 = vpop.f32.mrb[0].mxu0
  %v3800 = vadd.f32 %v3757, %v3799
  %v3801 = vpop.f32.mrb[0].mxu0
  %v3802 = vadd.f32 %v3759, %v3801
  %v3803 = vpop.f32.mrb[0].mxu0
  %v3804 = vadd.f32 %v3761, %v3803
  %3805 = vdwg.mxu0
  %3806 = vmatprep.subr.bf16.mxu0 %v2443
  %3807 = vmatpush1.bf16.msra.mxu0 %v2442
  %3808 = vmatprep.subr.bf16.mxu0 %v2451
  %3809 = vmatpush1.bf16.msra.mxu0 %v2450
  %3810 = vmatprep.subr.bf16.mxu0 %v2459
  %3811 = vmatpush1.bf16.msra.mxu0 %v2458
  %3812 = vmatprep.subr.bf16.mxu0 %v2467
  %3813 = vmatpush1.bf16.msra.mxu0 %v2466
  %3814 = vmatprep.subr.bf16.mxu0 %v2475
  %3815 = vmatpush1.bf16.msra.mxu0 %v2474
  %3816 = vmatprep.subr.bf16.mxu0 %v2483
  %3817 = vmatpush1.bf16.msra.mxu0 %v2482
  %3818 = vmatprep.subr.bf16.mxu0 %v2491
  %3819 = vmatpush1.bf16.msra.mxu0 %v2490
  %3820 = vmatprep.subr.bf16.mxu0 %v2499
  %3821 = vmatpush1.bf16.msra.mxu0 %v2498
  %3822 = vmatprep.subr.bf16.mxu0 %v2507
  %3823 = vmatpush1.bf16.msra.mxu0 %v2506
  %3824 = vmatprep.subr.bf16.mxu0 %v2515
  %3825 = vmatpush1.bf16.msra.mxu0 %v2514
  %3826 = vmatprep.subr.bf16.mxu0 %v2523
  %3827 = vmatpush1.bf16.msra.mxu0 %v2522
  %3828 = vmatprep.subr.bf16.mxu0 %v2531
  %3829 = vmatpush1.bf16.msra.mxu0 %v2530
  %3830 = vmatprep.subr.bf16.mxu0 %v2539
  %3831 = vmatpush1.bf16.msra.mxu0 %v2538
  %3832 = vmatprep.subr.bf16.mxu0 %v2547
  %3833 = vmatpush1.bf16.msra.mxu0 %v2546
  %3834 = vmatprep.subr.bf16.mxu0 %v2555
  %3835 = vmatpush1.bf16.msra.mxu0 %v2554
  %3836 = vmatprep.subr.bf16.mxu0 %v2563
  %3837 = vmatpush1.bf16.msra.mxu0 %v2562
  %3838 = vmatprep.mubr.bf16.mxu0 %v633
  %3839 = vmatmul.mubr.bf16.gmra.mrb[0].mxu0 %v632
  %v3840 = vpop.f32.mrb[0].mxu0
  %v3841 = vadd.f32 %v3798, %v3840
  %v3842 = vpop.f32.mrb[0].mxu0
  %v3843 = vadd.f32 %v3800, %v3842
  %v3844 = vpop.f32.mrb[0].mxu0
  %v3845 = vadd.f32 %v3802, %v3844
  %v3846 = vpop.f32.mrb[0].mxu0
  %v3847 = vadd.f32 %v3804, %v3846
  %3848 = vdwg.mxu0
  %3849 = vmatprep.subr.bf16.mxu0 %v2571
  %3850 = vmatpush1.bf16.msra.mxu0 %v2570
  %3851 = vmatprep.subr.bf16.mxu0 %v2579
  %3852 = vmatpush1.bf16.msra.mxu0 %v2578
  %3853 = vmatprep.subr.bf16.mxu0 %v2587
  %3854 = vmatpush1.bf16.msra.mxu0 %v2586
  %3855 = vmatprep.subr.bf16.mxu0 %v2595
  %3856 = vmatpush1.bf16.msra.mxu0 %v2594
  %3857 = vmatprep.subr.bf16.mxu0 %v2603
  %3858 = vmatpush1.bf16.msra.mxu0 %v2602
  %3859 = vmatprep.subr.bf16.mxu0 %v2611
  %3860 = vmatpush1.bf16.msra.mxu0 %v2610
  %3861 = vmatprep.subr.bf16.mxu0 %v2619
  %3862 = vmatpush1.bf16.msra.mxu0 %v2618
  %3863 = vmatprep.subr.bf16.mxu0 %v2627
  %3864 = vmatpush1.bf16.msra.mxu0 %v2626
  %3865 = vmatprep.subr.bf16.mxu0 %v2635
  %3866 = vmatpush1.bf16.msra.mxu0 %v2634
  %3867 = vmatprep.subr.bf16.mxu0 %v2643
  %3868 = vmatpush1.bf16.msra.mxu0 %v2642
  %3869 = vmatprep.subr.bf16.mxu0 %v2651
  %3870 = vmatpush1.bf16.msra.mxu0 %v2650
  %3871 = vmatprep.subr.bf16.mxu0 %v2659
  %3872 = vmatpush1.bf16.msra.mxu0 %v2658
  %3873 = vmatprep.subr.bf16.mxu0 %v2667
  %3874 = vmatpush1.bf16.msra.mxu0 %v2666
  %3875 = vmatprep.subr.bf16.mxu0 %v2675
  %3876 = vmatpush1.bf16.msra.mxu0 %v2674
  %3877 = vmatprep.subr.bf16.mxu0 %v2683
  %3878 = vmatpush1.bf16.msra.mxu0 %v2682
  %3879 = vmatprep.subr.bf16.mxu0 %v2691
  %3880 = vmatpush1.bf16.msra.mxu0 %v2690
  %3881 = vmatprep.mubr.bf16.mxu0 %v635
  %3882 = vmatmul.mubr.bf16.gmra.mrb[0].mxu0 %v634
  %v3883 = vpop.f32.mrb[0].mxu0
  %v3884 = vadd.f32 %v3841, %v3883
  %v3885 = vpop.f32.mrb[0].mxu0
  %v3886 = vadd.f32 %v3843, %v3885
  %v3887 = vpop.f32.mrb[0].mxu0
  %v3888 = vadd.f32 %v3845, %v3887
  %v3889 = vpop.f32.mrb[0].mxu0
  %v3890 = vadd.f32 %v3847, %v3889
  %3891 = vdwg.mxu0
  %v3892 = vpack.c.bf16 %v3372, %v3368
  %v3893 = vpack.c.bf16 %v3374, %v3370
  %v3894 = vpack.c.bf16 %v3544, %v3540
  %v3895 = vpack.c.bf16 %v3546, %v3542
  %v3896 = vpack.c.bf16 %v3716, %v3712
  %v3897 = vpack.c.bf16 %v3718, %v3714
  %v3898 = vpack.c.bf16 %v3888, %v3884
  %v3899 = vpack.c.bf16 %v3890, %v3886
  %v3900 = vld [vmem:[%s3] sm:$0xff]
  %v3901 = vld [vmem:[%s3 + $0x8] sm:$0xff]
  %v3902 = vld [vmem:[%s3 + $0x10] sm:$0xff]
  %v3903 = vld [vmem:[%s3 + $0x18] sm:$0xff]
  %v3904 = vld [vmem:[%s3 + $0x20] sm:$0xff]
  %v3905 = vld [vmem:[%s3 + $0x28] sm:$0xff]
  %v3906 = vld [vmem:[%s3 + $0x30] sm:$0xff]
  %v3907 = vld [vmem:[%s3 + $0x38] sm:$0xff]
  %v3908 = vld [vmem:[%s3 + $0x40] sm:$0xff]
  %v3909 = vld [vmem:[%s3 + $0x48] sm:$0xff]
  %v3910 = vld [vmem:[%s3 + $0x50] sm:$0xff]
  %v3911 = vld [vmem:[%s3 + $0x58] sm:$0xff]
  %v3912 = vld [vmem:[%s3 + $0x60] sm:$0xff]
  %v3913 = vld [vmem:[%s3 + $0x68] sm:$0xff]
  %v3914 = vld [vmem:[%s3 + $0x70] sm:$0xff]
  %v3915 = vld [vmem:[%s3 + $0x78] sm:$0xff]
  %v3916 = vld [vmem:[%s3 + $0x80] sm:$0xff]
  %v3917 = vld [vmem:[%s3 + $0x88] sm:$0xff]
  %v3918 = vld [vmem:[%s3 + $0x90] sm:$0xff]
  %v3919 = vld [vmem:[%s3 + $0x98] sm:$0xff]
  %v3920 = vld [vmem:[%s3 + $0xa0] sm:$0xff]
  %v3921 = vld [vmem:[%s3 + $0xa8] sm:$0xff]
  %v3922 = vld [vmem:[%s3 + $0xb0] sm:$0xff]
  %v3923 = vld [vmem:[%s3 + $0xb8] sm:$0xff]
  %v3924 = vld [vmem:[%s3 + $0xc0] sm:$0xff]
  %v3925 = vld [vmem:[%s3 + $0xc8] sm:$0xff]
  %v3926 = vld [vmem:[%s3 + $0xd0] sm:$0xff]
  %v3927 = vld [vmem:[%s3 + $0xd8] sm:$0xff]
  %v3928 = vld [vmem:[%s3 + $0xe0] sm:$0xff]
  %v3929 = vld [vmem:[%s3 + $0xe8] sm:$0xff]
  %v3930 = vld [vmem:[%s3 + $0xf0] sm:$0xff]
  %v3931 = vld [vmem:[%s3 + $0xf8] sm:$0xff]
  %v3932 = vld [vmem:[%s3 + $0x100] sm:$0xff]
  %v3933 = vld [vmem:[%s3 + $0x108] sm:$0xff]
  %v3934 = vld [vmem:[%s3 + $0x110] sm:$0xff]
  %v3935 = vld [vmem:[%s3 + $0x118] sm:$0xff]
  %v3936 = vld [vmem:[%s3 + $0x120] sm:$0xff]
  %v3937 = vld [vmem:[%s3 + $0x128] sm:$0xff]
  %v3938 = vld [vmem:[%s3 + $0x130] sm:$0xff]
  %v3939 = vld [vmem:[%s3 + $0x138] sm:$0xff]
  %v3940 = vld [vmem:[%s3 + $0x140] sm:$0xff]
  %v3941 = vld [vmem:[%s3 + $0x148] sm:$0xff]
  %v3942 = vld [vmem:[%s3 + $0x150] sm:$0xff]
  %v3943 = vld [vmem:[%s3 + $0x158] sm:$0xff]
  %v3944 = vld [vmem:[%s3 + $0x160] sm:$0xff]
  %v3945 = vld [vmem:[%s3 + $0x168] sm:$0xff]
  %v3946 = vld [vmem:[%s3 + $0x170] sm:$0xff]
  %v3947 = vld [vmem:[%s3 + $0x178] sm:$0xff]
  %v3948 = vld [vmem:[%s3 + $0x180] sm:$0xff]
  %v3949 = vld [vmem:[%s3 + $0x188] sm:$0xff]
  %v3950 = vld [vmem:[%s3 + $0x190] sm:$0xff]
  %v3951 = vld [vmem:[%s3 + $0x198] sm:$0xff]
  %v3952 = vld [vmem:[%s3 + $0x1a0] sm:$0xff]
  %v3953 = vld [vmem:[%s3 + $0x1a8] sm:$0xff]
  %v3954 = vld [vmem:[%s3 + $0x1b0] sm:$0xff]
  %v3955 = vld [vmem:[%s3 + $0x1b8] sm:$0xff]
  %v3956 = vld [vmem:[%s3 + $0x1c0] sm:$0xff]
  %v3957 = vld [vmem:[%s3 + $0x1c8] sm:$0xff]
  %v3958 = vld [vmem:[%s3 + $0x1d0] sm:$0xff]
  %v3959 = vld [vmem:[%s3 + $0x1d8] sm:$0xff]
  %v3960 = vld [vmem:[%s3 + $0x1e0] sm:$0xff]
  %v3961 = vld [vmem:[%s3 + $0x1e8] sm:$0xff]
  %v3962 = vld [vmem:[%s3 + $0x1f0] sm:$0xff]
  %v3963 = vld [vmem:[%s3 + $0x1f8] sm:$0xff]
  %v3964 = vld [vmem:[%s3 + $0x200] sm:$0xff]
  %v3965 = vld [vmem:[%s3 + $0x208] sm:$0xff]
  %v3966 = vld [vmem:[%s3 + $0x210] sm:$0xff]
  %v3967 = vld [vmem:[%s3 + $0x218] sm:$0xff]
  %v3968 = vld [vmem:[%s3 + $0x220] sm:$0xff]
  %v3969 = vld [vmem:[%s3 + $0x228] sm:$0xff]
  %v3970 = vld [vmem:[%s3 + $0x230] sm:$0xff]
  %v3971 = vld [vmem:[%s3 + $0x238] sm:$0xff]
  %v3972 = vld [vmem:[%s3 + $0x240] sm:$0xff]
  %v3973 = vld [vmem:[%s3 + $0x248] sm:$0xff]
  %v3974 = vld [vmem:[%s3 + $0x250] sm:$0xff]
  %v3975 = vld [vmem:[%s3 + $0x258] sm:$0xff]
  %v3976 = vld [vmem:[%s3 + $0x260] sm:$0xff]
  %v3977 = vld [vmem:[%s3 + $0x268] sm:$0xff]
  %v3978 = vld [vmem:[%s3 + $0x270] sm:$0xff]
  %v3979 = vld [vmem:[%s3 + $0x278] sm:$0xff]
  %v3980 = vld [vmem:[%s3 + $0x280] sm:$0xff]
  %v3981 = vld [vmem:[%s3 + $0x288] sm:$0xff]
  %v3982 = vld [vmem:[%s3 + $0x290] sm:$0xff]
  %v3983 = vld [vmem:[%s3 + $0x298] sm:$0xff]
  %v3984 = vld [vmem:[%s3 + $0x2a0] sm:$0xff]
  %v3985 = vld [vmem:[%s3 + $0x2a8] sm:$0xff]
  %v3986 = vld [vmem:[%s3 + $0x2b0] sm:$0xff]
  %v3987 = vld [vmem:[%s3 + $0x2b8] sm:$0xff]
  %v3988 = vld [vmem:[%s3 + $0x2c0] sm:$0xff]
  %v3989 = vld [vmem:[%s3 + $0x2c8] sm:$0xff]
  %v3990 = vld [vmem:[%s3 + $0x2d0] sm:$0xff]
  %v3991 = vld [vmem:[%s3 + $0x2d8] sm:$0xff]
  %v3992 = vld [vmem:[%s3 + $0x2e0] sm:$0xff]
  %v3993 = vld [vmem:[%s3 + $0x2e8] sm:$0xff]
  %v3994 = vld [vmem:[%s3 + $0x2f0] sm:$0xff]
  %v3995 = vld [vmem:[%s3 + $0x2f8] sm:$0xff]
  %v3996 = vld [vmem:[%s3 + $0x300] sm:$0xff]
  %v3997 = vld [vmem:[%s3 + $0x308] sm:$0xff]
  %v3998 = vld [vmem:[%s3 + $0x310] sm:$0xff]
  %v3999 = vld [vmem:[%s3 + $0x318] sm:$0xff]
  %v4000 = vld [vmem:[%s3 + $0x320] sm:$0xff]
  %v4001 = vld [vmem:[%s3 + $0x328] sm:$0xff]
  %v4002 = vld [vmem:[%s3 + $0x330] sm:$0xff]
  %v4003 = vld [vmem:[%s3 + $0x338] sm:$0xff]
  %v4004 = vld [vmem:[%s3 + $0x340] sm:$0xff]
  %v4005 = vld [vmem:[%s3 + $0x348] sm:$0xff]
  %v4006 = vld [vmem:[%s3 + $0x350] sm:$0xff]
  %v4007 = vld [vmem:[%s3 + $0x358] sm:$0xff]
  %v4008 = vld [vmem:[%s3 + $0x360] sm:$0xff]
  %v4009 = vld [vmem:[%s3 + $0x368] sm:$0xff]
  %v4010 = vld [vmem:[%s3 + $0x370] sm:$0xff]
  %v4011 = vld [vmem:[%s3 + $0x378] sm:$0xff]
  %v4012 = vld [vmem:[%s3 + $0x380] sm:$0xff]
  %v4013 = vld [vmem:[%s3 + $0x388] sm:$0xff]
  %v4014 = vld [vmem:[%s3 + $0x390] sm:$0xff]
  %v4015 = vld [vmem:[%s3 + $0x398] sm:$0xff]
  %v4016 = vld [vmem:[%s3 + $0x3a0] sm:$0xff]
  %v4017 = vld [vmem:[%s3 + $0x3a8] sm:$0xff]
  %v4018 = vld [vmem:[%s3 + $0x3b0] sm:$0xff]
  %v4019 = vld [vmem:[%s3 + $0x3b8] sm:$0xff]
  %v4020 = vld [vmem:[%s3 + $0x3c0] sm:$0xff]
  %v4021 = vld [vmem:[%s3 + $0x3c8] sm:$0xff]
  %v4022 = vld [vmem:[%s3 + $0x3d0] sm:$0xff]
  %v4023 = vld [vmem:[%s3 + $0x3d8] sm:$0xff]
  %v4024 = vld [vmem:[%s3 + $0x3e0] sm:$0xff]
  %v4025 = vld [vmem:[%s3 + $0x3e8] sm:$0xff]
  %v4026 = vld [vmem:[%s3 + $0x3f0] sm:$0xff]
  %v4027 = vld [vmem:[%s3 + $0x3f8] sm:$0xff]
  %v4028 = vld [vmem:[%s3 + $0x400] sm:$0xff]
  %v4029 = vld [vmem:[%s3 + $0x408] sm:$0xff]
  %v4030 = vld [vmem:[%s3 + $0x410] sm:$0xff]
  %v4031 = vld [vmem:[%s3 + $0x418] sm:$0xff]
  %v4032 = vld [vmem:[%s3 + $0x420] sm:$0xff]
  %v4033 = vld [vmem:[%s3 + $0x428] sm:$0xff]
  %v4034 = vld [vmem:[%s3 + $0x430] sm:$0xff]
  %v4035 = vld [vmem:[%s3 + $0x438] sm:$0xff]
  %v4036 = vld [vmem:[%s3 + $0x440] sm:$0xff]
  %v4037 = vld [vmem:[%s3 + $0x448] sm:$0xff]
  %v4038 = vld [vmem:[%s3 + $0x450] sm:$0xff]
  %v4039 = vld [vmem:[%s3 + $0x458] sm:$0xff]
  %v4040 = vld [vmem:[%s3 + $0x460] sm:$0xff]
  %v4041 = vld [vmem:[%s3 + $0x468] sm:$0xff]
  %v4042 = vld [vmem:[%s3 + $0x470] sm:$0xff]
  %v4043 = vld [vmem:[%s3 + $0x478] sm:$0xff]
  %v4044 = vld [vmem:[%s3 + $0x480] sm:$0xff]
  %v4045 = vld [vmem:[%s3 + $0x488] sm:$0xff]
  %v4046 = vld [vmem:[%s3 + $0x490] sm:$0xff]
  %v4047 = vld [vmem:[%s3 + $0x498] sm:$0xff]
  %v4048 = vld [vmem:[%s3 + $0x4a0] sm:$0xff]
  %v4049 = vld [vmem:[%s3 + $0x4a8] sm:$0xff]
  %v4050 = vld [vmem:[%s3 + $0x4b0] sm:$0xff]
  %v4051 = vld [vmem:[%s3 + $0x4b8] sm:$0xff]
  %v4052 = vld [vmem:[%s3 + $0x4c0] sm:$0xff]
  %v4053 = vld [vmem:[%s3 + $0x4c8] sm:$0xff]
  %v4054 = vld [vmem:[%s3 + $0x4d0] sm:$0xff]
  %v4055 = vld [vmem:[%s3 + $0x4d8] sm:$0xff]
  %v4056 = vld [vmem:[%s3 + $0x4e0] sm:$0xff]
  %v4057 = vld [vmem:[%s3 + $0x4e8] sm:$0xff]
  %v4058 = vld [vmem:[%s3 + $0x4f0] sm:$0xff]
  %v4059 = vld [vmem:[%s3 + $0x4f8] sm:$0xff]
  %v4060 = vld [vmem:[%s3 + $0x500] sm:$0xff]
  %v4061 = vld [vmem:[%s3 + $0x508] sm:$0xff]
  %v4062 = vld [vmem:[%s3 + $0x510] sm:$0xff]
  %v4063 = vld [vmem:[%s3 + $0x518] sm:$0xff]
  %v4064 = vld [vmem:[%s3 + $0x520] sm:$0xff]
  %v4065 = vld [vmem:[%s3 + $0x528] sm:$0xff]
  %v4066 = vld [vmem:[%s3 + $0x530] sm:$0xff]
  %v4067 = vld [vmem:[%s3 + $0x538] sm:$0xff]
  %v4068 = vld [vmem:[%s3 + $0x540] sm:$0xff]
  %v4069 = vld [vmem:[%s3 + $0x548] sm:$0xff]
  %v4070 = vld [vmem:[%s3 + $0x550] sm:$0xff]
  %v4071 = vld [vmem:[%s3 + $0x558] sm:$0xff]
  %v4072 = vld [vmem:[%s3 + $0x560] sm:$0xff]
  %v4073 = vld [vmem:[%s3 + $0x568] sm:$0xff]
  %v4074 = vld [vmem:[%s3 + $0x570] sm:$0xff]
  %v4075 = vld [vmem:[%s3 + $0x578] sm:$0xff]
  %v4076 = vld [vmem:[%s3 + $0x580] sm:$0xff]
  %v4077 = vld [vmem:[%s3 + $0x588] sm:$0xff]
  %v4078 = vld [vmem:[%s3 + $0x590] sm:$0xff]
  %v4079 = vld [vmem:[%s3 + $0x598] sm:$0xff]
  %v4080 = vld [vmem:[%s3 + $0x5a0] sm:$0xff]
  %v4081 = vld [vmem:[%s3 + $0x5a8] sm:$0xff]
  %v4082 = vld [vmem:[%s3 + $0x5b0] sm:$0xff]
  %v4083 = vld [vmem:[%s3 + $0x5b8] sm:$0xff]
  %v4084 = vld [vmem:[%s3 + $0x5c0] sm:$0xff]
  %v4085 = vld [vmem:[%s3 + $0x5c8] sm:$0xff]
  %v4086 = vld [vmem:[%s3 + $0x5d0] sm:$0xff]
  %v4087 = vld [vmem:[%s3 + $0x5d8] sm:$0xff]
  %v4088 = vld [vmem:[%s3 + $0x5e0] sm:$0xff]
  %v4089 = vld [vmem:[%s3 + $0x5e8] sm:$0xff]
  %v4090 = vld [vmem:[%s3 + $0x5f0] sm:$0xff]
  %v4091 = vld [vmem:[%s3 + $0x5f8] sm:$0xff]
  %v4092 = vld [vmem:[%s3 + $0x600] sm:$0xff]
  %v4093 = vld [vmem:[%s3 + $0x608] sm:$0xff]
  %v4094 = vld [vmem:[%s3 + $0x610] sm:$0xff]
  %v4095 = vld [vmem:[%s3 + $0x618] sm:$0xff]
  %v4096 = vld [vmem:[%s3 + $0x620] sm:$0xff]
  %v4097 = vld [vmem:[%s3 + $0x628] sm:$0xff]
  %v4098 = vld [vmem:[%s3 + $0x630] sm:$0xff]
  %v4099 = vld [vmem:[%s3 + $0x638] sm:$0xff]
  %v4100 = vld [vmem:[%s3 + $0x640] sm:$0xff]
  %v4101 = vld [vmem:[%s3 + $0x648] sm:$0xff]
  %v4102 = vld [vmem:[%s3 + $0x650] sm:$0xff]
  %v4103 = vld [vmem:[%s3 + $0x658] sm:$0xff]
  %v4104 = vld [vmem:[%s3 + $0x660] sm:$0xff]
  %v4105 = vld [vmem:[%s3 + $0x668] sm:$0xff]
  %v4106 = vld [vmem:[%s3 + $0x670] sm:$0xff]
  %v4107 = vld [vmem:[%s3 + $0x678] sm:$0xff]
  %v4108 = vld [vmem:[%s3 + $0x680] sm:$0xff]
  %v4109 = vld [vmem:[%s3 + $0x688] sm:$0xff]
  %v4110 = vld [vmem:[%s3 + $0x690] sm:$0xff]
  %v4111 = vld [vmem:[%s3 + $0x698] sm:$0xff]
  %v4112 = vld [vmem:[%s3 + $0x6a0] sm:$0xff]
  %v4113 = vld [vmem:[%s3 + $0x6a8] sm:$0xff]
  %v4114 = vld [vmem:[%s3 + $0x6b0] sm:$0xff]
  %v4115 = vld [vmem:[%s3 + $0x6b8] sm:$0xff]
  %v4116 = vld [vmem:[%s3 + $0x6c0] sm:$0xff]
  %v4117 = vld [vmem:[%s3 + $0x6c8] sm:$0xff]
  %v4118 = vld [vmem:[%s3 + $0x6d0] sm:$0xff]
  %v4119 = vld [vmem:[%s3 + $0x6d8] sm:$0xff]
  %v4120 = vld [vmem:[%s3 + $0x6e0] sm:$0xff]
  %v4121 = vld [vmem:[%s3 + $0x6e8] sm:$0xff]
  %v4122 = vld [vmem:[%s3 + $0x6f0] sm:$0xff]
  %v4123 = vld [vmem:[%s3 + $0x6f8] sm:$0xff]
  %v4124 = vld [vmem:[%s3 + $0x700] sm:$0xff]
  %v4125 = vld [vmem:[%s3 + $0x708] sm:$0xff]
  %v4126 = vld [vmem:[%s3 + $0x710] sm:$0xff]
  %v4127 = vld [vmem:[%s3 + $0x718] sm:$0xff]
  %v4128 = vld [vmem:[%s3 + $0x720] sm:$0xff]
  %v4129 = vld [vmem:[%s3 + $0x728] sm:$0xff]
  %v4130 = vld [vmem:[%s3 + $0x730] sm:$0xff]
  %v4131 = vld [vmem:[%s3 + $0x738] sm:$0xff]
  %v4132 = vld [vmem:[%s3 + $0x740] sm:$0xff]
  %v4133 = vld [vmem:[%s3 + $0x748] sm:$0xff]
  %v4134 = vld [vmem:[%s3 + $0x750] sm:$0xff]
  %v4135 = vld [vmem:[%s3 + $0x758] sm:$0xff]
  %v4136 = vld [vmem:[%s3 + $0x760] sm:$0xff]
  %v4137 = vld [vmem:[%s3 + $0x768] sm:$0xff]
  %v4138 = vld [vmem:[%s3 + $0x770] sm:$0xff]
  %v4139 = vld [vmem:[%s3 + $0x778] sm:$0xff]
  %v4140 = vld [vmem:[%s3 + $0x780] sm:$0xff]
  %v4141 = vld [vmem:[%s3 + $0x788] sm:$0xff]
  %v4142 = vld [vmem:[%s3 + $0x790] sm:$0xff]
  %v4143 = vld [vmem:[%s3 + $0x798] sm:$0xff]
  %v4144 = vld [vmem:[%s3 + $0x7a0] sm:$0xff]
  %v4145 = vld [vmem:[%s3 + $0x7a8] sm:$0xff]
  %v4146 = vld [vmem:[%s3 + $0x7b0] sm:$0xff]
  %v4147 = vld [vmem:[%s3 + $0x7b8] sm:$0xff]
  %v4148 = vld [vmem:[%s3 + $0x7c0] sm:$0xff]
  %v4149 = vld [vmem:[%s3 + $0x7c8] sm:$0xff]
  %v4150 = vld [vmem:[%s3 + $0x7d0] sm:$0xff]
  %v4151 = vld [vmem:[%s3 + $0x7d8] sm:$0xff]
  %v4152 = vld [vmem:[%s3 + $0x7e0] sm:$0xff]
  %v4153 = vld [vmem:[%s3 + $0x7e8] sm:$0xff]
  %v4154 = vld [vmem:[%s3 + $0x7f0] sm:$0xff]
  %v4155 = vld [vmem:[%s3 + $0x7f8] sm:$0xff]
  %v4156 = vld [vmem:[%s3 + $0x800] sm:$0xff]
  %v4157 = vld [vmem:[%s3 + $0x808] sm:$0xff]
  %v4158 = vld [vmem:[%s3 + $0x810] sm:$0xff]
  %v4159 = vld [vmem:[%s3 + $0x818] sm:$0xff]
  %v4160 = vld [vmem:[%s3 + $0x820] sm:$0xff]
  %v4161 = vld [vmem:[%s3 + $0x828] sm:$0xff]
  %v4162 = vld [vmem:[%s3 + $0x830] sm:$0xff]
  %v4163 = vld [vmem:[%s3 + $0x838] sm:$0xff]
  %v4164 = vld [vmem:[%s3 + $0x840] sm:$0xff]
  %v4165 = vld [vmem:[%s3 + $0x848] sm:$0xff]
  %v4166 = vld [vmem:[%s3 + $0x850] sm:$0xff]
  %v4167 = vld [vmem:[%s3 + $0x858] sm:$0xff]
  %v4168 = vld [vmem:[%s3 + $0x860] sm:$0xff]
  %v4169 = vld [vmem:[%s3 + $0x868] sm:$0xff]
  %v4170 = vld [vmem:[%s3 + $0x870] sm:$0xff]
  %v4171 = vld [vmem:[%s3 + $0x878] sm:$0xff]
  %v4172 = vld [vmem:[%s3 + $0x880] sm:$0xff]
  %v4173 = vld [vmem:[%s3 + $0x888] sm:$0xff]
  %v4174 = vld [vmem:[%s3 + $0x890] sm:$0xff]
  %v4175 = vld [vmem:[%s3 + $0x898] sm:$0xff]
  %v4176 = vld [vmem:[%s3 + $0x8a0] sm:$0xff]
  %v4177 = vld [vmem:[%s3 + $0x8a8] sm:$0xff]
  %v4178 = vld [vmem:[%s3 + $0x8b0] sm:$0xff]
  %v4179 = vld [vmem:[%s3 + $0x8b8] sm:$0xff]
  %v4180 = vld [vmem:[%s3 + $0x8c0] sm:$0xff]
  %v4181 = vld [vmem:[%s3 + $0x8c8] sm:$0xff]
  %v4182 = vld [vmem:[%s3 + $0x8d0] sm:$0xff]
  %v4183 = vld [vmem:[%s3 + $0x8d8] sm:$0xff]
  %v4184 = vld [vmem:[%s3 + $0x8e0] sm:$0xff]
  %v4185 = vld [vmem:[%s3 + $0x8e8] sm:$0xff]
  %v4186 = vld [vmem:[%s3 + $0x8f0] sm:$0xff]
  %v4187 = vld [vmem:[%s3 + $0x8f8] sm:$0xff]
  %v4188 = vld [vmem:[%s3 + $0x900] sm:$0xff]
  %v4189 = vld [vmem:[%s3 + $0x908] sm:$0xff]
  %v4190 = vld [vmem:[%s3 + $0x910] sm:$0xff]
  %v4191 = vld [vmem:[%s3 + $0x918] sm:$0xff]
  %v4192 = vld [vmem:[%s3 + $0x920] sm:$0xff]
  %v4193 = vld [vmem:[%s3 + $0x928] sm:$0xff]
  %v4194 = vld [vmem:[%s3 + $0x930] sm:$0xff]
  %v4195 = vld [vmem:[%s3 + $0x938] sm:$0xff]
  %v4196 = vld [vmem:[%s3 + $0x940] sm:$0xff]
  %v4197 = vld [vmem:[%s3 + $0x948] sm:$0xff]
  %v4198 = vld [vmem:[%s3 + $0x950] sm:$0xff]
  %v4199 = vld [vmem:[%s3 + $0x958] sm:$0xff]
  %v4200 = vld [vmem:[%s3 + $0x960] sm:$0xff]
  %v4201 = vld [vmem:[%s3 + $0x968] sm:$0xff]
  %v4202 = vld [vmem:[%s3 + $0x970] sm:$0xff]
  %v4203 = vld [vmem:[%s3 + $0x978] sm:$0xff]
  %v4204 = vld [vmem:[%s3 + $0x980] sm:$0xff]
  %v4205 = vld [vmem:[%s3 + $0x988] sm:$0xff]
  %v4206 = vld [vmem:[%s3 + $0x990] sm:$0xff]
  %v4207 = vld [vmem:[%s3 + $0x998] sm:$0xff]
  %v4208 = vld [vmem:[%s3 + $0x9a0] sm:$0xff]
  %v4209 = vld [vmem:[%s3 + $0x9a8] sm:$0xff]
  %v4210 = vld [vmem:[%s3 + $0x9b0] sm:$0xff]
  %v4211 = vld [vmem:[%s3 + $0x9b8] sm:$0xff]
  %v4212 = vld [vmem:[%s3 + $0x9c0] sm:$0xff]
  %v4213 = vld [vmem:[%s3 + $0x9c8] sm:$0xff]
  %v4214 = vld [vmem:[%s3 + $0x9d0] sm:$0xff]
  %v4215 = vld [vmem:[%s3 + $0x9d8] sm:$0xff]
  %v4216 = vld [vmem:[%s3 + $0x9e0] sm:$0xff]
  %v4217 = vld [vmem:[%s3 + $0x9e8] sm:$0xff]
  %v4218 = vld [vmem:[%s3 + $0x9f0] sm:$0xff]
  %v4219 = vld [vmem:[%s3 + $0x9f8] sm:$0xff]
  %v4220 = vld [vmem:[%s3 + $0xa00] sm:$0xff]
  %v4221 = vld [vmem:[%s3 + $0xa08] sm:$0xff]
  %v4222 = vld [vmem:[%s3 + $0xa10] sm:$0xff]
  %v4223 = vld [vmem:[%s3 + $0xa18] sm:$0xff]
  %v4224 = vld [vmem:[%s3 + $0xa20] sm:$0xff]
  %v4225 = vld [vmem:[%s3 + $0xa28] sm:$0xff]
  %v4226 = vld [vmem:[%s3 + $0xa30] sm:$0xff]
  %v4227 = vld [vmem:[%s3 + $0xa38] sm:$0xff]
  %v4228 = vld [vmem:[%s3 + $0xa40] sm:$0xff]
  %v4229 = vld [vmem:[%s3 + $0xa48] sm:$0xff]
  %v4230 = vld [vmem:[%s3 + $0xa50] sm:$0xff]
  %v4231 = vld [vmem:[%s3 + $0xa58] sm:$0xff]
  %v4232 = vld [vmem:[%s3 + $0xa60] sm:$0xff]
  %v4233 = vld [vmem:[%s3 + $0xa68] sm:$0xff]
  %v4234 = vld [vmem:[%s3 + $0xa70] sm:$0xff]
  %v4235 = vld [vmem:[%s3 + $0xa78] sm:$0xff]
  %v4236 = vld [vmem:[%s3 + $0xa80] sm:$0xff]
  %v4237 = vld [vmem:[%s3 + $0xa88] sm:$0xff]
  %v4238 = vld [vmem:[%s3 + $0xa90] sm:$0xff]
  %v4239 = vld [vmem:[%s3 + $0xa98] sm:$0xff]
  %v4240 = vld [vmem:[%s3 + $0xaa0] sm:$0xff]
  %v4241 = vld [vmem:[%s3 + $0xaa8] sm:$0xff]
  %v4242 = vld [vmem:[%s3 + $0xab0] sm:$0xff]
  %v4243 = vld [vmem:[%s3 + $0xab8] sm:$0xff]
  %v4244 = vld [vmem:[%s3 + $0xac0] sm:$0xff]
  %v4245 = vld [vmem:[%s3 + $0xac8] sm:$0xff]
  %v4246 = vld [vmem:[%s3 + $0xad0] sm:$0xff]
  %v4247 = vld [vmem:[%s3 + $0xad8] sm:$0xff]
  %v4248 = vld [vmem:[%s3 + $0xae0] sm:$0xff]
  %v4249 = vld [vmem:[%s3 + $0xae8] sm:$0xff]
  %v4250 = vld [vmem:[%s3 + $0xaf0] sm:$0xff]
  %v4251 = vld [vmem:[%s3 + $0xaf8] sm:$0xff]
  %v4252 = vld [vmem:[%s3 + $0xb00] sm:$0xff]
  %v4253 = vld [vmem:[%s3 + $0xb08] sm:$0xff]
  %v4254 = vld [vmem:[%s3 + $0xb10] sm:$0xff]
  %v4255 = vld [vmem:[%s3 + $0xb18] sm:$0xff]
  %v4256 = vld [vmem:[%s3 + $0xb20] sm:$0xff]
  %v4257 = vld [vmem:[%s3 + $0xb28] sm:$0xff]
  %v4258 = vld [vmem:[%s3 + $0xb30] sm:$0xff]
  %v4259 = vld [vmem:[%s3 + $0xb38] sm:$0xff]
  %v4260 = vld [vmem:[%s3 + $0xb40] sm:$0xff]
  %v4261 = vld [vmem:[%s3 + $0xb48] sm:$0xff]
  %v4262 = vld [vmem:[%s3 + $0xb50] sm:$0xff]
  %v4263 = vld [vmem:[%s3 + $0xb58] sm:$0xff]
  %v4264 = vld [vmem:[%s3 + $0xb60] sm:$0xff]
  %v4265 = vld [vmem:[%s3 + $0xb68] sm:$0xff]
  %v4266 = vld [vmem:[%s3 + $0xb70] sm:$0xff]
  %v4267 = vld [vmem:[%s3 + $0xb78] sm:$0xff]
  %v4268 = vld [vmem:[%s3 + $0xb80] sm:$0xff]
  %v4269 = vld [vmem:[%s3 + $0xb88] sm:$0xff]
  %v4270 = vld [vmem:[%s3 + $0xb90] sm:$0xff]
  %v4271 = vld [vmem:[%s3 + $0xb98] sm:$0xff]
  %v4272 = vld [vmem:[%s3 + $0xba0] sm:$0xff]
  %v4273 = vld [vmem:[%s3 + $0xba8] sm:$0xff]
  %v4274 = vld [vmem:[%s3 + $0xbb0] sm:$0xff]
  %v4275 = vld [vmem:[%s3 + $0xbb8] sm:$0xff]
  %v4276 = vld [vmem:[%s3 + $0xbc0] sm:$0xff]
  %v4277 = vld [vmem:[%s3 + $0xbc8] sm:$0xff]
  %v4278 = vld [vmem:[%s3 + $0xbd0] sm:$0xff]
  %v4279 = vld [vmem:[%s3 + $0xbd8] sm:$0xff]
  %v4280 = vld [vmem:[%s3 + $0xbe0] sm:$0xff]
  %v4281 = vld [vmem:[%s3 + $0xbe8] sm:$0xff]
  %v4282 = vld [vmem:[%s3 + $0xbf0] sm:$0xff]
  %v4283 = vld [vmem:[%s3 + $0xbf8] sm:$0xff]
  %v4284 = vld [vmem:[%s3 + $0xc00] sm:$0xff]
  %v4285 = vld [vmem:[%s3 + $0xc08] sm:$0xff]
  %v4286 = vld [vmem:[%s3 + $0xc10] sm:$0xff]
  %v4287 = vld [vmem:[%s3 + $0xc18] sm:$0xff]
  %v4288 = vld [vmem:[%s3 + $0xc20] sm:$0xff]
  %v4289 = vld [vmem:[%s3 + $0xc28] sm:$0xff]
  %v4290 = vld [vmem:[%s3 + $0xc30] sm:$0xff]
  %v4291 = vld [vmem:[%s3 + $0xc38] sm:$0xff]
  %v4292 = vld [vmem:[%s3 + $0xc40] sm:$0xff]
  %v4293 = vld [vmem:[%s3 + $0xc48] sm:$0xff]
  %v4294 = vld [vmem:[%s3 + $0xc50] sm:$0xff]
  %v4295 = vld [vmem:[%s3 + $0xc58] sm:$0xff]
  %v4296 = vld [vmem:[%s3 + $0xc60] sm:$0xff]
  %v4297 = vld [vmem:[%s3 + $0xc68] sm:$0xff]
  %v4298 = vld [vmem:[%s3 + $0xc70] sm:$0xff]
  %v4299 = vld [vmem:[%s3 + $0xc78] sm:$0xff]
  %v4300 = vld [vmem:[%s3 + $0xc80] sm:$0xff]
  %v4301 = vld [vmem:[%s3 + $0xc88] sm:$0xff]
  %v4302 = vld [vmem:[%s3 + $0xc90] sm:$0xff]
  %v4303 = vld [vmem:[%s3 + $0xc98] sm:$0xff]
  %v4304 = vld [vmem:[%s3 + $0xca0] sm:$0xff]
  %v4305 = vld [vmem:[%s3 + $0xca8] sm:$0xff]
  %v4306 = vld [vmem:[%s3 + $0xcb0] sm:$0xff]
  %v4307 = vld [vmem:[%s3 + $0xcb8] sm:$0xff]
  %v4308 = vld [vmem:[%s3 + $0xcc0] sm:$0xff]
  %v4309 = vld [vmem:[%s3 + $0xcc8] sm:$0xff]
  %v4310 = vld [vmem:[%s3 + $0xcd0] sm:$0xff]
  %v4311 = vld [vmem:[%s3 + $0xcd8] sm:$0xff]
  %v4312 = vld [vmem:[%s3 + $0xce0] sm:$0xff]
  %v4313 = vld [vmem:[%s3 + $0xce8] sm:$0xff]
  %v4314 = vld [vmem:[%s3 + $0xcf0] sm:$0xff]
  %v4315 = vld [vmem:[%s3 + $0xcf8] sm:$0xff]
  %v4316 = vld [vmem:[%s3 + $0xd00] sm:$0xff]
  %v4317 = vld [vmem:[%s3 + $0xd08] sm:$0xff]
  %v4318 = vld [vmem:[%s3 + $0xd10] sm:$0xff]
  %v4319 = vld [vmem:[%s3 + $0xd18] sm:$0xff]
  %v4320 = vld [vmem:[%s3 + $0xd20] sm:$0xff]
  %v4321 = vld [vmem:[%s3 + $0xd28] sm:$0xff]
  %v4322 = vld [vmem:[%s3 + $0xd30] sm:$0xff]
  %v4323 = vld [vmem:[%s3 + $0xd38] sm:$0xff]
  %v4324 = vld [vmem:[%s3 + $0xd40] sm:$0xff]
  %v4325 = vld [vmem:[%s3 + $0xd48] sm:$0xff]
  %v4326 = vld [vmem:[%s3 + $0xd50] sm:$0xff]
  %v4327 = vld [vmem:[%s3 + $0xd58] sm:$0xff]
  %v4328 = vld [vmem:[%s3 + $0xd60] sm:$0xff]
  %v4329 = vld [vmem:[%s3 + $0xd68] sm:$0xff]
  %v4330 = vld [vmem:[%s3 + $0xd70] sm:$0xff]
  %v4331 = vld [vmem:[%s3 + $0xd78] sm:$0xff]
  %v4332 = vld [vmem:[%s3 + $0xd80] sm:$0xff]
  %v4333 = vld [vmem:[%s3 + $0xd88] sm:$0xff]
  %v4334 = vld [vmem:[%s3 + $0xd90] sm:$0xff]
  %v4335 = vld [vmem:[%s3 + $0xd98] sm:$0xff]
  %v4336 = vld [vmem:[%s3 + $0xda0] sm:$0xff]
  %v4337 = vld [vmem:[%s3 + $0xda8] sm:$0xff]
  %v4338 = vld [vmem:[%s3 + $0xdb0] sm:$0xff]
  %v4339 = vld [vmem:[%s3 + $0xdb8] sm:$0xff]
  %v4340 = vld [vmem:[%s3 + $0xdc0] sm:$0xff]
  %v4341 = vld [vmem:[%s3 + $0xdc8] sm:$0xff]
  %v4342 = vld [vmem:[%s3 + $0xdd0] sm:$0xff]
  %v4343 = vld [vmem:[%s3 + $0xdd8] sm:$0xff]
  %v4344 = vld [vmem:[%s3 + $0xde0] sm:$0xff]
  %v4345 = vld [vmem:[%s3 + $0xde8] sm:$0xff]
  %v4346 = vld [vmem:[%s3 + $0xdf0] sm:$0xff]
  %v4347 = vld [vmem:[%s3 + $0xdf8] sm:$0xff]
  %v4348 = vld [vmem:[%s3 + $0xe00] sm:$0xff]
  %v4349 = vld [vmem:[%s3 + $0xe08] sm:$0xff]
  %v4350 = vld [vmem:[%s3 + $0xe10] sm:$0xff]
  %v4351 = vld [vmem:[%s3 + $0xe18] sm:$0xff]
  %v4352 = vld [vmem:[%s3 + $0xe20] sm:$0xff]
  %v4353 = vld [vmem:[%s3 + $0xe28] sm:$0xff]
  %v4354 = vld [vmem:[%s3 + $0xe30] sm:$0xff]
  %v4355 = vld [vmem:[%s3 + $0xe38] sm:$0xff]
  %v4356 = vld [vmem:[%s3 + $0xe40] sm:$0xff]
  %v4357 = vld [vmem:[%s3 + $0xe48] sm:$0xff]
  %v4358 = vld [vmem:[%s3 + $0xe50] sm:$0xff]
  %v4359 = vld [vmem:[%s3 + $0xe58] sm:$0xff]
  %v4360 = vld [vmem:[%s3 + $0xe60] sm:$0xff]
  %v4361 = vld [vmem:[%s3 + $0xe68] sm:$0xff]
  %v4362 = vld [vmem:[%s3 + $0xe70] sm:$0xff]
  %v4363 = vld [vmem:[%s3 + $0xe78] sm:$0xff]
  %v4364 = vld [vmem:[%s3 + $0xe80] sm:$0xff]
  %v4365 = vld [vmem:[%s3 + $0xe88] sm:$0xff]
  %v4366 = vld [vmem:[%s3 + $0xe90] sm:$0xff]
  %v4367 = vld [vmem:[%s3 + $0xe98] sm:$0xff]
  %v4368 = vld [vmem:[%s3 + $0xea0] sm:$0xff]
  %v4369 = vld [vmem:[%s3 + $0xea8] sm:$0xff]
  %v4370 = vld [vmem:[%s3 + $0xeb0] sm:$0xff]
  %v4371 = vld [vmem:[%s3 + $0xeb8] sm:$0xff]
  %v4372 = vld [vmem:[%s3 + $0xec0] sm:$0xff]
  %v4373 = vld [vmem:[%s3 + $0xec8] sm:$0xff]
  %v4374 = vld [vmem:[%s3 + $0xed0] sm:$0xff]
  %v4375 = vld [vmem:[%s3 + $0xed8] sm:$0xff]
  %v4376 = vld [vmem:[%s3 + $0xee0] sm:$0xff]
  %v4377 = vld [vmem:[%s3 + $0xee8] sm:$0xff]
  %v4378 = vld [vmem:[%s3 + $0xef0] sm:$0xff]
  %v4379 = vld [vmem:[%s3 + $0xef8] sm:$0xff]
  %v4380 = vld [vmem:[%s3 + $0xf00] sm:$0xff]
  %v4381 = vld [vmem:[%s3 + $0xf08] sm:$0xff]
  %v4382 = vld [vmem:[%s3 + $0xf10] sm:$0xff]
  %v4383 = vld [vmem:[%s3 + $0xf18] sm:$0xff]
  %v4384 = vld [vmem:[%s3 + $0xf20] sm:$0xff]
  %v4385 = vld [vmem:[%s3 + $0xf28] sm:$0xff]
  %v4386 = vld [vmem:[%s3 + $0xf30] sm:$0xff]
  %v4387 = vld [vmem:[%s3 + $0xf38] sm:$0xff]
  %v4388 = vld [vmem:[%s3 + $0xf40] sm:$0xff]
  %v4389 = vld [vmem:[%s3 + $0xf48] sm:$0xff]
  %v4390 = vld [vmem:[%s3 + $0xf50] sm:$0xff]
  %v4391 = vld [vmem:[%s3 + $0xf58] sm:$0xff]
  %v4392 = vld [vmem:[%s3 + $0xf60] sm:$0xff]
  %v4393 = vld [vmem:[%s3 + $0xf68] sm:$0xff]
  %v4394 = vld [vmem:[%s3 + $0xf70] sm:$0xff]
  %v4395 = vld [vmem:[%s3 + $0xf78] sm:$0xff]
  %v4396 = vld [vmem:[%s3 + $0xf80] sm:$0xff]
  %v4397 = vld [vmem:[%s3 + $0xf88] sm:$0xff]
  %v4398 = vld [vmem:[%s3 + $0xf90] sm:$0xff]
  %v4399 = vld [vmem:[%s3 + $0xf98] sm:$0xff]
  %v4400 = vld [vmem:[%s3 + $0xfa0] sm:$0xff]
  %v4401 = vld [vmem:[%s3 + $0xfa8] sm:$0xff]
  %v4402 = vld [vmem:[%s3 + $0xfb0] sm:$0xff]
  %v4403 = vld [vmem:[%s3 + $0xfb8] sm:$0xff]
  %v4404 = vld [vmem:[%s3 + $0xfc0] sm:$0xff]
  %v4405 = vld [vmem:[%s3 + $0xfc8] sm:$0xff]
  %v4406 = vld [vmem:[%s3 + $0xfd0] sm:$0xff]
  %v4407 = vld [vmem:[%s3 + $0xfd8] sm:$0xff]
  %v4408 = vld [vmem:[%s3 + $0xfe0] sm:$0xff]
  %v4409 = vld [vmem:[%s3 + $0xfe8] sm:$0xff]
  %v4410 = vld [vmem:[%s3 + $0xff0] sm:$0xff]
  %v4411 = vld [vmem:[%s3 + $0xff8] sm:$0xff]
  %v4412 = vld [vmem:[%s3 + $0x1000] sm:$0xff]
  %v4413 = vld [vmem:[%s3 + $0x1008] sm:$0xff]
  %v4414 = vld [vmem:[%s3 + $0x1010] sm:$0xff]
  %v4415 = vld [vmem:[%s3 + $0x1018] sm:$0xff]
  %v4416 = vld [vmem:[%s3 + $0x1020] sm:$0xff]
  %v4417 = vld [vmem:[%s3 + $0x1028] sm:$0xff]
  %v4418 = vld [vmem:[%s3 + $0x1030] sm:$0xff]
  %v4419 = vld [vmem:[%s3 + $0x1038] sm:$0xff]
  %v4420 = vld [vmem:[%s3 + $0x1040] sm:$0xff]
  %v4421 = vld [vmem:[%s3 + $0x1048] sm:$0xff]
  %v4422 = vld [vmem:[%s3 + $0x1050] sm:$0xff]
  %v4423 = vld [vmem:[%s3 + $0x1058] sm:$0xff]
  %v4424 = vld [vmem:[%s3 + $0x1060] sm:$0xff]
  %v4425 = vld [vmem:[%s3 + $0x1068] sm:$0xff]
  %v4426 = vld [vmem:[%s3 + $0x1070] sm:$0xff]
  %v4427 = vld [vmem:[%s3 + $0x1078] sm:$0xff]
  %v4428 = vld [vmem:[%s3 + $0x1080] sm:$0xff]
  %v4429 = vld [vmem:[%s3 + $0x1088] sm:$0xff]
  %v4430 = vld [vmem:[%s3 + $0x1090] sm:$0xff]
  %v4431 = vld [vmem:[%s3 + $0x1098] sm:$0xff]
  %v4432 = vld [vmem:[%s3 + $0x10a0] sm:$0xff]
  %v4433 = vld [vmem:[%s3 + $0x10a8] sm:$0xff]
  %v4434 = vld [vmem:[%s3 + $0x10b0] sm:$0xff]
  %v4435 = vld [vmem:[%s3 + $0x10b8] sm:$0xff]
  %v4436 = vld [vmem:[%s3 + $0x10c0] sm:$0xff]
  %v4437 = vld [vmem:[%s3 + $0x10c8] sm:$0xff]
  %v4438 = vld [vmem:[%s3 + $0x10d0] sm:$0xff]
  %v4439 = vld [vmem:[%s3 + $0x10d8] sm:$0xff]
  %v4440 = vld [vmem:[%s3 + $0x10e0] sm:$0xff]
  %v4441 = vld [vmem:[%s3 + $0x10e8] sm:$0xff]
  %v4442 = vld [vmem:[%s3 + $0x10f0] sm:$0xff]
  %v4443 = vld [vmem:[%s3 + $0x10f8] sm:$0xff]
  %v4444 = vld [vmem:[%s3 + $0x1100] sm:$0xff]
  %v4445 = vld [vmem:[%s3 + $0x1108] sm:$0xff]
  %v4446 = vld [vmem:[%s3 + $0x1110] sm:$0xff]
  %v4447 = vld [vmem:[%s3 + $0x1118] sm:$0xff]
  %v4448 = vld [vmem:[%s3 + $0x1120] sm:$0xff]
  %v4449 = vld [vmem:[%s3 + $0x1128] sm:$0xff]
  %v4450 = vld [vmem:[%s3 + $0x1130] sm:$0xff]
  %v4451 = vld [vmem:[%s3 + $0x1138] sm:$0xff]
  %v4452 = vld [vmem:[%s3 + $0x1140] sm:$0xff]
  %v4453 = vld [vmem:[%s3 + $0x1148] sm:$0xff]
  %v4454 = vld [vmem:[%s3 + $0x1150] sm:$0xff]
  %v4455 = vld [vmem:[%s3 + $0x1158] sm:$0xff]
  %v4456 = vld [vmem:[%s3 + $0x1160] sm:$0xff]
  %v4457 = vld [vmem:[%s3 + $0x1168] sm:$0xff]
  %v4458 = vld [vmem:[%s3 + $0x1170] sm:$0xff]
  %v4459 = vld [vmem:[%s3 + $0x1178] sm:$0xff]
  %v4460 = vld [vmem:[%s3 + $0x1180] sm:$0xff]
  %v4461 = vld [vmem:[%s3 + $0x1188] sm:$0xff]
  %v4462 = vld [vmem:[%s3 + $0x1190] sm:$0xff]
  %v4463 = vld [vmem:[%s3 + $0x1198] sm:$0xff]
  %v4464 = vld [vmem:[%s3 + $0x11a0] sm:$0xff]
  %v4465 = vld [vmem:[%s3 + $0x11a8] sm:$0xff]
  %v4466 = vld [vmem:[%s3 + $0x11b0] sm:$0xff]
  %v4467 = vld [vmem:[%s3 + $0x11b8] sm:$0xff]
  %v4468 = vld [vmem:[%s3 + $0x11c0] sm:$0xff]
  %v4469 = vld [vmem:[%s3 + $0x11c8] sm:$0xff]
  %v4470 = vld [vmem:[%s3 + $0x11d0] sm:$0xff]
  %v4471 = vld [vmem:[%s3 + $0x11d8] sm:$0xff]
  %v4472 = vld [vmem:[%s3 + $0x11e0] sm:$0xff]
  %v4473 = vld [vmem:[%s3 + $0x11e8] sm:$0xff]
  %v4474 = vld [vmem:[%s3 + $0x11f0] sm:$0xff]
  %v4475 = vld [vmem:[%s3 + $0x11f8] sm:$0xff]
  %v4476 = vld [vmem:[%s3 + $0x1200] sm:$0xff]
  %v4477 = vld [vmem:[%s3 + $0x1208] sm:$0xff]
  %v4478 = vld [vmem:[%s3 + $0x1210] sm:$0xff]
  %v4479 = vld [vmem:[%s3 + $0x1218] sm:$0xff]
  %v4480 = vld [vmem:[%s3 + $0x1220] sm:$0xff]
  %v4481 = vld [vmem:[%s3 + $0x1228] sm:$0xff]
  %v4482 = vld [vmem:[%s3 + $0x1230] sm:$0xff]
  %v4483 = vld [vmem:[%s3 + $0x1238] sm:$0xff]
  %v4484 = vld [vmem:[%s3 + $0x1240] sm:$0xff]
  %v4485 = vld [vmem:[%s3 + $0x1248] sm:$0xff]
  %v4486 = vld [vmem:[%s3 + $0x1250] sm:$0xff]
  %v4487 = vld [vmem:[%s3 + $0x1258] sm:$0xff]
  %v4488 = vld [vmem:[%s3 + $0x1260] sm:$0xff]
  %v4489 = vld [vmem:[%s3 + $0x1268] sm:$0xff]
  %v4490 = vld [vmem:[%s3 + $0x1270] sm:$0xff]
  %v4491 = vld [vmem:[%s3 + $0x1278] sm:$0xff]
  %v4492 = vld [vmem:[%s3 + $0x1280] sm:$0xff]
  %v4493 = vld [vmem:[%s3 + $0x1288] sm:$0xff]
  %v4494 = vld [vmem:[%s3 + $0x1290] sm:$0xff]
  %v4495 = vld [vmem:[%s3 + $0x1298] sm:$0xff]
  %v4496 = vld [vmem:[%s3 + $0x12a0] sm:$0xff]
  %v4497 = vld [vmem:[%s3 + $0x12a8] sm:$0xff]
  %v4498 = vld [vmem:[%s3 + $0x12b0] sm:$0xff]
  %v4499 = vld [vmem:[%s3 + $0x12b8] sm:$0xff]
  %v4500 = vld [vmem:[%s3 + $0x12c0] sm:$0xff]
  %v4501 = vld [vmem:[%s3 + $0x12c8] sm:$0xff]
  %v4502 = vld [vmem:[%s3 + $0x12d0] sm:$0xff]
  %v4503 = vld [vmem:[%s3 + $0x12d8] sm:$0xff]
  %v4504 = vld [vmem:[%s3 + $0x12e0] sm:$0xff]
  %v4505 = vld [vmem:[%s3 + $0x12e8] sm:$0xff]
  %v4506 = vld [vmem:[%s3 + $0x12f0] sm:$0xff]
  %v4507 = vld [vmem:[%s3 + $0x12f8] sm:$0xff]
  %v4508 = vld [vmem:[%s3 + $0x1300] sm:$0xff]
  %v4509 = vld [vmem:[%s3 + $0x1308] sm:$0xff]
  %v4510 = vld [vmem:[%s3 + $0x1310] sm:$0xff]
  %v4511 = vld [vmem:[%s3 + $0x1318] sm:$0xff]
  %v4512 = vld [vmem:[%s3 + $0x1320] sm:$0xff]
  %v4513 = vld [vmem:[%s3 + $0x1328] sm:$0xff]
  %v4514 = vld [vmem:[%s3 + $0x1330] sm:$0xff]
  %v4515 = vld [vmem:[%s3 + $0x1338] sm:$0xff]
  %v4516 = vld [vmem:[%s3 + $0x1340] sm:$0xff]
  %v4517 = vld [vmem:[%s3 + $0x1348] sm:$0xff]
  %v4518 = vld [vmem:[%s3 + $0x1350] sm:$0xff]
  %v4519 = vld [vmem:[%s3 + $0x1358] sm:$0xff]
  %v4520 = vld [vmem:[%s3 + $0x1360] sm:$0xff]
  %v4521 = vld [vmem:[%s3 + $0x1368] sm:$0xff]
  %v4522 = vld [vmem:[%s3 + $0x1370] sm:$0xff]
  %v4523 = vld [vmem:[%s3 + $0x1378] sm:$0xff]
  %v4524 = vld [vmem:[%s3 + $0x1380] sm:$0xff]
  %v4525 = vld [vmem:[%s3 + $0x1388] sm:$0xff]
  %v4526 = vld [vmem:[%s3 + $0x1390] sm:$0xff]
  %v4527 = vld [vmem:[%s3 + $0x1398] sm:$0xff]
  %v4528 = vld [vmem:[%s3 + $0x13a0] sm:$0xff]
  %v4529 = vld [vmem:[%s3 + $0x13a8] sm:$0xff]
  %v4530 = vld [vmem:[%s3 + $0x13b0] sm:$0xff]
  %v4531 = vld [vmem:[%s3 + $0x13b8] sm:$0xff]
  %v4532 = vld [vmem:[%s3 + $0x13c0] sm:$0xff]
  %v4533 = vld [vmem:[%s3 + $0x13c8] sm:$0xff]
  %v4534 = vld [vmem:[%s3 + $0x13d0] sm:$0xff]
  %v4535 = vld [vmem:[%s3 + $0x13d8] sm:$0xff]
  %v4536 = vld [vmem:[%s3 + $0x13e0] sm:$0xff]
  %v4537 = vld [vmem:[%s3 + $0x13e8] sm:$0xff]
  %v4538 = vld [vmem:[%s3 + $0x13f0] sm:$0xff]
  %v4539 = vld [vmem:[%s3 + $0x13f8] sm:$0xff]
  %v4540 = vld [vmem:[%s3 + $0x1400] sm:$0xff]
  %v4541 = vld [vmem:[%s3 + $0x1408] sm:$0xff]
  %v4542 = vld [vmem:[%s3 + $0x1410] sm:$0xff]
  %v4543 = vld [vmem:[%s3 + $0x1418] sm:$0xff]
  %v4544 = vld [vmem:[%s3 + $0x1420] sm:$0xff]
  %v4545 = vld [vmem:[%s3 + $0x1428] sm:$0xff]
  %v4546 = vld [vmem:[%s3 + $0x1430] sm:$0xff]
  %v4547 = vld [vmem:[%s3 + $0x1438] sm:$0xff]
  %v4548 = vld [vmem:[%s3 + $0x1440] sm:$0xff]
  %v4549 = vld [vmem:[%s3 + $0x1448] sm:$0xff]
  %v4550 = vld [vmem:[%s3 + $0x1450] sm:$0xff]
  %v4551 = vld [vmem:[%s3 + $0x1458] sm:$0xff]
  %v4552 = vld [vmem:[%s3 + $0x1460] sm:$0xff]
  %v4553 = vld [vmem:[%s3 + $0x1468] sm:$0xff]
  %v4554 = vld [vmem:[%s3 + $0x1470] sm:$0xff]
  %v4555 = vld [vmem:[%s3 + $0x1478] sm:$0xff]
  %v4556 = vld [vmem:[%s3 + $0x1480] sm:$0xff]
  %v4557 = vld [vmem:[%s3 + $0x1488] sm:$0xff]
  %v4558 = vld [vmem:[%s3 + $0x1490] sm:$0xff]
  %v4559 = vld [vmem:[%s3 + $0x1498] sm:$0xff]
  %v4560 = vld [vmem:[%s3 + $0x14a0] sm:$0xff]
  %v4561 = vld [vmem:[%s3 + $0x14a8] sm:$0xff]
  %v4562 = vld [vmem:[%s3 + $0x14b0] sm:$0xff]
  %v4563 = vld [vmem:[%s3 + $0x14b8] sm:$0xff]
  %v4564 = vld [vmem:[%s3 + $0x14c0] sm:$0xff]
  %v4565 = vld [vmem:[%s3 + $0x14c8] sm:$0xff]
  %v4566 = vld [vmem:[%s3 + $0x14d0] sm:$0xff]
  %v4567 = vld [vmem:[%s3 + $0x14d8] sm:$0xff]
  %v4568 = vld [vmem:[%s3 + $0x14e0] sm:$0xff]
  %v4569 = vld [vmem:[%s3 + $0x14e8] sm:$0xff]
  %v4570 = vld [vmem:[%s3 + $0x14f0] sm:$0xff]
  %v4571 = vld [vmem:[%s3 + $0x14f8] sm:$0xff]
  %v4572 = vld [vmem:[%s3 + $0x1500] sm:$0xff]
  %v4573 = vld [vmem:[%s3 + $0x1508] sm:$0xff]
  %v4574 = vld [vmem:[%s3 + $0x1510] sm:$0xff]
  %v4575 = vld [vmem:[%s3 + $0x1518] sm:$0xff]
  %v4576 = vld [vmem:[%s3 + $0x1520] sm:$0xff]
  %v4577 = vld [vmem:[%s3 + $0x1528] sm:$0xff]
  %v4578 = vld [vmem:[%s3 + $0x1530] sm:$0xff]
  %v4579 = vld [vmem:[%s3 + $0x1538] sm:$0xff]
  %v4580 = vld [vmem:[%s3 + $0x1540] sm:$0xff]
  %v4581 = vld [vmem:[%s3 + $0x1548] sm:$0xff]
  %v4582 = vld [vmem:[%s3 + $0x1550] sm:$0xff]
  %v4583 = vld [vmem:[%s3 + $0x1558] sm:$0xff]
  %v4584 = vld [vmem:[%s3 + $0x1560] sm:$0xff]
  %v4585 = vld [vmem:[%s3 + $0x1568] sm:$0xff]
  %v4586 = vld [vmem:[%s3 + $0x1570] sm:$0xff]
  %v4587 = vld [vmem:[%s3 + $0x1578] sm:$0xff]
  %v4588 = vld [vmem:[%s3 + $0x1580] sm:$0xff]
  %v4589 = vld [vmem:[%s3 + $0x1588] sm:$0xff]
  %v4590 = vld [vmem:[%s3 + $0x1590] sm:$0xff]
  %v4591 = vld [vmem:[%s3 + $0x1598] sm:$0xff]
  %v4592 = vld [vmem:[%s3 + $0x15a0] sm:$0xff]
  %v4593 = vld [vmem:[%s3 + $0x15a8] sm:$0xff]
  %v4594 = vld [vmem:[%s3 + $0x15b0] sm:$0xff]
  %v4595 = vld [vmem:[%s3 + $0x15b8] sm:$0xff]
  %v4596 = vld [vmem:[%s3 + $0x15c0] sm:$0xff]
  %v4597 = vld [vmem:[%s3 + $0x15c8] sm:$0xff]
  %v4598 = vld [vmem:[%s3 + $0x15d0] sm:$0xff]
  %v4599 = vld [vmem:[%s3 + $0x15d8] sm:$0xff]
  %v4600 = vld [vmem:[%s3 + $0x15e0] sm:$0xff]
  %v4601 = vld [vmem:[%s3 + $0x15e8] sm:$0xff]
  %v4602 = vld [vmem:[%s3 + $0x15f0] sm:$0xff]
  %v4603 = vld [vmem:[%s3 + $0x15f8] sm:$0xff]
  %v4604 = vld [vmem:[%s3 + $0x1600] sm:$0xff]
  %v4605 = vld [vmem:[%s3 + $0x1608] sm:$0xff]
  %v4606 = vld [vmem:[%s3 + $0x1610] sm:$0xff]
  %v4607 = vld [vmem:[%s3 + $0x1618] sm:$0xff]
  %v4608 = vld [vmem:[%s3 + $0x1620] sm:$0xff]
  %v4609 = vld [vmem:[%s3 + $0x1628] sm:$0xff]
  %v4610 = vld [vmem:[%s3 + $0x1630] sm:$0xff]
  %v4611 = vld [vmem:[%s3 + $0x1638] sm:$0xff]
  %v4612 = vld [vmem:[%s3 + $0x1640] sm:$0xff]
  %v4613 = vld [vmem:[%s3 + $0x1648] sm:$0xff]
  %v4614 = vld [vmem:[%s3 + $0x1650] sm:$0xff]
  %v4615 = vld [vmem:[%s3 + $0x1658] sm:$0xff]
  %v4616 = vld [vmem:[%s3 + $0x1660] sm:$0xff]
  %v4617 = vld [vmem:[%s3 + $0x1668] sm:$0xff]
  %v4618 = vld [vmem:[%s3 + $0x1670] sm:$0xff]
  %v4619 = vld [vmem:[%s3 + $0x1678] sm:$0xff]
  %v4620 = vld [vmem:[%s3 + $0x1680] sm:$0xff]
  %v4621 = vld [vmem:[%s3 + $0x1688] sm:$0xff]
  %v4622 = vld [vmem:[%s3 + $0x1690] sm:$0xff]
  %v4623 = vld [vmem:[%s3 + $0x1698] sm:$0xff]
  %v4624 = vld [vmem:[%s3 + $0x16a0] sm:$0xff]
  %v4625 = vld [vmem:[%s3 + $0x16a8] sm:$0xff]
  %v4626 = vld [vmem:[%s3 + $0x16b0] sm:$0xff]
  %v4627 = vld [vmem:[%s3 + $0x16b8] sm:$0xff]
  %v4628 = vld [vmem:[%s3 + $0x16c0] sm:$0xff]
  %v4629 = vld [vmem:[%s3 + $0x16c8] sm:$0xff]
  %v4630 = vld [vmem:[%s3 + $0x16d0] sm:$0xff]
  %v4631 = vld [vmem:[%s3 + $0x16d8] sm:$0xff]
  %v4632 = vld [vmem:[%s3 + $0x16e0] sm:$0xff]
  %v4633 = vld [vmem:[%s3 + $0x16e8] sm:$0xff]
  %v4634 = vld [vmem:[%s3 + $0x16f0] sm:$0xff]
  %v4635 = vld [vmem:[%s3 + $0x16f8] sm:$0xff]
  %v4636 = vld [vmem:[%s3 + $0x1700] sm:$0xff]
  %v4637 = vld [vmem:[%s3 + $0x1708] sm:$0xff]
  %v4638 = vld [vmem:[%s3 + $0x1710] sm:$0xff]
  %v4639 = vld [vmem:[%s3 + $0x1718] sm:$0xff]
  %v4640 = vld [vmem:[%s3 + $0x1720] sm:$0xff]
  %v4641 = vld [vmem:[%s3 + $0x1728] sm:$0xff]
  %v4642 = vld [vmem:[%s3 + $0x1730] sm:$0xff]
  %v4643 = vld [vmem:[%s3 + $0x1738] sm:$0xff]
  %v4644 = vld [vmem:[%s3 + $0x1740] sm:$0xff]
  %v4645 = vld [vmem:[%s3 + $0x1748] sm:$0xff]
  %v4646 = vld [vmem:[%s3 + $0x1750] sm:$0xff]
  %v4647 = vld [vmem:[%s3 + $0x1758] sm:$0xff]
  %v4648 = vld [vmem:[%s3 + $0x1760] sm:$0xff]
  %v4649 = vld [vmem:[%s3 + $0x1768] sm:$0xff]
  %v4650 = vld [vmem:[%s3 + $0x1770] sm:$0xff]
  %v4651 = vld [vmem:[%s3 + $0x1778] sm:$0xff]
  %v4652 = vld [vmem:[%s3 + $0x1780] sm:$0xff]
  %v4653 = vld [vmem:[%s3 + $0x1788] sm:$0xff]
  %v4654 = vld [vmem:[%s3 + $0x1790] sm:$0xff]
  %v4655 = vld [vmem:[%s3 + $0x1798] sm:$0xff]
  %v4656 = vld [vmem:[%s3 + $0x17a0] sm:$0xff]
  %v4657 = vld [vmem:[%s3 + $0x17a8] sm:$0xff]
  %v4658 = vld [vmem:[%s3 + $0x17b0] sm:$0xff]
  %v4659 = vld [vmem:[%s3 + $0x17b8] sm:$0xff]
  %v4660 = vld [vmem:[%s3 + $0x17c0] sm:$0xff]
  %v4661 = vld [vmem:[%s3 + $0x17c8] sm:$0xff]
  %v4662 = vld [vmem:[%s3 + $0x17d0] sm:$0xff]
  %v4663 = vld [vmem:[%s3 + $0x17d8] sm:$0xff]
  %v4664 = vld [vmem:[%s3 + $0x17e0] sm:$0xff]
  %v4665 = vld [vmem:[%s3 + $0x17e8] sm:$0xff]
  %v4666 = vld [vmem:[%s3 + $0x17f0] sm:$0xff]
  %v4667 = vld [vmem:[%s3 + $0x17f8] sm:$0xff]
  %v5436 = vunpack.c.l.b16 %v3900
  %v5437 = vunpack.c.h.b16 %v3900
  %v5438 = vunpack.c.l.b16 %v3901
  %v5439 = vunpack.c.h.b16 %v3901
  %v5440 = vunpack.c.l.b16 %v3902
  %v5441 = vunpack.c.h.b16 %v3902
  %v5442 = vunpack.c.l.b16 %v3903
  %v5443 = vunpack.c.h.b16 %v3903
  %v5444 = vunpack.c.l.b16 %v3904
  %v5445 = vunpack.c.h.b16 %v3904
  %v5446 = vunpack.c.l.b16 %v3905
  %v5447 = vunpack.c.h.b16 %v3905
  %v5448 = vunpack.c.l.b16 %v3906
  %v5449 = vunpack.c.h.b16 %v3906
  %v5450 = vunpack.c.l.b16 %v3907
  %v5451 = vunpack.c.h.b16 %v3907
  %v5452 = vunpack.c.l.b16 %v3908
  %v5453 = vunpack.c.h.b16 %v3908
  %v5454 = vunpack.c.l.b16 %v3909
  %v5455 = vunpack.c.h.b16 %v3909
  %v5456 = vunpack.c.l.b16 %v3910
  %v5457 = vunpack.c.h.b16 %v3910
  %v5458 = vunpack.c.l.b16 %v3911
  %v5459 = vunpack.c.h.b16 %v3911
  %v5460 = vunpack.c.l.b16 %v3912
  %v5461 = vunpack.c.h.b16 %v3912
  %v5462 = vunpack.c.l.b16 %v3913
  %v5463 = vunpack.c.h.b16 %v3913
  %v5464 = vunpack.c.l.b16 %v3914
  %v5465 = vunpack.c.h.b16 %v3914
  %v5466 = vunpack.c.l.b16 %v3915
  %v5467 = vunpack.c.h.b16 %v3915
  %v5468 = vunpack.c.l.b16 %v3916
  %v5469 = vunpack.c.h.b16 %v3916
  %v5470 = vunpack.c.l.b16 %v3917
  %v5471 = vunpack.c.h.b16 %v3917
  %v5472 = vunpack.c.l.b16 %v3918
  %v5473 = vunpack.c.h.b16 %v3918
  %v5474 = vunpack.c.l.b16 %v3919
  %v5475 = vunpack.c.h.b16 %v3919
  %v5476 = vunpack.c.l.b16 %v3920
  %v5477 = vunpack.c.h.b16 %v3920
  %v5478 = vunpack.c.l.b16 %v3921
  %v5479 = vunpack.c.h.b16 %v3921
  %v5480 = vunpack.c.l.b16 %v3922
  %v5481 = vunpack.c.h.b16 %v3922
  %v5482 = vunpack.c.l.b16 %v3923
  %v5483 = vunpack.c.h.b16 %v3923
  %v5484 = vunpack.c.l.b16 %v3924
  %v5485 = vunpack.c.h.b16 %v3924
  %v5486 = vunpack.c.l.b16 %v3925
  %v5487 = vunpack.c.h.b16 %v3925
  %v5488 = vunpack.c.l.b16 %v3926
  %v5489 = vunpack.c.h.b16 %v3926
  %v5490 = vunpack.c.l.b16 %v3927
  %v5491 = vunpack.c.h.b16 %v3927
  %v5492 = vunpack.c.l.b16 %v3928
  %v5493 = vunpack.c.h.b16 %v3928
  %v5494 = vunpack.c.l.b16 %v3929
  %v5495 = vunpack.c.h.b16 %v3929
  %v5496 = vunpack.c.l.b16 %v3930
  %v5497 = vunpack.c.h.b16 %v3930
  %v5498 = vunpack.c.l.b16 %v3931
  %v5499 = vunpack.c.h.b16 %v3931
  %v5500 = vunpack.c.l.b16 %v3932
  %v5501 = vunpack.c.h.b16 %v3932
  %v5502 = vunpack.c.l.b16 %v3933
  %v5503 = vunpack.c.h.b16 %v3933
  %v5504 = vunpack.c.l.b16 %v3934
  %v5505 = vunpack.c.h.b16 %v3934
  %v5506 = vunpack.c.l.b16 %v3935
  %v5507 = vunpack.c.h.b16 %v3935
  %v5508 = vunpack.c.l.b16 %v3936
  %v5509 = vunpack.c.h.b16 %v3936
  %v5510 = vunpack.c.l.b16 %v3937
  %v5511 = vunpack.c.h.b16 %v3937
  %v5512 = vunpack.c.l.b16 %v3938
  %v5513 = vunpack.c.h.b16 %v3938
  %v5514 = vunpack.c.l.b16 %v3939
  %v5515 = vunpack.c.h.b16 %v3939
  %v5516 = vunpack.c.l.b16 %v3940
  %v5517 = vunpack.c.h.b16 %v3940
  %v5518 = vunpack.c.l.b16 %v3941
  %v5519 = vunpack.c.h.b16 %v3941
  %v5520 = vunpack.c.l.b16 %v3942
  %v5521 = vunpack.c.h.b16 %v3942
  %v5522 = vunpack.c.l.b16 %v3943
  %v5523 = vunpack.c.h.b16 %v3943
  %v5524 = vunpack.c.l.b16 %v3944
  %v5525 = vunpack.c.h.b16 %v3944
  %v5526 = vunpack.c.l.b16 %v3945
  %v5527 = vunpack.c.h.b16 %v3945
  %v5528 = vunpack.c.l.b16 %v3946
  %v5529 = vunpack.c.h.b16 %v3946
  %v5530 = vunpack.c.l.b16 %v3947
  %v5531 = vunpack.c.h.b16 %v3947
  %v5532 = vunpack.c.l.b16 %v3948
  %v5533 = vunpack.c.h.b16 %v3948
  %v5534 = vunpack.c.l.b16 %v3949
  %v5535 = vunpack.c.h.b16 %v3949
  %v5536 = vunpack.c.l.b16 %v3950
  %v5537 = vunpack.c.h.b16 %v3950
  %v5538 = vunpack.c.l.b16 %v3951
  %v5539 = vunpack.c.h.b16 %v3951
  %v5540 = vunpack.c.l.b16 %v3952
  %v5541 = vunpack.c.h.b16 %v3952
  %v5542 = vunpack.c.l.b16 %v3953
  %v5543 = vunpack.c.h.b16 %v3953
  %v5544 = vunpack.c.l.b16 %v3954
  %v5545 = vunpack.c.h.b16 %v3954
  %v5546 = vunpack.c.l.b16 %v3955
  %v5547 = vunpack.c.h.b16 %v3955
  %v5548 = vunpack.c.l.b16 %v3956
  %v5549 = vunpack.c.h.b16 %v3956
  %v5550 = vunpack.c.l.b16 %v3957
  %v5551 = vunpack.c.h.b16 %v3957
  %v5552 = vunpack.c.l.b16 %v3958
  %v5553 = vunpack.c.h.b16 %v3958
  %v5554 = vunpack.c.l.b16 %v3959
  %v5555 = vunpack.c.h.b16 %v3959
  %v5556 = vunpack.c.l.b16 %v3960
  %v5557 = vunpack.c.h.b16 %v3960
  %v5558 = vunpack.c.l.b16 %v3961
  %v5559 = vunpack.c.h.b16 %v3961
  %v5560 = vunpack.c.l.b16 %v3962
  %v5561 = vunpack.c.h.b16 %v3962
  %v5562 = vunpack.c.l.b16 %v3963
  %v5563 = vunpack.c.h.b16 %v3963
  %v5564 = vunpack.c.l.b16 %v3964
  %v5565 = vunpack.c.h.b16 %v3964
  %v5566 = vunpack.c.l.b16 %v3965
  %v5567 = vunpack.c.h.b16 %v3965
  %v5568 = vunpack.c.l.b16 %v3966
  %v5569 = vunpack.c.h.b16 %v3966
  %v5570 = vunpack.c.l.b16 %v3967
  %v5571 = vunpack.c.h.b16 %v3967
  %v5572 = vunpack.c.l.b16 %v3968
  %v5573 = vunpack.c.h.b16 %v3968
  %v5574 = vunpack.c.l.b16 %v3969
  %v5575 = vunpack.c.h.b16 %v3969
  %v5576 = vunpack.c.l.b16 %v3970
  %v5577 = vunpack.c.h.b16 %v3970
  %v5578 = vunpack.c.l.b16 %v3971
  %v5579 = vunpack.c.h.b16 %v3971
  %v5580 = vunpack.c.l.b16 %v3972
  %v5581 = vunpack.c.h.b16 %v3972
  %v5582 = vunpack.c.l.b16 %v3973
  %v5583 = vunpack.c.h.b16 %v3973
  %v5584 = vunpack.c.l.b16 %v3974
  %v5585 = vunpack.c.h.b16 %v3974
  %v5586 = vunpack.c.l.b16 %v3975
  %v5587 = vunpack.c.h.b16 %v3975
  %v5588 = vunpack.c.l.b16 %v3976
  %v5589 = vunpack.c.h.b16 %v3976
  %v5590 = vunpack.c.l.b16 %v3977
  %v5591 = vunpack.c.h.b16 %v3977
  %v5592 = vunpack.c.l.b16 %v3978
  %v5593 = vunpack.c.h.b16 %v3978
  %v5594 = vunpack.c.l.b16 %v3979
  %v5595 = vunpack.c.h.b16 %v3979
  %v5596 = vunpack.c.l.b16 %v3980
  %v5597 = vunpack.c.h.b16 %v3980
  %v5598 = vunpack.c.l.b16 %v3981
  %v5599 = vunpack.c.h.b16 %v3981
  %v5600 = vunpack.c.l.b16 %v3982
  %v5601 = vunpack.c.h.b16 %v3982
  %v5602 = vunpack.c.l.b16 %v3983
  %v5603 = vunpack.c.h.b16 %v3983
  %v5604 = vunpack.c.l.b16 %v3984
  %v5605 = vunpack.c.h.b16 %v3984
  %v5606 = vunpack.c.l.b16 %v3985
  %v5607 = vunpack.c.h.b16 %v3985
  %v5608 = vunpack.c.l.b16 %v3986
  %v5609 = vunpack.c.h.b16 %v3986
  %v5610 = vunpack.c.l.b16 %v3987
  %v5611 = vunpack.c.h.b16 %v3987
  %v5612 = vunpack.c.l.b16 %v3988
  %v5613 = vunpack.c.h.b16 %v3988
  %v5614 = vunpack.c.l.b16 %v3989
  %v5615 = vunpack.c.h.b16 %v3989
  %v5616 = vunpack.c.l.b16 %v3990
  %v5617 = vunpack.c.h.b16 %v3990
  %v5618 = vunpack.c.l.b16 %v3991
  %v5619 = vunpack.c.h.b16 %v3991
  %v5620 = vunpack.c.l.b16 %v3992
  %v5621 = vunpack.c.h.b16 %v3992
  %v5622 = vunpack.c.l.b16 %v3993
  %v5623 = vunpack.c.h.b16 %v3993
  %v5624 = vunpack.c.l.b16 %v3994
  %v5625 = vunpack.c.h.b16 %v3994
  %v5626 = vunpack.c.l.b16 %v3995
  %v5627 = vunpack.c.h.b16 %v3995
  %v5628 = vunpack.c.l.b16 %v3996
  %v5629 = vunpack.c.h.b16 %v3996
  %v5630 = vunpack.c.l.b16 %v3997
  %v5631 = vunpack.c.h.b16 %v3997
  %v5632 = vunpack.c.l.b16 %v3998
  %v5633 = vunpack.c.h.b16 %v3998
  %v5634 = vunpack.c.l.b16 %v3999
  %v5635 = vunpack.c.h.b16 %v3999
  %v5636 = vunpack.c.l.b16 %v4000
  %v5637 = vunpack.c.h.b16 %v4000
  %v5638 = vunpack.c.l.b16 %v4001
  %v5639 = vunpack.c.h.b16 %v4001
  %v5640 = vunpack.c.l.b16 %v4002
  %v5641 = vunpack.c.h.b16 %v4002
  %v5642 = vunpack.c.l.b16 %v4003
  %v5643 = vunpack.c.h.b16 %v4003
  %v5644 = vunpack.c.l.b16 %v4004
  %v5645 = vunpack.c.h.b16 %v4004
  %v5646 = vunpack.c.l.b16 %v4005
  %v5647 = vunpack.c.h.b16 %v4005
  %v5648 = vunpack.c.l.b16 %v4006
  %v5649 = vunpack.c.h.b16 %v4006
  %v5650 = vunpack.c.l.b16 %v4007
  %v5651 = vunpack.c.h.b16 %v4007
  %v5652 = vunpack.c.l.b16 %v4008
  %v5653 = vunpack.c.h.b16 %v4008
  %v5654 = vunpack.c.l.b16 %v4009
  %v5655 = vunpack.c.h.b16 %v4009
  %v5656 = vunpack.c.l.b16 %v4010
  %v5657 = vunpack.c.h.b16 %v4010
  %v5658 = vunpack.c.l.b16 %v4011
  %v5659 = vunpack.c.h.b16 %v4011
  %v5660 = vunpack.c.l.b16 %v4012
  %v5661 = vunpack.c.h.b16 %v4012
  %v5662 = vunpack.c.l.b16 %v4013
  %v5663 = vunpack.c.h.b16 %v4013
  %v5664 = vunpack.c.l.b16 %v4014
  %v5665 = vunpack.c.h.b16 %v4014
  %v5666 = vunpack.c.l.b16 %v4015
  %v5667 = vunpack.c.h.b16 %v4015
  %v5668 = vunpack.c.l.b16 %v4016
  %v5669 = vunpack.c.h.b16 %v4016
  %v5670 = vunpack.c.l.b16 %v4017
  %v5671 = vunpack.c.h.b16 %v4017
  %v5672 = vunpack.c.l.b16 %v4018
  %v5673 = vunpack.c.h.b16 %v4018
  %v5674 = vunpack.c.l.b16 %v4019
  %v5675 = vunpack.c.h.b16 %v4019
  %v5676 = vunpack.c.l.b16 %v4020
  %v5677 = vunpack.c.h.b16 %v4020
  %v5678 = vunpack.c.l.b16 %v4021
  %v5679 = vunpack.c.h.b16 %v4021
  %v5680 = vunpack.c.l.b16 %v4022
  %v5681 = vunpack.c.h.b16 %v4022
  %v5682 = vunpack.c.l.b16 %v4023
  %v5683 = vunpack.c.h.b16 %v4023
  %v5684 = vunpack.c.l.b16 %v4024
  %v5685 = vunpack.c.h.b16 %v4024
  %v5686 = vunpack.c.l.b16 %v4025
  %v5687 = vunpack.c.h.b16 %v4025
  %v5688 = vunpack.c.l.b16 %v4026
  %v5689 = vunpack.c.h.b16 %v4026
  %v5690 = vunpack.c.l.b16 %v4027
  %v5691 = vunpack.c.h.b16 %v4027
  %v5692 = vunpack.c.l.b16 %v4028
  %v5693 = vunpack.c.h.b16 %v4028
  %v5694 = vunpack.c.l.b16 %v4029
  %v5695 = vunpack.c.h.b16 %v4029
  %v5696 = vunpack.c.l.b16 %v4030
  %v5697 = vunpack.c.h.b16 %v4030
  %v5698 = vunpack.c.l.b16 %v4031
  %v5699 = vunpack.c.h.b16 %v4031
  %v5700 = vunpack.c.l.b16 %v4032
  %v5701 = vunpack.c.h.b16 %v4032
  %v5702 = vunpack.c.l.b16 %v4033
  %v5703 = vunpack.c.h.b16 %v4033
  %v5704 = vunpack.c.l.b16 %v4034
  %v5705 = vunpack.c.h.b16 %v4034
  %v5706 = vunpack.c.l.b16 %v4035
  %v5707 = vunpack.c.h.b16 %v4035
  %v5708 = vunpack.c.l.b16 %v4036
  %v5709 = vunpack.c.h.b16 %v4036
  %v5710 = vunpack.c.l.b16 %v4037
  %v5711 = vunpack.c.h.b16 %v4037
  %v5712 = vunpack.c.l.b16 %v4038
  %v5713 = vunpack.c.h.b16 %v4038
  %v5714 = vunpack.c.l.b16 %v4039
  %v5715 = vunpack.c.h.b16 %v4039
  %v5716 = vunpack.c.l.b16 %v4040
  %v5717 = vunpack.c.h.b16 %v4040
  %v5718 = vunpack.c.l.b16 %v4041
  %v5719 = vunpack.c.h.b16 %v4041
  %v5720 = vunpack.c.l.b16 %v4042
  %v5721 = vunpack.c.h.b16 %v4042
  %v5722 = vunpack.c.l.b16 %v4043
  %v5723 = vunpack.c.h.b16 %v4043
  %v5724 = vunpack.c.l.b16 %v4044
  %v5725 = vunpack.c.h.b16 %v4044
  %v5726 = vunpack.c.l.b16 %v4045
  %v5727 = vunpack.c.h.b16 %v4045
  %v5728 = vunpack.c.l.b16 %v4046
  %v5729 = vunpack.c.h.b16 %v4046
  %v5730 = vunpack.c.l.b16 %v4047
  %v5731 = vunpack.c.h.b16 %v4047
  %v5732 = vunpack.c.l.b16 %v4048
  %v5733 = vunpack.c.h.b16 %v4048
  %v5734 = vunpack.c.l.b16 %v4049
  %v5735 = vunpack.c.h.b16 %v4049
  %v5736 = vunpack.c.l.b16 %v4050
  %v5737 = vunpack.c.h.b16 %v4050
  %v5738 = vunpack.c.l.b16 %v4051
  %v5739 = vunpack.c.h.b16 %v4051
  %v5740 = vunpack.c.l.b16 %v4052
  %v5741 = vunpack.c.h.b16 %v4052
  %v5742 = vunpack.c.l.b16 %v4053
  %v5743 = vunpack.c.h.b16 %v4053
  %v5744 = vunpack.c.l.b16 %v4054
  %v5745 = vunpack.c.h.b16 %v4054
  %v5746 = vunpack.c.l.b16 %v4055
  %v5747 = vunpack.c.h.b16 %v4055
  %v5748 = vunpack.c.l.b16 %v4056
  %v5749 = vunpack.c.h.b16 %v4056
  %v5750 = vunpack.c.l.b16 %v4057
  %v5751 = vunpack.c.h.b16 %v4057
  %v5752 = vunpack.c.l.b16 %v4058
  %v5753 = vunpack.c.h.b16 %v4058
  %v5754 = vunpack.c.l.b16 %v4059
  %v5755 = vunpack.c.h.b16 %v4059
  %v5756 = vunpack.c.l.b16 %v4060
  %v5757 = vunpack.c.h.b16 %v4060
  %v5758 = vunpack.c.l.b16 %v4061
  %v5759 = vunpack.c.h.b16 %v4061
  %v5760 = vunpack.c.l.b16 %v4062
  %v5761 = vunpack.c.h.b16 %v4062
  %v5762 = vunpack.c.l.b16 %v4063
  %v5763 = vunpack.c.h.b16 %v4063
  %v5764 = vunpack.c.l.b16 %v4064
  %v5765 = vunpack.c.h.b16 %v4064
  %v5766 = vunpack.c.l.b16 %v4065
  %v5767 = vunpack.c.h.b16 %v4065
  %v5768 = vunpack.c.l.b16 %v4066
  %v5769 = vunpack.c.h.b16 %v4066
  %v5770 = vunpack.c.l.b16 %v4067
  %v5771 = vunpack.c.h.b16 %v4067
  %v5772 = vunpack.c.l.b16 %v4068
  %v5773 = vunpack.c.h.b16 %v4068
  %v5774 = vunpack.c.l.b16 %v4069
  %v5775 = vunpack.c.h.b16 %v4069
  %v5776 = vunpack.c.l.b16 %v4070
  %v5777 = vunpack.c.h.b16 %v4070
  %v5778 = vunpack.c.l.b16 %v4071
  %v5779 = vunpack.c.h.b16 %v4071
  %v5780 = vunpack.c.l.b16 %v4072
  %v5781 = vunpack.c.h.b16 %v4072
  %v5782 = vunpack.c.l.b16 %v4073
  %v5783 = vunpack.c.h.b16 %v4073
  %v5784 = vunpack.c.l.b16 %v4074
  %v5785 = vunpack.c.h.b16 %v4074
  %v5786 = vunpack.c.l.b16 %v4075
  %v5787 = vunpack.c.h.b16 %v4075
  %v5788 = vunpack.c.l.b16 %v4076
  %v5789 = vunpack.c.h.b16 %v4076
  %v5790 = vunpack.c.l.b16 %v4077
  %v5791 = vunpack.c.h.b16 %v4077
  %v5792 = vunpack.c.l.b16 %v4078
  %v5793 = vunpack.c.h.b16 %v4078
  %v5794 = vunpack.c.l.b16 %v4079
  %v5795 = vunpack.c.h.b16 %v4079
  %v5796 = vunpack.c.l.b16 %v4080
  %v5797 = vunpack.c.h.b16 %v4080
  %v5798 = vunpack.c.l.b16 %v4081
  %v5799 = vunpack.c.h.b16 %v4081
  %v5800 = vunpack.c.l.b16 %v4082
  %v5801 = vunpack.c.h.b16 %v4082
  %v5802 = vunpack.c.l.b16 %v4083
  %v5803 = vunpack.c.h.b16 %v4083
  %v5804 = vunpack.c.l.b16 %v4084
  %v5805 = vunpack.c.h.b16 %v4084
  %v5806 = vunpack.c.l.b16 %v4085
  %v5807 = vunpack.c.h.b16 %v4085
  %v5808 = vunpack.c.l.b16 %v4086
  %v5809 = vunpack.c.h.b16 %v4086
  %v5810 = vunpack.c.l.b16 %v4087
  %v5811 = vunpack.c.h.b16 %v4087
  %v5812 = vunpack.c.l.b16 %v4088
  %v5813 = vunpack.c.h.b16 %v4088
  %v5814 = vunpack.c.l.b16 %v4089
  %v5815 = vunpack.c.h.b16 %v4089
  %v5816 = vunpack.c.l.b16 %v4090
  %v5817 = vunpack.c.h.b16 %v4090
  %v5818 = vunpack.c.l.b16 %v4091
  %v5819 = vunpack.c.h.b16 %v4091
  %v5820 = vunpack.c.l.b16 %v4092
  %v5821 = vunpack.c.h.b16 %v4092
  %v5822 = vunpack.c.l.b16 %v4093
  %v5823 = vunpack.c.h.b16 %v4093
  %v5824 = vunpack.c.l.b16 %v4094
  %v5825 = vunpack.c.h.b16 %v4094
  %v5826 = vunpack.c.l.b16 %v4095
  %v5827 = vunpack.c.h.b16 %v4095
  %v5828 = vunpack.c.l.b16 %v4096
  %v5829 = vunpack.c.h.b16 %v4096
  %v5830 = vunpack.c.l.b16 %v4097
  %v5831 = vunpack.c.h.b16 %v4097
  %v5832 = vunpack.c.l.b16 %v4098
  %v5833 = vunpack.c.h.b16 %v4098
  %v5834 = vunpack.c.l.b16 %v4099
  %v5835 = vunpack.c.h.b16 %v4099
  %v5836 = vunpack.c.l.b16 %v4100
  %v5837 = vunpack.c.h.b16 %v4100
  %v5838 = vunpack.c.l.b16 %v4101
  %v5839 = vunpack.c.h.b16 %v4101
  %v5840 = vunpack.c.l.b16 %v4102
  %v5841 = vunpack.c.h.b16 %v4102
  %v5842 = vunpack.c.l.b16 %v4103
  %v5843 = vunpack.c.h.b16 %v4103
  %v5844 = vunpack.c.l.b16 %v4104
  %v5845 = vunpack.c.h.b16 %v4104
  %v5846 = vunpack.c.l.b16 %v4105
  %v5847 = vunpack.c.h.b16 %v4105
  %v5848 = vunpack.c.l.b16 %v4106
  %v5849 = vunpack.c.h.b16 %v4106
  %v5850 = vunpack.c.l.b16 %v4107
  %v5851 = vunpack.c.h.b16 %v4107
  %v5852 = vunpack.c.l.b16 %v4108
  %v5853 = vunpack.c.h.b16 %v4108
  %v5854 = vunpack.c.l.b16 %v4109
  %v5855 = vunpack.c.h.b16 %v4109
  %v5856 = vunpack.c.l.b16 %v4110
  %v5857 = vunpack.c.h.b16 %v4110
  %v5858 = vunpack.c.l.b16 %v4111
  %v5859 = vunpack.c.h.b16 %v4111
  %v5860 = vunpack.c.l.b16 %v4112
  %v5861 = vunpack.c.h.b16 %v4112
  %v5862 = vunpack.c.l.b16 %v4113
  %v5863 = vunpack.c.h.b16 %v4113
  %v5864 = vunpack.c.l.b16 %v4114
  %v5865 = vunpack.c.h.b16 %v4114
  %v5866 = vunpack.c.l.b16 %v4115
  %v5867 = vunpack.c.h.b16 %v4115
  %v5868 = vunpack.c.l.b16 %v4116
  %v5869 = vunpack.c.h.b16 %v4116
  %v5870 = vunpack.c.l.b16 %v4117
  %v5871 = vunpack.c.h.b16 %v4117
  %v5872 = vunpack.c.l.b16 %v4118
  %v5873 = vunpack.c.h.b16 %v4118
  %v5874 = vunpack.c.l.b16 %v4119
  %v5875 = vunpack.c.h.b16 %v4119
  %v5876 = vunpack.c.l.b16 %v4120
  %v5877 = vunpack.c.h.b16 %v4120
  %v5878 = vunpack.c.l.b16 %v4121
  %v5879 = vunpack.c.h.b16 %v4121
  %v5880 = vunpack.c.l.b16 %v4122
  %v5881 = vunpack.c.h.b16 %v4122
  %v5882 = vunpack.c.l.b16 %v4123
  %v5883 = vunpack.c.h.b16 %v4123
  %v5884 = vunpack.c.l.b16 %v4124
  %v5885 = vunpack.c.h.b16 %v4124
  %v5886 = vunpack.c.l.b16 %v4125
  %v5887 = vunpack.c.h.b16 %v4125
  %v5888 = vunpack.c.l.b16 %v4126
  %v5889 = vunpack.c.h.b16 %v4126
  %v5890 = vunpack.c.l.b16 %v4127
  %v5891 = vunpack.c.h.b16 %v4127
  %v5892 = vunpack.c.l.b16 %v4128
  %v5893 = vunpack.c.h.b16 %v4128
  %v5894 = vunpack.c.l.b16 %v4129
  %v5895 = vunpack.c.h.b16 %v4129
  %v5896 = vunpack.c.l.b16 %v4130
  %v5897 = vunpack.c.h.b16 %v4130
  %v5898 = vunpack.c.l.b16 %v4131
  %v5899 = vunpack.c.h.b16 %v4131
  %v5900 = vunpack.c.l.b16 %v4132
  %v5901 = vunpack.c.h.b16 %v4132
  %v5902 = vunpack.c.l.b16 %v4133
  %v5903 = vunpack.c.h.b16 %v4133
  %v5904 = vunpack.c.l.b16 %v4134
  %v5905 = vunpack.c.h.b16 %v4134
  %v5906 = vunpack.c.l.b16 %v4135
  %v5907 = vunpack.c.h.b16 %v4135
  %v5908 = vunpack.c.l.b16 %v4136
  %v5909 = vunpack.c.h.b16 %v4136
  %v5910 = vunpack.c.l.b16 %v4137
  %v5911 = vunpack.c.h.b16 %v4137
  %v5912 = vunpack.c.l.b16 %v4138
  %v5913 = vunpack.c.h.b16 %v4138
  %v5914 = vunpack.c.l.b16 %v4139
  %v5915 = vunpack.c.h.b16 %v4139
  %v5916 = vunpack.c.l.b16 %v4140
  %v5917 = vunpack.c.h.b16 %v4140
  %v5918 = vunpack.c.l.b16 %v4141
  %v5919 = vunpack.c.h.b16 %v4141
  %v5920 = vunpack.c.l.b16 %v4142
  %v5921 = vunpack.c.h.b16 %v4142
  %v5922 = vunpack.c.l.b16 %v4143
  %v5923 = vunpack.c.h.b16 %v4143
  %v5924 = vunpack.c.l.b16 %v4144
  %v5925 = vunpack.c.h.b16 %v4144
  %v5926 = vunpack.c.l.b16 %v4145
  %v5927 = vunpack.c.h.b16 %v4145
  %v5928 = vunpack.c.l.b16 %v4146
  %v5929 = vunpack.c.h.b16 %v4146
  %v5930 = vunpack.c.l.b16 %v4147
  %v5931 = vunpack.c.h.b16 %v4147
  %v5932 = vunpack.c.l.b16 %v4148
  %v5933 = vunpack.c.h.b16 %v4148
  %v5934 = vunpack.c.l.b16 %v4149
  %v5935 = vunpack.c.h.b16 %v4149
  %v5936 = vunpack.c.l.b16 %v4150
  %v5937 = vunpack.c.h.b16 %v4150
  %v5938 = vunpack.c.l.b16 %v4151
  %v5939 = vunpack.c.h.b16 %v4151
  %v5940 = vunpack.c.l.b16 %v4152
  %v5941 = vunpack.c.h.b16 %v4152
  %v5942 = vunpack.c.l.b16 %v4153
  %v5943 = vunpack.c.h.b16 %v4153
  %v5944 = vunpack.c.l.b16 %v4154
  %v5945 = vunpack.c.h.b16 %v4154
  %v5946 = vunpack.c.l.b16 %v4155
  %v5947 = vunpack.c.h.b16 %v4155
  %v5948 = vunpack.c.l.b16 %v4156
  %v5949 = vunpack.c.h.b16 %v4156
  %v5950 = vunpack.c.l.b16 %v4157
  %v5951 = vunpack.c.h.b16 %v4157
  %v5952 = vunpack.c.l.b16 %v4158
  %v5953 = vunpack.c.h.b16 %v4158
  %v5954 = vunpack.c.l.b16 %v4159
  %v5955 = vunpack.c.h.b16 %v4159
  %v5956 = vunpack.c.l.b16 %v4160
  %v5957 = vunpack.c.h.b16 %v4160
  %v5958 = vunpack.c.l.b16 %v4161
  %v5959 = vunpack.c.h.b16 %v4161
  %v5960 = vunpack.c.l.b16 %v4162
  %v5961 = vunpack.c.h.b16 %v4162
  %v5962 = vunpack.c.l.b16 %v4163
  %v5963 = vunpack.c.h.b16 %v4163
  %v5964 = vunpack.c.l.b16 %v4164
  %v5965 = vunpack.c.h.b16 %v4164
  %v5966 = vunpack.c.l.b16 %v4165
  %v5967 = vunpack.c.h.b16 %v4165
  %v5968 = vunpack.c.l.b16 %v4166
  %v5969 = vunpack.c.h.b16 %v4166
  %v5970 = vunpack.c.l.b16 %v4167
  %v5971 = vunpack.c.h.b16 %v4167
  %v5972 = vunpack.c.l.b16 %v4168
  %v5973 = vunpack.c.h.b16 %v4168
  %v5974 = vunpack.c.l.b16 %v4169
  %v5975 = vunpack.c.h.b16 %v4169
  %v5976 = vunpack.c.l.b16 %v4170
  %v5977 = vunpack.c.h.b16 %v4170
  %v5978 = vunpack.c.l.b16 %v4171
  %v5979 = vunpack.c.h.b16 %v4171
  %v5980 = vunpack.c.l.b16 %v4172
  %v5981 = vunpack.c.h.b16 %v4172
  %v5982 = vunpack.c.l.b16 %v4173
  %v5983 = vunpack.c.h.b16 %v4173
  %v5984 = vunpack.c.l.b16 %v4174
  %v5985 = vunpack.c.h.b16 %v4174
  %v5986 = vunpack.c.l.b16 %v4175
  %v5987 = vunpack.c.h.b16 %v4175
  %v5988 = vunpack.c.l.b16 %v4176
  %v5989 = vunpack.c.h.b16 %v4176
  %v5990 = vunpack.c.l.b16 %v4177
  %v5991 = vunpack.c.h.b16 %v4177
  %v5992 = vunpack.c.l.b16 %v4178
  %v5993 = vunpack.c.h.b16 %v4178
  %v5994 = vunpack.c.l.b16 %v4179
  %v5995 = vunpack.c.h.b16 %v4179
  %v5996 = vunpack.c.l.b16 %v4180
  %v5997 = vunpack.c.h.b16 %v4180
  %v5998 = vunpack.c.l.b16 %v4181
  %v5999 = vunpack.c.h.b16 %v4181
  %v6000 = vunpack.c.l.b16 %v4182
  %v6001 = vunpack.c.h.b16 %v4182
  %v6002 = vunpack.c.l.b16 %v4183
  %v6003 = vunpack.c.h.b16 %v4183
  %v6004 = vunpack.c.l.b16 %v4184
  %v6005 = vunpack.c.h.b16 %v4184
  %v6006 = vunpack.c.l.b16 %v4185
  %v6007 = vunpack.c.h.b16 %v4185
  %v6008 = vunpack.c.l.b16 %v4186
  %v6009 = vunpack.c.h.b16 %v4186
  %v6010 = vunpack.c.l.b16 %v4187
  %v6011 = vunpack.c.h.b16 %v4187
  %v6012 = vunpack.c.l.b16 %v4188
  %v6013 = vunpack.c.h.b16 %v4188
  %v6014 = vunpack.c.l.b16 %v4189
  %v6015 = vunpack.c.h.b16 %v4189
  %v6016 = vunpack.c.l.b16 %v4190
  %v6017 = vunpack.c.h.b16 %v4190
  %v6018 = vunpack.c.l.b16 %v4191
  %v6019 = vunpack.c.h.b16 %v4191
  %v6020 = vunpack.c.l.b16 %v4192
  %v6021 = vunpack.c.h.b16 %v4192
  %v6022 = vunpack.c.l.b16 %v4193
  %v6023 = vunpack.c.h.b16 %v4193
  %v6024 = vunpack.c.l.b16 %v4194
  %v6025 = vunpack.c.h.b16 %v4194
  %v6026 = vunpack.c.l.b16 %v4195
  %v6027 = vunpack.c.h.b16 %v4195
  %v6028 = vunpack.c.l.b16 %v4196
  %v6029 = vunpack.c.h.b16 %v4196
  %v6030 = vunpack.c.l.b16 %v4197
  %v6031 = vunpack.c.h.b16 %v4197
  %v6032 = vunpack.c.l.b16 %v4198
  %v6033 = vunpack.c.h.b16 %v4198
  %v6034 = vunpack.c.l.b16 %v4199
  %v6035 = vunpack.c.h.b16 %v4199
  %v6036 = vunpack.c.l.b16 %v4200
  %v6037 = vunpack.c.h.b16 %v4200
  %v6038 = vunpack.c.l.b16 %v4201
  %v6039 = vunpack.c.h.b16 %v4201
  %v6040 = vunpack.c.l.b16 %v4202
  %v6041 = vunpack.c.h.b16 %v4202
  %v6042 = vunpack.c.l.b16 %v4203
  %v6043 = vunpack.c.h.b16 %v4203
  %v6044 = vunpack.c.l.b16 %v4204
  %v6045 = vunpack.c.h.b16 %v4204
  %v6046 = vunpack.c.l.b16 %v4205
  %v6047 = vunpack.c.h.b16 %v4205
  %v6048 = vunpack.c.l.b16 %v4206
  %v6049 = vunpack.c.h.b16 %v4206
  %v6050 = vunpack.c.l.b16 %v4207
  %v6051 = vunpack.c.h.b16 %v4207
  %v6052 = vunpack.c.l.b16 %v4208
  %v6053 = vunpack.c.h.b16 %v4208
  %v6054 = vunpack.c.l.b16 %v4209
  %v6055 = vunpack.c.h.b16 %v4209
  %v6056 = vunpack.c.l.b16 %v4210
  %v6057 = vunpack.c.h.b16 %v4210
  %v6058 = vunpack.c.l.b16 %v4211
  %v6059 = vunpack.c.h.b16 %v4211
  %v6060 = vunpack.c.l.b16 %v4212
  %v6061 = vunpack.c.h.b16 %v4212
  %v6062 = vunpack.c.l.b16 %v4213
  %v6063 = vunpack.c.h.b16 %v4213
  %v6064 = vunpack.c.l.b16 %v4214
  %v6065 = vunpack.c.h.b16 %v4214
  %v6066 = vunpack.c.l.b16 %v4215
  %v6067 = vunpack.c.h.b16 %v4215
  %v6068 = vunpack.c.l.b16 %v4216
  %v6069 = vunpack.c.h.b16 %v4216
  %v6070 = vunpack.c.l.b16 %v4217
  %v6071 = vunpack.c.h.b16 %v4217
  %v6072 = vunpack.c.l.b16 %v4218
  %v6073 = vunpack.c.h.b16 %v4218
  %v6074 = vunpack.c.l.b16 %v4219
  %v6075 = vunpack.c.h.b16 %v4219
  %v6076 = vunpack.c.l.b16 %v4220
  %v6077 = vunpack.c.h.b16 %v4220
  %v6078 = vunpack.c.l.b16 %v4221
  %v6079 = vunpack.c.h.b16 %v4221
  %v6080 = vunpack.c.l.b16 %v4222
  %v6081 = vunpack.c.h.b16 %v4222
  %v6082 = vunpack.c.l.b16 %v4223
  %v6083 = vunpack.c.h.b16 %v4223
  %v6084 = vunpack.c.l.b16 %v4224
  %v6085 = vunpack.c.h.b16 %v4224
  %v6086 = vunpack.c.l.b16 %v4225
  %v6087 = vunpack.c.h.b16 %v4225
  %v6088 = vunpack.c.l.b16 %v4226
  %v6089 = vunpack.c.h.b16 %v4226
  %v6090 = vunpack.c.l.b16 %v4227
  %v6091 = vunpack.c.h.b16 %v4227
  %v6092 = vunpack.c.l.b16 %v4228
  %v6093 = vunpack.c.h.b16 %v4228
  %v6094 = vunpack.c.l.b16 %v4229
  %v6095 = vunpack.c.h.b16 %v4229
  %v6096 = vunpack.c.l.b16 %v4230
  %v6097 = vunpack.c.h.b16 %v4230
  %v6098 = vunpack.c.l.b16 %v4231
  %v6099 = vunpack.c.h.b16 %v4231
  %v6100 = vunpack.c.l.b16 %v4232
  %v6101 = vunpack.c.h.b16 %v4232
  %v6102 = vunpack.c.l.b16 %v4233
  %v6103 = vunpack.c.h.b16 %v4233
  %v6104 = vunpack.c.l.b16 %v4234
  %v6105 = vunpack.c.h.b16 %v4234
  %v6106 = vunpack.c.l.b16 %v4235
  %v6107 = vunpack.c.h.b16 %v4235
  %v6108 = vunpack.c.l.b16 %v4236
  %v6109 = vunpack.c.h.b16 %v4236
  %v6110 = vunpack.c.l.b16 %v4237
  %v6111 = vunpack.c.h.b16 %v4237
  %v6112 = vunpack.c.l.b16 %v4238
  %v6113 = vunpack.c.h.b16 %v4238
  %v6114 = vunpack.c.l.b16 %v4239
  %v6115 = vunpack.c.h.b16 %v4239
  %v6116 = vunpack.c.l.b16 %v4240
  %v6117 = vunpack.c.h.b16 %v4240
  %v6118 = vunpack.c.l.b16 %v4241
  %v6119 = vunpack.c.h.b16 %v4241
  %v6120 = vunpack.c.l.b16 %v4242
  %v6121 = vunpack.c.h.b16 %v4242
  %v6122 = vunpack.c.l.b16 %v4243
  %v6123 = vunpack.c.h.b16 %v4243
  %v6124 = vunpack.c.l.b16 %v4244
  %v6125 = vunpack.c.h.b16 %v4244
  %v6126 = vunpack.c.l.b16 %v4245
  %v6127 = vunpack.c.h.b16 %v4245
  %v6128 = vunpack.c.l.b16 %v4246
  %v6129 = vunpack.c.h.b16 %v4246
  %v6130 = vunpack.c.l.b16 %v4247
  %v6131 = vunpack.c.h.b16 %v4247
  %v6132 = vunpack.c.l.b16 %v4248
  %v6133 = vunpack.c.h.b16 %v4248
  %v6134 = vunpack.c.l.b16 %v4249
  %v6135 = vunpack.c.h.b16 %v4249
  %v6136 = vunpack.c.l.b16 %v4250
  %v6137 = vunpack.c.h.b16 %v4250
  %v6138 = vunpack.c.l.b16 %v4251
  %v6139 = vunpack.c.h.b16 %v4251
  %v6140 = vunpack.c.l.b16 %v4252
  %v6141 = vunpack.c.h.b16 %v4252
  %v6142 = vunpack.c.l.b16 %v4253
  %v6143 = vunpack.c.h.b16 %v4253
  %v6144 = vunpack.c.l.b16 %v4254
  %v6145 = vunpack.c.h.b16 %v4254
  %v6146 = vunpack.c.l.b16 %v4255
  %v6147 = vunpack.c.h.b16 %v4255
  %v6148 = vunpack.c.l.b16 %v4256
  %v6149 = vunpack.c.h.b16 %v4256
  %v6150 = vunpack.c.l.b16 %v4257
  %v6151 = vunpack.c.h.b16 %v4257
  %v6152 = vunpack.c.l.b16 %v4258
  %v6153 = vunpack.c.h.b16 %v4258
  %v6154 = vunpack.c.l.b16 %v4259
  %v6155 = vunpack.c.h.b16 %v4259
  %v6156 = vunpack.c.l.b16 %v4260
  %v6157 = vunpack.c.h.b16 %v4260
  %v6158 = vunpack.c.l.b16 %v4261
  %v6159 = vunpack.c.h.b16 %v4261
  %v6160 = vunpack.c.l.b16 %v4262
  %v6161 = vunpack.c.h.b16 %v4262
  %v6162 = vunpack.c.l.b16 %v4263
  %v6163 = vunpack.c.h.b16 %v4263
  %v6164 = vunpack.c.l.b16 %v4264
  %v6165 = vunpack.c.h.b16 %v4264
  %v6166 = vunpack.c.l.b16 %v4265
  %v6167 = vunpack.c.h.b16 %v4265
  %v6168 = vunpack.c.l.b16 %v4266
  %v6169 = vunpack.c.h.b16 %v4266
  %v6170 = vunpack.c.l.b16 %v4267
  %v6171 = vunpack.c.h.b16 %v4267
  %v6172 = vunpack.c.l.b16 %v4268
  %v6173 = vunpack.c.h.b16 %v4268
  %v6174 = vunpack.c.l.b16 %v4269
  %v6175 = vunpack.c.h.b16 %v4269
  %v6176 = vunpack.c.l.b16 %v4270
  %v6177 = vunpack.c.h.b16 %v4270
  %v6178 = vunpack.c.l.b16 %v4271
  %v6179 = vunpack.c.h.b16 %v4271
  %v6180 = vunpack.c.l.b16 %v4272
  %v6181 = vunpack.c.h.b16 %v4272
  %v6182 = vunpack.c.l.b16 %v4273
  %v6183 = vunpack.c.h.b16 %v4273
  %v6184 = vunpack.c.l.b16 %v4274
  %v6185 = vunpack.c.h.b16 %v4274
  %v6186 = vunpack.c.l.b16 %v4275
  %v6187 = vunpack.c.h.b16 %v4275
  %v6188 = vunpack.c.l.b16 %v4276
  %v6189 = vunpack.c.h.b16 %v4276
  %v6190 = vunpack.c.l.b16 %v4277
  %v6191 = vunpack.c.h.b16 %v4277
  %v6192 = vunpack.c.l.b16 %v4278
  %v6193 = vunpack.c.h.b16 %v4278
  %v6194 = vunpack.c.l.b16 %v4279
  %v6195 = vunpack.c.h.b16 %v4279
  %v6196 = vunpack.c.l.b16 %v4280
  %v6197 = vunpack.c.h.b16 %v4280
  %v6198 = vunpack.c.l.b16 %v4281
  %v6199 = vunpack.c.h.b16 %v4281
  %v6200 = vunpack.c.l.b16 %v4282
  %v6201 = vunpack.c.h.b16 %v4282
  %v6202 = vunpack.c.l.b16 %v4283
  %v6203 = vunpack.c.h.b16 %v4283
  %v6204 = vunpack.c.l.b16 %v4284
  %v6205 = vunpack.c.h.b16 %v4284
  %v6206 = vunpack.c.l.b16 %v4285
  %v6207 = vunpack.c.h.b16 %v4285
  %v6208 = vunpack.c.l.b16 %v4286
  %v6209 = vunpack.c.h.b16 %v4286
  %v6210 = vunpack.c.l.b16 %v4287
  %v6211 = vunpack.c.h.b16 %v4287
  %v6212 = vunpack.c.l.b16 %v4288
  %v6213 = vunpack.c.h.b16 %v4288
  %v6214 = vunpack.c.l.b16 %v4289
  %v6215 = vunpack.c.h.b16 %v4289
  %v6216 = vunpack.c.l.b16 %v4290
  %v6217 = vunpack.c.h.b16 %v4290
  %v6218 = vunpack.c.l.b16 %v4291
  %v6219 = vunpack.c.h.b16 %v4291
  %v6220 = vunpack.c.l.b16 %v4292
  %v6221 = vunpack.c.h.b16 %v4292
  %v6222 = vunpack.c.l.b16 %v4293
  %v6223 = vunpack.c.h.b16 %v4293
  %v6224 = vunpack.c.l.b16 %v4294
  %v6225 = vunpack.c.h.b16 %v4294
  %v6226 = vunpack.c.l.b16 %v4295
  %v6227 = vunpack.c.h.b16 %v4295
  %v6228 = vunpack.c.l.b16 %v4296
  %v6229 = vunpack.c.h.b16 %v4296
  %v6230 = vunpack.c.l.b16 %v4297
  %v6231 = vunpack.c.h.b16 %v4297
  %v6232 = vunpack.c.l.b16 %v4298
  %v6233 = vunpack.c.h.b16 %v4298
  %v6234 = vunpack.c.l.b16 %v4299
  %v6235 = vunpack.c.h.b16 %v4299
  %v6236 = vunpack.c.l.b16 %v4300
  %v6237 = vunpack.c.h.b16 %v4300
  %v6238 = vunpack.c.l.b16 %v4301
  %v6239 = vunpack.c.h.b16 %v4301
  %v6240 = vunpack.c.l.b16 %v4302
  %v6241 = vunpack.c.h.b16 %v4302
  %v6242 = vunpack.c.l.b16 %v4303
  %v6243 = vunpack.c.h.b16 %v4303
  %v6244 = vunpack.c.l.b16 %v4304
  %v6245 = vunpack.c.h.b16 %v4304
  %v6246 = vunpack.c.l.b16 %v4305
  %v6247 = vunpack.c.h.b16 %v4305
  %v6248 = vunpack.c.l.b16 %v4306
  %v6249 = vunpack.c.h.b16 %v4306
  %v6250 = vunpack.c.l.b16 %v4307
  %v6251 = vunpack.c.h.b16 %v4307
  %v6252 = vunpack.c.l.b16 %v4308
  %v6253 = vunpack.c.h.b16 %v4308
  %v6254 = vunpack.c.l.b16 %v4309
  %v6255 = vunpack.c.h.b16 %v4309
  %v6256 = vunpack.c.l.b16 %v4310
  %v6257 = vunpack.c.h.b16 %v4310
  %v6258 = vunpack.c.l.b16 %v4311
  %v6259 = vunpack.c.h.b16 %v4311
  %v6260 = vunpack.c.l.b16 %v4312
  %v6261 = vunpack.c.h.b16 %v4312
  %v6262 = vunpack.c.l.b16 %v4313
  %v6263 = vunpack.c.h.b16 %v4313
  %v6264 = vunpack.c.l.b16 %v4314
  %v6265 = vunpack.c.h.b16 %v4314
  %v6266 = vunpack.c.l.b16 %v4315
  %v6267 = vunpack.c.h.b16 %v4315
  %v6268 = vunpack.c.l.b16 %v4316
  %v6269 = vunpack.c.h.b16 %v4316
  %v6270 = vunpack.c.l.b16 %v4317
  %v6271 = vunpack.c.h.b16 %v4317
  %v6272 = vunpack.c.l.b16 %v4318
  %v6273 = vunpack.c.h.b16 %v4318
  %v6274 = vunpack.c.l.b16 %v4319
  %v6275 = vunpack.c.h.b16 %v4319
  %v6276 = vunpack.c.l.b16 %v4320
  %v6277 = vunpack.c.h.b16 %v4320
  %v6278 = vunpack.c.l.b16 %v4321
  %v6279 = vunpack.c.h.b16 %v4321
  %v6280 = vunpack.c.l.b16 %v4322
  %v6281 = vunpack.c.h.b16 %v4322
  %v6282 = vunpack.c.l.b16 %v4323
  %v6283 = vunpack.c.h.b16 %v4323
  %v6284 = vunpack.c.l.b16 %v4324
  %v6285 = vunpack.c.h.b16 %v4324
  %v6286 = vunpack.c.l.b16 %v4325
  %v6287 = vunpack.c.h.b16 %v4325
  %v6288 = vunpack.c.l.b16 %v4326
  %v6289 = vunpack.c.h.b16 %v4326
  %v6290 = vunpack.c.l.b16 %v4327
  %v6291 = vunpack.c.h.b16 %v4327
  %v6292 = vunpack.c.l.b16 %v4328
  %v6293 = vunpack.c.h.b16 %v4328
  %v6294 = vunpack.c.l.b16 %v4329
  %v6295 = vunpack.c.h.b16 %v4329
  %v6296 = vunpack.c.l.b16 %v4330
  %v6297 = vunpack.c.h.b16 %v4330
  %v6298 = vunpack.c.l.b16 %v4331
  %v6299 = vunpack.c.h.b16 %v4331
  %v6300 = vunpack.c.l.b16 %v4332
  %v6301 = vunpack.c.h.b16 %v4332
  %v6302 = vunpack.c.l.b16 %v4333
  %v6303 = vunpack.c.h.b16 %v4333
  %v6304 = vunpack.c.l.b16 %v4334
  %v6305 = vunpack.c.h.b16 %v4334
  %v6306 = vunpack.c.l.b16 %v4335
  %v6307 = vunpack.c.h.b16 %v4335
  %v6308 = vunpack.c.l.b16 %v4336
  %v6309 = vunpack.c.h.b16 %v4336
  %v6310 = vunpack.c.l.b16 %v4337
  %v6311 = vunpack.c.h.b16 %v4337
  %v6312 = vunpack.c.l.b16 %v4338
  %v6313 = vunpack.c.h.b16 %v4338
  %v6314 = vunpack.c.l.b16 %v4339
  %v6315 = vunpack.c.h.b16 %v4339
  %v6316 = vunpack.c.l.b16 %v4340
  %v6317 = vunpack.c.h.b16 %v4340
  %v6318 = vunpack.c.l.b16 %v4341
  %v6319 = vunpack.c.h.b16 %v4341
  %v6320 = vunpack.c.l.b16 %v4342
  %v6321 = vunpack.c.h.b16 %v4342
  %v6322 = vunpack.c.l.b16 %v4343
  %v6323 = vunpack.c.h.b16 %v4343
  %v6324 = vunpack.c.l.b16 %v4344
  %v6325 = vunpack.c.h.b16 %v4344
  %v6326 = vunpack.c.l.b16 %v4345
  %v6327 = vunpack.c.h.b16 %v4345
  %v6328 = vunpack.c.l.b16 %v4346
  %v6329 = vunpack.c.h.b16 %v4346
  %v6330 = vunpack.c.l.b16 %v4347
  %v6331 = vunpack.c.h.b16 %v4347
  %v6332 = vunpack.c.l.b16 %v4348
  %v6333 = vunpack.c.h.b16 %v4348
  %v6334 = vunpack.c.l.b16 %v4349
  %v6335 = vunpack.c.h.b16 %v4349
  %v6336 = vunpack.c.l.b16 %v4350
  %v6337 = vunpack.c.h.b16 %v4350
  %v6338 = vunpack.c.l.b16 %v4351
  %v6339 = vunpack.c.h.b16 %v4351
  %v6340 = vunpack.c.l.b16 %v4352
  %v6341 = vunpack.c.h.b16 %v4352
  %v6342 = vunpack.c.l.b16 %v4353
  %v6343 = vunpack.c.h.b16 %v4353
  %v6344 = vunpack.c.l.b16 %v4354
  %v6345 = vunpack.c.h.b16 %v4354
  %v6346 = vunpack.c.l.b16 %v4355
  %v6347 = vunpack.c.h.b16 %v4355
  %v6348 = vunpack.c.l.b16 %v4356
  %v6349 = vunpack.c.h.b16 %v4356
  %v6350 = vunpack.c.l.b16 %v4357
  %v6351 = vunpack.c.h.b16 %v4357
  %v6352 = vunpack.c.l.b16 %v4358
  %v6353 = vunpack.c.h.b16 %v4358
  %v6354 = vunpack.c.l.b16 %v4359
  %v6355 = vunpack.c.h.b16 %v4359
  %v6356 = vunpack.c.l.b16 %v4360
  %v6357 = vunpack.c.h.b16 %v4360
  %v6358 = vunpack.c.l.b16 %v4361
  %v6359 = vunpack.c.h.b16 %v4361
  %v6360 = vunpack.c.l.b16 %v4362
  %v6361 = vunpack.c.h.b16 %v4362
  %v6362 = vunpack.c.l.b16 %v4363
  %v6363 = vunpack.c.h.b16 %v4363
  %v6364 = vunpack.c.l.b16 %v4364
  %v6365 = vunpack.c.h.b16 %v4364
  %v6366 = vunpack.c.l.b16 %v4365
  %v6367 = vunpack.c.h.b16 %v4365
  %v6368 = vunpack.c.l.b16 %v4366
  %v6369 = vunpack.c.h.b16 %v4366
  %v6370 = vunpack.c.l.b16 %v4367
  %v6371 = vunpack.c.h.b16 %v4367
  %v6372 = vunpack.c.l.b16 %v4368
  %v6373 = vunpack.c.h.b16 %v4368
  %v6374 = vunpack.c.l.b16 %v4369
  %v6375 = vunpack.c.h.b16 %v4369
  %v6376 = vunpack.c.l.b16 %v4370
  %v6377 = vunpack.c.h.b16 %v4370
  %v6378 = vunpack.c.l.b16 %v4371
  %v6379 = vunpack.c.h.b16 %v4371
  %v6380 = vunpack.c.l.b16 %v4372
  %v6381 = vunpack.c.h.b16 %v4372
  %v6382 = vunpack.c.l.b16 %v4373
  %v6383 = vunpack.c.h.b16 %v4373
  %v6384 = vunpack.c.l.b16 %v4374
  %v6385 = vunpack.c.h.b16 %v4374
  %v6386 = vunpack.c.l.b16 %v4375
  %v6387 = vunpack.c.h.b16 %v4375
  %v6388 = vunpack.c.l.b16 %v4376
  %v6389 = vunpack.c.h.b16 %v4376
  %v6390 = vunpack.c.l.b16 %v4377
  %v6391 = vunpack.c.h.b16 %v4377
  %v6392 = vunpack.c.l.b16 %v4378
  %v6393 = vunpack.c.h.b16 %v4378
  %v6394 = vunpack.c.l.b16 %v4379
  %v6395 = vunpack.c.h.b16 %v4379
  %v6396 = vunpack.c.l.b16 %v4380
  %v6397 = vunpack.c.h.b16 %v4380
  %v6398 = vunpack.c.l.b16 %v4381
  %v6399 = vunpack.c.h.b16 %v4381
  %v6400 = vunpack.c.l.b16 %v4382
  %v6401 = vunpack.c.h.b16 %v4382
  %v6402 = vunpack.c.l.b16 %v4383
  %v6403 = vunpack.c.h.b16 %v4383
  %v6404 = vunpack.c.l.b16 %v4384
  %v6405 = vunpack.c.h.b16 %v4384
  %v6406 = vunpack.c.l.b16 %v4385
  %v6407 = vunpack.c.h.b16 %v4385
  %v6408 = vunpack.c.l.b16 %v4386
  %v6409 = vunpack.c.h.b16 %v4386
  %v6410 = vunpack.c.l.b16 %v4387
  %v6411 = vunpack.c.h.b16 %v4387
  %v6412 = vunpack.c.l.b16 %v4388
  %v6413 = vunpack.c.h.b16 %v4388
  %v6414 = vunpack.c.l.b16 %v4389
  %v6415 = vunpack.c.h.b16 %v4389
  %v6416 = vunpack.c.l.b16 %v4390
  %v6417 = vunpack.c.h.b16 %v4390
  %v6418 = vunpack.c.l.b16 %v4391
  %v6419 = vunpack.c.h.b16 %v4391
  %v6420 = vunpack.c.l.b16 %v4392
  %v6421 = vunpack.c.h.b16 %v4392
  %v6422 = vunpack.c.l.b16 %v4393
  %v6423 = vunpack.c.h.b16 %v4393
  %v6424 = vunpack.c.l.b16 %v4394
  %v6425 = vunpack.c.h.b16 %v4394
  %v6426 = vunpack.c.l.b16 %v4395
  %v6427 = vunpack.c.h.b16 %v4395
  %v6428 = vunpack.c.l.b16 %v4396
  %v6429 = vunpack.c.h.b16 %v4396
  %v6430 = vunpack.c.l.b16 %v4397
  %v6431 = vunpack.c.h.b16 %v4397
  %v6432 = vunpack.c.l.b16 %v4398
  %v6433 = vunpack.c.h.b16 %v4398
  %v6434 = vunpack.c.l.b16 %v4399
  %v6435 = vunpack.c.h.b16 %v4399
  %v6436 = vunpack.c.l.b16 %v4400
  %v6437 = vunpack.c.h.b16 %v4400
  %v6438 = vunpack.c.l.b16 %v4401
  %v6439 = vunpack.c.h.b16 %v4401
  %v6440 = vunpack.c.l.b16 %v4402
  %v6441 = vunpack.c.h.b16 %v4402
  %v6442 = vunpack.c.l.b16 %v4403
  %v6443 = vunpack.c.h.b16 %v4403
  %v6444 = vunpack.c.l.b16 %v4404
  %v6445 = vunpack.c.h.b16 %v4404
  %v6446 = vunpack.c.l.b16 %v4405
  %v6447 = vunpack.c.h.b16 %v4405
  %v6448 = vunpack.c.l.b16 %v4406
  %v6449 = vunpack.c.h.b16 %v4406
  %v6450 = vunpack.c.l.b16 %v4407
  %v6451 = vunpack.c.h.b16 %v4407
  %v6452 = vunpack.c.l.b16 %v4408
  %v6453 = vunpack.c.h.b16 %v4408
  %v6454 = vunpack.c.l.b16 %v4409
  %v6455 = vunpack.c.h.b16 %v4409
  %v6456 = vunpack.c.l.b16 %v4410
  %v6457 = vunpack.c.h.b16 %v4410
  %v6458 = vunpack.c.l.b16 %v4411
  %v6459 = vunpack.c.h.b16 %v4411
  %v6460 = vunpack.c.l.b16 %v4412
  %v6461 = vunpack.c.h.b16 %v4412
  %v6462 = vunpack.c.l.b16 %v4413
  %v6463 = vunpack.c.h.b16 %v4413
  %v6464 = vunpack.c.l.b16 %v4414
  %v6465 = vunpack.c.h.b16 %v4414
  %v6466 = vunpack.c.l.b16 %v4415
  %v6467 = vunpack.c.h.b16 %v4415
  %v6468 = vunpack.c.l.b16 %v4416
  %v6469 = vunpack.c.h.b16 %v4416
  %v6470 = vunpack.c.l.b16 %v4417
  %v6471 = vunpack.c.h.b16 %v4417
  %v6472 = vunpack.c.l.b16 %v4418
  %v6473 = vunpack.c.h.b16 %v4418
  %v6474 = vunpack.c.l.b16 %v4419
  %v6475 = vunpack.c.h.b16 %v4419
  %v6476 = vunpack.c.l.b16 %v4420
  %v6477 = vunpack.c.h.b16 %v4420
  %v6478 = vunpack.c.l.b16 %v4421
  %v6479 = vunpack.c.h.b16 %v4421
  %v6480 = vunpack.c.l.b16 %v4422
  %v6481 = vunpack.c.h.b16 %v4422
  %v6482 = vunpack.c.l.b16 %v4423
  %v6483 = vunpack.c.h.b16 %v4423
  %v6484 = vunpack.c.l.b16 %v4424
  %v6485 = vunpack.c.h.b16 %v4424
  %v6486 = vunpack.c.l.b16 %v4425
  %v6487 = vunpack.c.h.b16 %v4425
  %v6488 = vunpack.c.l.b16 %v4426
  %v6489 = vunpack.c.h.b16 %v4426
  %v6490 = vunpack.c.l.b16 %v4427
  %v6491 = vunpack.c.h.b16 %v4427
  %v6492 = vunpack.c.l.b16 %v4428
  %v6493 = vunpack.c.h.b16 %v4428
  %v6494 = vunpack.c.l.b16 %v4429
  %v6495 = vunpack.c.h.b16 %v4429
  %v6496 = vunpack.c.l.b16 %v4430
  %v6497 = vunpack.c.h.b16 %v4430
  %v6498 = vunpack.c.l.b16 %v4431
  %v6499 = vunpack.c.h.b16 %v4431
  %v6500 = vunpack.c.l.b16 %v4432
  %v6501 = vunpack.c.h.b16 %v4432
  %v6502 = vunpack.c.l.b16 %v4433
  %v6503 = vunpack.c.h.b16 %v4433
  %v6504 = vunpack.c.l.b16 %v4434
  %v6505 = vunpack.c.h.b16 %v4434
  %v6506 = vunpack.c.l.b16 %v4435
  %v6507 = vunpack.c.h.b16 %v4435
  %v6508 = vunpack.c.l.b16 %v4436
  %v6509 = vunpack.c.h.b16 %v4436
  %v6510 = vunpack.c.l.b16 %v4437
  %v6511 = vunpack.c.h.b16 %v4437
  %v6512 = vunpack.c.l.b16 %v4438
  %v6513 = vunpack.c.h.b16 %v4438
  %v6514 = vunpack.c.l.b16 %v4439
  %v6515 = vunpack.c.h.b16 %v4439
  %v6516 = vunpack.c.l.b16 %v4440
  %v6517 = vunpack.c.h.b16 %v4440
  %v6518 = vunpack.c.l.b16 %v4441
  %v6519 = vunpack.c.h.b16 %v4441
  %v6520 = vunpack.c.l.b16 %v4442
  %v6521 = vunpack.c.h.b16 %v4442
  %v6522 = vunpack.c.l.b16 %v4443
  %v6523 = vunpack.c.h.b16 %v4443
  %v6524 = vunpack.c.l.b16 %v4444
  %v6525 = vunpack.c.h.b16 %v4444
  %v6526 = vunpack.c.l.b16 %v4445
  %v6527 = vunpack.c.h.b16 %v4445
  %v6528 = vunpack.c.l.b16 %v4446
  %v6529 = vunpack.c.h.b16 %v4446
  %v6530 = vunpack.c.l.b16 %v4447
  %v6531 = vunpack.c.h.b16 %v4447
  %v6532 = vunpack.c.l.b16 %v4448
  %v6533 = vunpack.c.h.b16 %v4448
  %v6534 = vunpack.c.l.b16 %v4449
  %v6535 = vunpack.c.h.b16 %v4449
  %v6536 = vunpack.c.l.b16 %v4450
  %v6537 = vunpack.c.h.b16 %v4450
  %v6538 = vunpack.c.l.b16 %v4451
  %v6539 = vunpack.c.h.b16 %v4451
  %v6540 = vunpack.c.l.b16 %v4452
  %v6541 = vunpack.c.h.b16 %v4452
  %v6542 = vunpack.c.l.b16 %v4453
  %v6543 = vunpack.c.h.b16 %v4453
  %v6544 = vunpack.c.l.b16 %v4454
  %v6545 = vunpack.c.h.b16 %v4454
  %v6546 = vunpack.c.l.b16 %v4455
  %v6547 = vunpack.c.h.b16 %v4455
  %v6548 = vunpack.c.l.b16 %v4456
  %v6549 = vunpack.c.h.b16 %v4456
  %v6550 = vunpack.c.l.b16 %v4457
  %v6551 = vunpack.c.h.b16 %v4457
  %v6552 = vunpack.c.l.b16 %v4458
  %v6553 = vunpack.c.h.b16 %v4458
  %v6554 = vunpack.c.l.b16 %v4459
  %v6555 = vunpack.c.h.b16 %v4459
  %v6556 = vunpack.c.l.b16 %v4460
  %v6557 = vunpack.c.h.b16 %v4460
  %v6558 = vunpack.c.l.b16 %v4461
  %v6559 = vunpack.c.h.b16 %v4461
  %v6560 = vunpack.c.l.b16 %v4462
  %v6561 = vunpack.c.h.b16 %v4462
  %v6562 = vunpack.c.l.b16 %v4463
  %v6563 = vunpack.c.h.b16 %v4463
  %v6564 = vunpack.c.l.b16 %v4464
  %v6565 = vunpack.c.h.b16 %v4464
  %v6566 = vunpack.c.l.b16 %v4465
  %v6567 = vunpack.c.h.b16 %v4465
  %v6568 = vunpack.c.l.b16 %v4466
  %v6569 = vunpack.c.h.b16 %v4466
  %v6570 = vunpack.c.l.b16 %v4467
  %v6571 = vunpack.c.h.b16 %v4467
  %v6572 = vunpack.c.l.b16 %v4468
  %v6573 = vunpack.c.h.b16 %v4468
  %v6574 = vunpack.c.l.b16 %v4469
  %v6575 = vunpack.c.h.b16 %v4469
  %v6576 = vunpack.c.l.b16 %v4470
  %v6577 = vunpack.c.h.b16 %v4470
  %v6578 = vunpack.c.l.b16 %v4471
  %v6579 = vunpack.c.h.b16 %v4471
  %v6580 = vunpack.c.l.b16 %v4472
  %v6581 = vunpack.c.h.b16 %v4472
  %v6582 = vunpack.c.l.b16 %v4473
  %v6583 = vunpack.c.h.b16 %v4473
  %v6584 = vunpack.c.l.b16 %v4474
  %v6585 = vunpack.c.h.b16 %v4474
  %v6586 = vunpack.c.l.b16 %v4475
  %v6587 = vunpack.c.h.b16 %v4475
  %v6588 = vunpack.c.l.b16 %v4476
  %v6589 = vunpack.c.h.b16 %v4476
  %v6590 = vunpack.c.l.b16 %v4477
  %v6591 = vunpack.c.h.b16 %v4477
  %v6592 = vunpack.c.l.b16 %v4478
  %v6593 = vunpack.c.h.b16 %v4478
  %v6594 = vunpack.c.l.b16 %v4479
  %v6595 = vunpack.c.h.b16 %v4479
  %v6596 = vunpack.c.l.b16 %v4480
  %v6597 = vunpack.c.h.b16 %v4480
  %v6598 = vunpack.c.l.b16 %v4481
  %v6599 = vunpack.c.h.b16 %v4481
  %v6600 = vunpack.c.l.b16 %v4482
  %v6601 = vunpack.c.h.b16 %v4482
  %v6602 = vunpack.c.l.b16 %v4483
  %v6603 = vunpack.c.h.b16 %v4483
  %v6604 = vunpack.c.l.b16 %v4484
  %v6605 = vunpack.c.h.b16 %v4484
  %v6606 = vunpack.c.l.b16 %v4485
  %v6607 = vunpack.c.h.b16 %v4485
  %v6608 = vunpack.c.l.b16 %v4486
  %v6609 = vunpack.c.h.b16 %v4486
  %v6610 = vunpack.c.l.b16 %v4487
  %v6611 = vunpack.c.h.b16 %v4487
  %v6612 = vunpack.c.l.b16 %v4488
  %v6613 = vunpack.c.h.b16 %v4488
  %v6614 = vunpack.c.l.b16 %v4489
  %v6615 = vunpack.c.h.b16 %v4489
  %v6616 = vunpack.c.l.b16 %v4490
  %v6617 = vunpack.c.h.b16 %v4490
  %v6618 = vunpack.c.l.b16 %v4491
  %v6619 = vunpack.c.h.b16 %v4491
  %v6620 = vunpack.c.l.b16 %v4492
  %v6621 = vunpack.c.h.b16 %v4492
  %v6622 = vunpack.c.l.b16 %v4493
  %v6623 = vunpack.c.h.b16 %v4493
  %v6624 = vunpack.c.l.b16 %v4494
  %v6625 = vunpack.c.h.b16 %v4494
  %v6626 = vunpack.c.l.b16 %v4495
  %v6627 = vunpack.c.h.b16 %v4495
  %v6628 = vunpack.c.l.b16 %v4496
  %v6629 = vunpack.c.h.b16 %v4496
  %v6630 = vunpack.c.l.b16 %v4497
  %v6631 = vunpack.c.h.b16 %v4497
  %v6632 = vunpack.c.l.b16 %v4498
  %v6633 = vunpack.c.h.b16 %v4498
  %v6634 = vunpack.c.l.b16 %v4499
  %v6635 = vunpack.c.h.b16 %v4499
  %v6636 = vunpack.c.l.b16 %v4500
  %v6637 = vunpack.c.h.b16 %v4500
  %v6638 = vunpack.c.l.b16 %v4501
  %v6639 = vunpack.c.h.b16 %v4501
  %v6640 = vunpack.c.l.b16 %v4502
  %v6641 = vunpack.c.h.b16 %v4502
  %v6642 = vunpack.c.l.b16 %v4503
  %v6643 = vunpack.c.h.b16 %v4503
  %v6644 = vunpack.c.l.b16 %v4504
  %v6645 = vunpack.c.h.b16 %v4504
  %v6646 = vunpack.c.l.b16 %v4505
  %v6647 = vunpack.c.h.b16 %v4505
  %v6648 = vunpack.c.l.b16 %v4506
  %v6649 = vunpack.c.h.b16 %v4506
  %v6650 = vunpack.c.l.b16 %v4507
  %v6651 = vunpack.c.h.b16 %v4507
  %v6652 = vunpack.c.l.b16 %v4508
  %v6653 = vunpack.c.h.b16 %v4508
  %v6654 = vunpack.c.l.b16 %v4509
  %v6655 = vunpack.c.h.b16 %v4509
  %v6656 = vunpack.c.l.b16 %v4510
  %v6657 = vunpack.c.h.b16 %v4510
  %v6658 = vunpack.c.l.b16 %v4511
  %v6659 = vunpack.c.h.b16 %v4511
  %v6660 = vunpack.c.l.b16 %v4512
  %v6661 = vunpack.c.h.b16 %v4512
  %v6662 = vunpack.c.l.b16 %v4513
  %v6663 = vunpack.c.h.b16 %v4513
  %v6664 = vunpack.c.l.b16 %v4514
  %v6665 = vunpack.c.h.b16 %v4514
  %v6666 = vunpack.c.l.b16 %v4515
  %v6667 = vunpack.c.h.b16 %v4515
  %v6668 = vunpack.c.l.b16 %v4516
  %v6669 = vunpack.c.h.b16 %v4516
  %v6670 = vunpack.c.l.b16 %v4517
  %v6671 = vunpack.c.h.b16 %v4517
  %v6672 = vunpack.c.l.b16 %v4518
  %v6673 = vunpack.c.h.b16 %v4518
  %v6674 = vunpack.c.l.b16 %v4519
  %v6675 = vunpack.c.h.b16 %v4519
  %v6676 = vunpack.c.l.b16 %v4520
  %v6677 = vunpack.c.h.b16 %v4520
  %v6678 = vunpack.c.l.b16 %v4521
  %v6679 = vunpack.c.h.b16 %v4521
  %v6680 = vunpack.c.l.b16 %v4522
  %v6681 = vunpack.c.h.b16 %v4522
  %v6682 = vunpack.c.l.b16 %v4523
  %v6683 = vunpack.c.h.b16 %v4523
  %v6684 = vunpack.c.l.b16 %v4524
  %v6685 = vunpack.c.h.b16 %v4524
  %v6686 = vunpack.c.l.b16 %v4525
  %v6687 = vunpack.c.h.b16 %v4525
  %v6688 = vunpack.c.l.b16 %v4526
  %v6689 = vunpack.c.h.b16 %v4526
  %v6690 = vunpack.c.l.b16 %v4527
  %v6691 = vunpack.c.h.b16 %v4527
  %v6692 = vunpack.c.l.b16 %v4528
  %v6693 = vunpack.c.h.b16 %v4528
  %v6694 = vunpack.c.l.b16 %v4529
  %v6695 = vunpack.c.h.b16 %v4529
  %v6696 = vunpack.c.l.b16 %v4530
  %v6697 = vunpack.c.h.b16 %v4530
  %v6698 = vunpack.c.l.b16 %v4531
  %v6699 = vunpack.c.h.b16 %v4531
  %v6700 = vunpack.c.l.b16 %v4532
  %v6701 = vunpack.c.h.b16 %v4532
  %v6702 = vunpack.c.l.b16 %v4533
  %v6703 = vunpack.c.h.b16 %v4533
  %v6704 = vunpack.c.l.b16 %v4534
  %v6705 = vunpack.c.h.b16 %v4534
  %v6706 = vunpack.c.l.b16 %v4535
  %v6707 = vunpack.c.h.b16 %v4535
  %v6708 = vunpack.c.l.b16 %v4536
  %v6709 = vunpack.c.h.b16 %v4536
  %v6710 = vunpack.c.l.b16 %v4537
  %v6711 = vunpack.c.h.b16 %v4537
  %v6712 = vunpack.c.l.b16 %v4538
  %v6713 = vunpack.c.h.b16 %v4538
  %v6714 = vunpack.c.l.b16 %v4539
  %v6715 = vunpack.c.h.b16 %v4539
  %v6716 = vunpack.c.l.b16 %v4540
  %v6717 = vunpack.c.h.b16 %v4540
  %v6718 = vunpack.c.l.b16 %v4541
  %v6719 = vunpack.c.h.b16 %v4541
  %v6720 = vunpack.c.l.b16 %v4542
  %v6721 = vunpack.c.h.b16 %v4542
  %v6722 = vunpack.c.l.b16 %v4543
  %v6723 = vunpack.c.h.b16 %v4543
  %v6724 = vunpack.c.l.b16 %v4544
  %v6725 = vunpack.c.h.b16 %v4544
  %v6726 = vunpack.c.l.b16 %v4545
  %v6727 = vunpack.c.h.b16 %v4545
  %v6728 = vunpack.c.l.b16 %v4546
  %v6729 = vunpack.c.h.b16 %v4546
  %v6730 = vunpack.c.l.b16 %v4547
  %v6731 = vunpack.c.h.b16 %v4547
  %v6732 = vunpack.c.l.b16 %v4548
  %v6733 = vunpack.c.h.b16 %v4548
  %v6734 = vunpack.c.l.b16 %v4549
  %v6735 = vunpack.c.h.b16 %v4549
  %v6736 = vunpack.c.l.b16 %v4550
  %v6737 = vunpack.c.h.b16 %v4550
  %v6738 = vunpack.c.l.b16 %v4551
  %v6739 = vunpack.c.h.b16 %v4551
  %v6740 = vunpack.c.l.b16 %v4552
  %v6741 = vunpack.c.h.b16 %v4552
  %v6742 = vunpack.c.l.b16 %v4553
  %v6743 = vunpack.c.h.b16 %v4553
  %v6744 = vunpack.c.l.b16 %v4554
  %v6745 = vunpack.c.h.b16 %v4554
  %v6746 = vunpack.c.l.b16 %v4555
  %v6747 = vunpack.c.h.b16 %v4555
  %v6748 = vunpack.c.l.b16 %v4556
  %v6749 = vunpack.c.h.b16 %v4556
  %v6750 = vunpack.c.l.b16 %v4557
  %v6751 = vunpack.c.h.b16 %v4557
  %v6752 = vunpack.c.l.b16 %v4558
  %v6753 = vunpack.c.h.b16 %v4558
  %v6754 = vunpack.c.l.b16 %v4559
  %v6755 = vunpack.c.h.b16 %v4559
  %v6756 = vunpack.c.l.b16 %v4560
  %v6757 = vunpack.c.h.b16 %v4560
  %v6758 = vunpack.c.l.b16 %v4561
  %v6759 = vunpack.c.h.b16 %v4561
  %v6760 = vunpack.c.l.b16 %v4562
  %v6761 = vunpack.c.h.b16 %v4562
  %v6762 = vunpack.c.l.b16 %v4563
  %v6763 = vunpack.c.h.b16 %v4563
  %v6764 = vunpack.c.l.b16 %v4564
  %v6765 = vunpack.c.h.b16 %v4564
  %v6766 = vunpack.c.l.b16 %v4565
  %v6767 = vunpack.c.h.b16 %v4565
  %v6768 = vunpack.c.l.b16 %v4566
  %v6769 = vunpack.c.h.b16 %v4566
  %v6770 = vunpack.c.l.b16 %v4567
  %v6771 = vunpack.c.h.b16 %v4567
  %v6772 = vunpack.c.l.b16 %v4568
  %v6773 = vunpack.c.h.b16 %v4568
  %v6774 = vunpack.c.l.b16 %v4569
  %v6775 = vunpack.c.h.b16 %v4569
  %v6776 = vunpack.c.l.b16 %v4570
  %v6777 = vunpack.c.h.b16 %v4570
  %v6778 = vunpack.c.l.b16 %v4571
  %v6779 = vunpack.c.h.b16 %v4571
  %v6780 = vunpack.c.l.b16 %v4572
  %v6781 = vunpack.c.h.b16 %v4572
  %v6782 = vunpack.c.l.b16 %v4573
  %v6783 = vunpack.c.h.b16 %v4573
  %v6784 = vunpack.c.l.b16 %v4574
  %v6785 = vunpack.c.h.b16 %v4574
  %v6786 = vunpack.c.l.b16 %v4575
  %v6787 = vunpack.c.h.b16 %v4575
  %v6788 = vunpack.c.l.b16 %v4576
  %v6789 = vunpack.c.h.b16 %v4576
  %v6790 = vunpack.c.l.b16 %v4577
  %v6791 = vunpack.c.h.b16 %v4577
  %v6792 = vunpack.c.l.b16 %v4578
  %v6793 = vunpack.c.h.b16 %v4578
  %v6794 = vunpack.c.l.b16 %v4579
  %v6795 = vunpack.c.h.b16 %v4579
  %v6796 = vunpack.c.l.b16 %v4580
  %v6797 = vunpack.c.h.b16 %v4580
  %v6798 = vunpack.c.l.b16 %v4581
  %v6799 = vunpack.c.h.b16 %v4581
  %v6800 = vunpack.c.l.b16 %v4582
  %v6801 = vunpack.c.h.b16 %v4582
  %v6802 = vunpack.c.l.b16 %v4583
  %v6803 = vunpack.c.h.b16 %v4583
  %v6804 = vunpack.c.l.b16 %v4584
  %v6805 = vunpack.c.h.b16 %v4584
  %v6806 = vunpack.c.l.b16 %v4585
  %v6807 = vunpack.c.h.b16 %v4585
  %v6808 = vunpack.c.l.b16 %v4586
  %v6809 = vunpack.c.h.b16 %v4586
  %v6810 = vunpack.c.l.b16 %v4587
  %v6811 = vunpack.c.h.b16 %v4587
  %v6812 = vunpack.c.l.b16 %v4588
  %v6813 = vunpack.c.h.b16 %v4588
  %v6814 = vunpack.c.l.b16 %v4589
  %v6815 = vunpack.c.h.b16 %v4589
  %v6816 = vunpack.c.l.b16 %v4590
  %v6817 = vunpack.c.h.b16 %v4590
  %v6818 = vunpack.c.l.b16 %v4591
  %v6819 = vunpack.c.h.b16 %v4591
  %v6820 = vunpack.c.l.b16 %v4592
  %v6821 = vunpack.c.h.b16 %v4592
  %v6822 = vunpack.c.l.b16 %v4593
  %v6823 = vunpack.c.h.b16 %v4593
  %v6824 = vunpack.c.l.b16 %v4594
  %v6825 = vunpack.c.h.b16 %v4594
  %v6826 = vunpack.c.l.b16 %v4595
  %v6827 = vunpack.c.h.b16 %v4595
  %v6828 = vunpack.c.l.b16 %v4596
  %v6829 = vunpack.c.h.b16 %v4596
  %v6830 = vunpack.c.l.b16 %v4597
  %v6831 = vunpack.c.h.b16 %v4597
  %v6832 = vunpack.c.l.b16 %v4598
  %v6833 = vunpack.c.h.b16 %v4598
  %v6834 = vunpack.c.l.b16 %v4599
  %v6835 = vunpack.c.h.b16 %v4599
  %v6836 = vunpack.c.l.b16 %v4600
  %v6837 = vunpack.c.h.b16 %v4600
  %v6838 = vunpack.c.l.b16 %v4601
  %v6839 = vunpack.c.h.b16 %v4601
  %v6840 = vunpack.c.l.b16 %v4602
  %v6841 = vunpack.c.h.b16 %v4602
  %v6842 = vunpack.c.l.b16 %v4603
  %v6843 = vunpack.c.h.b16 %v4603
  %v6844 = vunpack.c.l.b16 %v4604
  %v6845 = vunpack.c.h.b16 %v4604
  %v6846 = vunpack.c.l.b16 %v4605
  %v6847 = vunpack.c.h.b16 %v4605
  %v6848 = vunpack.c.l.b16 %v4606
  %v6849 = vunpack.c.h.b16 %v4606
  %v6850 = vunpack.c.l.b16 %v4607
  %v6851 = vunpack.c.h.b16 %v4607
  %v6852 = vunpack.c.l.b16 %v4608
  %v6853 = vunpack.c.h.b16 %v4608
  %v6854 = vunpack.c.l.b16 %v4609
  %v6855 = vunpack.c.h.b16 %v4609
  %v6856 = vunpack.c.l.b16 %v4610
  %v6857 = vunpack.c.h.b16 %v4610
  %v6858 = vunpack.c.l.b16 %v4611
  %v6859 = vunpack.c.h.b16 %v4611
  %v6860 = vunpack.c.l.b16 %v4612
  %v6861 = vunpack.c.h.b16 %v4612
  %v6862 = vunpack.c.l.b16 %v4613
  %v6863 = vunpack.c.h.b16 %v4613
  %v6864 = vunpack.c.l.b16 %v4614
  %v6865 = vunpack.c.h.b16 %v4614
  %v6866 = vunpack.c.l.b16 %v4615
  %v6867 = vunpack.c.h.b16 %v4615
  %v6868 = vunpack.c.l.b16 %v4616
  %v6869 = vunpack.c.h.b16 %v4616
  %v6870 = vunpack.c.l.b16 %v4617
  %v6871 = vunpack.c.h.b16 %v4617
  %v6872 = vunpack.c.l.b16 %v4618
  %v6873 = vunpack.c.h.b16 %v4618
  %v6874 = vunpack.c.l.b16 %v4619
  %v6875 = vunpack.c.h.b16 %v4619
  %v6876 = vunpack.c.l.b16 %v4620
  %v6877 = vunpack.c.h.b16 %v4620
  %v6878 = vunpack.c.l.b16 %v4621
  %v6879 = vunpack.c.h.b16 %v4621
  %v6880 = vunpack.c.l.b16 %v4622
  %v6881 = vunpack.c.h.b16 %v4622
  %v6882 = vunpack.c.l.b16 %v4623
  %v6883 = vunpack.c.h.b16 %v4623
  %v6884 = vunpack.c.l.b16 %v4624
  %v6885 = vunpack.c.h.b16 %v4624
  %v6886 = vunpack.c.l.b16 %v4625
  %v6887 = vunpack.c.h.b16 %v4625
  %v6888 = vunpack.c.l.b16 %v4626
  %v6889 = vunpack.c.h.b16 %v4626
  %v6890 = vunpack.c.l.b16 %v4627
  %v6891 = vunpack.c.h.b16 %v4627
  %v6892 = vunpack.c.l.b16 %v4628
  %v6893 = vunpack.c.h.b16 %v4628
  %v6894 = vunpack.c.l.b16 %v4629
  %v6895 = vunpack.c.h.b16 %v4629
  %v6896 = vunpack.c.l.b16 %v4630
  %v6897 = vunpack.c.h.b16 %v4630
  %v6898 = vunpack.c.l.b16 %v4631
  %v6899 = vunpack.c.h.b16 %v4631
  %v6900 = vunpack.c.l.b16 %v4632
  %v6901 = vunpack.c.h.b16 %v4632
  %v6902 = vunpack.c.l.b16 %v4633
  %v6903 = vunpack.c.h.b16 %v4633
  %v6904 = vunpack.c.l.b16 %v4634
  %v6905 = vunpack.c.h.b16 %v4634
  %v6906 = vunpack.c.l.b16 %v4635
  %v6907 = vunpack.c.h.b16 %v4635
  %v6908 = vunpack.c.l.b16 %v4636
  %v6909 = vunpack.c.h.b16 %v4636
  %v6910 = vunpack.c.l.b16 %v4637
  %v6911 = vunpack.c.h.b16 %v4637
  %v6912 = vunpack.c.l.b16 %v4638
  %v6913 = vunpack.c.h.b16 %v4638
  %v6914 = vunpack.c.l.b16 %v4639
  %v6915 = vunpack.c.h.b16 %v4639
  %v6916 = vunpack.c.l.b16 %v4640
  %v6917 = vunpack.c.h.b16 %v4640
  %v6918 = vunpack.c.l.b16 %v4641
  %v6919 = vunpack.c.h.b16 %v4641
  %v6920 = vunpack.c.l.b16 %v4642
  %v6921 = vunpack.c.h.b16 %v4642
  %v6922 = vunpack.c.l.b16 %v4643
  %v6923 = vunpack.c.h.b16 %v4643
  %v6924 = vunpack.c.l.b16 %v4644
  %v6925 = vunpack.c.h.b16 %v4644
  %v6926 = vunpack.c.l.b16 %v4645
  %v6927 = vunpack.c.h.b16 %v4645
  %v6928 = vunpack.c.l.b16 %v4646
  %v6929 = vunpack.c.h.b16 %v4646
  %v6930 = vunpack.c.l.b16 %v4647
  %v6931 = vunpack.c.h.b16 %v4647
  %v6932 = vunpack.c.l.b16 %v4648
  %v6933 = vunpack.c.h.b16 %v4648
  %v6934 = vunpack.c.l.b16 %v4649
  %v6935 = vunpack.c.h.b16 %v4649
  %v6936 = vunpack.c.l.b16 %v4650
  %v6937 = vunpack.c.h.b16 %v4650
  %v6938 = vunpack.c.l.b16 %v4651
  %v6939 = vunpack.c.h.b16 %v4651
  %v6940 = vunpack.c.l.b16 %v4652
  %v6941 = vunpack.c.h.b16 %v4652
  %v6942 = vunpack.c.l.b16 %v4653
  %v6943 = vunpack.c.h.b16 %v4653
  %v6944 = vunpack.c.l.b16 %v4654
  %v6945 = vunpack.c.h.b16 %v4654
  %v6946 = vunpack.c.l.b16 %v4655
  %v6947 = vunpack.c.h.b16 %v4655
  %v6948 = vunpack.c.l.b16 %v4656
  %v6949 = vunpack.c.h.b16 %v4656
  %v6950 = vunpack.c.l.b16 %v4657
  %v6951 = vunpack.c.h.b16 %v4657
  %v6952 = vunpack.c.l.b16 %v4658
  %v6953 = vunpack.c.h.b16 %v4658
  %v6954 = vunpack.c.l.b16 %v4659
  %v6955 = vunpack.c.h.b16 %v4659
  %v6956 = vunpack.c.l.b16 %v4660
  %v6957 = vunpack.c.h.b16 %v4660
  %v6958 = vunpack.c.l.b16 %v4661
  %v6959 = vunpack.c.h.b16 %v4661
  %v6960 = vunpack.c.l.b16 %v4662
  %v6961 = vunpack.c.h.b16 %v4662
  %v6962 = vunpack.c.l.b16 %v4663
  %v6963 = vunpack.c.h.b16 %v4663
  %v6964 = vunpack.c.l.b16 %v4664
  %v6965 = vunpack.c.h.b16 %v4664
  %v6966 = vunpack.c.l.b16 %v4665
  %v6967 = vunpack.c.h.b16 %v4665
  %v6968 = vunpack.c.l.b16 %v4666
  %v6969 = vunpack.c.h.b16 %v4666
  %v6970 = vunpack.c.l.b16 %v4667
  %v6971 = vunpack.c.h.b16 %v4667
  %v6972 = vpack.c.b16 %v5448, %v5436
  %v6973 = vpack.c.b16 %v5449, %v5437
  %v6974 = vpack.c.b16 %v5450, %v5438
  %v6975 = vpack.c.b16 %v5451, %v5439
  %v6976 = vpack.c.b16 %v5452, %v5440
  %v6977 = vpack.c.b16 %v5453, %v5441
  %v6978 = vpack.c.b16 %v5454, %v5442
  %v6979 = vpack.c.b16 %v5455, %v5443
  %v6980 = vpack.c.b16 %v5456, %v5444
  %v6981 = vpack.c.b16 %v5457, %v5445
  %v6982 = vpack.c.b16 %v5458, %v5446
  %v6983 = vpack.c.b16 %v5459, %v5447
  %v6984 = vpack.c.b16 %v5472, %v5460
  %v6985 = vpack.c.b16 %v5473, %v5461
  %v6986 = vpack.c.b16 %v5474, %v5462
  %v6987 = vpack.c.b16 %v5475, %v5463
  %v6988 = vpack.c.b16 %v5476, %v5464
  %v6989 = vpack.c.b16 %v5477, %v5465
  %v6990 = vpack.c.b16 %v5478, %v5466
  %v6991 = vpack.c.b16 %v5479, %v5467
  %v6992 = vpack.c.b16 %v5480, %v5468
  %v6993 = vpack.c.b16 %v5481, %v5469
  %v6994 = vpack.c.b16 %v5482, %v5470
  %v6995 = vpack.c.b16 %v5483, %v5471
  %v6996 = vpack.c.b16 %v5496, %v5484
  %v6997 = vpack.c.b16 %v5497, %v5485
  %v6998 = vpack.c.b16 %v5498, %v5486
  %v6999 = vpack.c.b16 %v5499, %v5487
  %v7000 = vpack.c.b16 %v5500, %v5488
  %v7001 = vpack.c.b16 %v5501, %v5489
  %v7002 = vpack.c.b16 %v5502, %v5490
  %v7003 = vpack.c.b16 %v5503, %v5491
  %v7004 = vpack.c.b16 %v5504, %v5492
  %v7005 = vpack.c.b16 %v5505, %v5493
  %v7006 = vpack.c.b16 %v5506, %v5494
  %v7007 = vpack.c.b16 %v5507, %v5495
  %v7008 = vpack.c.b16 %v5520, %v5508
  %v7009 = vpack.c.b16 %v5521, %v5509
  %v7010 = vpack.c.b16 %v5522, %v5510
  %v7011 = vpack.c.b16 %v5523, %v5511
  %v7012 = vpack.c.b16 %v5524, %v5512
  %v7013 = vpack.c.b16 %v5525, %v5513
  %v7014 = vpack.c.b16 %v5526, %v5514
  %v7015 = vpack.c.b16 %v5527, %v5515
  %v7016 = vpack.c.b16 %v5528, %v5516
  %v7017 = vpack.c.b16 %v5529, %v5517
  %v7018 = vpack.c.b16 %v5530, %v5518
  %v7019 = vpack.c.b16 %v5531, %v5519
  %v7020 = vpack.c.b16 %v5544, %v5532
  %v7021 = vpack.c.b16 %v5545, %v5533
  %v7022 = vpack.c.b16 %v5546, %v5534
  %v7023 = vpack.c.b16 %v5547, %v5535
  %v7024 = vpack.c.b16 %v5548, %v5536
  %v7025 = vpack.c.b16 %v5549, %v5537
  %v7026 = vpack.c.b16 %v5550, %v5538
  %v7027 = vpack.c.b16 %v5551, %v5539
  %v7028 = vpack.c.b16 %v5552, %v5540
  %v7029 = vpack.c.b16 %v5553, %v5541
  %v7030 = vpack.c.b16 %v5554, %v5542
  %v7031 = vpack.c.b16 %v5555, %v5543
  %v7032 = vpack.c.b16 %v5568, %v5556
  %v7033 = vpack.c.b16 %v5569, %v5557
  %v7034 = vpack.c.b16 %v5570, %v5558
  %v7035 = vpack.c.b16 %v5571, %v5559
  %v7036 = vpack.c.b16 %v5572, %v5560
  %v7037 = vpack.c.b16 %v5573, %v5561
  %v7038 = vpack.c.b16 %v5574, %v5562
  %v7039 = vpack.c.b16 %v5575, %v5563
  %v7040 = vpack.c.b16 %v5576, %v5564
  %v7041 = vpack.c.b16 %v5577, %v5565
  %v7042 = vpack.c.b16 %v5578, %v5566
  %v7043 = vpack.c.b16 %v5579, %v5567
  %v7044 = vpack.c.b16 %v5592, %v5580
  %v7045 = vpack.c.b16 %v5593, %v5581
  %v7046 = vpack.c.b16 %v5594, %v5582
  %v7047 = vpack.c.b16 %v5595, %v5583
  %v7048 = vpack.c.b16 %v5596, %v5584
  %v7049 = vpack.c.b16 %v5597, %v5585
  %v7050 = vpack.c.b16 %v5598, %v5586
  %v7051 = vpack.c.b16 %v5599, %v5587
  %v7052 = vpack.c.b16 %v5600, %v5588
  %v7053 = vpack.c.b16 %v5601, %v5589
  %v7054 = vpack.c.b16 %v5602, %v5590
  %v7055 = vpack.c.b16 %v5603, %v5591
  %v7056 = vpack.c.b16 %v5616, %v5604
  %v7057 = vpack.c.b16 %v5617, %v5605
  %v7058 = vpack.c.b16 %v5618, %v5606
  %v7059 = vpack.c.b16 %v5619, %v5607
  %v7060 = vpack.c.b16 %v5620, %v5608
  %v7061 = vpack.c.b16 %v5621, %v5609
  %v7062 = vpack.c.b16 %v5622, %v5610
  %v7063 = vpack.c.b16 %v5623, %v5611
  %v7064 = vpack.c.b16 %v5624, %v5612
  %v7065 = vpack.c.b16 %v5625, %v5613
  %v7066 = vpack.c.b16 %v5626, %v5614
  %v7067 = vpack.c.b16 %v5627, %v5615
  %v7068 = vpack.c.b16 %v5640, %v5628
  %v7069 = vpack.c.b16 %v5641, %v5629
  %v7070 = vpack.c.b16 %v5642, %v5630
  %v7071 = vpack.c.b16 %v5643, %v5631
  %v7072 = vpack.c.b16 %v5644, %v5632
  %v7073 = vpack.c.b16 %v5645, %v5633
  %v7074 = vpack.c.b16 %v5646, %v5634
  %v7075 = vpack.c.b16 %v5647, %v5635
  %v7076 = vpack.c.b16 %v5648, %v5636
  %v7077 = vpack.c.b16 %v5649, %v5637
  %v7078 = vpack.c.b16 %v5650, %v5638
  %v7079 = vpack.c.b16 %v5651, %v5639
  %v7080 = vpack.c.b16 %v5664, %v5652
  %v7081 = vpack.c.b16 %v5665, %v5653
  %v7082 = vpack.c.b16 %v5666, %v5654
  %v7083 = vpack.c.b16 %v5667, %v5655
  %v7084 = vpack.c.b16 %v5668, %v5656
  %v7085 = vpack.c.b16 %v5669, %v5657
  %v7086 = vpack.c.b16 %v5670, %v5658
  %v7087 = vpack.c.b16 %v5671, %v5659
  %v7088 = vpack.c.b16 %v5672, %v5660
  %v7089 = vpack.c.b16 %v5673, %v5661
  %v7090 = vpack.c.b16 %v5674, %v5662
  %v7091 = vpack.c.b16 %v5675, %v5663
  %v7092 = vpack.c.b16 %v5688, %v5676
  %v7093 = vpack.c.b16 %v5689, %v5677
  %v7094 = vpack.c.b16 %v5690, %v5678
  %v7095 = vpack.c.b16 %v5691, %v5679
  %v7096 = vpack.c.b16 %v5692, %v5680
  %v7097 = vpack.c.b16 %v5693, %v5681
  %v7098 = vpack.c.b16 %v5694, %v5682
  %v7099 = vpack.c.b16 %v5695, %v5683
  %v7100 = vpack.c.b16 %v5696, %v5684
  %v7101 = vpack.c.b16 %v5697, %v5685
  %v7102 = vpack.c.b16 %v5698, %v5686
  %v7103 = vpack.c.b16 %v5699, %v5687
  %v7104 = vpack.c.b16 %v5712, %v5700
  %v7105 = vpack.c.b16 %v5713, %v5701
  %v7106 = vpack.c.b16 %v5714, %v5702
  %v7107 = vpack.c.b16 %v5715, %v5703
  %v7108 = vpack.c.b16 %v5716, %v5704
  %v7109 = vpack.c.b16 %v5717, %v5705
  %v7110 = vpack.c.b16 %v5718, %v5706
  %v7111 = vpack.c.b16 %v5719, %v5707
  %v7112 = vpack.c.b16 %v5720, %v5708
  %v7113 = vpack.c.b16 %v5721, %v5709
  %v7114 = vpack.c.b16 %v5722, %v5710
  %v7115 = vpack.c.b16 %v5723, %v5711
  %v7116 = vpack.c.b16 %v5736, %v5724
  %v7117 = vpack.c.b16 %v5737, %v5725
  %v7118 = vpack.c.b16 %v5738, %v5726
  %v7119 = vpack.c.b16 %v5739, %v5727
  %v7120 = vpack.c.b16 %v5740, %v5728
  %v7121 = vpack.c.b16 %v5741, %v5729
  %v7122 = vpack.c.b16 %v5742, %v5730
  %v7123 = vpack.c.b16 %v5743, %v5731
  %v7124 = vpack.c.b16 %v5744, %v5732
  %v7125 = vpack.c.b16 %v5745, %v5733
  %v7126 = vpack.c.b16 %v5746, %v5734
  %v7127 = vpack.c.b16 %v5747, %v5735
  %v7128 = vpack.c.b16 %v5760, %v5748
  %v7129 = vpack.c.b16 %v5761, %v5749
  %v7130 = vpack.c.b16 %v5762, %v5750
  %v7131 = vpack.c.b16 %v5763, %v5751
  %v7132 = vpack.c.b16 %v5764, %v5752
  %v7133 = vpack.c.b16 %v5765, %v5753
  %v7134 = vpack.c.b16 %v5766, %v5754
  %v7135 = vpack.c.b16 %v5767, %v5755
  %v7136 = vpack.c.b16 %v5768, %v5756
  %v7137 = vpack.c.b16 %v5769, %v5757
  %v7138 = vpack.c.b16 %v5770, %v5758
  %v7139 = vpack.c.b16 %v5771, %v5759
  %v7140 = vpack.c.b16 %v5784, %v5772
  %v7141 = vpack.c.b16 %v5785, %v5773
  %v7142 = vpack.c.b16 %v5786, %v5774
  %v7143 = vpack.c.b16 %v5787, %v5775
  %v7144 = vpack.c.b16 %v5788, %v5776
  %v7145 = vpack.c.b16 %v5789, %v5777
  %v7146 = vpack.c.b16 %v5790, %v5778
  %v7147 = vpack.c.b16 %v5791, %v5779
  %v7148 = vpack.c.b16 %v5792, %v5780
  %v7149 = vpack.c.b16 %v5793, %v5781
  %v7150 = vpack.c.b16 %v5794, %v5782
  %v7151 = vpack.c.b16 %v5795, %v5783
  %v7152 = vpack.c.b16 %v5808, %v5796
  %v7153 = vpack.c.b16 %v5809, %v5797
  %v7154 = vpack.c.b16 %v5810, %v5798
  %v7155 = vpack.c.b16 %v5811, %v5799
  %v7156 = vpack.c.b16 %v5812, %v5800
  %v7157 = vpack.c.b16 %v5813, %v5801
  %v7158 = vpack.c.b16 %v5814, %v5802
  %v7159 = vpack.c.b16 %v5815, %v5803
  %v7160 = vpack.c.b16 %v5816, %v5804
  %v7161 = vpack.c.b16 %v5817, %v5805
  %v7162 = vpack.c.b16 %v5818, %v5806
  %v7163 = vpack.c.b16 %v5819, %v5807
  %v7164 = vpack.c.b16 %v5832, %v5820
  %v7165 = vpack.c.b16 %v5833, %v5821
  %v7166 = vpack.c.b16 %v5834, %v5822
  %v7167 = vpack.c.b16 %v5835, %v5823
  %v7168 = vpack.c.b16 %v5836, %v5824
  %v7169 = vpack.c.b16 %v5837, %v5825
  %v7170 = vpack.c.b16 %v5838, %v5826
  %v7171 = vpack.c.b16 %v5839, %v5827
  %v7172 = vpack.c.b16 %v5840, %v5828
  %v7173 = vpack.c.b16 %v5841, %v5829
  %v7174 = vpack.c.b16 %v5842, %v5830
  %v7175 = vpack.c.b16 %v5843, %v5831
  %v7176 = vpack.c.b16 %v5856, %v5844
  %v7177 = vpack.c.b16 %v5857, %v5845
  %v7178 = vpack.c.b16 %v5858, %v5846
  %v7179 = vpack.c.b16 %v5859, %v5847
  %v7180 = vpack.c.b16 %v5860, %v5848
  %v7181 = vpack.c.b16 %v5861, %v5849
  %v7182 = vpack.c.b16 %v5862, %v5850
  %v7183 = vpack.c.b16 %v5863, %v5851
  %v7184 = vpack.c.b16 %v5864, %v5852
  %v7185 = vpack.c.b16 %v5865, %v5853
  %v7186 = vpack.c.b16 %v5866, %v5854
  %v7187 = vpack.c.b16 %v5867, %v5855
  %v7188 = vpack.c.b16 %v5880, %v5868
  %v7189 = vpack.c.b16 %v5881, %v5869
  %v7190 = vpack.c.b16 %v5882, %v5870
  %v7191 = vpack.c.b16 %v5883, %v5871
  %v7192 = vpack.c.b16 %v5884, %v5872
  %v7193 = vpack.c.b16 %v5885, %v5873
  %v7194 = vpack.c.b16 %v5886, %v5874
  %v7195 = vpack.c.b16 %v5887, %v5875
  %v7196 = vpack.c.b16 %v5888, %v5876
  %v7197 = vpack.c.b16 %v5889, %v5877
  %v7198 = vpack.c.b16 %v5890, %v5878
  %v7199 = vpack.c.b16 %v5891, %v5879
  %v7200 = vpack.c.b16 %v5904, %v5892
  %v7201 = vpack.c.b16 %v5905, %v5893
  %v7202 = vpack.c.b16 %v5906, %v5894
  %v7203 = vpack.c.b16 %v5907, %v5895
  %v7204 = vpack.c.b16 %v5908, %v5896
  %v7205 = vpack.c.b16 %v5909, %v5897
  %v7206 = vpack.c.b16 %v5910, %v5898
  %v7207 = vpack.c.b16 %v5911, %v5899
  %v7208 = vpack.c.b16 %v5912, %v5900
  %v7209 = vpack.c.b16 %v5913, %v5901
  %v7210 = vpack.c.b16 %v5914, %v5902
  %v7211 = vpack.c.b16 %v5915, %v5903
  %v7212 = vpack.c.b16 %v5928, %v5916
  %v7213 = vpack.c.b16 %v5929, %v5917
  %v7214 = vpack.c.b16 %v5930, %v5918
  %v7215 = vpack.c.b16 %v5931, %v5919
  %v7216 = vpack.c.b16 %v5932, %v5920
  %v7217 = vpack.c.b16 %v5933, %v5921
  %v7218 = vpack.c.b16 %v5934, %v5922
  %v7219 = vpack.c.b16 %v5935, %v5923
  %v7220 = vpack.c.b16 %v5936, %v5924
  %v7221 = vpack.c.b16 %v5937, %v5925
  %v7222 = vpack.c.b16 %v5938, %v5926
  %v7223 = vpack.c.b16 %v5939, %v5927
  %v7224 = vpack.c.b16 %v5952, %v5940
  %v7225 = vpack.c.b16 %v5953, %v5941
  %v7226 = vpack.c.b16 %v5954, %v5942
  %v7227 = vpack.c.b16 %v5955, %v5943
  %v7228 = vpack.c.b16 %v5956, %v5944
  %v7229 = vpack.c.b16 %v5957, %v5945
  %v7230 = vpack.c.b16 %v5958, %v5946
  %v7231 = vpack.c.b16 %v5959, %v5947
  %v7232 = vpack.c.b16 %v5960, %v5948
  %v7233 = vpack.c.b16 %v5961, %v5949
  %v7234 = vpack.c.b16 %v5962, %v5950
  %v7235 = vpack.c.b16 %v5963, %v5951
  %v7236 = vpack.c.b16 %v5976, %v5964
  %v7237 = vpack.c.b16 %v5977, %v5965
  %v7238 = vpack.c.b16 %v5978, %v5966
  %v7239 = vpack.c.b16 %v5979, %v5967
  %v7240 = vpack.c.b16 %v5980, %v5968
  %v7241 = vpack.c.b16 %v5981, %v5969
  %v7242 = vpack.c.b16 %v5982, %v5970
  %v7243 = vpack.c.b16 %v5983, %v5971
  %v7244 = vpack.c.b16 %v5984, %v5972
  %v7245 = vpack.c.b16 %v5985, %v5973
  %v7246 = vpack.c.b16 %v5986, %v5974
  %v7247 = vpack.c.b16 %v5987, %v5975
  %v7248 = vpack.c.b16 %v6000, %v5988
  %v7249 = vpack.c.b16 %v6001, %v5989
  %v7250 = vpack.c.b16 %v6002, %v5990
  %v7251 = vpack.c.b16 %v6003, %v5991
  %v7252 = vpack.c.b16 %v6004, %v5992
  %v7253 = vpack.c.b16 %v6005, %v5993
  %v7254 = vpack.c.b16 %v6006, %v5994
  %v7255 = vpack.c.b16 %v6007, %v5995
  %v7256 = vpack.c.b16 %v6008, %v5996
  %v7257 = vpack.c.b16 %v6009, %v5997
  %v7258 = vpack.c.b16 %v6010, %v5998
  %v7259 = vpack.c.b16 %v6011, %v5999
  %v7260 = vpack.c.b16 %v6024, %v6012
  %v7261 = vpack.c.b16 %v6025, %v6013
  %v7262 = vpack.c.b16 %v6026, %v6014
  %v7263 = vpack.c.b16 %v6027, %v6015
  %v7264 = vpack.c.b16 %v6028, %v6016
  %v7265 = vpack.c.b16 %v6029, %v6017
  %v7266 = vpack.c.b16 %v6030, %v6018
  %v7267 = vpack.c.b16 %v6031, %v6019
  %v7268 = vpack.c.b16 %v6032, %v6020
  %v7269 = vpack.c.b16 %v6033, %v6021
  %v7270 = vpack.c.b16 %v6034, %v6022
  %v7271 = vpack.c.b16 %v6035, %v6023
  %v7272 = vpack.c.b16 %v6048, %v6036
  %v7273 = vpack.c.b16 %v6049, %v6037
  %v7274 = vpack.c.b16 %v6050, %v6038
  %v7275 = vpack.c.b16 %v6051, %v6039
  %v7276 = vpack.c.b16 %v6052, %v6040
  %v7277 = vpack.c.b16 %v6053, %v6041
  %v7278 = vpack.c.b16 %v6054, %v6042
  %v7279 = vpack.c.b16 %v6055, %v6043
  %v7280 = vpack.c.b16 %v6056, %v6044
  %v7281 = vpack.c.b16 %v6057, %v6045
  %v7282 = vpack.c.b16 %v6058, %v6046
  %v7283 = vpack.c.b16 %v6059, %v6047
  %v7284 = vpack.c.b16 %v6072, %v6060
  %v7285 = vpack.c.b16 %v6073, %v6061
  %v7286 = vpack.c.b16 %v6074, %v6062
  %v7287 = vpack.c.b16 %v6075, %v6063
  %v7288 = vpack.c.b16 %v6076, %v6064
  %v7289 = vpack.c.b16 %v6077, %v6065
  %v7290 = vpack.c.b16 %v6078, %v6066
  %v7291 = vpack.c.b16 %v6079, %v6067
  %v7292 = vpack.c.b16 %v6080, %v6068
  %v7293 = vpack.c.b16 %v6081, %v6069
  %v7294 = vpack.c.b16 %v6082, %v6070
  %v7295 = vpack.c.b16 %v6083, %v6071
  %v7296 = vpack.c.b16 %v6096, %v6084
  %v7297 = vpack.c.b16 %v6097, %v6085
  %v7298 = vpack.c.b16 %v6098, %v6086
  %v7299 = vpack.c.b16 %v6099, %v6087
  %v7300 = vpack.c.b16 %v6100, %v6088
  %v7301 = vpack.c.b16 %v6101, %v6089
  %v7302 = vpack.c.b16 %v6102, %v6090
  %v7303 = vpack.c.b16 %v6103, %v6091
  %v7304 = vpack.c.b16 %v6104, %v6092
  %v7305 = vpack.c.b16 %v6105, %v6093
  %v7306 = vpack.c.b16 %v6106, %v6094
  %v7307 = vpack.c.b16 %v6107, %v6095
  %v7308 = vpack.c.b16 %v6120, %v6108
  %v7309 = vpack.c.b16 %v6121, %v6109
  %v7310 = vpack.c.b16 %v6122, %v6110
  %v7311 = vpack.c.b16 %v6123, %v6111
  %v7312 = vpack.c.b16 %v6124, %v6112
  %v7313 = vpack.c.b16 %v6125, %v6113
  %v7314 = vpack.c.b16 %v6126, %v6114
  %v7315 = vpack.c.b16 %v6127, %v6115
  %v7316 = vpack.c.b16 %v6128, %v6116
  %v7317 = vpack.c.b16 %v6129, %v6117
  %v7318 = vpack.c.b16 %v6130, %v6118
  %v7319 = vpack.c.b16 %v6131, %v6119
  %v7320 = vpack.c.b16 %v6144, %v6132
  %v7321 = vpack.c.b16 %v6145, %v6133
  %v7322 = vpack.c.b16 %v6146, %v6134
  %v7323 = vpack.c.b16 %v6147, %v6135
  %v7324 = vpack.c.b16 %v6148, %v6136
  %v7325 = vpack.c.b16 %v6149, %v6137
  %v7326 = vpack.c.b16 %v6150, %v6138
  %v7327 = vpack.c.b16 %v6151, %v6139
  %v7328 = vpack.c.b16 %v6152, %v6140
  %v7329 = vpack.c.b16 %v6153, %v6141
  %v7330 = vpack.c.b16 %v6154, %v6142
  %v7331 = vpack.c.b16 %v6155, %v6143
  %v7332 = vpack.c.b16 %v6168, %v6156
  %v7333 = vpack.c.b16 %v6169, %v6157
  %v7334 = vpack.c.b16 %v6170, %v6158
  %v7335 = vpack.c.b16 %v6171, %v6159
  %v7336 = vpack.c.b16 %v6172, %v6160
  %v7337 = vpack.c.b16 %v6173, %v6161
  %v7338 = vpack.c.b16 %v6174, %v6162
  %v7339 = vpack.c.b16 %v6175, %v6163
  %v7340 = vpack.c.b16 %v6176, %v6164
  %v7341 = vpack.c.b16 %v6177, %v6165
  %v7342 = vpack.c.b16 %v6178, %v6166
  %v7343 = vpack.c.b16 %v6179, %v6167
  %v7344 = vpack.c.b16 %v6192, %v6180
  %v7345 = vpack.c.b16 %v6193, %v6181
  %v7346 = vpack.c.b16 %v6194, %v6182
  %v7347 = vpack.c.b16 %v6195, %v6183
  %v7348 = vpack.c.b16 %v6196, %v6184
  %v7349 = vpack.c.b16 %v6197, %v6185
  %v7350 = vpack.c.b16 %v6198, %v6186
  %v7351 = vpack.c.b16 %v6199, %v6187
  %v7352 = vpack.c.b16 %v6200, %v6188
  %v7353 = vpack.c.b16 %v6201, %v6189
  %v7354 = vpack.c.b16 %v6202, %v6190
  %v7355 = vpack.c.b16 %v6203, %v6191
  %v7356 = vpack.c.b16 %v6216, %v6204
  %v7357 = vpack.c.b16 %v6217, %v6205
  %v7358 = vpack.c.b16 %v6218, %v6206
  %v7359 = vpack.c.b16 %v6219, %v6207
  %v7360 = vpack.c.b16 %v6220, %v6208
  %v7361 = vpack.c.b16 %v6221, %v6209
  %v7362 = vpack.c.b16 %v6222, %v6210
  %v7363 = vpack.c.b16 %v6223, %v6211
  %v7364 = vpack.c.b16 %v6224, %v6212
  %v7365 = vpack.c.b16 %v6225, %v6213
  %v7366 = vpack.c.b16 %v6226, %v6214
  %v7367 = vpack.c.b16 %v6227, %v6215
  %v7368 = vpack.c.b16 %v6240, %v6228
  %v7369 = vpack.c.b16 %v6241, %v6229
  %v7370 = vpack.c.b16 %v6242, %v6230
  %v7371 = vpack.c.b16 %v6243, %v6231
  %v7372 = vpack.c.b16 %v6244, %v6232
  %v7373 = vpack.c.b16 %v6245, %v6233
  %v7374 = vpack.c.b16 %v6246, %v6234
  %v7375 = vpack.c.b16 %v6247, %v6235
  %v7376 = vpack.c.b16 %v6248, %v6236
  %v7377 = vpack.c.b16 %v6249, %v6237
  %v7378 = vpack.c.b16 %v6250, %v6238
  %v7379 = vpack.c.b16 %v6251, %v6239
  %v7380 = vpack.c.b16 %v6264, %v6252
  %v7381 = vpack.c.b16 %v6265, %v6253
  %v7382 = vpack.c.b16 %v6266, %v6254
  %v7383 = vpack.c.b16 %v6267, %v6255
  %v7384 = vpack.c.b16 %v6268, %v6256
  %v7385 = vpack.c.b16 %v6269, %v6257
  %v7386 = vpack.c.b16 %v6270, %v6258
  %v7387 = vpack.c.b16 %v6271, %v6259
  %v7388 = vpack.c.b16 %v6272, %v6260
  %v7389 = vpack.c.b16 %v6273, %v6261
  %v7390 = vpack.c.b16 %v6274, %v6262
  %v7391 = vpack.c.b16 %v6275, %v6263
  %v7392 = vpack.c.b16 %v6288, %v6276
  %v7393 = vpack.c.b16 %v6289, %v6277
  %v7394 = vpack.c.b16 %v6290, %v6278
  %v7395 = vpack.c.b16 %v6291, %v6279
  %v7396 = vpack.c.b16 %v6292, %v6280
  %v7397 = vpack.c.b16 %v6293, %v6281
  %v7398 = vpack.c.b16 %v6294, %v6282
  %v7399 = vpack.c.b16 %v6295, %v6283
  %v7400 = vpack.c.b16 %v6296, %v6284
  %v7401 = vpack.c.b16 %v6297, %v6285
  %v7402 = vpack.c.b16 %v6298, %v6286
  %v7403 = vpack.c.b16 %v6299, %v6287
  %v7404 = vpack.c.b16 %v6312, %v6300
  %v7405 = vpack.c.b16 %v6313, %v6301
  %v7406 = vpack.c.b16 %v6314, %v6302
  %v7407 = vpack.c.b16 %v6315, %v6303
  %v7408 = vpack.c.b16 %v6316, %v6304
  %v7409 = vpack.c.b16 %v6317, %v6305
  %v7410 = vpack.c.b16 %v6318, %v6306
  %v7411 = vpack.c.b16 %v6319, %v6307
  %v7412 = vpack.c.b16 %v6320, %v6308
  %v7413 = vpack.c.b16 %v6321, %v6309
  %v7414 = vpack.c.b16 %v6322, %v6310
  %v7415 = vpack.c.b16 %v6323, %v6311
  %v7416 = vpack.c.b16 %v6336, %v6324
  %v7417 = vpack.c.b16 %v6337, %v6325
  %v7418 = vpack.c.b16 %v6338, %v6326
  %v7419 = vpack.c.b16 %v6339, %v6327
  %v7420 = vpack.c.b16 %v6340, %v6328
  %v7421 = vpack.c.b16 %v6341, %v6329
  %v7422 = vpack.c.b16 %v6342, %v6330
  %v7423 = vpack.c.b16 %v6343, %v6331
  %v7424 = vpack.c.b16 %v6344, %v6332
  %v7425 = vpack.c.b16 %v6345, %v6333
  %v7426 = vpack.c.b16 %v6346, %v6334
  %v7427 = vpack.c.b16 %v6347, %v6335
  %v7428 = vpack.c.b16 %v6360, %v6348
  %v7429 = vpack.c.b16 %v6361, %v6349
  %v7430 = vpack.c.b16 %v6362, %v6350
  %v7431 = vpack.c.b16 %v6363, %v6351
  %v7432 = vpack.c.b16 %v6364, %v6352
  %v7433 = vpack.c.b16 %v6365, %v6353
  %v7434 = vpack.c.b16 %v6366, %v6354
  %v7435 = vpack.c.b16 %v6367, %v6355
  %v7436 = vpack.c.b16 %v6368, %v6356
  %v7437 = vpack.c.b16 %v6369, %v6357
  %v7438 = vpack.c.b16 %v6370, %v6358
  %v7439 = vpack.c.b16 %v6371, %v6359
  %v7440 = vpack.c.b16 %v6384, %v6372
  %v7441 = vpack.c.b16 %v6385, %v6373
  %v7442 = vpack.c.b16 %v6386, %v6374
  %v7443 = vpack.c.b16 %v6387, %v6375
  %v7444 = vpack.c.b16 %v6388, %v6376
  %v7445 = vpack.c.b16 %v6389, %v6377
  %v7446 = vpack.c.b16 %v6390, %v6378
  %v7447 = vpack.c.b16 %v6391, %v6379
  %v7448 = vpack.c.b16 %v6392, %v6380
  %v7449 = vpack.c.b16 %v6393, %v6381
  %v7450 = vpack.c.b16 %v6394, %v6382
  %v7451 = vpack.c.b16 %v6395, %v6383
  %v7452 = vpack.c.b16 %v6408, %v6396
  %v7453 = vpack.c.b16 %v6409, %v6397
  %v7454 = vpack.c.b16 %v6410, %v6398
  %v7455 = vpack.c.b16 %v6411, %v6399
  %v7456 = vpack.c.b16 %v6412, %v6400
  %v7457 = vpack.c.b16 %v6413, %v6401
  %v7458 = vpack.c.b16 %v6414, %v6402
  %v7459 = vpack.c.b16 %v6415, %v6403
  %v7460 = vpack.c.b16 %v6416, %v6404
  %v7461 = vpack.c.b16 %v6417, %v6405
  %v7462 = vpack.c.b16 %v6418, %v6406
  %v7463 = vpack.c.b16 %v6419, %v6407
  %v7464 = vpack.c.b16 %v6432, %v6420
  %v7465 = vpack.c.b16 %v6433, %v6421
  %v7466 = vpack.c.b16 %v6434, %v6422
  %v7467 = vpack.c.b16 %v6435, %v6423
  %v7468 = vpack.c.b16 %v6436, %v6424
  %v7469 = vpack.c.b16 %v6437, %v6425
  %v7470 = vpack.c.b16 %v6438, %v6426
  %v7471 = vpack.c.b16 %v6439, %v6427
  %v7472 = vpack.c.b16 %v6440, %v6428
  %v7473 = vpack.c.b16 %v6441, %v6429
  %v7474 = vpack.c.b16 %v6442, %v6430
  %v7475 = vpack.c.b16 %v6443, %v6431
  %v7476 = vpack.c.b16 %v6456, %v6444
  %v7477 = vpack.c.b16 %v6457, %v6445
  %v7478 = vpack.c.b16 %v6458, %v6446
  %v7479 = vpack.c.b16 %v6459, %v6447
  %v7480 = vpack.c.b16 %v6460, %v6448
  %v7481 = vpack.c.b16 %v6461, %v6449
  %v7482 = vpack.c.b16 %v6462, %v6450
  %v7483 = vpack.c.b16 %v6463, %v6451
  %v7484 = vpack.c.b16 %v6464, %v6452
  %v7485 = vpack.c.b16 %v6465, %v6453
  %v7486 = vpack.c.b16 %v6466, %v6454
  %v7487 = vpack.c.b16 %v6467, %v6455
  %v7488 = vpack.c.b16 %v6480, %v6468
  %v7489 = vpack.c.b16 %v6481, %v6469
  %v7490 = vpack.c.b16 %v6482, %v6470
  %v7491 = vpack.c.b16 %v6483, %v6471
  %v7492 = vpack.c.b16 %v6484, %v6472
  %v7493 = vpack.c.b16 %v6485, %v6473
  %v7494 = vpack.c.b16 %v6486, %v6474
  %v7495 = vpack.c.b16 %v6487, %v6475
  %v7496 = vpack.c.b16 %v6488, %v6476
  %v7497 = vpack.c.b16 %v6489, %v6477
  %v7498 = vpack.c.b16 %v6490, %v6478
  %v7499 = vpack.c.b16 %v6491, %v6479
  %v7500 = vpack.c.b16 %v6504, %v6492
  %v7501 = vpack.c.b16 %v6505, %v6493
  %v7502 = vpack.c.b16 %v6506, %v6494
  %v7503 = vpack.c.b16 %v6507, %v6495
  %v7504 = vpack.c.b16 %v6508, %v6496
  %v7505 = vpack.c.b16 %v6509, %v6497
  %v7506 = vpack.c.b16 %v6510, %v6498
  %v7507 = vpack.c.b16 %v6511, %v6499
  %v7508 = vpack.c.b16 %v6512, %v6500
  %v7509 = vpack.c.b16 %v6513, %v6501
  %v7510 = vpack.c.b16 %v6514, %v6502
  %v7511 = vpack.c.b16 %v6515, %v6503
  %v7512 = vpack.c.b16 %v6528, %v6516
  %v7513 = vpack.c.b16 %v6529, %v6517
  %v7514 = vpack.c.b16 %v6530, %v6518
  %v7515 = vpack.c.b16 %v6531, %v6519
  %v7516 = vpack.c.b16 %v6532, %v6520
  %v7517 = vpack.c.b16 %v6533, %v6521
  %v7518 = vpack.c.b16 %v6534, %v6522
  %v7519 = vpack.c.b16 %v6535, %v6523
  %v7520 = vpack.c.b16 %v6536, %v6524
  %v7521 = vpack.c.b16 %v6537, %v6525
  %v7522 = vpack.c.b16 %v6538, %v6526
  %v7523 = vpack.c.b16 %v6539, %v6527
  %v7524 = vpack.c.b16 %v6552, %v6540
  %v7525 = vpack.c.b16 %v6553, %v6541
  %v7526 = vpack.c.b16 %v6554, %v6542
  %v7527 = vpack.c.b16 %v6555, %v6543
  %v7528 = vpack.c.b16 %v6556, %v6544
  %v7529 = vpack.c.b16 %v6557, %v6545
  %v7530 = vpack.c.b16 %v6558, %v6546
  %v7531 = vpack.c.b16 %v6559, %v6547
  %v7532 = vpack.c.b16 %v6560, %v6548
  %v7533 = vpack.c.b16 %v6561, %v6549
  %v7534 = vpack.c.b16 %v6562, %v6550
  %v7535 = vpack.c.b16 %v6563, %v6551
  %v7536 = vpack.c.b16 %v6576, %v6564
  %v7537 = vpack.c.b16 %v6577, %v6565
  %v7538 = vpack.c.b16 %v6578, %v6566
  %v7539 = vpack.c.b16 %v6579, %v6567
  %v7540 = vpack.c.b16 %v6580, %v6568
  %v7541 = vpack.c.b16 %v6581, %v6569
  %v7542 = vpack.c.b16 %v6582, %v6570
  %v7543 = vpack.c.b16 %v6583, %v6571
  %v7544 = vpack.c.b16 %v6584, %v6572
  %v7545 = vpack.c.b16 %v6585, %v6573
  %v7546 = vpack.c.b16 %v6586, %v6574
  %v7547 = vpack.c.b16 %v6587, %v6575
  %v7548 = vpack.c.b16 %v6600, %v6588
  %v7549 = vpack.c.b16 %v6601, %v6589
  %v7550 = vpack.c.b16 %v6602, %v6590
  %v7551 = vpack.c.b16 %v6603, %v6591
  %v7552 = vpack.c.b16 %v6604, %v6592
  %v7553 = vpack.c.b16 %v6605, %v6593
  %v7554 = vpack.c.b16 %v6606, %v6594
  %v7555 = vpack.c.b16 %v6607, %v6595
  %v7556 = vpack.c.b16 %v6608, %v6596
  %v7557 = vpack.c.b16 %v6609, %v6597
  %v7558 = vpack.c.b16 %v6610, %v6598
  %v7559 = vpack.c.b16 %v6611, %v6599
  %v7560 = vpack.c.b16 %v6624, %v6612
  %v7561 = vpack.c.b16 %v6625, %v6613
  %v7562 = vpack.c.b16 %v6626, %v6614
  %v7563 = vpack.c.b16 %v6627, %v6615
  %v7564 = vpack.c.b16 %v6628, %v6616
  %v7565 = vpack.c.b16 %v6629, %v6617
  %v7566 = vpack.c.b16 %v6630, %v6618
  %v7567 = vpack.c.b16 %v6631, %v6619
  %v7568 = vpack.c.b16 %v6632, %v6620
  %v7569 = vpack.c.b16 %v6633, %v6621
  %v7570 = vpack.c.b16 %v6634, %v6622
  %v7571 = vpack.c.b16 %v6635, %v6623
  %v7572 = vpack.c.b16 %v6648, %v6636
  %v7573 = vpack.c.b16 %v6649, %v6637
  %v7574 = vpack.c.b16 %v6650, %v6638
  %v7575 = vpack.c.b16 %v6651, %v6639
  %v7576 = vpack.c.b16 %v6652, %v6640
  %v7577 = vpack.c.b16 %v6653, %v6641
  %v7578 = vpack.c.b16 %v6654, %v6642
  %v7579 = vpack.c.b16 %v6655, %v6643
  %v7580 = vpack.c.b16 %v6656, %v6644
  %v7581 = vpack.c.b16 %v6657, %v6645
  %v7582 = vpack.c.b16 %v6658, %v6646
  %v7583 = vpack.c.b16 %v6659, %v6647
  %v7584 = vpack.c.b16 %v6672, %v6660
  %v7585 = vpack.c.b16 %v6673, %v6661
  %v7586 = vpack.c.b16 %v6674, %v6662
  %v7587 = vpack.c.b16 %v6675, %v6663
  %v7588 = vpack.c.b16 %v6676, %v6664
  %v7589 = vpack.c.b16 %v6677, %v6665
  %v7590 = vpack.c.b16 %v6678, %v6666
  %v7591 = vpack.c.b16 %v6679, %v6667
  %v7592 = vpack.c.b16 %v6680, %v6668
  %v7593 = vpack.c.b16 %v6681, %v6669
  %v7594 = vpack.c.b16 %v6682, %v6670
  %v7595 = vpack.c.b16 %v6683, %v6671
  %v7596 = vpack.c.b16 %v6696, %v6684
  %v7597 = vpack.c.b16 %v6697, %v6685
  %v7598 = vpack.c.b16 %v6698, %v6686
  %v7599 = vpack.c.b16 %v6699, %v6687
  %v7600 = vpack.c.b16 %v6700, %v6688
  %v7601 = vpack.c.b16 %v6701, %v6689
  %v7602 = vpack.c.b16 %v6702, %v6690
  %v7603 = vpack.c.b16 %v6703, %v6691
  %v7604 = vpack.c.b16 %v6704, %v6692
  %v7605 = vpack.c.b16 %v6705, %v6693
  %v7606 = vpack.c.b16 %v6706, %v6694
  %v7607 = vpack.c.b16 %v6707, %v6695
  %v7608 = vpack.c.b16 %v6720, %v6708
  %v7609 = vpack.c.b16 %v6721, %v6709
  %v7610 = vpack.c.b16 %v6722, %v6710
  %v7611 = vpack.c.b16 %v6723, %v6711
  %v7612 = vpack.c.b16 %v6724, %v6712
  %v7613 = vpack.c.b16 %v6725, %v6713
  %v7614 = vpack.c.b16 %v6726, %v6714
  %v7615 = vpack.c.b16 %v6727, %v6715
  %v7616 = vpack.c.b16 %v6728, %v6716
  %v7617 = vpack.c.b16 %v6729, %v6717
  %v7618 = vpack.c.b16 %v6730, %v6718
  %v7619 = vpack.c.b16 %v6731, %v6719
  %v7620 = vpack.c.b16 %v6744, %v6732
  %v7621 = vpack.c.b16 %v6745, %v6733
  %v7622 = vpack.c.b16 %v6746, %v6734
  %v7623 = vpack.c.b16 %v6747, %v6735
  %v7624 = vpack.c.b16 %v6748, %v6736
  %v7625 = vpack.c.b16 %v6749, %v6737
  %v7626 = vpack.c.b16 %v6750, %v6738
  %v7627 = vpack.c.b16 %v6751, %v6739
  %v7628 = vpack.c.b16 %v6752, %v6740
  %v7629 = vpack.c.b16 %v6753, %v6741
  %v7630 = vpack.c.b16 %v6754, %v6742
  %v7631 = vpack.c.b16 %v6755, %v6743
  %v7632 = vpack.c.b16 %v6768, %v6756
  %v7633 = vpack.c.b16 %v6769, %v6757
  %v7634 = vpack.c.b16 %v6770, %v6758
  %v7635 = vpack.c.b16 %v6771, %v6759
  %v7636 = vpack.c.b16 %v6772, %v6760
  %v7637 = vpack.c.b16 %v6773, %v6761
  %v7638 = vpack.c.b16 %v6774, %v6762
  %v7639 = vpack.c.b16 %v6775, %v6763
  %v7640 = vpack.c.b16 %v6776, %v6764
  %v7641 = vpack.c.b16 %v6777, %v6765
  %v7642 = vpack.c.b16 %v6778, %v6766
  %v7643 = vpack.c.b16 %v6779, %v6767
  %v7644 = vpack.c.b16 %v6792, %v6780
  %v7645 = vpack.c.b16 %v6793, %v6781
  %v7646 = vpack.c.b16 %v6794, %v6782
  %v7647 = vpack.c.b16 %v6795, %v6783
  %v7648 = vpack.c.b16 %v6796, %v6784
  %v7649 = vpack.c.b16 %v6797, %v6785
  %v7650 = vpack.c.b16 %v6798, %v6786
  %v7651 = vpack.c.b16 %v6799, %v6787
  %v7652 = vpack.c.b16 %v6800, %v6788
  %v7653 = vpack.c.b16 %v6801, %v6789
  %v7654 = vpack.c.b16 %v6802, %v6790
  %v7655 = vpack.c.b16 %v6803, %v6791
  %v7656 = vpack.c.b16 %v6816, %v6804
  %v7657 = vpack.c.b16 %v6817, %v6805
  %v7658 = vpack.c.b16 %v6818, %v6806
  %v7659 = vpack.c.b16 %v6819, %v6807
  %v7660 = vpack.c.b16 %v6820, %v6808
  %v7661 = vpack.c.b16 %v6821, %v6809
  %v7662 = vpack.c.b16 %v6822, %v6810
  %v7663 = vpack.c.b16 %v6823, %v6811
  %v7664 = vpack.c.b16 %v6824, %v6812
  %v7665 = vpack.c.b16 %v6825, %v6813
  %v7666 = vpack.c.b16 %v6826, %v6814
  %v7667 = vpack.c.b16 %v6827, %v6815
  %v7668 = vpack.c.b16 %v6840, %v6828
  %v7669 = vpack.c.b16 %v6841, %v6829
  %v7670 = vpack.c.b16 %v6842, %v6830
  %v7671 = vpack.c.b16 %v6843, %v6831
  %v7672 = vpack.c.b16 %v6844, %v6832
  %v7673 = vpack.c.b16 %v6845, %v6833
  %v7674 = vpack.c.b16 %v6846, %v6834
  %v7675 = vpack.c.b16 %v6847, %v6835
  %v7676 = vpack.c.b16 %v6848, %v6836
  %v7677 = vpack.c.b16 %v6849, %v6837
  %v7678 = vpack.c.b16 %v6850, %v6838
  %v7679 = vpack.c.b16 %v6851, %v6839
  %v7680 = vpack.c.b16 %v6864, %v6852
  %v7681 = vpack.c.b16 %v6865, %v6853
  %v7682 = vpack.c.b16 %v6866, %v6854
  %v7683 = vpack.c.b16 %v6867, %v6855
  %v7684 = vpack.c.b16 %v6868, %v6856
  %v7685 = vpack.c.b16 %v6869, %v6857
  %v7686 = vpack.c.b16 %v6870, %v6858
  %v7687 = vpack.c.b16 %v6871, %v6859
  %v7688 = vpack.c.b16 %v6872, %v6860
  %v7689 = vpack.c.b16 %v6873, %v6861
  %v7690 = vpack.c.b16 %v6874, %v6862
  %v7691 = vpack.c.b16 %v6875, %v6863
  %v7692 = vpack.c.b16 %v6888, %v6876
  %v7693 = vpack.c.b16 %v6889, %v6877
  %v7694 = vpack.c.b16 %v6890, %v6878
  %v7695 = vpack.c.b16 %v6891, %v6879
  %v7696 = vpack.c.b16 %v6892, %v6880
  %v7697 = vpack.c.b16 %v6893, %v6881
  %v7698 = vpack.c.b16 %v6894, %v6882
  %v7699 = vpack.c.b16 %v6895, %v6883
  %v7700 = vpack.c.b16 %v6896, %v6884
  %v7701 = vpack.c.b16 %v6897, %v6885
  %v7702 = vpack.c.b16 %v6898, %v6886
  %v7703 = vpack.c.b16 %v6899, %v6887
  %v7704 = vpack.c.b16 %v6912, %v6900
  %v7705 = vpack.c.b16 %v6913, %v6901
  %v7706 = vpack.c.b16 %v6914, %v6902
  %v7707 = vpack.c.b16 %v6915, %v6903
  %v7708 = vpack.c.b16 %v6916, %v6904
  %v7709 = vpack.c.b16 %v6917, %v6905
  %v7710 = vpack.c.b16 %v6918, %v6906
  %v7711 = vpack.c.b16 %v6919, %v6907
  %v7712 = vpack.c.b16 %v6920, %v6908
  %v7713 = vpack.c.b16 %v6921, %v6909
  %v7714 = vpack.c.b16 %v6922, %v6910
  %v7715 = vpack.c.b16 %v6923, %v6911
  %v7716 = vpack.c.b16 %v6936, %v6924
  %v7717 = vpack.c.b16 %v6937, %v6925
  %v7718 = vpack.c.b16 %v6938, %v6926
  %v7719 = vpack.c.b16 %v6939, %v6927
  %v7720 = vpack.c.b16 %v6940, %v6928
  %v7721 = vpack.c.b16 %v6941, %v6929
  %v7722 = vpack.c.b16 %v6942, %v6930
  %v7723 = vpack.c.b16 %v6943, %v6931
  %v7724 = vpack.c.b16 %v6944, %v6932
  %v7725 = vpack.c.b16 %v6945, %v6933
  %v7726 = vpack.c.b16 %v6946, %v6934
  %v7727 = vpack.c.b16 %v6947, %v6935
  %v7728 = vpack.c.b16 %v6960, %v6948
  %v7729 = vpack.c.b16 %v6961, %v6949
  %v7730 = vpack.c.b16 %v6962, %v6950
  %v7731 = vpack.c.b16 %v6963, %v6951
  %v7732 = vpack.c.b16 %v6964, %v6952
  %v7733 = vpack.c.b16 %v6965, %v6953
  %v7734 = vpack.c.b16 %v6966, %v6954
  %v7735 = vpack.c.b16 %v6967, %v6955
  %v7736 = vpack.c.b16 %v6968, %v6956
  %v7737 = vpack.c.b16 %v6969, %v6957
  %v7738 = vpack.c.b16 %v6970, %v6958
  %v7739 = vpack.c.b16 %v6971, %v6959
  %8508 = vmatprep.subr.bf16.mxu0 %v6973
  %8509 = vmatpush1.bf16.msra.mxu0 %v6972
  %8510 = vmatprep.subr.bf16.mxu0 %v6985
  %8511 = vmatpush1.bf16.msra.mxu0 %v6984
  %8512 = vmatprep.subr.bf16.mxu0 %v6997
  %8513 = vmatpush1.bf16.msra.mxu0 %v6996
  %8514 = vmatprep.subr.bf16.mxu0 %v7009
  %8515 = vmatpush1.bf16.msra.mxu0 %v7008
  %8516 = vmatprep.subr.bf16.mxu0 %v7021
  %8517 = vmatpush1.bf16.msra.mxu0 %v7020
  %8518 = vmatprep.subr.bf16.mxu0 %v7033
  %8519 = vmatpush1.bf16.msra.mxu0 %v7032
  %8520 = vmatprep.subr.bf16.mxu0 %v7045
  %8521 = vmatpush1.bf16.msra.mxu0 %v7044
  %8522 = vmatprep.subr.bf16.mxu0 %v7057
  %8523 = vmatpush1.bf16.msra.mxu0 %v7056
  %8524 = vmatprep.subr.bf16.mxu0 %v7069
  %8525 = vmatpush1.bf16.msra.mxu0 %v7068
  %8526 = vmatprep.subr.bf16.mxu0 %v7081
  %8527 = vmatpush1.bf16.msra.mxu0 %v7080
  %8528 = vmatprep.subr.bf16.mxu0 %v7093
  %8529 = vmatpush1.bf16.msra.mxu0 %v7092
  %8530 = vmatprep.subr.bf16.mxu0 %v7105
  %8531 = vmatpush1.bf16.msra.mxu0 %v7104
  %8532 = vmatprep.subr.bf16.mxu0 %v7117
  %8533 = vmatpush1.bf16.msra.mxu0 %v7116
  %8534 = vmatprep.subr.bf16.mxu0 %v7129
  %8535 = vmatpush1.bf16.msra.mxu0 %v7128
  %8536 = vmatprep.subr.bf16.mxu0 %v7141
  %8537 = vmatpush1.bf16.msra.mxu0 %v7140
  %8538 = vmatprep.subr.bf16.mxu0 %v7153
  %8539 = vmatpush1.bf16.msra.mxu0 %v7152
  %8540 = vmatprep.mubr.bf16.mxu0 %v3893
  %8541 = vmatmul.mubr.bf16.gmra.mrb[0].mxu0 %v3892
  %v8542 = vpop.f32.mrb[0].mxu0
  %v8543 = vadd.f32 0.0, %v8542
  %v8544 = vpop.f32.mrb[0].mxu0
  %v8545 = vadd.f32 0.0, %v8544
  %v8546 = vpop.f32.mrb[0].mxu0
  %v8547 = vadd.f32 0.0, %v8546
  %v8548 = vpop.f32.mrb[0].mxu0
  %v8549 = vadd.f32 0.0, %v8548
  %8550 = vdwg.mxu0
  %8551 = vmatprep.subr.bf16.mxu0 %v7165
  %8552 = vmatpush1.bf16.msra.mxu0 %v7164
  %8553 = vmatprep.subr.bf16.mxu0 %v7177
  %8554 = vmatpush1.bf16.msra.mxu0 %v7176
  %8555 = vmatprep.subr.bf16.mxu0 %v7189
  %8556 = vmatpush1.bf16.msra.mxu0 %v7188
  %8557 = vmatprep.subr.bf16.mxu0 %v7201
  %8558 = vmatpush1.bf16.msra.mxu0 %v7200
  %8559 = vmatprep.subr.bf16.mxu0 %v7213
  %8560 = vmatpush1.bf16.msra.mxu0 %v7212
  %8561 = vmatprep.subr.bf16.mxu0 %v7225
  %8562 = vmatpush1.bf16.msra.mxu0 %v7224
  %8563 = vmatprep.subr.bf16.mxu0 %v7237
  %8564 = vmatpush1.bf16.msra.mxu0 %v7236
  %8565 = vmatprep.subr.bf16.mxu0 %v7249
  %8566 = vmatpush1.bf16.msra.mxu0 %v7248
  %8567 = vmatprep.subr.bf16.mxu0 %v7261
  %8568 = vmatpush1.bf16.msra.mxu0 %v7260
  %8569 = vmatprep.subr.bf16.mxu0 %v7273
  %8570 = vmatpush1.bf16.msra.mxu0 %v7272
  %8571 = vmatprep.subr.bf16.mxu0 %v7285
  %8572 = vmatpush1.bf16.msra.mxu0 %v7284
  %8573 = vmatprep.subr.bf16.mxu0 %v7297
  %8574 = vmatpush1.bf16.msra.mxu0 %v7296
  %8575 = vmatprep.subr.bf16.mxu0 %v7309
  %8576 = vmatpush1.bf16.msra.mxu0 %v7308
  %8577 = vmatprep.subr.bf16.mxu0 %v7321
  %8578 = vmatpush1.bf16.msra.mxu0 %v7320
  %8579 = vmatprep.subr.bf16.mxu0 %v7333
  %8580 = vmatpush1.bf16.msra.mxu0 %v7332
  %8581 = vmatprep.subr.bf16.mxu0 %v7345
  %8582 = vmatpush1.bf16.msra.mxu0 %v7344
  %8583 = vmatprep.mubr.bf16.mxu0 %v3895
  %8584 = vmatmul.mubr.bf16.gmra.mrb[0].mxu0 %v3894
  %v8585 = vpop.f32.mrb[0].mxu0
  %v8586 = vadd.f32 %v8543, %v8585
  %v8587 = vpop.f32.mrb[0].mxu0
  %v8588 = vadd.f32 %v8545, %v8587
  %v8589 = vpop.f32.mrb[0].mxu0
  %v8590 = vadd.f32 %v8547, %v8589
  %v8591 = vpop.f32.mrb[0].mxu0
  %v8592 = vadd.f32 %v8549, %v8591
  %8593 = vdwg.mxu0
  %8594 = vmatprep.subr.bf16.mxu0 %v7357
  %8595 = vmatpush1.bf16.msra.mxu0 %v7356
  %8596 = vmatprep.subr.bf16.mxu0 %v7369
  %8597 = vmatpush1.bf16.msra.mxu0 %v7368
  %8598 = vmatprep.subr.bf16.mxu0 %v7381
  %8599 = vmatpush1.bf16.msra.mxu0 %v7380
  %8600 = vmatprep.subr.bf16.mxu0 %v7393
  %8601 = vmatpush1.bf16.msra.mxu0 %v7392
  %8602 = vmatprep.subr.bf16.mxu0 %v7405
  %8603 = vmatpush1.bf16.msra.mxu0 %v7404
  %8604 = vmatprep.subr.bf16.mxu0 %v7417
  %8605 = vmatpush1.bf16.msra.mxu0 %v7416
  %8606 = vmatprep.subr.bf16.mxu0 %v7429
  %8607 = vmatpush1.bf16.msra.mxu0 %v7428
  %8608 = vmatprep.subr.bf16.mxu0 %v7441
  %8609 = vmatpush1.bf16.msra.mxu0 %v7440
  %8610 = vmatprep.subr.bf16.mxu0 %v7453
  %8611 = vmatpush1.bf16.msra.mxu0 %v7452
  %8612 = vmatprep.subr.bf16.mxu0 %v7465
  %8613 = vmatpush1.bf16.msra.mxu0 %v7464
  %8614 = vmatprep.subr.bf16.mxu0 %v7477
  %8615 = vmatpush1.bf16.msra.mxu0 %v7476
  %8616 = vmatprep.subr.bf16.mxu0 %v7489
  %8617 = vmatpush1.bf16.msra.mxu0 %v7488
  %8618 = vmatprep.subr.bf16.mxu0 %v7501
  %8619 = vmatpush1.bf16.msra.mxu0 %v7500
  %8620 = vmatprep.subr.bf16.mxu0 %v7513
  %8621 = vmatpush1.bf16.msra.mxu0 %v7512
  %8622 = vmatprep.subr.bf16.mxu0 %v7525
  %8623 = vmatpush1.bf16.msra.mxu0 %v7524
  %8624 = vmatprep.subr.bf16.mxu0 %v7537
  %8625 = vmatpush1.bf16.msra.mxu0 %v7536
  %8626 = vmatprep.mubr.bf16.mxu0 %v3897
  %8627 = vmatmul.mubr.bf16.gmra.mrb[0].mxu0 %v3896
  %v8628 = vpop.f32.mrb[0].mxu0
  %v8629 = vadd.f32 %v8586, %v8628
  %v8630 = vpop.f32.mrb[0].mxu0
  %v8631 = vadd.f32 %v8588, %v8630
  %v8632 = vpop.f32.mrb[0].mxu0
  %v8633 = vadd.f32 %v8590, %v8632
  %v8634 = vpop.f32.mrb[0].mxu0
  %v8635 = vadd.f32 %v8592, %v8634
  %8636 = vdwg.mxu0
  %8637 = vmatprep.subr.bf16.mxu0 %v7549
  %8638 = vmatpush1.bf16.msra.mxu0 %v7548
  %8639 = vmatprep.subr.bf16.mxu0 %v7561
  %8640 = vmatpush1.bf16.msra.mxu0 %v7560
  %8641 = vmatprep.subr.bf16.mxu0 %v7573
  %8642 = vmatpush1.bf16.msra.mxu0 %v7572
  %8643 = vmatprep.subr.bf16.mxu0 %v7585
  %8644 = vmatpush1.bf16.msra.mxu0 %v7584
  %8645 = vmatprep.subr.bf16.mxu0 %v7597
  %8646 = vmatpush1.bf16.msra.mxu0 %v7596
  %8647 = vmatprep.subr.bf16.mxu0 %v7609
  %8648 = vmatpush1.bf16.msra.mxu0 %v7608
  %8649 = vmatprep.subr.bf16.mxu0 %v7621
  %8650 = vmatpush1.bf16.msra.mxu0 %v7620
  %8651 = vmatprep.subr.bf16.mxu0 %v7633
  %8652 = vmatpush1.bf16.msra.mxu0 %v7632
  %8653 = vmatprep.subr.bf16.mxu0 %v7645
  %8654 = vmatpush1.bf16.msra.mxu0 %v7644
  %8655 = vmatprep.subr.bf16.mxu0 %v7657
  %8656 = vmatpush1.bf16.msra.mxu0 %v7656
  %8657 = vmatprep.subr.bf16.mxu0 %v7669
  %8658 = vmatpush1.bf16.msra.mxu0 %v7668
  %8659 = vmatprep.subr.bf16.mxu0 %v7681
  %8660 = vmatpush1.bf16.msra.mxu0 %v7680
  %8661 = vmatprep.subr.bf16.mxu0 %v7693
  %8662 = vmatpush1.bf16.msra.mxu0 %v7692
  %8663 = vmatprep.subr.bf16.mxu0 %v7705
  %8664 = vmatpush1.bf16.msra.mxu0 %v7704
  %8665 = vmatprep.subr.bf16.mxu0 %v7717
  %8666 = vmatpush1.bf16.msra.mxu0 %v7716
  %8667 = vmatprep.subr.bf16.mxu0 %v7729
  %8668 = vmatpush1.bf16.msra.mxu0 %v7728
  %8669 = vmatprep.mubr.bf16.mxu0 %v3899
  %8670 = vmatmul.mubr.bf16.gmra.mrb[0].mxu0 %v3898
  %v8671 = vpop.f32.mrb[0].mxu0
  %v8672 = vadd.f32 %v8629, %v8671
  %v8673 = vpop.f32.mrb[0].mxu0
  %v8674 = vadd.f32 %v8631, %v8673
  %v8675 = vpop.f32.mrb[0].mxu0
  %v8676 = vadd.f32 %v8633, %v8675
  %v8677 = vpop.f32.mrb[0].mxu0
  %v8678 = vadd.f32 %v8635, %v8677
  %8679 = vdwg.mxu0
  %8680 = vmatprep.subr.bf16.mxu0 %v6975
  %8681 = vmatpush1.bf16.msra.mxu0 %v6974
  %8682 = vmatprep.subr.bf16.mxu0 %v6987
  %8683 = vmatpush1.bf16.msra.mxu0 %v6986
  %8684 = vmatprep.subr.bf16.mxu0 %v6999
  %8685 = vmatpush1.bf16.msra.mxu0 %v6998
  %8686 = vmatprep.subr.bf16.mxu0 %v7011
  %8687 = vmatpush1.bf16.msra.mxu0 %v7010
  %8688 = vmatprep.subr.bf16.mxu0 %v7023
  %8689 = vmatpush1.bf16.msra.mxu0 %v7022
  %8690 = vmatprep.subr.bf16.mxu0 %v7035
  %8691 = vmatpush1.bf16.msra.mxu0 %v7034
  %8692 = vmatprep.subr.bf16.mxu0 %v7047
  %8693 = vmatpush1.bf16.msra.mxu0 %v7046
  %8694 = vmatprep.subr.bf16.mxu0 %v7059
  %8695 = vmatpush1.bf16.msra.mxu0 %v7058
  %8696 = vmatprep.subr.bf16.mxu0 %v7071
  %8697 = vmatpush1.bf16.msra.mxu0 %v7070
  %8698 = vmatprep.subr.bf16.mxu0 %v7083
  %8699 = vmatpush1.bf16.msra.mxu0 %v7082
  %8700 = vmatprep.subr.bf16.mxu0 %v7095
  %8701 = vmatpush1.bf16.msra.mxu0 %v7094
  %8702 = vmatprep.subr.bf16.mxu0 %v7107
  %8703 = vmatpush1.bf16.msra.mxu0 %v7106
  %8704 = vmatprep.subr.bf16.mxu0 %v7119
  %8705 = vmatpush1.bf16.msra.mxu0 %v7118
  %8706 = vmatprep.subr.bf16.mxu0 %v7131
  %8707 = vmatpush1.bf16.msra.mxu0 %v7130
  %8708 = vmatprep.subr.bf16.mxu0 %v7143
  %8709 = vmatpush1.bf16.msra.mxu0 %v7142
  %8710 = vmatprep.subr.bf16.mxu0 %v7155
  %8711 = vmatpush1.bf16.msra.mxu0 %v7154
  %8712 = vmatprep.mubr.bf16.mxu0 %v3893
  %8713 = vmatmul.mubr.bf16.gmra.mrb[0].mxu0 %v3892
  %v8714 = vpop.f32.mrb[0].mxu0
  %v8715 = vadd.f32 0.0, %v8714
  %v8716 = vpop.f32.mrb[0].mxu0
  %v8717 = vadd.f32 0.0, %v8716
  %v8718 = vpop.f32.mrb[0].mxu0
  %v8719 = vadd.f32 0.0, %v8718
  %v8720 = vpop.f32.mrb[0].mxu0
  %v8721 = vadd.f32 0.0, %v8720
  %8722 = vdwg.mxu0
  %8723 = vmatprep.subr.bf16.mxu0 %v7167
  %8724 = vmatpush1.bf16.msra.mxu0 %v7166
  %8725 = vmatprep.subr.bf16.mxu0 %v7179
  %8726 = vmatpush1.bf16.msra.mxu0 %v7178
  %8727 = vmatprep.subr.bf16.mxu0 %v7191
  %8728 = vmatpush1.bf16.msra.mxu0 %v7190
  %8729 = vmatprep.subr.bf16.mxu0 %v7203
  %8730 = vmatpush1.bf16.msra.mxu0 %v7202
  %8731 = vmatprep.subr.bf16.mxu0 %v7215
  %8732 = vmatpush1.bf16.msra.mxu0 %v7214
  %8733 = vmatprep.subr.bf16.mxu0 %v7227
  %8734 = vmatpush1.bf16.msra.mxu0 %v7226
  %8735 = vmatprep.subr.bf16.mxu0 %v7239
  %8736 = vmatpush1.bf16.msra.mxu0 %v7238
  %8737 = vmatprep.subr.bf16.mxu0 %v7251
  %8738 = vmatpush1.bf16.msra.mxu0 %v7250
  %8739 = vmatprep.subr.bf16.mxu0 %v7263
  %8740 = vmatpush1.bf16.msra.mxu0 %v7262
  %8741 = vmatprep.subr.bf16.mxu0 %v7275
  %8742 = vmatpush1.bf16.msra.mxu0 %v7274
  %8743 = vmatprep.subr.bf16.mxu0 %v7287
  %8744 = vmatpush1.bf16.msra.mxu0 %v7286
  %8745 = vmatprep.subr.bf16.mxu0 %v7299
  %8746 = vmatpush1.bf16.msra.mxu0 %v7298
  %8747 = vmatprep.subr.bf16.mxu0 %v7311
  %8748 = vmatpush1.bf16.msra.mxu0 %v7310
  %8749 = vmatprep.subr.bf16.mxu0 %v7323
  %8750 = vmatpush1.bf16.msra.mxu0 %v7322
  %8751 = vmatprep.subr.bf16.mxu0 %v7335
  %8752 = vmatpush1.bf16.msra.mxu0 %v7334
  %8753 = vmatprep.subr.bf16.mxu0 %v7347
  %8754 = vmatpush1.bf16.msra.mxu0 %v7346
  %8755 = vmatprep.mubr.bf16.mxu0 %v3895
  %8756 = vmatmul.mubr.bf16.gmra.mrb[0].mxu0 %v3894
  %v8757 = vpop.f32.mrb[0].mxu0
  %v8758 = vadd.f32 %v8715, %v8757
  %v8759 = vpop.f32.mrb[0].mxu0
  %v8760 = vadd.f32 %v8717, %v8759
  %v8761 = vpop.f32.mrb[0].mxu0
  %v8762 = vadd.f32 %v8719, %v8761
  %v8763 = vpop.f32.mrb[0].mxu0
  %v8764 = vadd.f32 %v8721, %v8763
  %8765 = vdwg.mxu0
  %8766 = vmatprep.subr.bf16.mxu0 %v7359
  %8767 = vmatpush1.bf16.msra.mxu0 %v7358
  %8768 = vmatprep.subr.bf16.mxu0 %v7371
  %8769 = vmatpush1.bf16.msra.mxu0 %v7370
  %8770 = vmatprep.subr.bf16.mxu0 %v7383
  %8771 = vmatpush1.bf16.msra.mxu0 %v7382
  %8772 = vmatprep.subr.bf16.mxu0 %v7395
  %8773 = vmatpush1.bf16.msra.mxu0 %v7394
  %8774 = vmatprep.subr.bf16.mxu0 %v7407
  %8775 = vmatpush1.bf16.msra.mxu0 %v7406
  %8776 = vmatprep.subr.bf16.mxu0 %v7419
  %8777 = vmatpush1.bf16.msra.mxu0 %v7418
  %8778 = vmatprep.subr.bf16.mxu0 %v7431
  %8779 = vmatpush1.bf16.msra.mxu0 %v7430
  %8780 = vmatprep.subr.bf16.mxu0 %v7443
  %8781 = vmatpush1.bf16.msra.mxu0 %v7442
  %8782 = vmatprep.subr.bf16.mxu0 %v7455
  %8783 = vmatpush1.bf16.msra.mxu0 %v7454
  %8784 = vmatprep.subr.bf16.mxu0 %v7467
  %8785 = vmatpush1.bf16.msra.mxu0 %v7466
  %8786 = vmatprep.subr.bf16.mxu0 %v7479
  %8787 = vmatpush1.bf16.msra.mxu0 %v7478
  %8788 = vmatprep.subr.bf16.mxu0 %v7491
  %8789 = vmatpush1.bf16.msra.mxu0 %v7490
  %8790 = vmatprep.subr.bf16.mxu0 %v7503
  %8791 = vmatpush1.bf16.msra.mxu0 %v7502
  %8792 = vmatprep.subr.bf16.mxu0 %v7515
  %8793 = vmatpush1.bf16.msra.mxu0 %v7514
  %8794 = vmatprep.subr.bf16.mxu0 %v7527
  %8795 = vmatpush1.bf16.msra.mxu0 %v7526
  %8796 = vmatprep.subr.bf16.mxu0 %v7539
  %8797 = vmatpush1.bf16.msra.mxu0 %v7538
  %8798 = vmatprep.mubr.bf16.mxu0 %v3897
  %8799 = vmatmul.mubr.bf16.gmra.mrb[0].mxu0 %v3896
  %v8800 = vpop.f32.mrb[0].mxu0
  %v8801 = vadd.f32 %v8758, %v8800
  %v8802 = vpop.f32.mrb[0].mxu0
  %v8803 = vadd.f32 %v8760, %v8802
  %v8804 = vpop.f32.mrb[0].mxu0
  %v8805 = vadd.f32 %v8762, %v8804
  %v8806 = vpop.f32.mrb[0].mxu0
  %v8807 = vadd.f32 %v8764, %v8806
  %8808 = vdwg.mxu0
  %8809 = vmatprep.subr.bf16.mxu0 %v7551
  %8810 = vmatpush1.bf16.msra.mxu0 %v7550
  %8811 = vmatprep.subr.bf16.mxu0 %v7563
  %8812 = vmatpush1.bf16.msra.mxu0 %v7562
  %8813 = vmatprep.subr.bf16.mxu0 %v7575
  %8814 = vmatpush1.bf16.msra.mxu0 %v7574
  %8815 = vmatprep.subr.bf16.mxu0 %v7587
  %8816 = vmatpush1.bf16.msra.mxu0 %v7586
  %8817 = vmatprep.subr.bf16.mxu0 %v7599
  %8818 = vmatpush1.bf16.msra.mxu0 %v7598
  %8819 = vmatprep.subr.bf16.mxu0 %v7611
  %8820 = vmatpush1.bf16.msra.mxu0 %v7610
  %8821 = vmatprep.subr.bf16.mxu0 %v7623
  %8822 = vmatpush1.bf16.msra.mxu0 %v7622
  %8823 = vmatprep.subr.bf16.mxu0 %v7635
  %8824 = vmatpush1.bf16.msra.mxu0 %v7634
  %8825 = vmatprep.subr.bf16.mxu0 %v7647
  %8826 = vmatpush1.bf16.msra.mxu0 %v7646
  %8827 = vmatprep.subr.bf16.mxu0 %v7659
  %8828 = vmatpush1.bf16.msra.mxu0 %v7658
  %8829 = vmatprep.subr.bf16.mxu0 %v7671
  %8830 = vmatpush1.bf16.msra.mxu0 %v7670
  %8831 = vmatprep.subr.bf16.mxu0 %v7683
  %8832 = vmatpush1.bf16.msra.mxu0 %v7682
  %8833 = vmatprep.subr.bf16.mxu0 %v7695
  %8834 = vmatpush1.bf16.msra.mxu0 %v7694
  %8835 = vmatprep.subr.bf16.mxu0 %v7707
  %8836 = vmatpush1.bf16.msra.mxu0 %v7706
  %8837 = vmatprep.subr.bf16.mxu0 %v7719
  %8838 = vmatpush1.bf16.msra.mxu0 %v7718
  %8839 = vmatprep.subr.bf16.mxu0 %v7731
  %8840 = vmatpush1.bf16.msra.mxu0 %v7730
  %8841 = vmatprep.mubr.bf16.mxu0 %v3899
  %8842 = vmatmul.mubr.bf16.gmra.mrb[0].mxu0 %v3898
  %v8843 = vpop.f32.mrb[0].mxu0
  %v8844 = vadd.f32 %v8801, %v8843
  %v8845 = vpop.f32.mrb[0].mxu0
  %v8846 = vadd.f32 %v8803, %v8845
  %v8847 = vpop.f32.mrb[0].mxu0
  %v8848 = vadd.f32 %v8805, %v8847
  %v8849 = vpop.f32.mrb[0].mxu0
  %v8850 = vadd.f32 %v8807, %v8849
  %8851 = vdwg.mxu0
  %8852 = vmatprep.subr.bf16.mxu0 %v6977
  %8853 = vmatpush1.bf16.msra.mxu0 %v6976
  %8854 = vmatprep.subr.bf16.mxu0 %v6989
  %8855 = vmatpush1.bf16.msra.mxu0 %v6988
  %8856 = vmatprep.subr.bf16.mxu0 %v7001
  %8857 = vmatpush1.bf16.msra.mxu0 %v7000
  %8858 = vmatprep.subr.bf16.mxu0 %v7013
  %8859 = vmatpush1.bf16.msra.mxu0 %v7012
  %8860 = vmatprep.subr.bf16.mxu0 %v7025
  %8861 = vmatpush1.bf16.msra.mxu0 %v7024
  %8862 = vmatprep.subr.bf16.mxu0 %v7037
  %8863 = vmatpush1.bf16.msra.mxu0 %v7036
  %8864 = vmatprep.subr.bf16.mxu0 %v7049
  %8865 = vmatpush1.bf16.msra.mxu0 %v7048
  %8866 = vmatprep.subr.bf16.mxu0 %v7061
  %8867 = vmatpush1.bf16.msra.mxu0 %v7060
  %8868 = vmatprep.subr.bf16.mxu0 %v7073
  %8869 = vmatpush1.bf16.msra.mxu0 %v7072
  %8870 = vmatprep.subr.bf16.mxu0 %v7085
  %8871 = vmatpush1.bf16.msra.mxu0 %v7084
  %8872 = vmatprep.subr.bf16.mxu0 %v7097
  %8873 = vmatpush1.bf16.msra.mxu0 %v7096
  %8874 = vmatprep.subr.bf16.mxu0 %v7109
  %8875 = vmatpush1.bf16.msra.mxu0 %v7108
  %8876 = vmatprep.subr.bf16.mxu0 %v7121
  %8877 = vmatpush1.bf16.msra.mxu0 %v7120
  %8878 = vmatprep.subr.bf16.mxu0 %v7133
  %8879 = vmatpush1.bf16.msra.mxu0 %v7132
  %8880 = vmatprep.subr.bf16.mxu0 %v7145
  %8881 = vmatpush1.bf16.msra.mxu0 %v7144
  %8882 = vmatprep.subr.bf16.mxu0 %v7157
  %8883 = vmatpush1.bf16.msra.mxu0 %v7156
  %8884 = vmatprep.mubr.bf16.mxu0 %v3893
  %8885 = vmatmul.mubr.bf16.gmra.mrb[0].mxu0 %v3892
  %v8886 = vpop.f32.mrb[0].mxu0
  %v8887 = vadd.f32 0.0, %v8886
  %v8888 = vpop.f32.mrb[0].mxu0
  %v8889 = vadd.f32 0.0, %v8888
  %v8890 = vpop.f32.mrb[0].mxu0
  %v8891 = vadd.f32 0.0, %v8890
  %v8892 = vpop.f32.mrb[0].mxu0
  %v8893 = vadd.f32 0.0, %v8892
  %8894 = vdwg.mxu0
  %8895 = vmatprep.subr.bf16.mxu0 %v7169
  %8896 = vmatpush1.bf16.msra.mxu0 %v7168
  %8897 = vmatprep.subr.bf16.mxu0 %v7181
  %8898 = vmatpush1.bf16.msra.mxu0 %v7180
  %8899 = vmatprep.subr.bf16.mxu0 %v7193
  %8900 = vmatpush1.bf16.msra.mxu0 %v7192
  %8901 = vmatprep.subr.bf16.mxu0 %v7205
  %8902 = vmatpush1.bf16.msra.mxu0 %v7204
  %8903 = vmatprep.subr.bf16.mxu0 %v7217
  %8904 = vmatpush1.bf16.msra.mxu0 %v7216
  %8905 = vmatprep.subr.bf16.mxu0 %v7229
  %8906 = vmatpush1.bf16.msra.mxu0 %v7228
  %8907 = vmatprep.subr.bf16.mxu0 %v7241
  %8908 = vmatpush1.bf16.msra.mxu0 %v7240
  %8909 = vmatprep.subr.bf16.mxu0 %v7253
  %8910 = vmatpush1.bf16.msra.mxu0 %v7252
  %8911 = vmatprep.subr.bf16.mxu0 %v7265
  %8912 = vmatpush1.bf16.msra.mxu0 %v7264
  %8913 = vmatprep.subr.bf16.mxu0 %v7277
  %8914 = vmatpush1.bf16.msra.mxu0 %v7276
  %8915 = vmatprep.subr.bf16.mxu0 %v7289
  %8916 = vmatpush1.bf16.msra.mxu0 %v7288
  %8917 = vmatprep.subr.bf16.mxu0 %v7301
  %8918 = vmatpush1.bf16.msra.mxu0 %v7300
  %8919 = vmatprep.subr.bf16.mxu0 %v7313
  %8920 = vmatpush1.bf16.msra.mxu0 %v7312
  %8921 = vmatprep.subr.bf16.mxu0 %v7325
  %8922 = vmatpush1.bf16.msra.mxu0 %v7324
  %8923 = vmatprep.subr.bf16.mxu0 %v7337
  %8924 = vmatpush1.bf16.msra.mxu0 %v7336
  %8925 = vmatprep.subr.bf16.mxu0 %v7349
  %8926 = vmatpush1.bf16.msra.mxu0 %v7348
  %8927 = vmatprep.mubr.bf16.mxu0 %v3895
  %8928 = vmatmul.mubr.bf16.gmra.mrb[0].mxu0 %v3894
  %v8929 = vpop.f32.mrb[0].mxu0
  %v8930 = vadd.f32 %v8887, %v8929
  %v8931 = vpop.f32.mrb[0].mxu0
  %v8932 = vadd.f32 %v8889, %v8931
  %v8933 = vpop.f32.mrb[0].mxu0
  %v8934 = vadd.f32 %v8891, %v8933
  %v8935 = vpop.f32.mrb[0].mxu0
  %v8936 = vadd.f32 %v8893, %v8935
  %8937 = vdwg.mxu0
  %8938 = vmatprep.subr.bf16.mxu0 %v7361
  %8939 = vmatpush1.bf16.msra.mxu0 %v7360
  %8940 = vmatprep.subr.bf16.mxu0 %v7373
  %8941 = vmatpush1.bf16.msra.mxu0 %v7372
  %8942 = vmatprep.subr.bf16.mxu0 %v7385
  %8943 = vmatpush1.bf16.msra.mxu0 %v7384
  %8944 = vmatprep.subr.bf16.mxu0 %v7397
  %8945 = vmatpush1.bf16.msra.mxu0 %v7396
  %8946 = vmatprep.subr.bf16.mxu0 %v7409
  %8947 = vmatpush1.bf16.msra.mxu0 %v7408
  %8948 = vmatprep.subr.bf16.mxu0 %v7421
  %8949 = vmatpush1.bf16.msra.mxu0 %v7420
  %8950 = vmatprep.subr.bf16.mxu0 %v7433
  %8951 = vmatpush1.bf16.msra.mxu0 %v7432
  %8952 = vmatprep.subr.bf16.mxu0 %v7445
  %8953 = vmatpush1.bf16.msra.mxu0 %v7444
  %8954 = vmatprep.subr.bf16.mxu0 %v7457
  %8955 = vmatpush1.bf16.msra.mxu0 %v7456
  %8956 = vmatprep.subr.bf16.mxu0 %v7469
  %8957 = vmatpush1.bf16.msra.mxu0 %v7468
  %8958 = vmatprep.subr.bf16.mxu0 %v7481
  %8959 = vmatpush1.bf16.msra.mxu0 %v7480
  %8960 = vmatprep.subr.bf16.mxu0 %v7493
  %8961 = vmatpush1.bf16.msra.mxu0 %v7492
  %8962 = vmatprep.subr.bf16.mxu0 %v7505
  %8963 = vmatpush1.bf16.msra.mxu0 %v7504
  %8964 = vmatprep.subr.bf16.mxu0 %v7517
  %8965 = vmatpush1.bf16.msra.mxu0 %v7516
  %8966 = vmatprep.subr.bf16.mxu0 %v7529
  %8967 = vmatpush1.bf16.msra.mxu0 %v7528
  %8968 = vmatprep.subr.bf16.mxu0 %v7541
  %8969 = vmatpush1.bf16.msra.mxu0 %v7540
  %8970 = vmatprep.mubr.bf16.mxu0 %v3897
  %8971 = vmatmul.mubr.bf16.gmra.mrb[0].mxu0 %v3896
  %v8972 = vpop.f32.mrb[0].mxu0
  %v8973 = vadd.f32 %v8930, %v8972
  %v8974 = vpop.f32.mrb[0].mxu0
  %v8975 = vadd.f32 %v8932, %v8974
  %v8976 = vpop.f32.mrb[0].mxu0
  %v8977 = vadd.f32 %v8934, %v8976
  %v8978 = vpop.f32.mrb[0].mxu0
  %v8979 = vadd.f32 %v8936, %v8978
  %8980 = vdwg.mxu0
  %8981 = vmatprep.subr.bf16.mxu0 %v7553
  %8982 = vmatpush1.bf16.msra.mxu0 %v7552
  %8983 = vmatprep.subr.bf16.mxu0 %v7565
  %8984 = vmatpush1.bf16.msra.mxu0 %v7564
  %8985 = vmatprep.subr.bf16.mxu0 %v7577
  %8986 = vmatpush1.bf16.msra.mxu0 %v7576
  %8987 = vmatprep.subr.bf16.mxu0 %v7589
  %8988 = vmatpush1.bf16.msra.mxu0 %v7588
  %8989 = vmatprep.subr.bf16.mxu0 %v7601
  %8990 = vmatpush1.bf16.msra.mxu0 %v7600
  %8991 = vmatprep.subr.bf16.mxu0 %v7613
  %8992 = vmatpush1.bf16.msra.mxu0 %v7612
  %8993 = vmatprep.subr.bf16.mxu0 %v7625
  %8994 = vmatpush1.bf16.msra.mxu0 %v7624
  %8995 = vmatprep.subr.bf16.mxu0 %v7637
  %8996 = vmatpush1.bf16.msra.mxu0 %v7636
  %8997 = vmatprep.subr.bf16.mxu0 %v7649
  %8998 = vmatpush1.bf16.msra.mxu0 %v7648
  %8999 = vmatprep.subr.bf16.mxu0 %v7661
  %9000 = vmatpush1.bf16.msra.mxu0 %v7660
  %9001 = vmatprep.subr.bf16.mxu0 %v7673
  %9002 = vmatpush1.bf16.msra.mxu0 %v7672
  %9003 = vmatprep.subr.bf16.mxu0 %v7685
  %9004 = vmatpush1.bf16.msra.mxu0 %v7684
  %9005 = vmatprep.subr.bf16.mxu0 %v7697
  %9006 = vmatpush1.bf16.msra.mxu0 %v7696
  %9007 = vmatprep.subr.bf16.mxu0 %v7709
  %9008 = vmatpush1.bf16.msra.mxu0 %v7708
  %9009 = vmatprep.subr.bf16.mxu0 %v7721
  %9010 = vmatpush1.bf16.msra.mxu0 %v7720
  %9011 = vmatprep.subr.bf16.mxu0 %v7733
  %9012 = vmatpush1.bf16.msra.mxu0 %v7732
  %9013 = vmatprep.mubr.bf16.mxu0 %v3899
  %9014 = vmatmul.mubr.bf16.gmra.mrb[0].mxu0 %v3898
  %v9015 = vpop.f32.mrb[0].mxu0
  %v9016 = vadd.f32 %v8973, %v9015
  %v9017 = vpop.f32.mrb[0].mxu0
  %v9018 = vadd.f32 %v8975, %v9017
  %v9019 = vpop.f32.mrb[0].mxu0
  %v9020 = vadd.f32 %v8977, %v9019
  %v9021 = vpop.f32.mrb[0].mxu0
  %v9022 = vadd.f32 %v8979, %v9021
  %9023 = vdwg.mxu0
  %9024 = vmatprep.subr.bf16.mxu0 %v6979
  %9025 = vmatpush1.bf16.msra.mxu0 %v6978
  %9026 = vmatprep.subr.bf16.mxu0 %v6991
  %9027 = vmatpush1.bf16.msra.mxu0 %v6990
  %9028 = vmatprep.subr.bf16.mxu0 %v7003
  %9029 = vmatpush1.bf16.msra.mxu0 %v7002
  %9030 = vmatprep.subr.bf16.mxu0 %v7015
  %9031 = vmatpush1.bf16.msra.mxu0 %v7014
  %9032 = vmatprep.subr.bf16.mxu0 %v7027
  %9033 = vmatpush1.bf16.msra.mxu0 %v7026
  %9034 = vmatprep.subr.bf16.mxu0 %v7039
  %9035 = vmatpush1.bf16.msra.mxu0 %v7038
  %9036 = vmatprep.subr.bf16.mxu0 %v7051
  %9037 = vmatpush1.bf16.msra.mxu0 %v7050
  %9038 = vmatprep.subr.bf16.mxu0 %v7063
  %9039 = vmatpush1.bf16.msra.mxu0 %v7062
  %9040 = vmatprep.subr.bf16.mxu0 %v7075
  %9041 = vmatpush1.bf16.msra.mxu0 %v7074
  %9042 = vmatprep.subr.bf16.mxu0 %v7087
  %9043 = vmatpush1.bf16.msra.mxu0 %v7086
  %9044 = vmatprep.subr.bf16.mxu0 %v7099
  %9045 = vmatpush1.bf16.msra.mxu0 %v7098
  %9046 = vmatprep.subr.bf16.mxu0 %v7111
  %9047 = vmatpush1.bf16.msra.mxu0 %v7110
  %9048 = vmatprep.subr.bf16.mxu0 %v7123
  %9049 = vmatpush1.bf16.msra.mxu0 %v7122
  %9050 = vmatprep.subr.bf16.mxu0 %v7135
  %9051 = vmatpush1.bf16.msra.mxu0 %v7134
  %9052 = vmatprep.subr.bf16.mxu0 %v7147
  %9053 = vmatpush1.bf16.msra.mxu0 %v7146
  %9054 = vmatprep.subr.bf16.mxu0 %v7159
  %9055 = vmatpush1.bf16.msra.mxu0 %v7158
  %9056 = vmatprep.mubr.bf16.mxu0 %v3893
  %9057 = vmatmul.mubr.bf16.gmra.mrb[0].mxu0 %v3892
  %v9058 = vpop.f32.mrb[0].mxu0
  %v9059 = vadd.f32 0.0, %v9058
  %v9060 = vpop.f32.mrb[0].mxu0
  %v9061 = vadd.f32 0.0, %v9060
  %v9062 = vpop.f32.mrb[0].mxu0
  %v9063 = vadd.f32 0.0, %v9062
  %v9064 = vpop.f32.mrb[0].mxu0
  %v9065 = vadd.f32 0.0, %v9064
  %9066 = vdwg.mxu0
  %9067 = vmatprep.subr.bf16.mxu0 %v7171
  %9068 = vmatpush1.bf16.msra.mxu0 %v7170
  %9069 = vmatprep.subr.bf16.mxu0 %v7183
  %9070 = vmatpush1.bf16.msra.mxu0 %v7182
  %9071 = vmatprep.subr.bf16.mxu0 %v7195
  %9072 = vmatpush1.bf16.msra.mxu0 %v7194
  %9073 = vmatprep.subr.bf16.mxu0 %v7207
  %9074 = vmatpush1.bf16.msra.mxu0 %v7206
  %9075 = vmatprep.subr.bf16.mxu0 %v7219
  %9076 = vmatpush1.bf16.msra.mxu0 %v7218
  %9077 = vmatprep.subr.bf16.mxu0 %v7231
  %9078 = vmatpush1.bf16.msra.mxu0 %v7230
  %9079 = vmatprep.subr.bf16.mxu0 %v7243
  %9080 = vmatpush1.bf16.msra.mxu0 %v7242
  %9081 = vmatprep.subr.bf16.mxu0 %v7255
  %9082 = vmatpush1.bf16.msra.mxu0 %v7254
  %9083 = vmatprep.subr.bf16.mxu0 %v7267
  %9084 = vmatpush1.bf16.msra.mxu0 %v7266
  %9085 = vmatprep.subr.bf16.mxu0 %v7279
  %9086 = vmatpush1.bf16.msra.mxu0 %v7278
  %9087 = vmatprep.subr.bf16.mxu0 %v7291
  %9088 = vmatpush1.bf16.msra.mxu0 %v7290
  %9089 = vmatprep.subr.bf16.mxu0 %v7303
  %9090 = vmatpush1.bf16.msra.mxu0 %v7302
  %9091 = vmatprep.subr.bf16.mxu0 %v7315
  %9092 = vmatpush1.bf16.msra.mxu0 %v7314
  %9093 = vmatprep.subr.bf16.mxu0 %v7327
  %9094 = vmatpush1.bf16.msra.mxu0 %v7326
  %9095 = vmatprep.subr.bf16.mxu0 %v7339
  %9096 = vmatpush1.bf16.msra.mxu0 %v7338
  %9097 = vmatprep.subr.bf16.mxu0 %v7351
  %9098 = vmatpush1.bf16.msra.mxu0 %v7350
  %9099 = vmatprep.mubr.bf16.mxu0 %v3895
  %9100 = vmatmul.mubr.bf16.gmra.mrb[0].mxu0 %v3894
  %v9101 = vpop.f32.mrb[0].mxu0
  %v9102 = vadd.f32 %v9059, %v9101
  %v9103 = vpop.f32.mrb[0].mxu0
  %v9104 = vadd.f32 %v9061, %v9103
  %v9105 = vpop.f32.mrb[0].mxu0
  %v9106 = vadd.f32 %v9063, %v9105
  %v9107 = vpop.f32.mrb[0].mxu0
  %v9108 = vadd.f32 %v9065, %v9107
  %9109 = vdwg.mxu0
  %9110 = vmatprep.subr.bf16.mxu0 %v7363
  %9111 = vmatpush1.bf16.msra.mxu0 %v7362
  %9112 = vmatprep.subr.bf16.mxu0 %v7375
  %9113 = vmatpush1.bf16.msra.mxu0 %v7374
  %9114 = vmatprep.subr.bf16.mxu0 %v7387
  %9115 = vmatpush1.bf16.msra.mxu0 %v7386
  %9116 = vmatprep.subr.bf16.mxu0 %v7399
  %9117 = vmatpush1.bf16.msra.mxu0 %v7398
  %9118 = vmatprep.subr.bf16.mxu0 %v7411
  %9119 = vmatpush1.bf16.msra.mxu0 %v7410
  %9120 = vmatprep.subr.bf16.mxu0 %v7423
  %9121 = vmatpush1.bf16.msra.mxu0 %v7422
  %9122 = vmatprep.subr.bf16.mxu0 %v7435
  %9123 = vmatpush1.bf16.msra.mxu0 %v7434
  %9124 = vmatprep.subr.bf16.mxu0 %v7447
  %9125 = vmatpush1.bf16.msra.mxu0 %v7446
  %9126 = vmatprep.subr.bf16.mxu0 %v7459
  %9127 = vmatpush1.bf16.msra.mxu0 %v7458
  %9128 = vmatprep.subr.bf16.mxu0 %v7471
  %9129 = vmatpush1.bf16.msra.mxu0 %v7470
  %9130 = vmatprep.subr.bf16.mxu0 %v7483
  %9131 = vmatpush1.bf16.msra.mxu0 %v7482
  %9132 = vmatprep.subr.bf16.mxu0 %v7495
  %9133 = vmatpush1.bf16.msra.mxu0 %v7494
  %9134 = vmatprep.subr.bf16.mxu0 %v7507
  %9135 = vmatpush1.bf16.msra.mxu0 %v7506
  %9136 = vmatprep.subr.bf16.mxu0 %v7519
  %9137 = vmatpush1.bf16.msra.mxu0 %v7518
  %9138 = vmatprep.subr.bf16.mxu0 %v7531
  %9139 = vmatpush1.bf16.msra.mxu0 %v7530
  %9140 = vmatprep.subr.bf16.mxu0 %v7543
  %9141 = vmatpush1.bf16.msra.mxu0 %v7542
  %9142 = vmatprep.mubr.bf16.mxu0 %v3897
  %9143 = vmatmul.mubr.bf16.gmra.mrb[0].mxu0 %v3896
  %v9144 = vpop.f32.mrb[0].mxu0
  %v9145 = vadd.f32 %v9102, %v9144
  %v9146 = vpop.f32.mrb[0].mxu0
  %v9147 = vadd.f32 %v9104, %v9146
  %v9148 = vpop.f32.mrb[0].mxu0
  %v9149 = vadd.f32 %v9106, %v9148
  %v9150 = vpop.f32.mrb[0].mxu0
  %v9151 = vadd.f32 %v9108, %v9150
  %9152 = vdwg.mxu0
  %9153 = vmatprep.subr.bf16.mxu0 %v7555
  %9154 = vmatpush1.bf16.msra.mxu0 %v7554
  %9155 = vmatprep.subr.bf16.mxu0 %v7567
  %9156 = vmatpush1.bf16.msra.mxu0 %v7566
  %9157 = vmatprep.subr.bf16.mxu0 %v7579
  %9158 = vmatpush1.bf16.msra.mxu0 %v7578
  %9159 = vmatprep.subr.bf16.mxu0 %v7591
  %9160 = vmatpush1.bf16.msra.mxu0 %v7590
  %9161 = vmatprep.subr.bf16.mxu0 %v7603
  %9162 = vmatpush1.bf16.msra.mxu0 %v7602
  %9163 = vmatprep.subr.bf16.mxu0 %v7615
  %9164 = vmatpush1.bf16.msra.mxu0 %v7614
  %9165 = vmatprep.subr.bf16.mxu0 %v7627
  %9166 = vmatpush1.bf16.msra.mxu0 %v7626
  %9167 = vmatprep.subr.bf16.mxu0 %v7639
  %9168 = vmatpush1.bf16.msra.mxu0 %v7638
  %9169 = vmatprep.subr.bf16.mxu0 %v7651
  %9170 = vmatpush1.bf16.msra.mxu0 %v7650
  %9171 = vmatprep.subr.bf16.mxu0 %v7663
  %9172 = vmatpush1.bf16.msra.mxu0 %v7662
  %9173 = vmatprep.subr.bf16.mxu0 %v7675
  %9174 = vmatpush1.bf16.msra.mxu0 %v7674
  %9175 = vmatprep.subr.bf16.mxu0 %v7687
  %9176 = vmatpush1.bf16.msra.mxu0 %v7686
  %9177 = vmatprep.subr.bf16.mxu0 %v7699
  %9178 = vmatpush1.bf16.msra.mxu0 %v7698
  %9179 = vmatprep.subr.bf16.mxu0 %v7711
  %9180 = vmatpush1.bf16.msra.mxu0 %v7710
  %9181 = vmatprep.subr.bf16.mxu0 %v7723
  %9182 = vmatpush1.bf16.msra.mxu0 %v7722
  %9183 = vmatprep.subr.bf16.mxu0 %v7735
  %9184 = vmatpush1.bf16.msra.mxu0 %v7734
  %9185 = vmatprep.mubr.bf16.mxu0 %v3899
  %9186 = vmatmul.mubr.bf16.gmra.mrb[0].mxu0 %v3898
  %v9187 = vpop.f32.mrb[0].mxu0
  %v9188 = vadd.f32 %v9145, %v9187
  %v9189 = vpop.f32.mrb[0].mxu0
  %v9190 = vadd.f32 %v9147, %v9189
  %v9191 = vpop.f32.mrb[0].mxu0
  %v9192 = vadd.f32 %v9149, %v9191
  %v9193 = vpop.f32.mrb[0].mxu0
  %v9194 = vadd.f32 %v9151, %v9193
  %9195 = vdwg.mxu0
  %9196 = vmatprep.subr.bf16.mxu0 %v6981
  %9197 = vmatpush1.bf16.msra.mxu0 %v6980
  %9198 = vmatprep.subr.bf16.mxu0 %v6993
  %9199 = vmatpush1.bf16.msra.mxu0 %v6992
  %9200 = vmatprep.subr.bf16.mxu0 %v7005
  %9201 = vmatpush1.bf16.msra.mxu0 %v7004
  %9202 = vmatprep.subr.bf16.mxu0 %v7017
  %9203 = vmatpush1.bf16.msra.mxu0 %v7016
  %9204 = vmatprep.subr.bf16.mxu0 %v7029
  %9205 = vmatpush1.bf16.msra.mxu0 %v7028
  %9206 = vmatprep.subr.bf16.mxu0 %v7041
  %9207 = vmatpush1.bf16.msra.mxu0 %v7040
  %9208 = vmatprep.subr.bf16.mxu0 %v7053
  %9209 = vmatpush1.bf16.msra.mxu0 %v7052
  %9210 = vmatprep.subr.bf16.mxu0 %v7065
  %9211 = vmatpush1.bf16.msra.mxu0 %v7064
  %9212 = vmatprep.subr.bf16.mxu0 %v7077
  %9213 = vmatpush1.bf16.msra.mxu0 %v7076
  %9214 = vmatprep.subr.bf16.mxu0 %v7089
  %9215 = vmatpush1.bf16.msra.mxu0 %v7088
  %9216 = vmatprep.subr.bf16.mxu0 %v7101
  %9217 = vmatpush1.bf16.msra.mxu0 %v7100
  %9218 = vmatprep.subr.bf16.mxu0 %v7113
  %9219 = vmatpush1.bf16.msra.mxu0 %v7112
  %9220 = vmatprep.subr.bf16.mxu0 %v7125
  %9221 = vmatpush1.bf16.msra.mxu0 %v7124
  %9222 = vmatprep.subr.bf16.mxu0 %v7137
  %9223 = vmatpush1.bf16.msra.mxu0 %v7136
  %9224 = vmatprep.subr.bf16.mxu0 %v7149
  %9225 = vmatpush1.bf16.msra.mxu0 %v7148
  %9226 = vmatprep.subr.bf16.mxu0 %v7161
  %9227 = vmatpush1.bf16.msra.mxu0 %v7160
  %9228 = vmatprep.mubr.bf16.mxu0 %v3893
  %9229 = vmatmul.mubr.bf16.gmra.mrb[0].mxu0 %v3892
  %v9230 = vpop.f32.mrb[0].mxu0
  %v9231 = vadd.f32 0.0, %v9230
  %v9232 = vpop.f32.mrb[0].mxu0
  %v9233 = vadd.f32 0.0, %v9232
  %v9234 = vpop.f32.mrb[0].mxu0
  %v9235 = vadd.f32 0.0, %v9234
  %v9236 = vpop.f32.mrb[0].mxu0
  %v9237 = vadd.f32 0.0, %v9236
  %9238 = vdwg.mxu0
  %9239 = vmatprep.subr.bf16.mxu0 %v7173
  %9240 = vmatpush1.bf16.msra.mxu0 %v7172
  %9241 = vmatprep.subr.bf16.mxu0 %v7185
  %9242 = vmatpush1.bf16.msra.mxu0 %v7184
  %9243 = vmatprep.subr.bf16.mxu0 %v7197
  %9244 = vmatpush1.bf16.msra.mxu0 %v7196
  %9245 = vmatprep.subr.bf16.mxu0 %v7209
  %9246 = vmatpush1.bf16.msra.mxu0 %v7208
  %9247 = vmatprep.subr.bf16.mxu0 %v7221
  %9248 = vmatpush1.bf16.msra.mxu0 %v7220
  %9249 = vmatprep.subr.bf16.mxu0 %v7233
  %9250 = vmatpush1.bf16.msra.mxu0 %v7232
  %9251 = vmatprep.subr.bf16.mxu0 %v7245
  %9252 = vmatpush1.bf16.msra.mxu0 %v7244
  %9253 = vmatprep.subr.bf16.mxu0 %v7257
  %9254 = vmatpush1.bf16.msra.mxu0 %v7256
  %9255 = vmatprep.subr.bf16.mxu0 %v7269
  %9256 = vmatpush1.bf16.msra.mxu0 %v7268
  %9257 = vmatprep.subr.bf16.mxu0 %v7281
  %9258 = vmatpush1.bf16.msra.mxu0 %v7280
  %9259 = vmatprep.subr.bf16.mxu0 %v7293
  %9260 = vmatpush1.bf16.msra.mxu0 %v7292
  %9261 = vmatprep.subr.bf16.mxu0 %v7305
  %9262 = vmatpush1.bf16.msra.mxu0 %v7304
  %9263 = vmatprep.subr.bf16.mxu0 %v7317
  %9264 = vmatpush1.bf16.msra.mxu0 %v7316
  %9265 = vmatprep.subr.bf16.mxu0 %v7329
  %9266 = vmatpush1.bf16.msra.mxu0 %v7328
  %9267 = vmatprep.subr.bf16.mxu0 %v7341
  %9268 = vmatpush1.bf16.msra.mxu0 %v7340
  %9269 = vmatprep.subr.bf16.mxu0 %v7353
  %9270 = vmatpush1.bf16.msra.mxu0 %v7352
  %9271 = vmatprep.mubr.bf16.mxu0 %v3895
  %9272 = vmatmul.mubr.bf16.gmra.mrb[0].mxu0 %v3894
  %v9273 = vpop.f32.mrb[0].mxu0
  %v9274 = vadd.f32 %v9231, %v9273
  %v9275 = vpop.f32.mrb[0].mxu0
  %v9276 = vadd.f32 %v9233, %v9275
  %v9277 = vpop.f32.mrb[0].mxu0
  %v9278 = vadd.f32 %v9235, %v9277
  %v9279 = vpop.f32.mrb[0].mxu0
  %v9280 = vadd.f32 %v9237, %v9279
  %9281 = vdwg.mxu0
  %9282 = vmatprep.subr.bf16.mxu0 %v7365
  %9283 = vmatpush1.bf16.msra.mxu0 %v7364
  %9284 = vmatprep.subr.bf16.mxu0 %v7377
  %9285 = vmatpush1.bf16.msra.mxu0 %v7376
  %9286 = vmatprep.subr.bf16.mxu0 %v7389
  %9287 = vmatpush1.bf16.msra.mxu0 %v7388
  %9288 = vmatprep.subr.bf16.mxu0 %v7401
  %9289 = vmatpush1.bf16.msra.mxu0 %v7400
  %9290 = vmatprep.subr.bf16.mxu0 %v7413
  %9291 = vmatpush1.bf16.msra.mxu0 %v7412
  %9292 = vmatprep.subr.bf16.mxu0 %v7425
  %9293 = vmatpush1.bf16.msra.mxu0 %v7424
  %9294 = vmatprep.subr.bf16.mxu0 %v7437
  %9295 = vmatpush1.bf16.msra.mxu0 %v7436
  %9296 = vmatprep.subr.bf16.mxu0 %v7449
  %9297 = vmatpush1.bf16.msra.mxu0 %v7448
  %9298 = vmatprep.subr.bf16.mxu0 %v7461
  %9299 = vmatpush1.bf16.msra.mxu0 %v7460
  %9300 = vmatprep.subr.bf16.mxu0 %v7473
  %9301 = vmatpush1.bf16.msra.mxu0 %v7472
  %9302 = vmatprep.subr.bf16.mxu0 %v7485
  %9303 = vmatpush1.bf16.msra.mxu0 %v7484
  %9304 = vmatprep.subr.bf16.mxu0 %v7497
  %9305 = vmatpush1.bf16.msra.mxu0 %v7496
  %9306 = vmatprep.subr.bf16.mxu0 %v7509
  %9307 = vmatpush1.bf16.msra.mxu0 %v7508
  %9308 = vmatprep.subr.bf16.mxu0 %v7521
  %9309 = vmatpush1.bf16.msra.mxu0 %v7520
  %9310 = vmatprep.subr.bf16.mxu0 %v7533
  %9311 = vmatpush1.bf16.msra.mxu0 %v7532
  %9312 = vmatprep.subr.bf16.mxu0 %v7545
  %9313 = vmatpush1.bf16.msra.mxu0 %v7544
  %9314 = vmatprep.mubr.bf16.mxu0 %v3897
  %9315 = vmatmul.mubr.bf16.gmra.mrb[0].mxu0 %v3896
  %v9316 = vpop.f32.mrb[0].mxu0
  %v9317 = vadd.f32 %v9274, %v9316
  %v9318 = vpop.f32.mrb[0].mxu0
  %v9319 = vadd.f32 %v9276, %v9318
  %v9320 = vpop.f32.mrb[0].mxu0
  %v9321 = vadd.f32 %v9278, %v9320
  %v9322 = vpop.f32.mrb[0].mxu0
  %v9323 = vadd.f32 %v9280, %v9322
  %9324 = vdwg.mxu0
  %9325 = vmatprep.subr.bf16.mxu0 %v7557
  %9326 = vmatpush1.bf16.msra.mxu0 %v7556
  %9327 = vmatprep.subr.bf16.mxu0 %v7569
  %9328 = vmatpush1.bf16.msra.mxu0 %v7568
  %9329 = vmatprep.subr.bf16.mxu0 %v7581
  %9330 = vmatpush1.bf16.msra.mxu0 %v7580
  %9331 = vmatprep.subr.bf16.mxu0 %v7593
  %9332 = vmatpush1.bf16.msra.mxu0 %v7592
  %9333 = vmatprep.subr.bf16.mxu0 %v7605
  %9334 = vmatpush1.bf16.msra.mxu0 %v7604
  %9335 = vmatprep.subr.bf16.mxu0 %v7617
  %9336 = vmatpush1.bf16.msra.mxu0 %v7616
  %9337 = vmatprep.subr.bf16.mxu0 %v7629
  %9338 = vmatpush1.bf16.msra.mxu0 %v7628
  %9339 = vmatprep.subr.bf16.mxu0 %v7641
  %9340 = vmatpush1.bf16.msra.mxu0 %v7640
  %9341 = vmatprep.subr.bf16.mxu0 %v7653
  %9342 = vmatpush1.bf16.msra.mxu0 %v7652
  %9343 = vmatprep.subr.bf16.mxu0 %v7665
  %9344 = vmatpush1.bf16.msra.mxu0 %v7664
  %9345 = vmatprep.subr.bf16.mxu0 %v7677
  %9346 = vmatpush1.bf16.msra.mxu0 %v7676
  %9347 = vmatprep.subr.bf16.mxu0 %v7689
  %9348 = vmatpush1.bf16.msra.mxu0 %v7688
  %9349 = vmatprep.subr.bf16.mxu0 %v7701
  %9350 = vmatpush1.bf16.msra.mxu0 %v7700
  %9351 = vmatprep.subr.bf16.mxu0 %v7713
  %9352 = vmatpush1.bf16.msra.mxu0 %v7712
  %9353 = vmatprep.subr.bf16.mxu0 %v7725
  %9354 = vmatpush1.bf16.msra.mxu0 %v7724
  %9355 = vmatprep.subr.bf16.mxu0 %v7737
  %9356 = vmatpush1.bf16.msra.mxu0 %v7736
  %9357 = vmatprep.mubr.bf16.mxu0 %v3899
  %9358 = vmatmul.mubr.bf16.gmra.mrb[0].mxu0 %v3898
  %v9359 = vpop.f32.mrb[0].mxu0
  %v9360 = vadd.f32 %v9317, %v9359
  %v9361 = vpop.f32.mrb[0].mxu0
  %v9362 = vadd.f32 %v9319, %v9361
  %v9363 = vpop.f32.mrb[0].mxu0
  %v9364 = vadd.f32 %v9321, %v9363
  %v9365 = vpop.f32.mrb[0].mxu0
  %v9366 = vadd.f32 %v9323, %v9365
  %9367 = vdwg.mxu0
  %9368 = vmatprep.subr.bf16.mxu0 %v6983
  %9369 = vmatpush1.bf16.msra.mxu0 %v6982
  %9370 = vmatprep.subr.bf16.mxu0 %v6995
  %9371 = vmatpush1.bf16.msra.mxu0 %v6994
  %9372 = vmatprep.subr.bf16.mxu0 %v7007
  %9373 = vmatpush1.bf16.msra.mxu0 %v7006
  %9374 = vmatprep.subr.bf16.mxu0 %v7019
  %9375 = vmatpush1.bf16.msra.mxu0 %v7018
  %9376 = vmatprep.subr.bf16.mxu0 %v7031
  %9377 = vmatpush1.bf16.msra.mxu0 %v7030
  %9378 = vmatprep.subr.bf16.mxu0 %v7043
  %9379 = vmatpush1.bf16.msra.mxu0 %v7042
  %9380 = vmatprep.subr.bf16.mxu0 %v7055
  %9381 = vmatpush1.bf16.msra.mxu0 %v7054
  %9382 = vmatprep.subr.bf16.mxu0 %v7067
  %9383 = vmatpush1.bf16.msra.mxu0 %v7066
  %9384 = vmatprep.subr.bf16.mxu0 %v7079
  %9385 = vmatpush1.bf16.msra.mxu0 %v7078
  %9386 = vmatprep.subr.bf16.mxu0 %v7091
  %9387 = vmatpush1.bf16.msra.mxu0 %v7090
  %9388 = vmatprep.subr.bf16.mxu0 %v7103
  %9389 = vmatpush1.bf16.msra.mxu0 %v7102
  %9390 = vmatprep.subr.bf16.mxu0 %v7115
  %9391 = vmatpush1.bf16.msra.mxu0 %v7114
  %9392 = vmatprep.subr.bf16.mxu0 %v7127
  %9393 = vmatpush1.bf16.msra.mxu0 %v7126
  %9394 = vmatprep.subr.bf16.mxu0 %v7139
  %9395 = vmatpush1.bf16.msra.mxu0 %v7138
  %9396 = vmatprep.subr.bf16.mxu0 %v7151
  %9397 = vmatpush1.bf16.msra.mxu0 %v7150
  %9398 = vmatprep.subr.bf16.mxu0 %v7163
  %9399 = vmatpush1.bf16.msra.mxu0 %v7162
  %9400 = vmatprep.mubr.bf16.mxu0 %v3893
  %9401 = vmatmul.mubr.bf16.gmra.mrb[0].mxu0 %v3892
  %v9402 = vpop.f32.mrb[0].mxu0
  %v9403 = vadd.f32 0.0, %v9402
  %v9404 = vpop.f32.mrb[0].mxu0
  %v9405 = vadd.f32 0.0, %v9404
  %v9406 = vpop.f32.mrb[0].mxu0
  %v9407 = vadd.f32 0.0, %v9406
  %v9408 = vpop.f32.mrb[0].mxu0
  %v9409 = vadd.f32 0.0, %v9408
  %9410 = vdwg.mxu0
  %9411 = vmatprep.subr.bf16.mxu0 %v7175
  %9412 = vmatpush1.bf16.msra.mxu0 %v7174
  %9413 = vmatprep.subr.bf16.mxu0 %v7187
  %9414 = vmatpush1.bf16.msra.mxu0 %v7186
  %9415 = vmatprep.subr.bf16.mxu0 %v7199
  %9416 = vmatpush1.bf16.msra.mxu0 %v7198
  %9417 = vmatprep.subr.bf16.mxu0 %v7211
  %9418 = vmatpush1.bf16.msra.mxu0 %v7210
  %9419 = vmatprep.subr.bf16.mxu0 %v7223
  %9420 = vmatpush1.bf16.msra.mxu0 %v7222
  %9421 = vmatprep.subr.bf16.mxu0 %v7235
  %9422 = vmatpush1.bf16.msra.mxu0 %v7234
  %9423 = vmatprep.subr.bf16.mxu0 %v7247
  %9424 = vmatpush1.bf16.msra.mxu0 %v7246
  %9425 = vmatprep.subr.bf16.mxu0 %v7259
  %9426 = vmatpush1.bf16.msra.mxu0 %v7258
  %9427 = vmatprep.subr.bf16.mxu0 %v7271
  %9428 = vmatpush1.bf16.msra.mxu0 %v7270
  %9429 = vmatprep.subr.bf16.mxu0 %v7283
  %9430 = vmatpush1.bf16.msra.mxu0 %v7282
  %9431 = vmatprep.subr.bf16.mxu0 %v7295
  %9432 = vmatpush1.bf16.msra.mxu0 %v7294
  %9433 = vmatprep.subr.bf16.mxu0 %v7307
  %9434 = vmatpush1.bf16.msra.mxu0 %v7306
  %9435 = vmatprep.subr.bf16.mxu0 %v7319
  %9436 = vmatpush1.bf16.msra.mxu0 %v7318
  %9437 = vmatprep.subr.bf16.mxu0 %v7331
  %9438 = vmatpush1.bf16.msra.mxu0 %v7330
  %9439 = vmatprep.subr.bf16.mxu0 %v7343
  %9440 = vmatpush1.bf16.msra.mxu0 %v7342
  %9441 = vmatprep.subr.bf16.mxu0 %v7355
  %9442 = vmatpush1.bf16.msra.mxu0 %v7354
  %9443 = vmatprep.mubr.bf16.mxu0 %v3895
  %9444 = vmatmul.mubr.bf16.gmra.mrb[0].mxu0 %v3894
  %v9445 = vpop.f32.mrb[0].mxu0
  %v9446 = vadd.f32 %v9403, %v9445
  %v9447 = vpop.f32.mrb[0].mxu0
  %v9448 = vadd.f32 %v9405, %v9447
  %v9449 = vpop.f32.mrb[0].mxu0
  %v9450 = vadd.f32 %v9407, %v9449
  %v9451 = vpop.f32.mrb[0].mxu0
  %v9452 = vadd.f32 %v9409, %v9451
  %9453 = vdwg.mxu0
  %9454 = vmatprep.subr.bf16.mxu0 %v7367
  %9455 = vmatpush1.bf16.msra.mxu0 %v7366
  %9456 = vmatprep.subr.bf16.mxu0 %v7379
  %9457 = vmatpush1.bf16.msra.mxu0 %v7378
  %9458 = vmatprep.subr.bf16.mxu0 %v7391
  %9459 = vmatpush1.bf16.msra.mxu0 %v7390
  %9460 = vmatprep.subr.bf16.mxu0 %v7403
  %9461 = vmatpush1.bf16.msra.mxu0 %v7402
  %9462 = vmatprep.subr.bf16.mxu0 %v7415
  %9463 = vmatpush1.bf16.msra.mxu0 %v7414
  %9464 = vmatprep.subr.bf16.mxu0 %v7427
  %9465 = vmatpush1.bf16.msra.mxu0 %v7426
  %9466 = vmatprep.subr.bf16.mxu0 %v7439
  %9467 = vmatpush1.bf16.msra.mxu0 %v7438
  %9468 = vmatprep.subr.bf16.mxu0 %v7451
  %9469 = vmatpush1.bf16.msra.mxu0 %v7450
  %9470 = vmatprep.subr.bf16.mxu0 %v7463
  %9471 = vmatpush1.bf16.msra.mxu0 %v7462
  %9472 = vmatprep.subr.bf16.mxu0 %v7475
  %9473 = vmatpush1.bf16.msra.mxu0 %v7474
  %9474 = vmatprep.subr.bf16.mxu0 %v7487
  %9475 = vmatpush1.bf16.msra.mxu0 %v7486
  %9476 = vmatprep.subr.bf16.mxu0 %v7499
  %9477 = vmatpush1.bf16.msra.mxu0 %v7498
  %9478 = vmatprep.subr.bf16.mxu0 %v7511
  %9479 = vmatpush1.bf16.msra.mxu0 %v7510
  %9480 = vmatprep.subr.bf16.mxu0 %v7523
  %9481 = vmatpush1.bf16.msra.mxu0 %v7522
  %9482 = vmatprep.subr.bf16.mxu0 %v7535
  %9483 = vmatpush1.bf16.msra.mxu0 %v7534
  %9484 = vmatprep.subr.bf16.mxu0 %v7547
  %9485 = vmatpush1.bf16.msra.mxu0 %v7546
  %9486 = vmatprep.mubr.bf16.mxu0 %v3897
  %9487 = vmatmul.mubr.bf16.gmra.mrb[0].mxu0 %v3896
  %v9488 = vpop.f32.mrb[0].mxu0
  %v9489 = vadd.f32 %v9446, %v9488
  %v9490 = vpop.f32.mrb[0].mxu0
  %v9491 = vadd.f32 %v9448, %v9490
  %v9492 = vpop.f32.mrb[0].mxu0
  %v9493 = vadd.f32 %v9450, %v9492
  %v9494 = vpop.f32.mrb[0].mxu0
  %v9495 = vadd.f32 %v9452, %v9494
  %9496 = vdwg.mxu0
  %9497 = vmatprep.subr.bf16.mxu0 %v7559
  %9498 = vmatpush1.bf16.msra.mxu0 %v7558
  %9499 = vmatprep.subr.bf16.mxu0 %v7571
  %9500 = vmatpush1.bf16.msra.mxu0 %v7570
  %9501 = vmatprep.subr.bf16.mxu0 %v7583
  %9502 = vmatpush1.bf16.msra.mxu0 %v7582
  %9503 = vmatprep.subr.bf16.mxu0 %v7595
  %9504 = vmatpush1.bf16.msra.mxu0 %v7594
  %9505 = vmatprep.subr.bf16.mxu0 %v7607
  %9506 = vmatpush1.bf16.msra.mxu0 %v7606
  %9507 = vmatprep.subr.bf16.mxu0 %v7619
  %9508 = vmatpush1.bf16.msra.mxu0 %v7618
  %9509 = vmatprep.subr.bf16.mxu0 %v7631
  %9510 = vmatpush1.bf16.msra.mxu0 %v7630
  %9511 = vmatprep.subr.bf16.mxu0 %v7643
  %9512 = vmatpush1.bf16.msra.mxu0 %v7642
  %9513 = vmatprep.subr.bf16.mxu0 %v7655
  %9514 = vmatpush1.bf16.msra.mxu0 %v7654
  %9515 = vmatprep.subr.bf16.mxu0 %v7667
  %9516 = vmatpush1.bf16.msra.mxu0 %v7666
  %9517 = vmatprep.subr.bf16.mxu0 %v7679
  %9518 = vmatpush1.bf16.msra.mxu0 %v7678
  %9519 = vmatprep.subr.bf16.mxu0 %v7691
  %9520 = vmatpush1.bf16.msra.mxu0 %v7690
  %9521 = vmatprep.subr.bf16.mxu0 %v7703
  %9522 = vmatpush1.bf16.msra.mxu0 %v7702
  %9523 = vmatprep.subr.bf16.mxu0 %v7715
  %9524 = vmatpush1.bf16.msra.mxu0 %v7714
  %9525 = vmatprep.subr.bf16.mxu0 %v7727
  %9526 = vmatpush1.bf16.msra.mxu0 %v7726
  %9527 = vmatprep.subr.bf16.mxu0 %v7739
  %9528 = vmatpush1.bf16.msra.mxu0 %v7738
  %9529 = vmatprep.mubr.bf16.mxu0 %v3899
  %9530 = vmatmul.mubr.bf16.gmra.mrb[0].mxu0 %v3898
  %v9531 = vpop.f32.mrb[0].mxu0
  %v9532 = vadd.f32 %v9489, %v9531
  %v9533 = vpop.f32.mrb[0].mxu0
  %v9534 = vadd.f32 %v9491, %v9533
  %v9535 = vpop.f32.mrb[0].mxu0
  %v9536 = vadd.f32 %v9493, %v9535
  %v9537 = vpop.f32.mrb[0].mxu0
  %v9538 = vadd.f32 %v9495, %v9537
  %9539 = vdwg.mxu0
  %v9540 = vlaneseq
  %v9541 = vand.u32 %v9540, 127
  %vm9542 = vcmp.lt.s32.totalorder %v9541, 0
  %v9543 = vsub.s32 0, %v9541
  %v9544 = vsel %vm9542, %v9543, %v9541
  %v9545 = vmul.u32.u64.compose %v9544, 2863311531
  %v9546 = vextract.low.u32 %v9545
  %v9547 = vextract.high.u32 %v9545
  %v9548 = vshrl.u32 %v9547, 2
  %v9549 = vmul.u32 %v9548, 6
  %v9550 = vsub.s32 %v9544, %v9549
  %v9551 = vsub.s32 0, %v9550
  %v9552 = vsel %vm9542, %v9551, %v9550
  %vm9553 = vcmp.ne.s32.totalorder %v9552, 0
  %vm9554 = vcmp.lt.s32.totalorder %v9552, 0
  %vm9555 = vmand %vm9554, %vm9553
  %v9556 = vadd.s32 %v9552, 6
  %v9557 = vsel %vm9555, %v9556, %v9552
  %vm9558 = vcmp.lt.s32.totalorder %v9541, 96
  %vm9559 = vcmp.eq.s32.totalorder %v9557, 0
  %vm9560 = vcmp.eq.s32.totalorder %v9557, 4
  %vm9561 = vmor %vm9559, %vm9560
  %vm9562 = vmand %vm9558, %vm9561
  %v9563 = vsel %vm9562, 1.0, 0.0
  %v9564 = vpack.c.bf16 %v9563, %v9563
  %v9565 = vld [vmem:[%s4] sm:$0xff]
  %v9566 = vld [vmem:[%s4 + $0x8] sm:$0xff]
  %v9567 = vld [vmem:[%s4 + $0x10] sm:$0xff]
  %v9568 = vld [vmem:[%s4 + $0x18] sm:$0xff]
  %v9569 = vld [vmem:[%s4 + $0x20] sm:$0xff]
  %v9570 = vld [vmem:[%s4 + $0x28] sm:$0xff]
  %v9571 = vld [vmem:[%s4 + $0x30] sm:$0xff]
  %v9572 = vld [vmem:[%s4 + $0x38] sm:$0xff]
  %v9573 = vld [vmem:[%s4 + $0x40] sm:$0xff]
  %v9574 = vld [vmem:[%s4 + $0x48] sm:$0xff]
  %v9575 = vld [vmem:[%s4 + $0x50] sm:$0xff]
  %v9576 = vld [vmem:[%s4 + $0x58] sm:$0xff]
  %v9577 = vld [vmem:[%s4 + $0x60] sm:$0xff]
  %v9578 = vld [vmem:[%s4 + $0x68] sm:$0xff]
  %v9579 = vld [vmem:[%s4 + $0x70] sm:$0xff]
  %v9580 = vld [vmem:[%s4 + $0x78] sm:$0xff]
  %v9581 = vld [vmem:[%s4 + $0x80] sm:$0xff]
  %v9582 = vld [vmem:[%s4 + $0x88] sm:$0xff]
  %v9583 = vld [vmem:[%s4 + $0x90] sm:$0xff]
  %v9584 = vld [vmem:[%s4 + $0x98] sm:$0xff]
  %v9585 = vld [vmem:[%s4 + $0xa0] sm:$0xff]
  %v9586 = vld [vmem:[%s4 + $0xa8] sm:$0xff]
  %v9587 = vld [vmem:[%s4 + $0xb0] sm:$0xff]
  %v9588 = vld [vmem:[%s4 + $0xb8] sm:$0xff]
  %v9589 = vld [vmem:[%s4 + $0xc0] sm:$0xff]
  %v9590 = vld [vmem:[%s4 + $0xc8] sm:$0xff]
  %v9591 = vld [vmem:[%s4 + $0xd0] sm:$0xff]
  %v9592 = vld [vmem:[%s4 + $0xd8] sm:$0xff]
  %v9593 = vld [vmem:[%s4 + $0xe0] sm:$0xff]
  %v9594 = vld [vmem:[%s4 + $0xe8] sm:$0xff]
  %v9595 = vld [vmem:[%s4 + $0xf0] sm:$0xff]
  %v9596 = vld [vmem:[%s4 + $0xf8] sm:$0xff]
  %v9629 = vunpack.c.l.b16 %v9565
  %v9630 = vunpack.c.h.b16 %v9565
  %v9631 = vunpack.c.l.b16 %v9566
  %v9632 = vunpack.c.h.b16 %v9566
  %v9633 = vunpack.c.l.b16 %v9567
  %v9634 = vunpack.c.h.b16 %v9567
  %v9635 = vunpack.c.l.b16 %v9568
  %v9636 = vunpack.c.h.b16 %v9568
  %v9637 = vunpack.c.l.b16 %v9569
  %v9638 = vunpack.c.h.b16 %v9569
  %v9639 = vunpack.c.l.b16 %v9570
  %v9640 = vunpack.c.h.b16 %v9570
  %v9641 = vunpack.c.l.b16 %v9571
  %v9642 = vunpack.c.h.b16 %v9571
  %v9643 = vunpack.c.l.b16 %v9572
  %v9644 = vunpack.c.h.b16 %v9572
  %v9645 = vunpack.c.l.b16 %v9573
  %v9646 = vunpack.c.h.b16 %v9573
  %v9647 = vunpack.c.l.b16 %v9574
  %v9648 = vunpack.c.h.b16 %v9574
  %v9649 = vunpack.c.l.b16 %v9575
  %v9650 = vunpack.c.h.b16 %v9575
  %v9651 = vunpack.c.l.b16 %v9576
  %v9652 = vunpack.c.h.b16 %v9576
  %v9653 = vunpack.c.l.b16 %v9577
  %v9654 = vunpack.c.h.b16 %v9577
  %v9655 = vunpack.c.l.b16 %v9578
  %v9656 = vunpack.c.h.b16 %v9578
  %v9657 = vunpack.c.l.b16 %v9579
  %v9658 = vunpack.c.h.b16 %v9579
  %v9659 = vunpack.c.l.b16 %v9580
  %v9660 = vunpack.c.h.b16 %v9580
  %v9661 = vunpack.c.l.b16 %v9581
  %v9662 = vunpack.c.h.b16 %v9581
  %v9663 = vunpack.c.l.b16 %v9582
  %v9664 = vunpack.c.h.b16 %v9582
  %v9665 = vunpack.c.l.b16 %v9583
  %v9666 = vunpack.c.h.b16 %v9583
  %v9667 = vunpack.c.l.b16 %v9584
  %v9668 = vunpack.c.h.b16 %v9584
  %v9669 = vunpack.c.l.b16 %v9585
  %v9670 = vunpack.c.h.b16 %v9585
  %v9671 = vunpack.c.l.b16 %v9586
  %v9672 = vunpack.c.h.b16 %v9586
  %v9673 = vunpack.c.l.b16 %v9587
  %v9674 = vunpack.c.h.b16 %v9587
  %v9675 = vunpack.c.l.b16 %v9588
  %v9676 = vunpack.c.h.b16 %v9588
  %v9677 = vunpack.c.l.b16 %v9589
  %v9678 = vunpack.c.h.b16 %v9589
  %v9679 = vunpack.c.l.b16 %v9590
  %v9680 = vunpack.c.h.b16 %v9590
  %v9681 = vunpack.c.l.b16 %v9591
  %v9682 = vunpack.c.h.b16 %v9591
  %v9683 = vunpack.c.l.b16 %v9592
  %v9684 = vunpack.c.h.b16 %v9592
  %v9685 = vunpack.c.l.b16 %v9593
  %v9686 = vunpack.c.h.b16 %v9593
  %v9687 = vunpack.c.l.b16 %v9594
  %v9688 = vunpack.c.h.b16 %v9594
  %v9689 = vunpack.c.l.b16 %v9595
  %v9690 = vunpack.c.h.b16 %v9595
  %v9691 = vunpack.c.l.b16 %v9596
  %v9692 = vunpack.c.h.b16 %v9596
  %v9693 = vpack.c.b16 %v9633, %v9629
  %v9694 = vpack.c.b16 %v9634, %v9630
  %v9695 = vpack.c.b16 %v9635, %v9631
  %v9696 = vpack.c.b16 %v9636, %v9632
  %v9697 = vpack.c.b16 %v9641, %v9637
  %v9698 = vpack.c.b16 %v9642, %v9638
  %v9699 = vpack.c.b16 %v9643, %v9639
  %v9700 = vpack.c.b16 %v9644, %v9640
  %v9701 = vpack.c.b16 %v9649, %v9645
  %v9702 = vpack.c.b16 %v9650, %v9646
  %v9703 = vpack.c.b16 %v9651, %v9647
  %v9704 = vpack.c.b16 %v9652, %v9648
  %v9705 = vpack.c.b16 %v9657, %v9653
  %v9706 = vpack.c.b16 %v9658, %v9654
  %v9707 = vpack.c.b16 %v9659, %v9655
  %v9708 = vpack.c.b16 %v9660, %v9656
  %v9709 = vpack.c.b16 %v9665, %v9661
  %v9710 = vpack.c.b16 %v9666, %v9662
  %v9711 = vpack.c.b16 %v9667, %v9663
  %v9712 = vpack.c.b16 %v9668, %v9664
  %v9713 = vpack.c.b16 %v9673, %v9669
  %v9714 = vpack.c.b16 %v9674, %v9670
  %v9715 = vpack.c.b16 %v9675, %v9671
  %v9716 = vpack.c.b16 %v9676, %v9672
  %v9717 = vpack.c.b16 %v9681, %v9677
  %v9718 = vpack.c.b16 %v9682, %v9678
  %v9719 = vpack.c.b16 %v9683, %v9679
  %v9720 = vpack.c.b16 %v9684, %v9680
  %v9721 = vpack.c.b16 %v9689, %v9685
  %v9722 = vpack.c.b16 %v9690, %v9686
  %v9723 = vpack.c.b16 %v9691, %v9687
  %v9724 = vpack.c.b16 %v9692, %v9688
  %9757 = vmatprep.subr.bf16.mxu0 %v9694
  %9758 = vmatpush1.bf16.msra.mxu0 %v9693
  %9759 = vmatprep.subr.bf16.mxu0 %v9698
  %9760 = vmatpush1.bf16.msra.mxu0 %v9697
  %9761 = vmatprep.subr.bf16.mxu0 %v9702
  %9762 = vmatpush1.bf16.msra.mxu0 %v9701
  %9763 = vmatprep.subr.bf16.mxu0 %v9706
  %9764 = vmatpush1.bf16.msra.mxu0 %v9705
  %9765 = vmatprep.subr.bf16.mxu0 %v9710
  %9766 = vmatpush1.bf16.msra.mxu0 %v9709
  %9767 = vmatprep.subr.bf16.mxu0 %v9714
  %9768 = vmatpush1.bf16.msra.mxu0 %v9713
  %9769 = vmatprep.subr.bf16.mxu0 %v9718
  %9770 = vmatpush1.bf16.msra.mxu0 %v9717
  %9771 = vmatprep.subr.bf16.mxu0 %v9722
  %9772 = vmatpush1.bf16.msra.mxu0 %v9721
  %9773 = vmatprep.subr.bf16.mxu0 0
  %9774 = vmatpush1.bf16.msra.mxu0 0
  %9775 = vmatprep.subr.bf16.mxu0 0
  %9776 = vmatpush1.bf16.msra.mxu0 0
  %9777 = vmatprep.subr.bf16.mxu0 0
  %9778 = vmatpush1.bf16.msra.mxu0 0
  %9779 = vmatprep.subr.bf16.mxu0 0
  %9780 = vmatpush1.bf16.msra.mxu0 0
  %9781 = vmatprep.subr.bf16.mxu0 0
  %9782 = vmatpush1.bf16.msra.mxu0 0
  %9783 = vmatprep.subr.bf16.mxu0 0
  %9784 = vmatpush1.bf16.msra.mxu0 0
  %9785 = vmatprep.subr.bf16.mxu0 0
  %9786 = vmatpush1.bf16.msra.mxu0 0
  %9787 = vmatprep.subr.bf16.mxu0 0
  %9788 = vmatpush1.bf16.msra.mxu0 0
  %9789 = vmatprep.mubr.bf16.mxu0 0
  %9790 = vmatmul.mubr.bf16.gmra.mrb[0].mxu0 %v9564
  %v9791 = vpop.f32.mrb[0].mxu0
  %v9792 = vadd.f32 0.0, %v9791
  %v9793 = vpop.f32.mrb[0].mxu0
  %v9794 = vadd.f32 0.0, %v9793
  %v9795 = vpop.f32.mrb[0].mxu0
  %v9796 = vadd.f32 0.0, %v9795
  %v9797 = vpop.f32.mrb[0].mxu0
  %v9798 = vadd.f32 0.0, %v9797
  %9799 = vdwg.mxu0
  %9800 = vmatprep.subr.bf16.mxu0 %v9696
  %9801 = vmatpush1.bf16.msra.mxu0 %v9695
  %9802 = vmatprep.subr.bf16.mxu0 %v9700
  %9803 = vmatpush1.bf16.msra.mxu0 %v9699
  %9804 = vmatprep.subr.bf16.mxu0 %v9704
  %9805 = vmatpush1.bf16.msra.mxu0 %v9703
  %9806 = vmatprep.subr.bf16.mxu0 %v9708
  %9807 = vmatpush1.bf16.msra.mxu0 %v9707
  %9808 = vmatprep.subr.bf16.mxu0 %v9712
  %9809 = vmatpush1.bf16.msra.mxu0 %v9711
  %9810 = vmatprep.subr.bf16.mxu0 %v9716
  %9811 = vmatpush1.bf16.msra.mxu0 %v9715
  %9812 = vmatprep.subr.bf16.mxu0 %v9720
  %9813 = vmatpush1.bf16.msra.mxu0 %v9719
  %9814 = vmatprep.subr.bf16.mxu0 %v9724
  %9815 = vmatpush1.bf16.msra.mxu0 %v9723
  %9816 = vmatprep.subr.bf16.mxu0 0
  %9817 = vmatpush1.bf16.msra.mxu0 0
  %9818 = vmatprep.subr.bf16.mxu0 0
  %9819 = vmatpush1.bf16.msra.mxu0 0
  %9820 = vmatprep.subr.bf16.mxu0 0
  %9821 = vmatpush1.bf16.msra.mxu0 0
  %9822 = vmatprep.subr.bf16.mxu0 0
  %9823 = vmatpush1.bf16.msra.mxu0 0
  %9824 = vmatprep.subr.bf16.mxu0 0
  %9825 = vmatpush1.bf16.msra.mxu0 0
  %9826 = vmatprep.subr.bf16.mxu0 0
  %9827 = vmatpush1.bf16.msra.mxu0 0
  %9828 = vmatprep.subr.bf16.mxu0 0
  %9829 = vmatpush1.bf16.msra.mxu0 0
  %9830 = vmatprep.subr.bf16.mxu0 0
  %9831 = vmatpush1.bf16.msra.mxu0 0
  %9832 = vmatprep.mubr.bf16.mxu0 0
  %9833 = vmatmul.mubr.bf16.gmra.mrb[0].mxu0 %v9564
  %v9834 = vpop.f32.mrb[0].mxu0
  %v9835 = vadd.f32 0.0, %v9834
  %v9836 = vpop.f32.mrb[0].mxu0
  %v9837 = vadd.f32 0.0, %v9836
  %v9838 = vpop.f32.mrb[0].mxu0
  %v9839 = vadd.f32 0.0, %v9838
  %v9840 = vpop.f32.mrb[0].mxu0
  %v9841 = vadd.f32 0.0, %v9840
  %9842 = vdwg.mxu0
  %v9843 = vadd.f32 %v8672, %v9792
  %v9844 = vadd.f32 %v8674, %v9794
  %v9845 = vadd.f32 %v8844, %v9835
  %v9846 = vadd.f32 %v8846, %v9837
  %v9847 = vadd.f32 %v8676, %v9796
  %v9848 = vadd.f32 %v8678, %v9798
  %v9849 = vadd.f32 %v8848, %v9839
  %v9850 = vadd.f32 %v8850, %v9841
  %v9851 = vld [vmem:[%s5] sm:$0xf]
  %v9853 = vlaneseq
  %v9854 = vshrl.u32 %v9853, 7
  %v9855 = vsub.s32 0, %v9854
  %v9856 = vrot.slane %v9851, %v9855
  %v9857 = vlaneseq
  %v9858 = vshrl.u32 %v9857, 7
  %v9859 = vsub.s32 1, %v9858
  %v9860 = vrot.slane %v9851, %v9859
  %v9861 = vlaneseq
  %v9862 = vshrl.u32 %v9861, 7
  %v9863 = vsub.s32 2, %v9862
  %v9864 = vrot.slane %v9851, %v9863
  %v9865 = vlaneseq
  %v9866 = vshrl.u32 %v9865, 7
  %v9867 = vsub.s32 3, %v9866
  %v9868 = vrot.slane %v9851, %v9867
  %v9873 = vadd.f32 %v9843, %v9856
  %v9874 = vadd.f32 %v9844, %v9860
  %v9875 = vadd.f32 %v9845, %v9864
  %v9876 = vadd.f32 %v9846, %v9868
  %v9877 = vadd.f32 %v9847, %v9856
  %v9878 = vadd.f32 %v9848, %v9860
  %v9879 = vadd.f32 %v9849, %v9864
  %v9880 = vadd.f32 %v9850, %v9868
  %v9881 = vmax.f32 %v9873, 0.0
  %v9882 = vmax.f32 %v9874, 0.0
  %v9883 = vmax.f32 %v9875, 0.0
  %v9884 = vmax.f32 %v9876, 0.0
  %v9885 = vmax.f32 %v9877, 0.0
  %v9886 = vmax.f32 %v9878, 0.0
  %v9887 = vmax.f32 %v9879, 0.0
  %v9888 = vmax.f32 %v9880, 0.0
  %v9889 = vpack.c.bf16 %v9885, %v9881
  %v9890 = vpack.c.bf16 %v9886, %v9882
  %v9891 = vpack.c.bf16 %v9887, %v9883
  %v9892 = vpack.c.bf16 %v9888, %v9884
  %v9893 = vld [vmem:[%s6] sm:$0xff]
  %v9894 = vld [vmem:[%s6 + $0x8] sm:$0xff]
  %v9895 = vld [vmem:[%s6 + $0x10] sm:$0xff]
  %v9896 = vld [vmem:[%s6 + $0x18] sm:$0xff]
  %v9897 = vld [vmem:[%s6 + $0x20] sm:$0xff]
  %v9898 = vld [vmem:[%s6 + $0x28] sm:$0xff]
  %v9899 = vld [vmem:[%s6 + $0x30] sm:$0xff]
  %v9900 = vld [vmem:[%s6 + $0x38] sm:$0xff]
  %v9901 = vld [vmem:[%s6 + $0x40] sm:$0xff]
  %v9902 = vld [vmem:[%s6 + $0x48] sm:$0xff]
  %v9903 = vld [vmem:[%s6 + $0x50] sm:$0xff]
  %v9904 = vld [vmem:[%s6 + $0x58] sm:$0xff]
  %v9905 = vld [vmem:[%s6 + $0x60] sm:$0xff]
  %v9906 = vld [vmem:[%s6 + $0x68] sm:$0xff]
  %v9907 = vld [vmem:[%s6 + $0x70] sm:$0xff]
  %v9908 = vld [vmem:[%s6 + $0x78] sm:$0xff]
  %v9909 = vld [vmem:[%s6 + $0x80] sm:$0xff]
  %v9910 = vld [vmem:[%s6 + $0x88] sm:$0xff]
  %v9911 = vld [vmem:[%s6 + $0x90] sm:$0xff]
  %v9912 = vld [vmem:[%s6 + $0x98] sm:$0xff]
  %v9913 = vld [vmem:[%s6 + $0xa0] sm:$0xff]
  %v9914 = vld [vmem:[%s6 + $0xa8] sm:$0xff]
  %v9915 = vld [vmem:[%s6 + $0xb0] sm:$0xff]
  %v9916 = vld [vmem:[%s6 + $0xb8] sm:$0xff]
  %v9917 = vld [vmem:[%s6 + $0xc0] sm:$0xff]
  %v9918 = vld [vmem:[%s6 + $0xc8] sm:$0xff]
  %v9919 = vld [vmem:[%s6 + $0xd0] sm:$0xff]
  %v9920 = vld [vmem:[%s6 + $0xd8] sm:$0xff]
  %v9921 = vld [vmem:[%s6 + $0xe0] sm:$0xff]
  %v9922 = vld [vmem:[%s6 + $0xe8] sm:$0xff]
  %v9923 = vld [vmem:[%s6 + $0xf0] sm:$0xff]
  %v9924 = vld [vmem:[%s6 + $0xf8] sm:$0xff]
  %v9925 = vld [vmem:[%s6 + $0x100] sm:$0xff]
  %v9926 = vld [vmem:[%s6 + $0x108] sm:$0xff]
  %v9927 = vld [vmem:[%s6 + $0x110] sm:$0xff]
  %v9928 = vld [vmem:[%s6 + $0x118] sm:$0xff]
  %v9929 = vld [vmem:[%s6 + $0x120] sm:$0xff]
  %v9930 = vld [vmem:[%s6 + $0x128] sm:$0xff]
  %v9931 = vld [vmem:[%s6 + $0x130] sm:$0xff]
  %v9932 = vld [vmem:[%s6 + $0x138] sm:$0xff]
  %v9933 = vld [vmem:[%s6 + $0x140] sm:$0xff]
  %v9934 = vld [vmem:[%s6 + $0x148] sm:$0xff]
  %v9935 = vld [vmem:[%s6 + $0x150] sm:$0xff]
  %v9936 = vld [vmem:[%s6 + $0x158] sm:$0xff]
  %v9937 = vld [vmem:[%s6 + $0x160] sm:$0xff]
  %v9938 = vld [vmem:[%s6 + $0x168] sm:$0xff]
  %v9939 = vld [vmem:[%s6 + $0x170] sm:$0xff]
  %v9940 = vld [vmem:[%s6 + $0x178] sm:$0xff]
  %v9941 = vld [vmem:[%s6 + $0x180] sm:$0xff]
  %v9942 = vld [vmem:[%s6 + $0x188] sm:$0xff]
  %v9943 = vld [vmem:[%s6 + $0x190] sm:$0xff]
  %v9944 = vld [vmem:[%s6 + $0x198] sm:$0xff]
  %v9945 = vld [vmem:[%s6 + $0x1a0] sm:$0xff]
  %v9946 = vld [vmem:[%s6 + $0x1a8] sm:$0xff]
  %v9947 = vld [vmem:[%s6 + $0x1b0] sm:$0xff]
  %v9948 = vld [vmem:[%s6 + $0x1b8] sm:$0xff]
  %v9949 = vld [vmem:[%s6 + $0x1c0] sm:$0xff]
  %v9950 = vld [vmem:[%s6 + $0x1c8] sm:$0xff]
  %v9951 = vld [vmem:[%s6 + $0x1d0] sm:$0xff]
  %v9952 = vld [vmem:[%s6 + $0x1d8] sm:$0xff]
  %v9953 = vld [vmem:[%s6 + $0x1e0] sm:$0xff]
  %v9954 = vld [vmem:[%s6 + $0x1e8] sm:$0xff]
  %v9955 = vld [vmem:[%s6 + $0x1f0] sm:$0xff]
  %v9956 = vld [vmem:[%s6 + $0x1f8] sm:$0xff]
  %v9957 = vld [vmem:[%s7] sm:$0x3]
  %v9959 = vlaneseq
  %v9960 = vshrl.u32 %v9959, 7
  %v9961 = vsub.s32 0, %v9960
  %v9962 = vrot.slane %v9957, %v9961
  %v9963 = vlaneseq
  %v9964 = vshrl.u32 %v9963, 7
  %v9965 = vsub.s32 1, %v9964
  %v9966 = vrot.slane %v9957, %v9965
  %v10033 = vunpack.c.l.b16 %v9893
  %v10034 = vunpack.c.h.b16 %v9893
  %v10035 = vunpack.c.l.b16 %v9894
  %v10036 = vunpack.c.h.b16 %v9894
  %v10037 = vunpack.c.l.b16 %v9895
  %v10038 = vunpack.c.h.b16 %v9895
  %v10039 = vunpack.c.l.b16 %v9896
  %v10040 = vunpack.c.h.b16 %v9896
  %v10041 = vunpack.c.l.b16 %v9897
  %v10042 = vunpack.c.h.b16 %v9897
  %v10043 = vunpack.c.l.b16 %v9898
  %v10044 = vunpack.c.h.b16 %v9898
  %v10045 = vunpack.c.l.b16 %v9899
  %v10046 = vunpack.c.h.b16 %v9899
  %v10047 = vunpack.c.l.b16 %v9900
  %v10048 = vunpack.c.h.b16 %v9900
  %v10049 = vunpack.c.l.b16 %v9901
  %v10050 = vunpack.c.h.b16 %v9901
  %v10051 = vunpack.c.l.b16 %v9902
  %v10052 = vunpack.c.h.b16 %v9902
  %v10053 = vunpack.c.l.b16 %v9903
  %v10054 = vunpack.c.h.b16 %v9903
  %v10055 = vunpack.c.l.b16 %v9904
  %v10056 = vunpack.c.h.b16 %v9904
  %v10057 = vunpack.c.l.b16 %v9905
  %v10058 = vunpack.c.h.b16 %v9905
  %v10059 = vunpack.c.l.b16 %v9906
  %v10060 = vunpack.c.h.b16 %v9906
  %v10061 = vunpack.c.l.b16 %v9907
  %v10062 = vunpack.c.h.b16 %v9907
  %v10063 = vunpack.c.l.b16 %v9908
  %v10064 = vunpack.c.h.b16 %v9908
  %v10065 = vunpack.c.l.b16 %v9909
  %v10066 = vunpack.c.h.b16 %v9909
  %v10067 = vunpack.c.l.b16 %v9910
  %v10068 = vunpack.c.h.b16 %v9910
  %v10069 = vunpack.c.l.b16 %v9911
  %v10070 = vunpack.c.h.b16 %v9911
  %v10071 = vunpack.c.l.b16 %v9912
  %v10072 = vunpack.c.h.b16 %v9912
  %v10073 = vunpack.c.l.b16 %v9913
  %v10074 = vunpack.c.h.b16 %v9913
  %v10075 = vunpack.c.l.b16 %v9914
  %v10076 = vunpack.c.h.b16 %v9914
  %v10077 = vunpack.c.l.b16 %v9915
  %v10078 = vunpack.c.h.b16 %v9915
  %v10079 = vunpack.c.l.b16 %v9916
  %v10080 = vunpack.c.h.b16 %v9916
  %v10081 = vunpack.c.l.b16 %v9917
  %v10082 = vunpack.c.h.b16 %v9917
  %v10083 = vunpack.c.l.b16 %v9918
  %v10084 = vunpack.c.h.b16 %v9918
  %v10085 = vunpack.c.l.b16 %v9919
  %v10086 = vunpack.c.h.b16 %v9919
  %v10087 = vunpack.c.l.b16 %v9920
  %v10088 = vunpack.c.h.b16 %v9920
  %v10089 = vunpack.c.l.b16 %v9921
  %v10090 = vunpack.c.h.b16 %v9921
  %v10091 = vunpack.c.l.b16 %v9922
  %v10092 = vunpack.c.h.b16 %v9922
  %v10093 = vunpack.c.l.b16 %v9923
  %v10094 = vunpack.c.h.b16 %v9923
  %v10095 = vunpack.c.l.b16 %v9924
  %v10096 = vunpack.c.h.b16 %v9924
  %v10097 = vunpack.c.l.b16 %v9925
  %v10098 = vunpack.c.h.b16 %v9925
  %v10099 = vunpack.c.l.b16 %v9926
  %v10100 = vunpack.c.h.b16 %v9926
  %v10101 = vunpack.c.l.b16 %v9927
  %v10102 = vunpack.c.h.b16 %v9927
  %v10103 = vunpack.c.l.b16 %v9928
  %v10104 = vunpack.c.h.b16 %v9928
  %v10105 = vunpack.c.l.b16 %v9929
  %v10106 = vunpack.c.h.b16 %v9929
  %v10107 = vunpack.c.l.b16 %v9930
  %v10108 = vunpack.c.h.b16 %v9930
  %v10109 = vunpack.c.l.b16 %v9931
  %v10110 = vunpack.c.h.b16 %v9931
  %v10111 = vunpack.c.l.b16 %v9932
  %v10112 = vunpack.c.h.b16 %v9932
  %v10113 = vunpack.c.l.b16 %v9933
  %v10114 = vunpack.c.h.b16 %v9933
  %v10115 = vunpack.c.l.b16 %v9934
  %v10116 = vunpack.c.h.b16 %v9934
  %v10117 = vunpack.c.l.b16 %v9935
  %v10118 = vunpack.c.h.b16 %v9935
  %v10119 = vunpack.c.l.b16 %v9936
  %v10120 = vunpack.c.h.b16 %v9936
  %v10121 = vunpack.c.l.b16 %v9937
  %v10122 = vunpack.c.h.b16 %v9937
  %v10123 = vunpack.c.l.b16 %v9938
  %v10124 = vunpack.c.h.b16 %v9938
  %v10125 = vunpack.c.l.b16 %v9939
  %v10126 = vunpack.c.h.b16 %v9939
  %v10127 = vunpack.c.l.b16 %v9940
  %v10128 = vunpack.c.h.b16 %v9940
  %v10129 = vunpack.c.l.b16 %v9941
  %v10130 = vunpack.c.h.b16 %v9941
  %v10131 = vunpack.c.l.b16 %v9942
  %v10132 = vunpack.c.h.b16 %v9942
  %v10133 = vunpack.c.l.b16 %v9943
  %v10134 = vunpack.c.h.b16 %v9943
  %v10135 = vunpack.c.l.b16 %v9944
  %v10136 = vunpack.c.h.b16 %v9944
  %v10137 = vunpack.c.l.b16 %v9945
  %v10138 = vunpack.c.h.b16 %v9945
  %v10139 = vunpack.c.l.b16 %v9946
  %v10140 = vunpack.c.h.b16 %v9946
  %v10141 = vunpack.c.l.b16 %v9947
  %v10142 = vunpack.c.h.b16 %v9947
  %v10143 = vunpack.c.l.b16 %v9948
  %v10144 = vunpack.c.h.b16 %v9948
  %v10145 = vunpack.c.l.b16 %v9949
  %v10146 = vunpack.c.h.b16 %v9949
  %v10147 = vunpack.c.l.b16 %v9950
  %v10148 = vunpack.c.h.b16 %v9950
  %v10149 = vunpack.c.l.b16 %v9951
  %v10150 = vunpack.c.h.b16 %v9951
  %v10151 = vunpack.c.l.b16 %v9952
  %v10152 = vunpack.c.h.b16 %v9952
  %v10153 = vunpack.c.l.b16 %v9953
  %v10154 = vunpack.c.h.b16 %v9953
  %v10155 = vunpack.c.l.b16 %v9954
  %v10156 = vunpack.c.h.b16 %v9954
  %v10157 = vunpack.c.l.b16 %v9955
  %v10158 = vunpack.c.h.b16 %v9955
  %v10159 = vunpack.c.l.b16 %v9956
  %v10160 = vunpack.c.h.b16 %v9956
  %v10161 = vpack.c.b16 %v10035, %v10033
  %v10162 = vpack.c.b16 %v10036, %v10034
  %v10163 = vpack.c.b16 %v10039, %v10037
  %v10164 = vpack.c.b16 %v10040, %v10038
  %v10165 = vpack.c.b16 %v10043, %v10041
  %v10166 = vpack.c.b16 %v10044, %v10042
  %v10167 = vpack.c.b16 %v10047, %v10045
  %v10168 = vpack.c.b16 %v10048, %v10046
  %v10169 = vpack.c.b16 %v10051, %v10049
  %v10170 = vpack.c.b16 %v10052, %v10050
  %v10171 = vpack.c.b16 %v10055, %v10053
  %v10172 = vpack.c.b16 %v10056, %v10054
  %v10173 = vpack.c.b16 %v10059, %v10057
  %v10174 = vpack.c.b16 %v10060, %v10058
  %v10175 = vpack.c.b16 %v10063, %v10061
  %v10176 = vpack.c.b16 %v10064, %v10062
  %v10177 = vpack.c.b16 %v10067, %v10065
  %v10178 = vpack.c.b16 %v10068, %v10066
  %v10179 = vpack.c.b16 %v10071, %v10069
  %v10180 = vpack.c.b16 %v10072, %v10070
  %v10181 = vpack.c.b16 %v10075, %v10073
  %v10182 = vpack.c.b16 %v10076, %v10074
  %v10183 = vpack.c.b16 %v10079, %v10077
  %v10184 = vpack.c.b16 %v10080, %v10078
  %v10185 = vpack.c.b16 %v10083, %v10081
  %v10186 = vpack.c.b16 %v10084, %v10082
  %v10187 = vpack.c.b16 %v10087, %v10085
  %v10188 = vpack.c.b16 %v10088, %v10086
  %v10189 = vpack.c.b16 %v10091, %v10089
  %v10190 = vpack.c.b16 %v10092, %v10090
  %v10191 = vpack.c.b16 %v10095, %v10093
  %v10192 = vpack.c.b16 %v10096, %v10094
  %v10193 = vpack.c.b16 %v10099, %v10097
  %v10194 = vpack.c.b16 %v10100, %v10098
  %v10195 = vpack.c.b16 %v10103, %v10101
  %v10196 = vpack.c.b16 %v10104, %v10102
  %v10197 = vpack.c.b16 %v10107, %v10105
  %v10198 = vpack.c.b16 %v10108, %v10106
  %v10199 = vpack.c.b16 %v10111, %v10109
  %v10200 = vpack.c.b16 %v10112, %v10110
  %v10201 = vpack.c.b16 %v10115, %v10113
  %v10202 = vpack.c.b16 %v10116, %v10114
  %v10203 = vpack.c.b16 %v10119, %v10117
  %v10204 = vpack.c.b16 %v10120, %v10118
  %v10205 = vpack.c.b16 %v10123, %v10121
  %v10206 = vpack.c.b16 %v10124, %v10122
  %v10207 = vpack.c.b16 %v10127, %v10125
  %v10208 = vpack.c.b16 %v10128, %v10126
  %v10209 = vpack.c.b16 %v10131, %v10129
  %v10210 = vpack.c.b16 %v10132, %v10130
  %v10211 = vpack.c.b16 %v10135, %v10133
  %v10212 = vpack.c.b16 %v10136, %v10134
  %v10213 = vpack.c.b16 %v10139, %v10137
  %v10214 = vpack.c.b16 %v10140, %v10138
  %v10215 = vpack.c.b16 %v10143, %v10141
  %v10216 = vpack.c.b16 %v10144, %v10142
  %v10217 = vpack.c.b16 %v10147, %v10145
  %v10218 = vpack.c.b16 %v10148, %v10146
  %v10219 = vpack.c.b16 %v10151, %v10149
  %v10220 = vpack.c.b16 %v10152, %v10150
  %v10221 = vpack.c.b16 %v10155, %v10153
  %v10222 = vpack.c.b16 %v10156, %v10154
  %v10223 = vpack.c.b16 %v10159, %v10157
  %v10224 = vpack.c.b16 %v10160, %v10158
  %10289 = vmatprep.subr.bf16.mxu0 %v10162
  %10290 = vmatpush1.bf16.msra.mxu0 %v10161
  %10291 = vmatprep.subr.bf16.mxu0 %v10164
  %10292 = vmatpush1.bf16.msra.mxu0 %v10163
  %10293 = vmatprep.subr.bf16.mxu0 %v10166
  %10294 = vmatpush1.bf16.msra.mxu0 %v10165
  %10295 = vmatprep.subr.bf16.mxu0 %v10168
  %10296 = vmatpush1.bf16.msra.mxu0 %v10167
  %10297 = vmatprep.subr.bf16.mxu0 %v10170
  %10298 = vmatpush1.bf16.msra.mxu0 %v10169
  %10299 = vmatprep.subr.bf16.mxu0 %v10172
  %10300 = vmatpush1.bf16.msra.mxu0 %v10171
  %10301 = vmatprep.subr.bf16.mxu0 %v10174
  %10302 = vmatpush1.bf16.msra.mxu0 %v10173
  %10303 = vmatprep.subr.bf16.mxu0 %v10176
  %10304 = vmatpush1.bf16.msra.mxu0 %v10175
  %10305 = vmatprep.subr.bf16.mxu0 %v10178
  %10306 = vmatpush1.bf16.msra.mxu0 %v10177
  %10307 = vmatprep.subr.bf16.mxu0 %v10180
  %10308 = vmatpush1.bf16.msra.mxu0 %v10179
  %10309 = vmatprep.subr.bf16.mxu0 %v10182
  %10310 = vmatpush1.bf16.msra.mxu0 %v10181
  %10311 = vmatprep.subr.bf16.mxu0 %v10184
  %10312 = vmatpush1.bf16.msra.mxu0 %v10183
  %10313 = vmatprep.subr.bf16.mxu0 %v10186
  %10314 = vmatpush1.bf16.msra.mxu0 %v10185
  %10315 = vmatprep.subr.bf16.mxu0 %v10188
  %10316 = vmatpush1.bf16.msra.mxu0 %v10187
  %10317 = vmatprep.subr.bf16.mxu0 %v10190
  %10318 = vmatpush1.bf16.msra.mxu0 %v10189
  %10319 = vmatprep.subr.bf16.mxu0 %v10192
  %10320 = vmatpush1.bf16.msra.mxu0 %v10191
  %10321 = vmatprep.mubr.bf16.mxu0 %v9890
  %10322 = vmatmul.mubr.bf16.gmra.mrb[0].mxu0 %v9889
  %v10323 = vpop.f32.mrb[0].mxu0
  %v10324 = vadd.f32 %v9962, %v10323
  %v10325 = vpop.f32.mrb[0].mxu0
  %v10326 = vadd.f32 %v9966, %v10325
  %v10327 = vpop.f32.mrb[0].mxu0
  %v10328 = vadd.f32 %v9962, %v10327
  %v10329 = vpop.f32.mrb[0].mxu0
  %v10330 = vadd.f32 %v9966, %v10329
  %10331 = vdwg.mxu0
  %10332 = vmatprep.subr.bf16.mxu0 %v10194
  %10333 = vmatpush1.bf16.msra.mxu0 %v10193
  %10334 = vmatprep.subr.bf16.mxu0 %v10196
  %10335 = vmatpush1.bf16.msra.mxu0 %v10195
  %10336 = vmatprep.subr.bf16.mxu0 %v10198
  %10337 = vmatpush1.bf16.msra.mxu0 %v10197
  %10338 = vmatprep.subr.bf16.mxu0 %v10200
  %10339 = vmatpush1.bf16.msra.mxu0 %v10199
  %10340 = vmatprep.subr.bf16.mxu0 %v10202
  %10341 = vmatpush1.bf16.msra.mxu0 %v10201
  %10342 = vmatprep.subr.bf16.mxu0 %v10204
  %10343 = vmatpush1.bf16.msra.mxu0 %v10203
  %10344 = vmatprep.subr.bf16.mxu0 %v10206
  %10345 = vmatpush1.bf16.msra.mxu0 %v10205
  %10346 = vmatprep.subr.bf16.mxu0 %v10208
  %10347 = vmatpush1.bf16.msra.mxu0 %v10207
  %10348 = vmatprep.subr.bf16.mxu0 %v10210
  %10349 = vmatpush1.bf16.msra.mxu0 %v10209
  %10350 = vmatprep.subr.bf16.mxu0 %v10212
  %10351 = vmatpush1.bf16.msra.mxu0 %v10211
  %10352 = vmatprep.subr.bf16.mxu0 %v10214
  %10353 = vmatpush1.bf16.msra.mxu0 %v10213
  %10354 = vmatprep.subr.bf16.mxu0 %v10216
  %10355 = vmatpush1.bf16.msra.mxu0 %v10215
  %10356 = vmatprep.subr.bf16.mxu0 %v10218
  %10357 = vmatpush1.bf16.msra.mxu0 %v10217
  %10358 = vmatprep.subr.bf16.mxu0 %v10220
  %10359 = vmatpush1.bf16.msra.mxu0 %v10219
  %10360 = vmatprep.subr.bf16.mxu0 %v10222
  %10361 = vmatpush1.bf16.msra.mxu0 %v10221
  %10362 = vmatprep.subr.bf16.mxu0 %v10224
  %10363 = vmatpush1.bf16.msra.mxu0 %v10223
  %10364 = vmatprep.mubr.bf16.mxu0 %v9892
  %10365 = vmatmul.mubr.bf16.gmra.mrb[0].mxu0 %v9891
  %v10366 = vpop.f32.mrb[0].mxu0
  %v10367 = vadd.f32 %v10324, %v10366
  %v10368 = vpop.f32.mrb[0].mxu0
  %v10369 = vadd.f32 %v10326, %v10368
  %v10370 = vpop.f32.mrb[0].mxu0
  %v10371 = vadd.f32 %v10328, %v10370
  %v10372 = vpop.f32.mrb[0].mxu0
  %v10373 = vadd.f32 %v10330, %v10372
  %10374 = vdwg.mxu0
  %v10375 = vmax.f32 %v10367, 0.0
  %v10376 = vmax.f32 %v10369, 0.0
  %v10377 = vmax.f32 %v10371, 0.0
  %v10378 = vmax.f32 %v10373, 0.0
  %v10379 = vpack.c.bf16 %v10377, %v10375
  %v10380 = vpack.c.bf16 %v10378, %v10376
  %v10381 = vld [vmem:[%s8] sm:$0xf]
  %v10382 = vld [vmem:[%s8 + $0x4] sm:$0xf]
  %v10383 = vld [vmem:[%s8 + $0x8] sm:$0xf]
  %v10384 = vld [vmem:[%s8 + $0xc] sm:$0xf]
  %v10385 = vld [vmem:[%s8 + $0x10] sm:$0xf]
  %v10386 = vld [vmem:[%s8 + $0x14] sm:$0xf]
  %v10387 = vld [vmem:[%s8 + $0x18] sm:$0xf]
  %v10388 = vld [vmem:[%s8 + $0x1c] sm:$0xf]
  %v10389 = vld [vmem:[%s8 + $0x20] sm:$0xf]
  %v10390 = vld [vmem:[%s8 + $0x24] sm:$0xf]
  %v10391 = vld [vmem:[%s8 + $0x28] sm:$0xf]
  %v10392 = vld [vmem:[%s8 + $0x2c] sm:$0xf]
  %v10393 = vld [vmem:[%s8 + $0x30] sm:$0xf]
  %v10394 = vld [vmem:[%s8 + $0x34] sm:$0xf]
  %v10395 = vld [vmem:[%s8 + $0x38] sm:$0xf]
  %v10396 = vld [vmem:[%s8 + $0x3c] sm:$0xf]
  %v10397 = vld [vmem:[%s8 + $0x40] sm:$0xf]
  %v10398 = vld [vmem:[%s8 + $0x44] sm:$0xf]
  %v10399 = vld [vmem:[%s8 + $0x48] sm:$0xf]
  %v10400 = vld [vmem:[%s8 + $0x4c] sm:$0xf]
  %v10401 = vld [vmem:[%s8 + $0x50] sm:$0xf]
  %v10402 = vld [vmem:[%s8 + $0x54] sm:$0xf]
  %v10403 = vld [vmem:[%s8 + $0x58] sm:$0xf]
  %v10404 = vld [vmem:[%s8 + $0x5c] sm:$0xf]
  %v10405 = vld [vmem:[%s8 + $0x60] sm:$0xf]
  %v10406 = vld [vmem:[%s8 + $0x64] sm:$0xf]
  %v10407 = vld [vmem:[%s8 + $0x68] sm:$0xf]
  %v10408 = vld [vmem:[%s8 + $0x6c] sm:$0xf]
  %v10409 = vld [vmem:[%s8 + $0x70] sm:$0xf]
  %v10410 = vld [vmem:[%s8 + $0x74] sm:$0xf]
  %v10411 = vld [vmem:[%s8 + $0x78] sm:$0xf]
  %v10412 = vld [vmem:[%s8 + $0x7c] sm:$0xf]
  %v10413 = vld [vmem:[%s9] sm:$0x1]
  %v10415 = vlaneseq
  %v10416 = vshrl.u32 %v10415, 7
  %v10417 = vsub.s32 0, %v10416
  %v10418 = vrot.slane %v10413, %v10417
  %v10452 = vunpack.c.l.b16 %v10381
  %v10453 = vunpack.c.l.b16 %v10382
  %v10454 = vunpack.c.l.b16 %v10383
  %v10455 = vunpack.c.l.b16 %v10384
  %v10456 = vunpack.c.l.b16 %v10385
  %v10457 = vunpack.c.l.b16 %v10386
  %v10458 = vunpack.c.l.b16 %v10387
  %v10459 = vunpack.c.l.b16 %v10388
  %v10460 = vunpack.c.l.b16 %v10389
  %v10461 = vunpack.c.l.b16 %v10390
  %v10462 = vunpack.c.l.b16 %v10391
  %v10463 = vunpack.c.l.b16 %v10392
  %v10464 = vunpack.c.l.b16 %v10393
  %v10465 = vunpack.c.l.b16 %v10394
  %v10466 = vunpack.c.l.b16 %v10395
  %v10467 = vunpack.c.l.b16 %v10396
  %v10468 = vunpack.c.l.b16 %v10397
  %v10469 = vunpack.c.l.b16 %v10398
  %v10470 = vunpack.c.l.b16 %v10399
  %v10471 = vunpack.c.l.b16 %v10400
  %v10472 = vunpack.c.l.b16 %v10401
  %v10473 = vunpack.c.l.b16 %v10402
  %v10474 = vunpack.c.l.b16 %v10403
  %v10475 = vunpack.c.l.b16 %v10404
  %v10476 = vunpack.c.l.b16 %v10405
  %v10477 = vunpack.c.l.b16 %v10406
  %v10478 = vunpack.c.l.b16 %v10407
  %v10479 = vunpack.c.l.b16 %v10408
  %v10480 = vunpack.c.l.b16 %v10409
  %v10481 = vunpack.c.l.b16 %v10410
  %v10482 = vunpack.c.l.b16 %v10411
  %v10483 = vunpack.c.l.b16 %v10412
  %v10484 = vpack.c.b16 %v10453, %v10452
  %v10485 = vpack.c.b16 %v10455, %v10454
  %v10486 = vpack.c.b16 %v10457, %v10456
  %v10487 = vpack.c.b16 %v10459, %v10458
  %v10488 = vpack.c.b16 %v10461, %v10460
  %v10489 = vpack.c.b16 %v10463, %v10462
  %v10490 = vpack.c.b16 %v10465, %v10464
  %v10491 = vpack.c.b16 %v10467, %v10466
  %v10492 = vpack.c.b16 %v10469, %v10468
  %v10493 = vpack.c.b16 %v10471, %v10470
  %v10494 = vpack.c.b16 %v10473, %v10472
  %v10495 = vpack.c.b16 %v10475, %v10474
  %v10496 = vpack.c.b16 %v10477, %v10476
  %v10497 = vpack.c.b16 %v10479, %v10478
  %v10498 = vpack.c.b16 %v10481, %v10480
  %v10499 = vpack.c.b16 %v10483, %v10482
  %10516 = vmatprep.subr.bf16.mxu0 0
  %10517 = vmatpush1.bf16.msra.mxu0 %v10484
  %10518 = vmatprep.subr.bf16.mxu0 0
  %10519 = vmatpush1.bf16.msra.mxu0 %v10485
  %10520 = vmatprep.subr.bf16.mxu0 0
  %10521 = vmatpush1.bf16.msra.mxu0 %v10486
  %10522 = vmatprep.subr.bf16.mxu0 0
  %10523 = vmatpush1.bf16.msra.mxu0 %v10487
  %10524 = vmatprep.subr.bf16.mxu0 0
  %10525 = vmatpush1.bf16.msra.mxu0 %v10488
  %10526 = vmatprep.subr.bf16.mxu0 0
  %10527 = vmatpush1.bf16.msra.mxu0 %v10489
  %10528 = vmatprep.subr.bf16.mxu0 0
  %10529 = vmatpush1.bf16.msra.mxu0 %v10490
  %10530 = vmatprep.subr.bf16.mxu0 0
  %10531 = vmatpush1.bf16.msra.mxu0 %v10491
  %10532 = vmatprep.subr.bf16.mxu0 0
  %10533 = vmatpush1.bf16.msra.mxu0 %v10492
  %10534 = vmatprep.subr.bf16.mxu0 0
  %10535 = vmatpush1.bf16.msra.mxu0 %v10493
  %10536 = vmatprep.subr.bf16.mxu0 0
  %10537 = vmatpush1.bf16.msra.mxu0 %v10494
  %10538 = vmatprep.subr.bf16.mxu0 0
  %10539 = vmatpush1.bf16.msra.mxu0 %v10495
  %10540 = vmatprep.subr.bf16.mxu0 0
  %10541 = vmatpush1.bf16.msra.mxu0 %v10496
  %10542 = vmatprep.subr.bf16.mxu0 0
  %10543 = vmatpush1.bf16.msra.mxu0 %v10497
  %10544 = vmatprep.subr.bf16.mxu0 0
  %10545 = vmatpush1.bf16.msra.mxu0 %v10498
  %10546 = vmatprep.subr.bf16.mxu0 0
  %10547 = vmatpush1.bf16.msra.mxu0 %v10499
  %10548 = vmatprep.mubr.bf16.mxu0 %v10380
  %10549 = vmatmul.mubr.bf16.gmra.mrb[0].mxu0 %v10379
  %v10550 = vpop.f32.mrb[0].mxu0
  %v10551 = vadd.f32 %v10418, %v10550
  %v10552 = vpop.f32.mrb[0].mxu0
  %v10553 = vpop.f32.mrb[0].mxu0
  %v10554 = vadd.f32 %v10418, %v10553
  %v10555 = vpop.f32.mrb[0].mxu0
  %10556 = vdwg.mxu0
  %v10557 = vmax.f32 %v10551, 0.0
  %v10558 = vmax.f32 %v10554, 0.0
  %v10559 = vpack.c.bf16 %v10558, %v10557
  %v10560 = vld [vmem:[%s10] sm:$0xf]
  %v10561 = vld [vmem:[%s10 + $0x4] sm:$0xf]
  %v10562 = vld [vmem:[%s10 + $0x8] sm:$0xf]
  %v10563 = vld [vmem:[%s10 + $0xc] sm:$0xf]
  %v10564 = vld [vmem:[%s10 + $0x10] sm:$0xf]
  %v10565 = vld [vmem:[%s10 + $0x14] sm:$0xf]
  %v10566 = vld [vmem:[%s10 + $0x18] sm:$0xf]
  %v10567 = vld [vmem:[%s10 + $0x1c] sm:$0xf]
  %v10568 = vld [vmem:[%s10 + $0x20] sm:$0xf]
  %v10569 = vld [vmem:[%s10 + $0x24] sm:$0xf]
  %v10570 = vld [vmem:[%s10 + $0x28] sm:$0xf]
  %v10571 = vld [vmem:[%s10 + $0x2c] sm:$0xf]
  %v10572 = vld [vmem:[%s10 + $0x30] sm:$0xf]
  %v10573 = vld [vmem:[%s10 + $0x34] sm:$0xf]
  %v10574 = vld [vmem:[%s10 + $0x38] sm:$0xf]
  %v10575 = vld [vmem:[%s10 + $0x3c] sm:$0xf]
  %v10576 = vld [vmem:[%s11] sm:$0x1]
  %v10578 = vlaneseq
  %v10579 = vshrl.u32 %v10578, 7
  %v10580 = vsub.s32 0, %v10579
  %v10581 = vrot.slane %v10576, %v10580
  %v10599 = vunpack.c.l.b16 %v10560
  %v10600 = vunpack.c.l.b16 %v10561
  %v10601 = vunpack.c.l.b16 %v10562
  %v10602 = vunpack.c.l.b16 %v10563
  %v10603 = vunpack.c.l.b16 %v10564
  %v10604 = vunpack.c.l.b16 %v10565
  %v10605 = vunpack.c.l.b16 %v10566
  %v10606 = vunpack.c.l.b16 %v10567
  %v10607 = vunpack.c.l.b16 %v10568
  %v10608 = vunpack.c.l.b16 %v10569
  %v10609 = vunpack.c.l.b16 %v10570
  %v10610 = vunpack.c.l.b16 %v10571
  %v10611 = vunpack.c.l.b16 %v10572
  %v10612 = vunpack.c.l.b16 %v10573
  %v10613 = vunpack.c.l.b16 %v10574
  %v10614 = vunpack.c.l.b16 %v10575
  %v10615 = vpack.c.b16 %v10600, %v10599
  %v10616 = vpack.c.b16 %v10602, %v10601
  %v10617 = vpack.c.b16 %v10604, %v10603
  %v10618 = vpack.c.b16 %v10606, %v10605
  %v10619 = vpack.c.b16 %v10608, %v10607
  %v10620 = vpack.c.b16 %v10610, %v10609
  %v10621 = vpack.c.b16 %v10612, %v10611
  %v10622 = vpack.c.b16 %v10614, %v10613
  %10631 = vmatprep.subr.bf16.mxu0 0
  %10632 = vmatpush1.bf16.msra.mxu0 %v10615
  %10633 = vmatprep.subr.bf16.mxu0 0
  %10634 = vmatpush1.bf16.msra.mxu0 %v10616
  %10635 = vmatprep.subr.bf16.mxu0 0
  %10636 = vmatpush1.bf16.msra.mxu0 %v10617
  %10637 = vmatprep.subr.bf16.mxu0 0
  %10638 = vmatpush1.bf16.msra.mxu0 %v10618
  %10639 = vmatprep.subr.bf16.mxu0 0
  %10640 = vmatpush1.bf16.msra.mxu0 %v10619
  %10641 = vmatprep.subr.bf16.mxu0 0
  %10642 = vmatpush1.bf16.msra.mxu0 %v10620
  %10643 = vmatprep.subr.bf16.mxu0 0
  %10644 = vmatpush1.bf16.msra.mxu0 %v10621
  %10645 = vmatprep.subr.bf16.mxu0 0
  %10646 = vmatpush1.bf16.msra.mxu0 %v10622
  %10647 = vmatprep.subr.bf16.mxu0 0
  %10648 = vmatpush1.bf16.msra.mxu0 0
  %10649 = vmatprep.subr.bf16.mxu0 0
  %10650 = vmatpush1.bf16.msra.mxu0 0
  %10651 = vmatprep.subr.bf16.mxu0 0
  %10652 = vmatpush1.bf16.msra.mxu0 0
  %10653 = vmatprep.subr.bf16.mxu0 0
  %10654 = vmatpush1.bf16.msra.mxu0 0
  %10655 = vmatprep.subr.bf16.mxu0 0
  %10656 = vmatpush1.bf16.msra.mxu0 0
  %10657 = vmatprep.subr.bf16.mxu0 0
  %10658 = vmatpush1.bf16.msra.mxu0 0
  %10659 = vmatprep.subr.bf16.mxu0 0
  %10660 = vmatpush1.bf16.msra.mxu0 0
  %10661 = vmatprep.subr.bf16.mxu0 0
  %10662 = vmatpush1.bf16.msra.mxu0 0
  %10663 = vmatprep.mubr.bf16.mxu0 0
  %10664 = vmatmul.mubr.bf16.gmra.mrb[0].mxu0 %v10559
  %v10665 = vpop.f32.mrb[0].mxu0
  %v10666 = vadd.f32 %v10581, %v10665
  %v10667 = vpop.f32.mrb[0].mxu0
  %v10668 = vpop.f32.mrb[0].mxu0
  %v10669 = vadd.f32 %v10581, %v10668
  %v10670 = vpop.f32.mrb[0].mxu0
  %10671 = vdwg.mxu0
  %v10672 = vadd.f32 %v9563, %v10666
  %v10673 = vadd.f32 %v9563, %v10669
  %10674 = vst [vmem:[%s12] sm:$0xff] %v10672
  %10675 = vst [vmem:[%s12 + $0x8] sm:$0xff] %v10673
  %v10676 = vpack.c.bf16 %v10673, %v10672
  %s10677 = scalar_lea.vmem %s4, 256
  %v10678 = vld [vmem:[%s10677] sm:$0xff]
  %v10679 = vld [vmem:[%s10677 + $0x8] sm:$0xff]
  %v10680 = vld [vmem:[%s10677 + $0x10] sm:$0xff]
  %v10681 = vld [vmem:[%s10677 + $0x18] sm:$0xff]
  %v10682 = vld [vmem:[%s10677 + $0x20] sm:$0xff]
  %v10683 = vld [vmem:[%s10677 + $0x28] sm:$0xff]
  %v10684 = vld [vmem:[%s10677 + $0x30] sm:$0xff]
  %v10685 = vld [vmem:[%s10677 + $0x38] sm:$0xff]
  %v10686 = vld [vmem:[%s10677 + $0x40] sm:$0xff]
  %v10687 = vld [vmem:[%s10677 + $0x48] sm:$0xff]
  %v10688 = vld [vmem:[%s10677 + $0x50] sm:$0xff]
  %v10689 = vld [vmem:[%s10677 + $0x58] sm:$0xff]
  %v10690 = vld [vmem:[%s10677 + $0x60] sm:$0xff]
  %v10691 = vld [vmem:[%s10677 + $0x68] sm:$0xff]
  %v10692 = vld [vmem:[%s10677 + $0x70] sm:$0xff]
  %v10693 = vld [vmem:[%s10677 + $0x78] sm:$0xff]
  %v10694 = vld [vmem:[%s10677 + $0x80] sm:$0xff]
  %v10695 = vld [vmem:[%s10677 + $0x88] sm:$0xff]
  %v10696 = vld [vmem:[%s10677 + $0x90] sm:$0xff]
  %v10697 = vld [vmem:[%s10677 + $0x98] sm:$0xff]
  %v10698 = vld [vmem:[%s10677 + $0xa0] sm:$0xff]
  %v10699 = vld [vmem:[%s10677 + $0xa8] sm:$0xff]
  %v10700 = vld [vmem:[%s10677 + $0xb0] sm:$0xff]
  %v10701 = vld [vmem:[%s10677 + $0xb8] sm:$0xff]
  %v10702 = vld [vmem:[%s10677 + $0xc0] sm:$0xff]
  %v10703 = vld [vmem:[%s10677 + $0xc8] sm:$0xff]
  %v10704 = vld [vmem:[%s10677 + $0xd0] sm:$0xff]
  %v10705 = vld [vmem:[%s10677 + $0xd8] sm:$0xff]
  %v10706 = vld [vmem:[%s10677 + $0xe0] sm:$0xff]
  %v10707 = vld [vmem:[%s10677 + $0xe8] sm:$0xff]
  %v10708 = vld [vmem:[%s10677 + $0xf0] sm:$0xff]
  %v10709 = vld [vmem:[%s10677 + $0xf8] sm:$0xff]
  %v10742 = vunpack.c.l.b16 %v10678
  %v10743 = vunpack.c.h.b16 %v10678
  %v10744 = vunpack.c.l.b16 %v10679
  %v10745 = vunpack.c.h.b16 %v10679
  %v10746 = vunpack.c.l.b16 %v10680
  %v10747 = vunpack.c.h.b16 %v10680
  %v10748 = vunpack.c.l.b16 %v10681
  %v10749 = vunpack.c.h.b16 %v10681
  %v10750 = vunpack.c.l.b16 %v10682
  %v10751 = vunpack.c.h.b16 %v10682
  %v10752 = vunpack.c.l.b16 %v10683
  %v10753 = vunpack.c.h.b16 %v10683
  %v10754 = vunpack.c.l.b16 %v10684
  %v10755 = vunpack.c.h.b16 %v10684
  %v10756 = vunpack.c.l.b16 %v10685
  %v10757 = vunpack.c.h.b16 %v10685
  %v10758 = vunpack.c.l.b16 %v10686
  %v10759 = vunpack.c.h.b16 %v10686
  %v10760 = vunpack.c.l.b16 %v10687
  %v10761 = vunpack.c.h.b16 %v10687
  %v10762 = vunpack.c.l.b16 %v10688
  %v10763 = vunpack.c.h.b16 %v10688
  %v10764 = vunpack.c.l.b16 %v10689
  %v10765 = vunpack.c.h.b16 %v10689
  %v10766 = vunpack.c.l.b16 %v10690
  %v10767 = vunpack.c.h.b16 %v10690
  %v10768 = vunpack.c.l.b16 %v10691
  %v10769 = vunpack.c.h.b16 %v10691
  %v10770 = vunpack.c.l.b16 %v10692
  %v10771 = vunpack.c.h.b16 %v10692
  %v10772 = vunpack.c.l.b16 %v10693
  %v10773 = vunpack.c.h.b16 %v10693
  %v10774 = vunpack.c.l.b16 %v10694
  %v10775 = vunpack.c.h.b16 %v10694
  %v10776 = vunpack.c.l.b16 %v10695
  %v10777 = vunpack.c.h.b16 %v10695
  %v10778 = vunpack.c.l.b16 %v10696
  %v10779 = vunpack.c.h.b16 %v10696
  %v10780 = vunpack.c.l.b16 %v10697
  %v10781 = vunpack.c.h.b16 %v10697
  %v10782 = vunpack.c.l.b16 %v10698
  %v10783 = vunpack.c.h.b16 %v10698
  %v10784 = vunpack.c.l.b16 %v10699
  %v10785 = vunpack.c.h.b16 %v10699
  %v10786 = vunpack.c.l.b16 %v10700
  %v10787 = vunpack.c.h.b16 %v10700
  %v10788 = vunpack.c.l.b16 %v10701
  %v10789 = vunpack.c.h.b16 %v10701
  %v10790 = vunpack.c.l.b16 %v10702
  %v10791 = vunpack.c.h.b16 %v10702
  %v10792 = vunpack.c.l.b16 %v10703
  %v10793 = vunpack.c.h.b16 %v10703
  %v10794 = vunpack.c.l.b16 %v10704
  %v10795 = vunpack.c.h.b16 %v10704
  %v10796 = vunpack.c.l.b16 %v10705
  %v10797 = vunpack.c.h.b16 %v10705
  %v10798 = vunpack.c.l.b16 %v10706
  %v10799 = vunpack.c.h.b16 %v10706
  %v10800 = vunpack.c.l.b16 %v10707
  %v10801 = vunpack.c.h.b16 %v10707
  %v10802 = vunpack.c.l.b16 %v10708
  %v10803 = vunpack.c.h.b16 %v10708
  %v10804 = vunpack.c.l.b16 %v10709
  %v10805 = vunpack.c.h.b16 %v10709
  %v10806 = vpack.c.b16 %v10746, %v10742
  %v10807 = vpack.c.b16 %v10747, %v10743
  %v10808 = vpack.c.b16 %v10748, %v10744
  %v10809 = vpack.c.b16 %v10749, %v10745
  %v10810 = vpack.c.b16 %v10754, %v10750
  %v10811 = vpack.c.b16 %v10755, %v10751
  %v10812 = vpack.c.b16 %v10756, %v10752
  %v10813 = vpack.c.b16 %v10757, %v10753
  %v10814 = vpack.c.b16 %v10762, %v10758
  %v10815 = vpack.c.b16 %v10763, %v10759
  %v10816 = vpack.c.b16 %v10764, %v10760
  %v10817 = vpack.c.b16 %v10765, %v10761
  %v10818 = vpack.c.b16 %v10770, %v10766
  %v10819 = vpack.c.b16 %v10771, %v10767
  %v10820 = vpack.c.b16 %v10772, %v10768
  %v10821 = vpack.c.b16 %v10773, %v10769
  %v10822 = vpack.c.b16 %v10778, %v10774
  %v10823 = vpack.c.b16 %v10779, %v10775
  %v10824 = vpack.c.b16 %v10780, %v10776
  %v10825 = vpack.c.b16 %v10781, %v10777
  %v10826 = vpack.c.b16 %v10786, %v10782
  %v10827 = vpack.c.b16 %v10787, %v10783
  %v10828 = vpack.c.b16 %v10788, %v10784
  %v10829 = vpack.c.b16 %v10789, %v10785
  %v10830 = vpack.c.b16 %v10794, %v10790
  %v10831 = vpack.c.b16 %v10795, %v10791
  %v10832 = vpack.c.b16 %v10796, %v10792
  %v10833 = vpack.c.b16 %v10797, %v10793
  %v10834 = vpack.c.b16 %v10802, %v10798
  %v10835 = vpack.c.b16 %v10803, %v10799
  %v10836 = vpack.c.b16 %v10804, %v10800
  %v10837 = vpack.c.b16 %v10805, %v10801
  %10870 = vmatprep.subr.bf16.mxu0 %v10807
  %10871 = vmatpush1.bf16.msra.mxu0 %v10806
  %10872 = vmatprep.subr.bf16.mxu0 %v10811
  %10873 = vmatpush1.bf16.msra.mxu0 %v10810
  %10874 = vmatprep.subr.bf16.mxu0 %v10815
  %10875 = vmatpush1.bf16.msra.mxu0 %v10814
  %10876 = vmatprep.subr.bf16.mxu0 %v10819
  %10877 = vmatpush1.bf16.msra.mxu0 %v10818
  %10878 = vmatprep.subr.bf16.mxu0 %v10823
  %10879 = vmatpush1.bf16.msra.mxu0 %v10822
  %10880 = vmatprep.subr.bf16.mxu0 %v10827
  %10881 = vmatpush1.bf16.msra.mxu0 %v10826
  %10882 = vmatprep.subr.bf16.mxu0 %v10831
  %10883 = vmatpush1.bf16.msra.mxu0 %v10830
  %10884 = vmatprep.subr.bf16.mxu0 %v10835
  %10885 = vmatpush1.bf16.msra.mxu0 %v10834
  %10886 = vmatprep.subr.bf16.mxu0 0
  %10887 = vmatpush1.bf16.msra.mxu0 0
  %10888 = vmatprep.subr.bf16.mxu0 0
  %10889 = vmatpush1.bf16.msra.mxu0 0
  %10890 = vmatprep.subr.bf16.mxu0 0
  %10891 = vmatpush1.bf16.msra.mxu0 0
  %10892 = vmatprep.subr.bf16.mxu0 0
  %10893 = vmatpush1.bf16.msra.mxu0 0
  %10894 = vmatprep.subr.bf16.mxu0 0
  %10895 = vmatpush1.bf16.msra.mxu0 0
  %10896 = vmatprep.subr.bf16.mxu0 0
  %10897 = vmatpush1.bf16.msra.mxu0 0
  %10898 = vmatprep.subr.bf16.mxu0 0
  %10899 = vmatpush1.bf16.msra.mxu0 0
  %10900 = vmatprep.subr.bf16.mxu0 0
  %10901 = vmatpush1.bf16.msra.mxu0 0
  %10902 = vmatprep.mubr.bf16.mxu0 0
  %10903 = vmatmul.mubr.bf16.gmra.mrb[0].mxu0 %v10676
  %v10904 = vpop.f32.mrb[0].mxu0
  %v10905 = vadd.f32 0.0, %v10904
  %v10906 = vpop.f32.mrb[0].mxu0
  %v10907 = vadd.f32 0.0, %v10906
  %v10908 = vpop.f32.mrb[0].mxu0
  %v10909 = vadd.f32 0.0, %v10908
  %v10910 = vpop.f32.mrb[0].mxu0
  %v10911 = vadd.f32 0.0, %v10910
  %10912 = vdwg.mxu0
  %10913 = vmatprep.subr.bf16.mxu0 %v10809
  %10914 = vmatpush1.bf16.msra.mxu0 %v10808
  %10915 = vmatprep.subr.bf16.mxu0 %v10813
  %10916 = vmatpush1.bf16.msra.mxu0 %v10812
  %10917 = vmatprep.subr.bf16.mxu0 %v10817
  %10918 = vmatpush1.bf16.msra.mxu0 %v10816
  %10919 = vmatprep.subr.bf16.mxu0 %v10821
  %10920 = vmatpush1.bf16.msra.mxu0 %v10820
  %10921 = vmatprep.subr.bf16.mxu0 %v10825
  %10922 = vmatpush1.bf16.msra.mxu0 %v10824
  %10923 = vmatprep.subr.bf16.mxu0 %v10829
  %10924 = vmatpush1.bf16.msra.mxu0 %v10828
  %10925 = vmatprep.subr.bf16.mxu0 %v10833
  %10926 = vmatpush1.bf16.msra.mxu0 %v10832
  %10927 = vmatprep.subr.bf16.mxu0 %v10837
  %10928 = vmatpush1.bf16.msra.mxu0 %v10836
  %10929 = vmatprep.subr.bf16.mxu0 0
  %10930 = vmatpush1.bf16.msra.mxu0 0
  %10931 = vmatprep.subr.bf16.mxu0 0
  %10932 = vmatpush1.bf16.msra.mxu0 0
  %10933 = vmatprep.subr.bf16.mxu0 0
  %10934 = vmatpush1.bf16.msra.mxu0 0
  %10935 = vmatprep.subr.bf16.mxu0 0
  %10936 = vmatpush1.bf16.msra.mxu0 0
  %10937 = vmatprep.subr.bf16.mxu0 0
  %10938 = vmatpush1.bf16.msra.mxu0 0
  %10939 = vmatprep.subr.bf16.mxu0 0
  %10940 = vmatpush1.bf16.msra.mxu0 0
  %10941 = vmatprep.subr.bf16.mxu0 0
  %10942 = vmatpush1.bf16.msra.mxu0 0
  %10943 = vmatprep.subr.bf16.mxu0 0
  %10944 = vmatpush1.bf16.msra.mxu0 0
  %10945 = vmatprep.mubr.bf16.mxu0 0
  %10946 = vmatmul.mubr.bf16.gmra.mrb[0].mxu0 %v10676
  %v10947 = vpop.f32.mrb[0].mxu0
  %v10948 = vadd.f32 0.0, %v10947
  %v10949 = vpop.f32.mrb[0].mxu0
  %v10950 = vadd.f32 0.0, %v10949
  %v10951 = vpop.f32.mrb[0].mxu0
  %v10952 = vadd.f32 0.0, %v10951
  %v10953 = vpop.f32.mrb[0].mxu0
  %v10954 = vadd.f32 0.0, %v10953
  %10955 = vdwg.mxu0
  %v10956 = vadd.f32 %v9016, %v10905
  %v10957 = vadd.f32 %v9018, %v10907
  %v10958 = vadd.f32 %v9188, %v10948
  %v10959 = vadd.f32 %v9190, %v10950
  %v10960 = vadd.f32 %v9020, %v10909
  %v10961 = vadd.f32 %v9022, %v10911
  %v10962 = vadd.f32 %v9192, %v10952
  %v10963 = vadd.f32 %v9194, %v10954
  %s10964 = scalar_lea.vmem %s5, 4
  %v10965 = vld [vmem:[%s10964] sm:$0xf]
  %v10967 = vlaneseq
  %v10968 = vshrl.u32 %v10967, 7
  %v10969 = vsub.s32 0, %v10968
  %v10970 = vrot.slane %v10965, %v10969
  %v10971 = vlaneseq
  %v10972 = vshrl.u32 %v10971, 7
  %v10973 = vsub.s32 1, %v10972
  %v10974 = vrot.slane %v10965, %v10973
  %v10975 = vlaneseq
  %v10976 = vshrl.u32 %v10975, 7
  %v10977 = vsub.s32 2, %v10976
  %v10978 = vrot.slane %v10965, %v10977
  %v10979 = vlaneseq
  %v10980 = vshrl.u32 %v10979, 7
  %v10981 = vsub.s32 3, %v10980
  %v10982 = vrot.slane %v10965, %v10981
  %v10987 = vadd.f32 %v10956, %v10970
  %v10988 = vadd.f32 %v10957, %v10974
  %v10989 = vadd.f32 %v10958, %v10978
  %v10990 = vadd.f32 %v10959, %v10982
  %v10991 = vadd.f32 %v10960, %v10970
  %v10992 = vadd.f32 %v10961, %v10974
  %v10993 = vadd.f32 %v10962, %v10978
  %v10994 = vadd.f32 %v10963, %v10982
  %v10995 = vmax.f32 %v10987, 0.0
  %v10996 = vmax.f32 %v10988, 0.0
  %v10997 = vmax.f32 %v10989, 0.0
  %v10998 = vmax.f32 %v10990, 0.0
  %v10999 = vmax.f32 %v10991, 0.0
  %v11000 = vmax.f32 %v10992, 0.0
  %v11001 = vmax.f32 %v10993, 0.0
  %v11002 = vmax.f32 %v10994, 0.0
  %v11003 = vpack.c.bf16 %v10999, %v10995
  %v11004 = vpack.c.bf16 %v11000, %v10996
  %v11005 = vpack.c.bf16 %v11001, %v10997
  %v11006 = vpack.c.bf16 %v11002, %v10998
  %s11007 = scalar_lea.vmem %s6, 512
  %v11008 = vld [vmem:[%s11007] sm:$0xff]
  %v11009 = vld [vmem:[%s11007 + $0x8] sm:$0xff]
  %v11010 = vld [vmem:[%s11007 + $0x10] sm:$0xff]
  %v11011 = vld [vmem:[%s11007 + $0x18] sm:$0xff]
  %v11012 = vld [vmem:[%s11007 + $0x20] sm:$0xff]
  %v11013 = vld [vmem:[%s11007 + $0x28] sm:$0xff]
  %v11014 = vld [vmem:[%s11007 + $0x30] sm:$0xff]
  %v11015 = vld [vmem:[%s11007 + $0x38] sm:$0xff]
  %v11016 = vld [vmem:[%s11007 + $0x40] sm:$0xff]
  %v11017 = vld [vmem:[%s11007 + $0x48] sm:$0xff]
  %v11018 = vld [vmem:[%s11007 + $0x50] sm:$0xff]
  %v11019 = vld [vmem:[%s11007 + $0x58] sm:$0xff]
  %v11020 = vld [vmem:[%s11007 + $0x60] sm:$0xff]
  %v11021 = vld [vmem:[%s11007 + $0x68] sm:$0xff]
  %v11022 = vld [vmem:[%s11007 + $0x70] sm:$0xff]
  %v11023 = vld [vmem:[%s11007 + $0x78] sm:$0xff]
  %v11024 = vld [vmem:[%s11007 + $0x80] sm:$0xff]
  %v11025 = vld [vmem:[%s11007 + $0x88] sm:$0xff]
  %v11026 = vld [vmem:[%s11007 + $0x90] sm:$0xff]
  %v11027 = vld [vmem:[%s11007 + $0x98] sm:$0xff]
  %v11028 = vld [vmem:[%s11007 + $0xa0] sm:$0xff]
  %v11029 = vld [vmem:[%s11007 + $0xa8] sm:$0xff]
  %v11030 = vld [vmem:[%s11007 + $0xb0] sm:$0xff]
  %v11031 = vld [vmem:[%s11007 + $0xb8] sm:$0xff]
  %v11032 = vld [vmem:[%s11007 + $0xc0] sm:$0xff]
  %v11033 = vld [vmem:[%s11007 + $0xc8] sm:$0xff]
  %v11034 = vld [vmem:[%s11007 + $0xd0] sm:$0xff]
  %v11035 = vld [vmem:[%s11007 + $0xd8] sm:$0xff]
  %v11036 = vld [vmem:[%s11007 + $0xe0] sm:$0xff]
  %v11037 = vld [vmem:[%s11007 + $0xe8] sm:$0xff]
  %v11038 = vld [vmem:[%s11007 + $0xf0] sm:$0xff]
  %v11039 = vld [vmem:[%s11007 + $0xf8] sm:$0xff]
  %v11040 = vld [vmem:[%s11007 + $0x100] sm:$0xff]
  %v11041 = vld [vmem:[%s11007 + $0x108] sm:$0xff]
  %v11042 = vld [vmem:[%s11007 + $0x110] sm:$0xff]
  %v11043 = vld [vmem:[%s11007 + $0x118] sm:$0xff]
  %v11044 = vld [vmem:[%s11007 + $0x120] sm:$0xff]
  %v11045 = vld [vmem:[%s11007 + $0x128] sm:$0xff]
  %v11046 = vld [vmem:[%s11007 + $0x130] sm:$0xff]
  %v11047 = vld [vmem:[%s11007 + $0x138] sm:$0xff]
  %v11048 = vld [vmem:[%s11007 + $0x140] sm:$0xff]
  %v11049 = vld [vmem:[%s11007 + $0x148] sm:$0xff]
  %v11050 = vld [vmem:[%s11007 + $0x150] sm:$0xff]
  %v11051 = vld [vmem:[%s11007 + $0x158] sm:$0xff]
  %v11052 = vld [vmem:[%s11007 + $0x160] sm:$0xff]
  %v11053 = vld [vmem:[%s11007 + $0x168] sm:$0xff]
  %v11054 = vld [vmem:[%s11007 + $0x170] sm:$0xff]
  %v11055 = vld [vmem:[%s11007 + $0x178] sm:$0xff]
  %v11056 = vld [vmem:[%s11007 + $0x180] sm:$0xff]
  %v11057 = vld [vmem:[%s11007 + $0x188] sm:$0xff]
  %v11058 = vld [vmem:[%s11007 + $0x190] sm:$0xff]
  %v11059 = vld [vmem:[%s11007 + $0x198] sm:$0xff]
  %v11060 = vld [vmem:[%s11007 + $0x1a0] sm:$0xff]
  %v11061 = vld [vmem:[%s11007 + $0x1a8] sm:$0xff]
  %v11062 = vld [vmem:[%s11007 + $0x1b0] sm:$0xff]
  %v11063 = vld [vmem:[%s11007 + $0x1b8] sm:$0xff]
  %v11064 = vld [vmem:[%s11007 + $0x1c0] sm:$0xff]
  %v11065 = vld [vmem:[%s11007 + $0x1c8] sm:$0xff]
  %v11066 = vld [vmem:[%s11007 + $0x1d0] sm:$0xff]
  %v11067 = vld [vmem:[%s11007 + $0x1d8] sm:$0xff]
  %v11068 = vld [vmem:[%s11007 + $0x1e0] sm:$0xff]
  %v11069 = vld [vmem:[%s11007 + $0x1e8] sm:$0xff]
  %v11070 = vld [vmem:[%s11007 + $0x1f0] sm:$0xff]
  %v11071 = vld [vmem:[%s11007 + $0x1f8] sm:$0xff]
  %s11072 = scalar_lea.vmem %s7, 2
  %v11073 = vld [vmem:[%s11072] sm:$0x3]
  %v11075 = vlaneseq
  %v11076 = vshrl.u32 %v11075, 7
  %v11077 = vsub.s32 0, %v11076
  %v11078 = vrot.slane %v11073, %v11077
  %v11079 = vlaneseq
  %v11080 = vshrl.u32 %v11079, 7
  %v11081 = vsub.s32 1, %v11080
  %v11082 = vrot.slane %v11073, %v11081
  %v11149 = vunpack.c.l.b16 %v11008
  %v11150 = vunpack.c.h.b16 %v11008
  %v11151 = vunpack.c.l.b16 %v11009
  %v11152 = vunpack.c.h.b16 %v11009
  %v11153 = vunpack.c.l.b16 %v11010
  %v11154 = vunpack.c.h.b16 %v11010
  %v11155 = vunpack.c.l.b16 %v11011
  %v11156 = vunpack.c.h.b16 %v11011
  %v11157 = vunpack.c.l.b16 %v11012
  %v11158 = vunpack.c.h.b16 %v11012
  %v11159 = vunpack.c.l.b16 %v11013
  %v11160 = vunpack.c.h.b16 %v11013
  %v11161 = vunpack.c.l.b16 %v11014
  %v11162 = vunpack.c.h.b16 %v11014
  %v11163 = vunpack.c.l.b16 %v11015
  %v11164 = vunpack.c.h.b16 %v11015
  %v11165 = vunpack.c.l.b16 %v11016
  %v11166 = vunpack.c.h.b16 %v11016
  %v11167 = vunpack.c.l.b16 %v11017
  %v11168 = vunpack.c.h.b16 %v11017
  %v11169 = vunpack.c.l.b16 %v11018
  %v11170 = vunpack.c.h.b16 %v11018
  %v11171 = vunpack.c.l.b16 %v11019
  %v11172 = vunpack.c.h.b16 %v11019
  %v11173 = vunpack.c.l.b16 %v11020
  %v11174 = vunpack.c.h.b16 %v11020
  %v11175 = vunpack.c.l.b16 %v11021
  %v11176 = vunpack.c.h.b16 %v11021
  %v11177 = vunpack.c.l.b16 %v11022
  %v11178 = vunpack.c.h.b16 %v11022
  %v11179 = vunpack.c.l.b16 %v11023
  %v11180 = vunpack.c.h.b16 %v11023
  %v11181 = vunpack.c.l.b16 %v11024
  %v11182 = vunpack.c.h.b16 %v11024
  %v11183 = vunpack.c.l.b16 %v11025
  %v11184 = vunpack.c.h.b16 %v11025
  %v11185 = vunpack.c.l.b16 %v11026
  %v11186 = vunpack.c.h.b16 %v11026
  %v11187 = vunpack.c.l.b16 %v11027
  %v11188 = vunpack.c.h.b16 %v11027
  %v11189 = vunpack.c.l.b16 %v11028
  %v11190 = vunpack.c.h.b16 %v11028
  %v11191 = vunpack.c.l.b16 %v11029
  %v11192 = vunpack.c.h.b16 %v11029
  %v11193 = vunpack.c.l.b16 %v11030
  %v11194 = vunpack.c.h.b16 %v11030
  %v11195 = vunpack.c.l.b16 %v11031
  %v11196 = vunpack.c.h.b16 %v11031
  %v11197 = vunpack.c.l.b16 %v11032
  %v11198 = vunpack.c.h.b16 %v11032
  %v11199 = vunpack.c.l.b16 %v11033
  %v11200 = vunpack.c.h.b16 %v11033
  %v11201 = vunpack.c.l.b16 %v11034
  %v11202 = vunpack.c.h.b16 %v11034
  %v11203 = vunpack.c.l.b16 %v11035
  %v11204 = vunpack.c.h.b16 %v11035
  %v11205 = vunpack.c.l.b16 %v11036
  %v11206 = vunpack.c.h.b16 %v11036
  %v11207 = vunpack.c.l.b16 %v11037
  %v11208 = vunpack.c.h.b16 %v11037
  %v11209 = vunpack.c.l.b16 %v11038
  %v11210 = vunpack.c.h.b16 %v11038
  %v11211 = vunpack.c.l.b16 %v11039
  %v11212 = vunpack.c.h.b16 %v11039
  %v11213 = vunpack.c.l.b16 %v11040
  %v11214 = vunpack.c.h.b16 %v11040
  %v11215 = vunpack.c.l.b16 %v11041
  %v11216 = vunpack.c.h.b16 %v11041
  %v11217 = vunpack.c.l.b16 %v11042
  %v11218 = vunpack.c.h.b16 %v11042
  %v11219 = vunpack.c.l.b16 %v11043
  %v11220 = vunpack.c.h.b16 %v11043
  %v11221 = vunpack.c.l.b16 %v11044
  %v11222 = vunpack.c.h.b16 %v11044
  %v11223 = vunpack.c.l.b16 %v11045
  %v11224 = vunpack.c.h.b16 %v11045
  %v11225 = vunpack.c.l.b16 %v11046
  %v11226 = vunpack.c.h.b16 %v11046
  %v11227 = vunpack.c.l.b16 %v11047
  %v11228 = vunpack.c.h.b16 %v11047
  %v11229 = vunpack.c.l.b16 %v11048
  %v11230 = vunpack.c.h.b16 %v11048
  %v11231 = vunpack.c.l.b16 %v11049
  %v11232 = vunpack.c.h.b16 %v11049
  %v11233 = vunpack.c.l.b16 %v11050
  %v11234 = vunpack.c.h.b16 %v11050
  %v11235 = vunpack.c.l.b16 %v11051
  %v11236 = vunpack.c.h.b16 %v11051
  %v11237 = vunpack.c.l.b16 %v11052
  %v11238 = vunpack.c.h.b16 %v11052
  %v11239 = vunpack.c.l.b16 %v11053
  %v11240 = vunpack.c.h.b16 %v11053
  %v11241 = vunpack.c.l.b16 %v11054
  %v11242 = vunpack.c.h.b16 %v11054
  %v11243 = vunpack.c.l.b16 %v11055
  %v11244 = vunpack.c.h.b16 %v11055
  %v11245 = vunpack.c.l.b16 %v11056
  %v11246 = vunpack.c.h.b16 %v11056
  %v11247 = vunpack.c.l.b16 %v11057
  %v11248 = vunpack.c.h.b16 %v11057
  %v11249 = vunpack.c.l.b16 %v11058
  %v11250 = vunpack.c.h.b16 %v11058
  %v11251 = vunpack.c.l.b16 %v11059
  %v11252 = vunpack.c.h.b16 %v11059
  %v11253 = vunpack.c.l.b16 %v11060
  %v11254 = vunpack.c.h.b16 %v11060
  %v11255 = vunpack.c.l.b16 %v11061
  %v11256 = vunpack.c.h.b16 %v11061
  %v11257 = vunpack.c.l.b16 %v11062
  %v11258 = vunpack.c.h.b16 %v11062
  %v11259 = vunpack.c.l.b16 %v11063
  %v11260 = vunpack.c.h.b16 %v11063
  %v11261 = vunpack.c.l.b16 %v11064
  %v11262 = vunpack.c.h.b16 %v11064
  %v11263 = vunpack.c.l.b16 %v11065
  %v11264 = vunpack.c.h.b16 %v11065
  %v11265 = vunpack.c.l.b16 %v11066
  %v11266 = vunpack.c.h.b16 %v11066
  %v11267 = vunpack.c.l.b16 %v11067
  %v11268 = vunpack.c.h.b16 %v11067
  %v11269 = vunpack.c.l.b16 %v11068
  %v11270 = vunpack.c.h.b16 %v11068
  %v11271 = vunpack.c.l.b16 %v11069
  %v11272 = vunpack.c.h.b16 %v11069
  %v11273 = vunpack.c.l.b16 %v11070
  %v11274 = vunpack.c.h.b16 %v11070
  %v11275 = vunpack.c.l.b16 %v11071
  %v11276 = vunpack.c.h.b16 %v11071
  %v11277 = vpack.c.b16 %v11151, %v11149
  %v11278 = vpack.c.b16 %v11152, %v11150
  %v11279 = vpack.c.b16 %v11155, %v11153
  %v11280 = vpack.c.b16 %v11156, %v11154
  %v11281 = vpack.c.b16 %v11159, %v11157
  %v11282 = vpack.c.b16 %v11160, %v11158
  %v11283 = vpack.c.b16 %v11163, %v11161
  %v11284 = vpack.c.b16 %v11164, %v11162
  %v11285 = vpack.c.b16 %v11167, %v11165
  %v11286 = vpack.c.b16 %v11168, %v11166
  %v11287 = vpack.c.b16 %v11171, %v11169
  %v11288 = vpack.c.b16 %v11172, %v11170
  %v11289 = vpack.c.b16 %v11175, %v11173
  %v11290 = vpack.c.b16 %v11176, %v11174
  %v11291 = vpack.c.b16 %v11179, %v11177
  %v11292 = vpack.c.b16 %v11180, %v11178
  %v11293 = vpack.c.b16 %v11183, %v11181
  %v11294 = vpack.c.b16 %v11184, %v11182
  %v11295 = vpack.c.b16 %v11187, %v11185
  %v11296 = vpack.c.b16 %v11188, %v11186
  %v11297 = vpack.c.b16 %v11191, %v11189
  %v11298 = vpack.c.b16 %v11192, %v11190
  %v11299 = vpack.c.b16 %v11195, %v11193
  %v11300 = vpack.c.b16 %v11196, %v11194
  %v11301 = vpack.c.b16 %v11199, %v11197
  %v11302 = vpack.c.b16 %v11200, %v11198
  %v11303 = vpack.c.b16 %v11203, %v11201
  %v11304 = vpack.c.b16 %v11204, %v11202
  %v11305 = vpack.c.b16 %v11207, %v11205
  %v11306 = vpack.c.b16 %v11208, %v11206
  %v11307 = vpack.c.b16 %v11211, %v11209
  %v11308 = vpack.c.b16 %v11212, %v11210
  %v11309 = vpack.c.b16 %v11215, %v11213
  %v11310 = vpack.c.b16 %v11216, %v11214
  %v11311 = vpack.c.b16 %v11219, %v11217
  %v11312 = vpack.c.b16 %v11220, %v11218
  %v11313 = vpack.c.b16 %v11223, %v11221
  %v11314 = vpack.c.b16 %v11224, %v11222
  %v11315 = vpack.c.b16 %v11227, %v11225
  %v11316 = vpack.c.b16 %v11228, %v11226
  %v11317 = vpack.c.b16 %v11231, %v11229
  %v11318 = vpack.c.b16 %v11232, %v11230
  %v11319 = vpack.c.b16 %v11235, %v11233
  %v11320 = vpack.c.b16 %v11236, %v11234
  %v11321 = vpack.c.b16 %v11239, %v11237
  %v11322 = vpack.c.b16 %v11240, %v11238
  %v11323 = vpack.c.b16 %v11243, %v11241
  %v11324 = vpack.c.b16 %v11244, %v11242
  %v11325 = vpack.c.b16 %v11247, %v11245
  %v11326 = vpack.c.b16 %v11248, %v11246
  %v11327 = vpack.c.b16 %v11251, %v11249
  %v11328 = vpack.c.b16 %v11252, %v11250
  %v11329 = vpack.c.b16 %v11255, %v11253
  %v11330 = vpack.c.b16 %v11256, %v11254
  %v11331 = vpack.c.b16 %v11259, %v11257
  %v11332 = vpack.c.b16 %v11260, %v11258
  %v11333 = vpack.c.b16 %v11263, %v11261
  %v11334 = vpack.c.b16 %v11264, %v11262
  %v11335 = vpack.c.b16 %v11267, %v11265
  %v11336 = vpack.c.b16 %v11268, %v11266
  %v11337 = vpack.c.b16 %v11271, %v11269
  %v11338 = vpack.c.b16 %v11272, %v11270
  %v11339 = vpack.c.b16 %v11275, %v11273
  %v11340 = vpack.c.b16 %v11276, %v11274
  %11405 = vmatprep.subr.bf16.mxu0 %v11278
  %11406 = vmatpush1.bf16.msra.mxu0 %v11277
  %11407 = vmatprep.subr.bf16.mxu0 %v11280
  %11408 = vmatpush1.bf16.msra.mxu0 %v11279
  %11409 = vmatprep.subr.bf16.mxu0 %v11282
  %11410 = vmatpush1.bf16.msra.mxu0 %v11281
  %11411 = vmatprep.subr.bf16.mxu0 %v11284
  %11412 = vmatpush1.bf16.msra.mxu0 %v11283
  %11413 = vmatprep.subr.bf16.mxu0 %v11286
  %11414 = vmatpush1.bf16.msra.mxu0 %v11285
  %11415 = vmatprep.subr.bf16.mxu0 %v11288
  %11416 = vmatpush1.bf16.msra.mxu0 %v11287
  %11417 = vmatprep.subr.bf16.mxu0 %v11290
  %11418 = vmatpush1.bf16.msra.mxu0 %v11289
  %11419 = vmatprep.subr.bf16.mxu0 %v11292
  %11420 = vmatpush1.bf16.msra.mxu0 %v11291
  %11421 = vmatprep.subr.bf16.mxu0 %v11294
  %11422 = vmatpush1.bf16.msra.mxu0 %v11293
  %11423 = vmatprep.subr.bf16.mxu0 %v11296
  %11424 = vmatpush1.bf16.msra.mxu0 %v11295
  %11425 = vmatprep.subr.bf16.mxu0 %v11298
  %11426 = vmatpush1.bf16.msra.mxu0 %v11297
  %11427 = vmatprep.subr.bf16.mxu0 %v11300
  %11428 = vmatpush1.bf16.msra.mxu0 %v11299
  %11429 = vmatprep.subr.bf16.mxu0 %v11302
  %11430 = vmatpush1.bf16.msra.mxu0 %v11301
  %11431 = vmatprep.subr.bf16.mxu0 %v11304
  %11432 = vmatpush1.bf16.msra.mxu0 %v11303
  %11433 = vmatprep.subr.bf16.mxu0 %v11306
  %11434 = vmatpush1.bf16.msra.mxu0 %v11305
  %11435 = vmatprep.subr.bf16.mxu0 %v11308
  %11436 = vmatpush1.bf16.msra.mxu0 %v11307
  %11437 = vmatprep.mubr.bf16.mxu0 %v11004
  %11438 = vmatmul.mubr.bf16.gmra.mrb[0].mxu0 %v11003
  %v11439 = vpop.f32.mrb[0].mxu0
  %v11440 = vadd.f32 %v11078, %v11439
  %v11441 = vpop.f32.mrb[0].mxu0
  %v11442 = vadd.f32 %v11082, %v11441
  %v11443 = vpop.f32.mrb[0].mxu0
  %v11444 = vadd.f32 %v11078, %v11443
  %v11445 = vpop.f32.mrb[0].mxu0
  %v11446 = vadd.f32 %v11082, %v11445
  %11447 = vdwg.mxu0
  %11448 = vmatprep.subr.bf16.mxu0 %v11310
  %11449 = vmatpush1.bf16.msra.mxu0 %v11309
  %11450 = vmatprep.subr.bf16.mxu0 %v11312
  %11451 = vmatpush1.bf16.msra.mxu0 %v11311
  %11452 = vmatprep.subr.bf16.mxu0 %v11314
  %11453 = vmatpush1.bf16.msra.mxu0 %v11313
  %11454 = vmatprep.subr.bf16.mxu0 %v11316
  %11455 = vmatpush1.bf16.msra.mxu0 %v11315
  %11456 = vmatprep.subr.bf16.mxu0 %v11318
  %11457 = vmatpush1.bf16.msra.mxu0 %v11317
  %11458 = vmatprep.subr.bf16.mxu0 %v11320
  %11459 = vmatpush1.bf16.msra.mxu0 %v11319
  %11460 = vmatprep.subr.bf16.mxu0 %v11322
  %11461 = vmatpush1.bf16.msra.mxu0 %v11321
  %11462 = vmatprep.subr.bf16.mxu0 %v11324
  %11463 = vmatpush1.bf16.msra.mxu0 %v11323
  %11464 = vmatprep.subr.bf16.mxu0 %v11326
  %11465 = vmatpush1.bf16.msra.mxu0 %v11325
  %11466 = vmatprep.subr.bf16.mxu0 %v11328
  %11467 = vmatpush1.bf16.msra.mxu0 %v11327
  %11468 = vmatprep.subr.bf16.mxu0 %v11330
  %11469 = vmatpush1.bf16.msra.mxu0 %v11329
  %11470 = vmatprep.subr.bf16.mxu0 %v11332
  %11471 = vmatpush1.bf16.msra.mxu0 %v11331
  %11472 = vmatprep.subr.bf16.mxu0 %v11334
  %11473 = vmatpush1.bf16.msra.mxu0 %v11333
  %11474 = vmatprep.subr.bf16.mxu0 %v11336
  %11475 = vmatpush1.bf16.msra.mxu0 %v11335
  %11476 = vmatprep.subr.bf16.mxu0 %v11338
  %11477 = vmatpush1.bf16.msra.mxu0 %v11337
  %11478 = vmatprep.subr.bf16.mxu0 %v11340
  %11479 = vmatpush1.bf16.msra.mxu0 %v11339
  %11480 = vmatprep.mubr.bf16.mxu0 %v11006
  %11481 = vmatmul.mubr.bf16.gmra.mrb[0].mxu0 %v11005
  %v11482 = vpop.f32.mrb[0].mxu0
  %v11483 = vadd.f32 %v11440, %v11482
  %v11484 = vpop.f32.mrb[0].mxu0
  %v11485 = vadd.f32 %v11442, %v11484
  %v11486 = vpop.f32.mrb[0].mxu0
  %v11487 = vadd.f32 %v11444, %v11486
  %v11488 = vpop.f32.mrb[0].mxu0
  %v11489 = vadd.f32 %v11446, %v11488
  %11490 = vdwg.mxu0
  %v11491 = vmax.f32 %v11483, 0.0
  %v11492 = vmax.f32 %v11485, 0.0
  %v11493 = vmax.f32 %v11487, 0.0
  %v11494 = vmax.f32 %v11489, 0.0
  %v11495 = vpack.c.bf16 %v11493, %v11491
  %v11496 = vpack.c.bf16 %v11494, %v11492
  %s11497 = scalar_lea.vmem %s8, 128
  %v11498 = vld [vmem:[%s11497] sm:$0xf]
  %v11499 = vld [vmem:[%s11497 + $0x4] sm:$0xf]
  %v11500 = vld [vmem:[%s11497 + $0x8] sm:$0xf]
  %v11501 = vld [vmem:[%s11497 + $0xc] sm:$0xf]
  %v11502 = vld [vmem:[%s11497 + $0x10] sm:$0xf]
  %v11503 = vld [vmem:[%s11497 + $0x14] sm:$0xf]
  %v11504 = vld [vmem:[%s11497 + $0x18] sm:$0xf]
  %v11505 = vld [vmem:[%s11497 + $0x1c] sm:$0xf]
  %v11506 = vld [vmem:[%s11497 + $0x20] sm:$0xf]
  %v11507 = vld [vmem:[%s11497 + $0x24] sm:$0xf]
  %v11508 = vld [vmem:[%s11497 + $0x28] sm:$0xf]
  %v11509 = vld [vmem:[%s11497 + $0x2c] sm:$0xf]
  %v11510 = vld [vmem:[%s11497 + $0x30] sm:$0xf]
  %v11511 = vld [vmem:[%s11497 + $0x34] sm:$0xf]
  %v11512 = vld [vmem:[%s11497 + $0x38] sm:$0xf]
  %v11513 = vld [vmem:[%s11497 + $0x3c] sm:$0xf]
  %v11514 = vld [vmem:[%s11497 + $0x40] sm:$0xf]
  %v11515 = vld [vmem:[%s11497 + $0x44] sm:$0xf]
  %v11516 = vld [vmem:[%s11497 + $0x48] sm:$0xf]
  %v11517 = vld [vmem:[%s11497 + $0x4c] sm:$0xf]
  %v11518 = vld [vmem:[%s11497 + $0x50] sm:$0xf]
  %v11519 = vld [vmem:[%s11497 + $0x54] sm:$0xf]
  %v11520 = vld [vmem:[%s11497 + $0x58] sm:$0xf]
  %v11521 = vld [vmem:[%s11497 + $0x5c] sm:$0xf]
  %v11522 = vld [vmem:[%s11497 + $0x60] sm:$0xf]
  %v11523 = vld [vmem:[%s11497 + $0x64] sm:$0xf]
  %v11524 = vld [vmem:[%s11497 + $0x68] sm:$0xf]
  %v11525 = vld [vmem:[%s11497 + $0x6c] sm:$0xf]
  %v11526 = vld [vmem:[%s11497 + $0x70] sm:$0xf]
  %v11527 = vld [vmem:[%s11497 + $0x74] sm:$0xf]
  %v11528 = vld [vmem:[%s11497 + $0x78] sm:$0xf]
  %v11529 = vld [vmem:[%s11497 + $0x7c] sm:$0xf]
  %s11530 = scalar_lea.vmem %s9, 1
  %v11531 = vld [vmem:[%s11530] sm:$0x1]
  %v11533 = vlaneseq
  %v11534 = vshrl.u32 %v11533, 7
  %v11535 = vsub.s32 0, %v11534
  %v11536 = vrot.slane %v11531, %v11535
  %v11570 = vunpack.c.l.b16 %v11498
  %v11571 = vunpack.c.l.b16 %v11499
  %v11572 = vunpack.c.l.b16 %v11500
  %v11573 = vunpack.c.l.b16 %v11501
  %v11574 = vunpack.c.l.b16 %v11502
  %v11575 = vunpack.c.l.b16 %v11503
  %v11576 = vunpack.c.l.b16 %v11504
  %v11577 = vunpack.c.l.b16 %v11505
  %v11578 = vunpack.c.l.b16 %v11506
  %v11579 = vunpack.c.l.b16 %v11507
  %v11580 = vunpack.c.l.b16 %v11508
  %v11581 = vunpack.c.l.b16 %v11509
  %v11582 = vunpack.c.l.b16 %v11510
  %v11583 = vunpack.c.l.b16 %v11511
  %v11584 = vunpack.c.l.b16 %v11512
  %v11585 = vunpack.c.l.b16 %v11513
  %v11586 = vunpack.c.l.b16 %v11514
  %v11587 = vunpack.c.l.b16 %v11515
  %v11588 = vunpack.c.l.b16 %v11516
  %v11589 = vunpack.c.l.b16 %v11517
  %v11590 = vunpack.c.l.b16 %v11518
  %v11591 = vunpack.c.l.b16 %v11519
  %v11592 = vunpack.c.l.b16 %v11520
  %v11593 = vunpack.c.l.b16 %v11521
  %v11594 = vunpack.c.l.b16 %v11522
  %v11595 = vunpack.c.l.b16 %v11523
  %v11596 = vunpack.c.l.b16 %v11524
  %v11597 = vunpack.c.l.b16 %v11525
  %v11598 = vunpack.c.l.b16 %v11526
  %v11599 = vunpack.c.l.b16 %v11527
  %v11600 = vunpack.c.l.b16 %v11528
  %v11601 = vunpack.c.l.b16 %v11529
  %v11602 = vpack.c.b16 %v11571, %v11570
  %v11603 = vpack.c.b16 %v11573, %v11572
  %v11604 = vpack.c.b16 %v11575, %v11574
  %v11605 = vpack.c.b16 %v11577, %v11576
  %v11606 = vpack.c.b16 %v11579, %v11578
  %v11607 = vpack.c.b16 %v11581, %v11580
  %v11608 = vpack.c.b16 %v11583, %v11582
  %v11609 = vpack.c.b16 %v11585, %v11584
  %v11610 = vpack.c.b16 %v11587, %v11586
  %v11611 = vpack.c.b16 %v11589, %v11588
  %v11612 = vpack.c.b16 %v11591, %v11590
  %v11613 = vpack.c.b16 %v11593, %v11592
  %v11614 = vpack.c.b16 %v11595, %v11594
  %v11615 = vpack.c.b16 %v11597, %v11596
  %v11616 = vpack.c.b16 %v11599, %v11598
  %v11617 = vpack.c.b16 %v11601, %v11600
  %11634 = vmatprep.subr.bf16.mxu0 0
  %11635 = vmatpush1.bf16.msra.mxu0 %v11602
  %11636 = vmatprep.subr.bf16.mxu0 0
  %11637 = vmatpush1.bf16.msra.mxu0 %v11603
  %11638 = vmatprep.subr.bf16.mxu0 0
  %11639 = vmatpush1.bf16.msra.mxu0 %v11604
  %11640 = vmatprep.subr.bf16.mxu0 0
  %11641 = vmatpush1.bf16.msra.mxu0 %v11605
  %11642 = vmatprep.subr.bf16.mxu0 0
  %11643 = vmatpush1.bf16.msra.mxu0 %v11606
  %11644 = vmatprep.subr.bf16.mxu0 0
  %11645 = vmatpush1.bf16.msra.mxu0 %v11607
  %11646 = vmatprep.subr.bf16.mxu0 0
  %11647 = vmatpush1.bf16.msra.mxu0 %v11608
  %11648 = vmatprep.subr.bf16.mxu0 0
  %11649 = vmatpush1.bf16.msra.mxu0 %v11609
  %11650 = vmatprep.subr.bf16.mxu0 0
  %11651 = vmatpush1.bf16.msra.mxu0 %v11610
  %11652 = vmatprep.subr.bf16.mxu0 0
  %11653 = vmatpush1.bf16.msra.mxu0 %v11611
  %11654 = vmatprep.subr.bf16.mxu0 0
  %11655 = vmatpush1.bf16.msra.mxu0 %v11612
  %11656 = vmatprep.subr.bf16.mxu0 0
  %11657 = vmatpush1.bf16.msra.mxu0 %v11613
  %11658 = vmatprep.subr.bf16.mxu0 0
  %11659 = vmatpush1.bf16.msra.mxu0 %v11614
  %11660 = vmatprep.subr.bf16.mxu0 0
  %11661 = vmatpush1.bf16.msra.mxu0 %v11615
  %11662 = vmatprep.subr.bf16.mxu0 0
  %11663 = vmatpush1.bf16.msra.mxu0 %v11616
  %11664 = vmatprep.subr.bf16.mxu0 0
  %11665 = vmatpush1.bf16.msra.mxu0 %v11617
  %11666 = vmatprep.mubr.bf16.mxu0 %v11496
  %11667 = vmatmul.mubr.bf16.gmra.mrb[0].mxu0 %v11495
  %v11668 = vpop.f32.mrb[0].mxu0
  %v11669 = vadd.f32 %v11536, %v11668
  %v11670 = vpop.f32.mrb[0].mxu0
  %v11671 = vpop.f32.mrb[0].mxu0
  %v11672 = vadd.f32 %v11536, %v11671
  %v11673 = vpop.f32.mrb[0].mxu0
  %11674 = vdwg.mxu0
  %v11675 = vmax.f32 %v11669, 0.0
  %v11676 = vmax.f32 %v11672, 0.0
  %v11677 = vpack.c.bf16 %v11676, %v11675
  %s11678 = scalar_lea.vmem %s10, 64
  %v11679 = vld [vmem:[%s11678] sm:$0xf]
  %v11680 = vld [vmem:[%s11678 + $0x4] sm:$0xf]
  %v11681 = vld [vmem:[%s11678 + $0x8] sm:$0xf]
  %v11682 = vld [vmem:[%s11678 + $0xc] sm:$0xf]
  %v11683 = vld [vmem:[%s11678 + $0x10] sm:$0xf]
  %v11684 = vld [vmem:[%s11678 + $0x14] sm:$0xf]
  %v11685 = vld [vmem:[%s11678 + $0x18] sm:$0xf]
  %v11686 = vld [vmem:[%s11678 + $0x1c] sm:$0xf]
  %v11687 = vld [vmem:[%s11678 + $0x20] sm:$0xf]
  %v11688 = vld [vmem:[%s11678 + $0x24] sm:$0xf]
  %v11689 = vld [vmem:[%s11678 + $0x28] sm:$0xf]
  %v11690 = vld [vmem:[%s11678 + $0x2c] sm:$0xf]
  %v11691 = vld [vmem:[%s11678 + $0x30] sm:$0xf]
  %v11692 = vld [vmem:[%s11678 + $0x34] sm:$0xf]
  %v11693 = vld [vmem:[%s11678 + $0x38] sm:$0xf]
  %v11694 = vld [vmem:[%s11678 + $0x3c] sm:$0xf]
  %s11695 = scalar_lea.vmem %s11, 1
  %v11696 = vld [vmem:[%s11695] sm:$0x1]
  %v11698 = vlaneseq
  %v11699 = vshrl.u32 %v11698, 7
  %v11700 = vsub.s32 0, %v11699
  %v11701 = vrot.slane %v11696, %v11700
  %v11719 = vunpack.c.l.b16 %v11679
  %v11720 = vunpack.c.l.b16 %v11680
  %v11721 = vunpack.c.l.b16 %v11681
  %v11722 = vunpack.c.l.b16 %v11682
  %v11723 = vunpack.c.l.b16 %v11683
  %v11724 = vunpack.c.l.b16 %v11684
  %v11725 = vunpack.c.l.b16 %v11685
  %v11726 = vunpack.c.l.b16 %v11686
  %v11727 = vunpack.c.l.b16 %v11687
  %v11728 = vunpack.c.l.b16 %v11688
  %v11729 = vunpack.c.l.b16 %v11689
  %v11730 = vunpack.c.l.b16 %v11690
  %v11731 = vunpack.c.l.b16 %v11691
  %v11732 = vunpack.c.l.b16 %v11692
  %v11733 = vunpack.c.l.b16 %v11693
  %v11734 = vunpack.c.l.b16 %v11694
  %v11735 = vpack.c.b16 %v11720, %v11719
  %v11736 = vpack.c.b16 %v11722, %v11721
  %v11737 = vpack.c.b16 %v11724, %v11723
  %v11738 = vpack.c.b16 %v11726, %v11725
  %v11739 = vpack.c.b16 %v11728, %v11727
  %v11740 = vpack.c.b16 %v11730, %v11729
  %v11741 = vpack.c.b16 %v11732, %v11731
  %v11742 = vpack.c.b16 %v11734, %v11733
  %11751 = vmatprep.subr.bf16.mxu0 0
  %11752 = vmatpush1.bf16.msra.mxu0 %v11735
  %11753 = vmatprep.subr.bf16.mxu0 0
  %11754 = vmatpush1.bf16.msra.mxu0 %v11736
  %11755 = vmatprep.subr.bf16.mxu0 0
  %11756 = vmatpush1.bf16.msra.mxu0 %v11737
  %11757 = vmatprep.subr.bf16.mxu0 0
  %11758 = vmatpush1.bf16.msra.mxu0 %v11738
  %11759 = vmatprep.subr.bf16.mxu0 0
  %11760 = vmatpush1.bf16.msra.mxu0 %v11739
  %11761 = vmatprep.subr.bf16.mxu0 0
  %11762 = vmatpush1.bf16.msra.mxu0 %v11740
  %11763 = vmatprep.subr.bf16.mxu0 0
  %11764 = vmatpush1.bf16.msra.mxu0 %v11741
  %11765 = vmatprep.subr.bf16.mxu0 0
  %11766 = vmatpush1.bf16.msra.mxu0 %v11742
  %11767 = vmatprep.subr.bf16.mxu0 0
  %11768 = vmatpush1.bf16.msra.mxu0 0
  %11769 = vmatprep.subr.bf16.mxu0 0
  %11770 = vmatpush1.bf16.msra.mxu0 0
  %11771 = vmatprep.subr.bf16.mxu0 0
  %11772 = vmatpush1.bf16.msra.mxu0 0
  %11773 = vmatprep.subr.bf16.mxu0 0
  %11774 = vmatpush1.bf16.msra.mxu0 0
  %11775 = vmatprep.subr.bf16.mxu0 0
  %11776 = vmatpush1.bf16.msra.mxu0 0
  %11777 = vmatprep.subr.bf16.mxu0 0
  %11778 = vmatpush1.bf16.msra.mxu0 0
  %11779 = vmatprep.subr.bf16.mxu0 0
  %11780 = vmatpush1.bf16.msra.mxu0 0
  %11781 = vmatprep.subr.bf16.mxu0 0
  %11782 = vmatpush1.bf16.msra.mxu0 0
  %11783 = vmatprep.mubr.bf16.mxu0 0
  %11784 = vmatmul.mubr.bf16.gmra.mrb[0].mxu0 %v11677
  %v11785 = vpop.f32.mrb[0].mxu0
  %v11786 = vadd.f32 %v11701, %v11785
  %v11787 = vpop.f32.mrb[0].mxu0
  %v11788 = vpop.f32.mrb[0].mxu0
  %v11789 = vadd.f32 %v11701, %v11788
  %v11790 = vpop.f32.mrb[0].mxu0
  %11791 = vdwg.mxu0
  %v11792 = vadd.f32 %v10672, %v11786
  %v11793 = vadd.f32 %v10673, %v11789
  %s11794 = scalar_lea.vmem %s12, 16
  %11795 = vst [vmem:[%s11794] sm:$0xff] %v11792
  %11796 = vst [vmem:[%s11794 + $0x8] sm:$0xff] %v11793
  %v11797 = vpack.c.bf16 %v11793, %v11792
  %s11798 = scalar_lea.vmem %s4, 512
  %v11799 = vld [vmem:[%s11798] sm:$0xff]
  %v11800 = vld [vmem:[%s11798 + $0x8] sm:$0xff]
  %v11801 = vld [vmem:[%s11798 + $0x10] sm:$0xff]
  %v11802 = vld [vmem:[%s11798 + $0x18] sm:$0xff]
  %v11803 = vld [vmem:[%s11798 + $0x20] sm:$0xff]
  %v11804 = vld [vmem:[%s11798 + $0x28] sm:$0xff]
  %v11805 = vld [vmem:[%s11798 + $0x30] sm:$0xff]
  %v11806 = vld [vmem:[%s11798 + $0x38] sm:$0xff]
  %v11807 = vld [vmem:[%s11798 + $0x40] sm:$0xff]
  %v11808 = vld [vmem:[%s11798 + $0x48] sm:$0xff]
  %v11809 = vld [vmem:[%s11798 + $0x50] sm:$0xff]
  %v11810 = vld [vmem:[%s11798 + $0x58] sm:$0xff]
  %v11811 = vld [vmem:[%s11798 + $0x60] sm:$0xff]
  %v11812 = vld [vmem:[%s11798 + $0x68] sm:$0xff]
  %v11813 = vld [vmem:[%s11798 + $0x70] sm:$0xff]
  %v11814 = vld [vmem:[%s11798 + $0x78] sm:$0xff]
  %v11815 = vld [vmem:[%s11798 + $0x80] sm:$0xff]
  %v11816 = vld [vmem:[%s11798 + $0x88] sm:$0xff]
  %v11817 = vld [vmem:[%s11798 + $0x90] sm:$0xff]
  %v11818 = vld [vmem:[%s11798 + $0x98] sm:$0xff]
  %v11819 = vld [vmem:[%s11798 + $0xa0] sm:$0xff]
  %v11820 = vld [vmem:[%s11798 + $0xa8] sm:$0xff]
  %v11821 = vld [vmem:[%s11798 + $0xb0] sm:$0xff]
  %v11822 = vld [vmem:[%s11798 + $0xb8] sm:$0xff]
  %v11823 = vld [vmem:[%s11798 + $0xc0] sm:$0xff]
  %v11824 = vld [vmem:[%s11798 + $0xc8] sm:$0xff]
  %v11825 = vld [vmem:[%s11798 + $0xd0] sm:$0xff]
  %v11826 = vld [vmem:[%s11798 + $0xd8] sm:$0xff]
  %v11827 = vld [vmem:[%s11798 + $0xe0] sm:$0xff]
  %v11828 = vld [vmem:[%s11798 + $0xe8] sm:$0xff]
  %v11829 = vld [vmem:[%s11798 + $0xf0] sm:$0xff]
  %v11830 = vld [vmem:[%s11798 + $0xf8] sm:$0xff]
  %v11863 = vunpack.c.l.b16 %v11799
  %v11864 = vunpack.c.h.b16 %v11799
  %v11865 = vunpack.c.l.b16 %v11800
  %v11866 = vunpack.c.h.b16 %v11800
  %v11867 = vunpack.c.l.b16 %v11801
  %v11868 = vunpack.c.h.b16 %v11801
  %v11869 = vunpack.c.l.b16 %v11802
  %v11870 = vunpack.c.h.b16 %v11802
  %v11871 = vunpack.c.l.b16 %v11803
  %v11872 = vunpack.c.h.b16 %v11803
  %v11873 = vunpack.c.l.b16 %v11804
  %v11874 = vunpack.c.h.b16 %v11804
  %v11875 = vunpack.c.l.b16 %v11805
  %v11876 = vunpack.c.h.b16 %v11805
  %v11877 = vunpack.c.l.b16 %v11806
  %v11878 = vunpack.c.h.b16 %v11806
  %v11879 = vunpack.c.l.b16 %v11807
  %v11880 = vunpack.c.h.b16 %v11807
  %v11881 = vunpack.c.l.b16 %v11808
  %v11882 = vunpack.c.h.b16 %v11808
  %v11883 = vunpack.c.l.b16 %v11809
  %v11884 = vunpack.c.h.b16 %v11809
  %v11885 = vunpack.c.l.b16 %v11810
  %v11886 = vunpack.c.h.b16 %v11810
  %v11887 = vunpack.c.l.b16 %v11811
  %v11888 = vunpack.c.h.b16 %v11811
  %v11889 = vunpack.c.l.b16 %v11812
  %v11890 = vunpack.c.h.b16 %v11812
  %v11891 = vunpack.c.l.b16 %v11813
  %v11892 = vunpack.c.h.b16 %v11813
  %v11893 = vunpack.c.l.b16 %v11814
  %v11894 = vunpack.c.h.b16 %v11814
  %v11895 = vunpack.c.l.b16 %v11815
  %v11896 = vunpack.c.h.b16 %v11815
  %v11897 = vunpack.c.l.b16 %v11816
  %v11898 = vunpack.c.h.b16 %v11816
  %v11899 = vunpack.c.l.b16 %v11817
  %v11900 = vunpack.c.h.b16 %v11817
  %v11901 = vunpack.c.l.b16 %v11818
  %v11902 = vunpack.c.h.b16 %v11818
  %v11903 = vunpack.c.l.b16 %v11819
  %v11904 = vunpack.c.h.b16 %v11819
  %v11905 = vunpack.c.l.b16 %v11820
  %v11906 = vunpack.c.h.b16 %v11820
  %v11907 = vunpack.c.l.b16 %v11821
  %v11908 = vunpack.c.h.b16 %v11821
  %v11909 = vunpack.c.l.b16 %v11822
  %v11910 = vunpack.c.h.b16 %v11822
  %v11911 = vunpack.c.l.b16 %v11823
  %v11912 = vunpack.c.h.b16 %v11823
  %v11913 = vunpack.c.l.b16 %v11824
  %v11914 = vunpack.c.h.b16 %v11824
  %v11915 = vunpack.c.l.b16 %v11825
  %v11916 = vunpack.c.h.b16 %v11825
  %v11917 = vunpack.c.l.b16 %v11826
  %v11918 = vunpack.c.h.b16 %v11826
  %v11919 = vunpack.c.l.b16 %v11827
  %v11920 = vunpack.c.h.b16 %v11827
  %v11921 = vunpack.c.l.b16 %v11828
  %v11922 = vunpack.c.h.b16 %v11828
  %v11923 = vunpack.c.l.b16 %v11829
  %v11924 = vunpack.c.h.b16 %v11829
  %v11925 = vunpack.c.l.b16 %v11830
  %v11926 = vunpack.c.h.b16 %v11830
  %v11927 = vpack.c.b16 %v11867, %v11863
  %v11928 = vpack.c.b16 %v11868, %v11864
  %v11929 = vpack.c.b16 %v11869, %v11865
  %v11930 = vpack.c.b16 %v11870, %v11866
  %v11931 = vpack.c.b16 %v11875, %v11871
  %v11932 = vpack.c.b16 %v11876, %v11872
  %v11933 = vpack.c.b16 %v11877, %v11873
  %v11934 = vpack.c.b16 %v11878, %v11874
  %v11935 = vpack.c.b16 %v11883, %v11879
  %v11936 = vpack.c.b16 %v11884, %v11880
  %v11937 = vpack.c.b16 %v11885, %v11881
  %v11938 = vpack.c.b16 %v11886, %v11882
  %v11939 = vpack.c.b16 %v11891, %v11887
  %v11940 = vpack.c.b16 %v11892, %v11888
  %v11941 = vpack.c.b16 %v11893, %v11889
  %v11942 = vpack.c.b16 %v11894, %v11890
  %v11943 = vpack.c.b16 %v11899, %v11895
  %v11944 = vpack.c.b16 %v11900, %v11896
  %v11945 = vpack.c.b16 %v11901, %v11897
  %v11946 = vpack.c.b16 %v11902, %v11898
  %v11947 = vpack.c.b16 %v11907, %v11903
  %v11948 = vpack.c.b16 %v11908, %v11904
  %v11949 = vpack.c.b16 %v11909, %v11905
  %v11950 = vpack.c.b16 %v11910, %v11906
  %v11951 = vpack.c.b16 %v11915, %v11911
  %v11952 = vpack.c.b16 %v11916, %v11912
  %v11953 = vpack.c.b16 %v11917, %v11913
  %v11954 = vpack.c.b16 %v11918, %v11914
  %v11955 = vpack.c.b16 %v11923, %v11919
  %v11956 = vpack.c.b16 %v11924, %v11920
  %v11957 = vpack.c.b16 %v11925, %v11921
  %v11958 = vpack.c.b16 %v11926, %v11922
  %11991 = vmatprep.subr.bf16.mxu0 %v11928
  %11992 = vmatpush1.bf16.msra.mxu0 %v11927
  %11993 = vmatprep.subr.bf16.mxu0 %v11932
  %11994 = vmatpush1.bf16.msra.mxu0 %v11931
  %11995 = vmatprep.subr.bf16.mxu0 %v11936
  %11996 = vmatpush1.bf16.msra.mxu0 %v11935
  %11997 = vmatprep.subr.bf16.mxu0 %v11940
  %11998 = vmatpush1.bf16.msra.mxu0 %v11939
  %11999 = vmatprep.subr.bf16.mxu0 %v11944
  %12000 = vmatpush1.bf16.msra.mxu0 %v11943
  %12001 = vmatprep.subr.bf16.mxu0 %v11948
  %12002 = vmatpush1.bf16.msra.mxu0 %v11947
  %12003 = vmatprep.subr.bf16.mxu0 %v11952
  %12004 = vmatpush1.bf16.msra.mxu0 %v11951
  %12005 = vmatprep.subr.bf16.mxu0 %v11956
  %12006 = vmatpush1.bf16.msra.mxu0 %v11955
  %12007 = vmatprep.subr.bf16.mxu0 0
  %12008 = vmatpush1.bf16.msra.mxu0 0
  %12009 = vmatprep.subr.bf16.mxu0 0
  %12010 = vmatpush1.bf16.msra.mxu0 0
  %12011 = vmatprep.subr.bf16.mxu0 0
  %12012 = vmatpush1.bf16.msra.mxu0 0
  %12013 = vmatprep.subr.bf16.mxu0 0
  %12014 = vmatpush1.bf16.msra.mxu0 0
  %12015 = vmatprep.subr.bf16.mxu0 0
  %12016 = vmatpush1.bf16.msra.mxu0 0
  %12017 = vmatprep.subr.bf16.mxu0 0
  %12018 = vmatpush1.bf16.msra.mxu0 0
  %12019 = vmatprep.subr.bf16.mxu0 0
  %12020 = vmatpush1.bf16.msra.mxu0 0
  %12021 = vmatprep.subr.bf16.mxu0 0
  %12022 = vmatpush1.bf16.msra.mxu0 0
  %12023 = vmatprep.mubr.bf16.mxu0 0
  %12024 = vmatmul.mubr.bf16.gmra.mrb[0].mxu0 %v11797
  %v12025 = vpop.f32.mrb[0].mxu0
  %v12026 = vadd.f32 0.0, %v12025
  %v12027 = vpop.f32.mrb[0].mxu0
  %v12028 = vadd.f32 0.0, %v12027
  %v12029 = vpop.f32.mrb[0].mxu0
  %v12030 = vadd.f32 0.0, %v12029
  %v12031 = vpop.f32.mrb[0].mxu0
  %v12032 = vadd.f32 0.0, %v12031
  %12033 = vdwg.mxu0
  %12034 = vmatprep.subr.bf16.mxu0 %v11930
  %12035 = vmatpush1.bf16.msra.mxu0 %v11929
  %12036 = vmatprep.subr.bf16.mxu0 %v11934
  %12037 = vmatpush1.bf16.msra.mxu0 %v11933
  %12038 = vmatprep.subr.bf16.mxu0 %v11938
  %12039 = vmatpush1.bf16.msra.mxu0 %v11937
  %12040 = vmatprep.subr.bf16.mxu0 %v11942
  %12041 = vmatpush1.bf16.msra.mxu0 %v11941
  %12042 = vmatprep.subr.bf16.mxu0 %v11946
  %12043 = vmatpush1.bf16.msra.mxu0 %v11945
  %12044 = vmatprep.subr.bf16.mxu0 %v11950
  %12045 = vmatpush1.bf16.msra.mxu0 %v11949
  %12046 = vmatprep.subr.bf16.mxu0 %v11954
  %12047 = vmatpush1.bf16.msra.mxu0 %v11953
  %12048 = vmatprep.subr.bf16.mxu0 %v11958
  %12049 = vmatpush1.bf16.msra.mxu0 %v11957
  %12050 = vmatprep.subr.bf16.mxu0 0
  %12051 = vmatpush1.bf16.msra.mxu0 0
  %12052 = vmatprep.subr.bf16.mxu0 0
  %12053 = vmatpush1.bf16.msra.mxu0 0
  %12054 = vmatprep.subr.bf16.mxu0 0
  %12055 = vmatpush1.bf16.msra.mxu0 0
  %12056 = vmatprep.subr.bf16.mxu0 0
  %12057 = vmatpush1.bf16.msra.mxu0 0
  %12058 = vmatprep.subr.bf16.mxu0 0
  %12059 = vmatpush1.bf16.msra.mxu0 0
  %12060 = vmatprep.subr.bf16.mxu0 0
  %12061 = vmatpush1.bf16.msra.mxu0 0
  %12062 = vmatprep.subr.bf16.mxu0 0
  %12063 = vmatpush1.bf16.msra.mxu0 0
  %12064 = vmatprep.subr.bf16.mxu0 0
  %12065 = vmatpush1.bf16.msra.mxu0 0
  %12066 = vmatprep.mubr.bf16.mxu0 0
  %12067 = vmatmul.mubr.bf16.gmra.mrb[0].mxu0 %v11797
  %v12068 = vpop.f32.mrb[0].mxu0
  %v12069 = vadd.f32 0.0, %v12068
  %v12070 = vpop.f32.mrb[0].mxu0
  %v12071 = vadd.f32 0.0, %v12070
  %v12072 = vpop.f32.mrb[0].mxu0
  %v12073 = vadd.f32 0.0, %v12072
  %v12074 = vpop.f32.mrb[0].mxu0
  %v12075 = vadd.f32 0.0, %v12074
  %12076 = vdwg.mxu0
  %v12077 = vadd.f32 %v9360, %v12026
  %v12078 = vadd.f32 %v9362, %v12028
  %v12079 = vadd.f32 %v9532, %v12069
  %v12080 = vadd.f32 %v9534, %v12071
  %v12081 = vadd.f32 %v9364, %v12030
  %v12082 = vadd.f32 %v9366, %v12032
  %v12083 = vadd.f32 %v9536, %v12073
  %v12084 = vadd.f32 %v9538, %v12075
  %s12085 = scalar_lea.vmem %s5, 8
  %v12086 = vld [vmem:[%s12085] sm:$0xf]
  %v12088 = vlaneseq
  %v12089 = vshrl.u32 %v12088, 7
  %v12090 = vsub.s32 0, %v12089
  %v12091 = vrot.slane %v12086, %v12090
  %v12092 = vlaneseq
  %v12093 = vshrl.u32 %v12092, 7
  %v12094 = vsub.s32 1, %v12093
  %v12095 = vrot.slane %v12086, %v12094
  %v12096 = vlaneseq
  %v12097 = vshrl.u32 %v12096, 7
  %v12098 = vsub.s32 2, %v12097
  %v12099 = vrot.slane %v12086, %v12098
  %v12100 = vlaneseq
  %v12101 = vshrl.u32 %v12100, 7
  %v12102 = vsub.s32 3, %v12101
  %v12103 = vrot.slane %v12086, %v12102
  %v12108 = vadd.f32 %v12077, %v12091
  %v12109 = vadd.f32 %v12078, %v12095
  %v12110 = vadd.f32 %v12079, %v12099
  %v12111 = vadd.f32 %v12080, %v12103
  %v12112 = vadd.f32 %v12081, %v12091
  %v12113 = vadd.f32 %v12082, %v12095
  %v12114 = vadd.f32 %v12083, %v12099
  %v12115 = vadd.f32 %v12084, %v12103
  %v12116 = vmax.f32 %v12108, 0.0
  %v12117 = vmax.f32 %v12109, 0.0
  %v12118 = vmax.f32 %v12110, 0.0
  %v12119 = vmax.f32 %v12111, 0.0
  %v12120 = vmax.f32 %v12112, 0.0
  %v12121 = vmax.f32 %v12113, 0.0
  %v12122 = vmax.f32 %v12114, 0.0
  %v12123 = vmax.f32 %v12115, 0.0
  %v12124 = vpack.c.bf16 %v12120, %v12116
  %v12125 = vpack.c.bf16 %v12121, %v12117
  %v12126 = vpack.c.bf16 %v12122, %v12118
  %v12127 = vpack.c.bf16 %v12123, %v12119
  %s12128 = scalar_lea.vmem %s6, 1024
  %v12129 = vld [vmem:[%s12128] sm:$0xff]
  %v12130 = vld [vmem:[%s12128 + $0x8] sm:$0xff]
  %v12131 = vld [vmem:[%s12128 + $0x10] sm:$0xff]
  %v12132 = vld [vmem:[%s12128 + $0x18] sm:$0xff]
  %v12133 = vld [vmem:[%s12128 + $0x20] sm:$0xff]
  %v12134 = vld [vmem:[%s12128 + $0x28] sm:$0xff]
  %v12135 = vld [vmem:[%s12128 + $0x30] sm:$0xff]
  %v12136 = vld [vmem:[%s12128 + $0x38] sm:$0xff]
  %v12137 = vld [vmem:[%s12128 + $0x40] sm:$0xff]
  %v12138 = vld [vmem:[%s12128 + $0x48] sm:$0xff]
  %v12139 = vld [vmem:[%s12128 + $0x50] sm:$0xff]
  %v12140 = vld [vmem:[%s12128 + $0x58] sm:$0xff]
  %v12141 = vld [vmem:[%s12128 + $0x60] sm:$0xff]
  %v12142 = vld [vmem:[%s12128 + $0x68] sm:$0xff]
  %v12143 = vld [vmem:[%s12128 + $0x70] sm:$0xff]
  %v12144 = vld [vmem:[%s12128 + $0x78] sm:$0xff]
  %v12145 = vld [vmem:[%s12128 + $0x80] sm:$0xff]
  %v12146 = vld [vmem:[%s12128 + $0x88] sm:$0xff]
  %v12147 = vld [vmem:[%s12128 + $0x90] sm:$0xff]
  %v12148 = vld [vmem:[%s12128 + $0x98] sm:$0xff]
  %v12149 = vld [vmem:[%s12128 + $0xa0] sm:$0xff]
  %v12150 = vld [vmem:[%s12128 + $0xa8] sm:$0xff]
  %v12151 = vld [vmem:[%s12128 + $0xb0] sm:$0xff]
  %v12152 = vld [vmem:[%s12128 + $0xb8] sm:$0xff]
  %v12153 = vld [vmem:[%s12128 + $0xc0] sm:$0xff]
  %v12154 = vld [vmem:[%s12128 + $0xc8] sm:$0xff]
  %v12155 = vld [vmem:[%s12128 + $0xd0] sm:$0xff]
  %v12156 = vld [vmem:[%s12128 + $0xd8] sm:$0xff]
  %v12157 = vld [vmem:[%s12128 + $0xe0] sm:$0xff]
  %v12158 = vld [vmem:[%s12128 + $0xe8] sm:$0xff]
  %v12159 = vld [vmem:[%s12128 + $0xf0] sm:$0xff]
  %v12160 = vld [vmem:[%s12128 + $0xf8] sm:$0xff]
  %v12161 = vld [vmem:[%s12128 + $0x100] sm:$0xff]
  %v12162 = vld [vmem:[%s12128 + $0x108] sm:$0xff]
  %v12163 = vld [vmem:[%s12128 + $0x110] sm:$0xff]
  %v12164 = vld [vmem:[%s12128 + $0x118] sm:$0xff]
  %v12165 = vld [vmem:[%s12128 + $0x120] sm:$0xff]
  %v12166 = vld [vmem:[%s12128 + $0x128] sm:$0xff]
  %v12167 = vld [vmem:[%s12128 + $0x130] sm:$0xff]
  %v12168 = vld [vmem:[%s12128 + $0x138] sm:$0xff]
  %v12169 = vld [vmem:[%s12128 + $0x140] sm:$0xff]
  %v12170 = vld [vmem:[%s12128 + $0x148] sm:$0xff]
  %v12171 = vld [vmem:[%s12128 + $0x150] sm:$0xff]
  %v12172 = vld [vmem:[%s12128 + $0x158] sm:$0xff]
  %v12173 = vld [vmem:[%s12128 + $0x160] sm:$0xff]
  %v12174 = vld [vmem:[%s12128 + $0x168] sm:$0xff]
  %v12175 = vld [vmem:[%s12128 + $0x170] sm:$0xff]
  %v12176 = vld [vmem:[%s12128 + $0x178] sm:$0xff]
  %v12177 = vld [vmem:[%s12128 + $0x180] sm:$0xff]
  %v12178 = vld [vmem:[%s12128 + $0x188] sm:$0xff]
  %v12179 = vld [vmem:[%s12128 + $0x190] sm:$0xff]
  %v12180 = vld [vmem:[%s12128 + $0x198] sm:$0xff]
  %v12181 = vld [vmem:[%s12128 + $0x1a0] sm:$0xff]
  %v12182 = vld [vmem:[%s12128 + $0x1a8] sm:$0xff]
  %v12183 = vld [vmem:[%s12128 + $0x1b0] sm:$0xff]
  %v12184 = vld [vmem:[%s12128 + $0x1b8] sm:$0xff]
  %v12185 = vld [vmem:[%s12128 + $0x1c0] sm:$0xff]
  %v12186 = vld [vmem:[%s12128 + $0x1c8] sm:$0xff]
  %v12187 = vld [vmem:[%s12128 + $0x1d0] sm:$0xff]
  %v12188 = vld [vmem:[%s12128 + $0x1d8] sm:$0xff]
  %v12189 = vld [vmem:[%s12128 + $0x1e0] sm:$0xff]
  %v12190 = vld [vmem:[%s12128 + $0x1e8] sm:$0xff]
  %v12191 = vld [vmem:[%s12128 + $0x1f0] sm:$0xff]
  %v12192 = vld [vmem:[%s12128 + $0x1f8] sm:$0xff]
  %s12193 = scalar_lea.vmem %s7, 4
  %v12194 = vld [vmem:[%s12193] sm:$0x3]
  %v12196 = vlaneseq
  %v12197 = vshrl.u32 %v12196, 7
  %v12198 = vsub.s32 0, %v12197
  %v12199 = vrot.slane %v12194, %v12198
  %v12200 = vlaneseq
  %v12201 = vshrl.u32 %v12200, 7
  %v12202 = vsub.s32 1, %v12201
  %v12203 = vrot.slane %v12194, %v12202
  %v12270 = vunpack.c.l.b16 %v12129
  %v12271 = vunpack.c.h.b16 %v12129
  %v12272 = vunpack.c.l.b16 %v12130
  %v12273 = vunpack.c.h.b16 %v12130
  %v12274 = vunpack.c.l.b16 %v12131
  %v12275 = vunpack.c.h.b16 %v12131
  %v12276 = vunpack.c.l.b16 %v12132
  %v12277 = vunpack.c.h.b16 %v12132
  %v12278 = vunpack.c.l.b16 %v12133
  %v12279 = vunpack.c.h.b16 %v12133
  %v12280 = vunpack.c.l.b16 %v12134
  %v12281 = vunpack.c.h.b16 %v12134
  %v12282 = vunpack.c.l.b16 %v12135
  %v12283 = vunpack.c.h.b16 %v12135
  %v12284 = vunpack.c.l.b16 %v12136
  %v12285 = vunpack.c.h.b16 %v12136
  %v12286 = vunpack.c.l.b16 %v12137
  %v12287 = vunpack.c.h.b16 %v12137
  %v12288 = vunpack.c.l.b16 %v12138
  %v12289 = vunpack.c.h.b16 %v12138
  %v12290 = vunpack.c.l.b16 %v12139
  %v12291 = vunpack.c.h.b16 %v12139
  %v12292 = vunpack.c.l.b16 %v12140
  %v12293 = vunpack.c.h.b16 %v12140
  %v12294 = vunpack.c.l.b16 %v12141
  %v12295 = vunpack.c.h.b16 %v12141
  %v12296 = vunpack.c.l.b16 %v12142
  %v12297 = vunpack.c.h.b16 %v12142
  %v12298 = vunpack.c.l.b16 %v12143
  %v12299 = vunpack.c.h.b16 %v12143
  %v12300 = vunpack.c.l.b16 %v12144
  %v12301 = vunpack.c.h.b16 %v12144
  %v12302 = vunpack.c.l.b16 %v12145
  %v12303 = vunpack.c.h.b16 %v12145
  %v12304 = vunpack.c.l.b16 %v12146
  %v12305 = vunpack.c.h.b16 %v12146
  %v12306 = vunpack.c.l.b16 %v12147
  %v12307 = vunpack.c.h.b16 %v12147
  %v12308 = vunpack.c.l.b16 %v12148
  %v12309 = vunpack.c.h.b16 %v12148
  %v12310 = vunpack.c.l.b16 %v12149
  %v12311 = vunpack.c.h.b16 %v12149
  %v12312 = vunpack.c.l.b16 %v12150
  %v12313 = vunpack.c.h.b16 %v12150
  %v12314 = vunpack.c.l.b16 %v12151
  %v12315 = vunpack.c.h.b16 %v12151
  %v12316 = vunpack.c.l.b16 %v12152
  %v12317 = vunpack.c.h.b16 %v12152
  %v12318 = vunpack.c.l.b16 %v12153
  %v12319 = vunpack.c.h.b16 %v12153
  %v12320 = vunpack.c.l.b16 %v12154
  %v12321 = vunpack.c.h.b16 %v12154
  %v12322 = vunpack.c.l.b16 %v12155
  %v12323 = vunpack.c.h.b16 %v12155
  %v12324 = vunpack.c.l.b16 %v12156
  %v12325 = vunpack.c.h.b16 %v12156
  %v12326 = vunpack.c.l.b16 %v12157
  %v12327 = vunpack.c.h.b16 %v12157
  %v12328 = vunpack.c.l.b16 %v12158
  %v12329 = vunpack.c.h.b16 %v12158
  %v12330 = vunpack.c.l.b16 %v12159
  %v12331 = vunpack.c.h.b16 %v12159
  %v12332 = vunpack.c.l.b16 %v12160
  %v12333 = vunpack.c.h.b16 %v12160
  %v12334 = vunpack.c.l.b16 %v12161
  %v12335 = vunpack.c.h.b16 %v12161
  %v12336 = vunpack.c.l.b16 %v12162
  %v12337 = vunpack.c.h.b16 %v12162
  %v12338 = vunpack.c.l.b16 %v12163
  %v12339 = vunpack.c.h.b16 %v12163
  %v12340 = vunpack.c.l.b16 %v12164
  %v12341 = vunpack.c.h.b16 %v12164
  %v12342 = vunpack.c.l.b16 %v12165
  %v12343 = vunpack.c.h.b16 %v12165
  %v12344 = vunpack.c.l.b16 %v12166
  %v12345 = vunpack.c.h.b16 %v12166
  %v12346 = vunpack.c.l.b16 %v12167
  %v12347 = vunpack.c.h.b16 %v12167
  %v12348 = vunpack.c.l.b16 %v12168
  %v12349 = vunpack.c.h.b16 %v12168
  %v12350 = vunpack.c.l.b16 %v12169
  %v12351 = vunpack.c.h.b16 %v12169
  %v12352 = vunpack.c.l.b16 %v12170
  %v12353 = vunpack.c.h.b16 %v12170
  %v12354 = vunpack.c.l.b16 %v12171
  %v12355 = vunpack.c.h.b16 %v12171
  %v12356 = vunpack.c.l.b16 %v12172
  %v12357 = vunpack.c.h.b16 %v12172
  %v12358 = vunpack.c.l.b16 %v12173
  %v12359 = vunpack.c.h.b16 %v12173
  %v12360 = vunpack.c.l.b16 %v12174
  %v12361 = vunpack.c.h.b16 %v12174
  %v12362 = vunpack.c.l.b16 %v12175
  %v12363 = vunpack.c.h.b16 %v12175
  %v12364 = vunpack.c.l.b16 %v12176
  %v12365 = vunpack.c.h.b16 %v12176
  %v12366 = vunpack.c.l.b16 %v12177
  %v12367 = vunpack.c.h.b16 %v12177
  %v12368 = vunpack.c.l.b16 %v12178
  %v12369 = vunpack.c.h.b16 %v12178
  %v12370 = vunpack.c.l.b16 %v12179
  %v12371 = vunpack.c.h.b16 %v12179
  %v12372 = vunpack.c.l.b16 %v12180
  %v12373 = vunpack.c.h.b16 %v12180
  %v12374 = vunpack.c.l.b16 %v12181
  %v12375 = vunpack.c.h.b16 %v12181
  %v12376 = vunpack.c.l.b16 %v12182
  %v12377 = vunpack.c.h.b16 %v12182
  %v12378 = vunpack.c.l.b16 %v12183
  %v12379 = vunpack.c.h.b16 %v12183
  %v12380 = vunpack.c.l.b16 %v12184
  %v12381 = vunpack.c.h.b16 %v12184
  %v12382 = vunpack.c.l.b16 %v12185
  %v12383 = vunpack.c.h.b16 %v12185
  %v12384 = vunpack.c.l.b16 %v12186
  %v12385 = vunpack.c.h.b16 %v12186
  %v12386 = vunpack.c.l.b16 %v12187
  %v12387 = vunpack.c.h.b16 %v12187
  %v12388 = vunpack.c.l.b16 %v12188
  %v12389 = vunpack.c.h.b16 %v12188
  %v12390 = vunpack.c.l.b16 %v12189
  %v12391 = vunpack.c.h.b16 %v12189
  %v12392 = vunpack.c.l.b16 %v12190
  %v12393 = vunpack.c.h.b16 %v12190
  %v12394 = vunpack.c.l.b16 %v12191
  %v12395 = vunpack.c.h.b16 %v12191
  %v12396 = vunpack.c.l.b16 %v12192
  %v12397 = vunpack.c.h.b16 %v12192
  %v12398 = vpack.c.b16 %v12272, %v12270
  %v12399 = vpack.c.b16 %v12273, %v12271
  %v12400 = vpack.c.b16 %v12276, %v12274
  %v12401 = vpack.c.b16 %v12277, %v12275
  %v12402 = vpack.c.b16 %v12280, %v12278
  %v12403 = vpack.c.b16 %v12281, %v12279
  %v12404 = vpack.c.b16 %v12284, %v12282
  %v12405 = vpack.c.b16 %v12285, %v12283
  %v12406 = vpack.c.b16 %v12288, %v12286
  %v12407 = vpack.c.b16 %v12289, %v12287
  %v12408 = vpack.c.b16 %v12292, %v12290
  %v12409 = vpack.c.b16 %v12293, %v12291
  %v12410 = vpack.c.b16 %v12296, %v12294
  %v12411 = vpack.c.b16 %v12297, %v12295
  %v12412 = vpack.c.b16 %v12300, %v12298
  %v12413 = vpack.c.b16 %v12301, %v12299
  %v12414 = vpack.c.b16 %v12304, %v12302
  %v12415 = vpack.c.b16 %v12305, %v12303
  %v12416 = vpack.c.b16 %v12308, %v12306
  %v12417 = vpack.c.b16 %v12309, %v12307
  %v12418 = vpack.c.b16 %v12312, %v12310
  %v12419 = vpack.c.b16 %v12313, %v12311
  %v12420 = vpack.c.b16 %v12316, %v12314
  %v12421 = vpack.c.b16 %v12317, %v12315
  %v12422 = vpack.c.b16 %v12320, %v12318
  %v12423 = vpack.c.b16 %v12321, %v12319
  %v12424 = vpack.c.b16 %v12324, %v12322
  %v12425 = vpack.c.b16 %v12325, %v12323
  %v12426 = vpack.c.b16 %v12328, %v12326
  %v12427 = vpack.c.b16 %v12329, %v12327
  %v12428 = vpack.c.b16 %v12332, %v12330
  %v12429 = vpack.c.b16 %v12333, %v12331
  %v12430 = vpack.c.b16 %v12336, %v12334
  %v12431 = vpack.c.b16 %v12337, %v12335
  %v12432 = vpack.c.b16 %v12340, %v12338
  %v12433 = vpack.c.b16 %v12341, %v12339
  %v12434 = vpack.c.b16 %v12344, %v12342
  %v12435 = vpack.c.b16 %v12345, %v12343
  %v12436 = vpack.c.b16 %v12348, %v12346
  %v12437 = vpack.c.b16 %v12349, %v12347
  %v12438 = vpack.c.b16 %v12352, %v12350
  %v12439 = vpack.c.b16 %v12353, %v12351
  %v12440 = vpack.c.b16 %v12356, %v12354
  %v12441 = vpack.c.b16 %v12357, %v12355
  %v12442 = vpack.c.b16 %v12360, %v12358
  %v12443 = vpack.c.b16 %v12361, %v12359
  %v12444 = vpack.c.b16 %v12364, %v12362
  %v12445 = vpack.c.b16 %v12365, %v12363
  %v12446 = vpack.c.b16 %v12368, %v12366
  %v12447 = vpack.c.b16 %v12369, %v12367
  %v12448 = vpack.c.b16 %v12372, %v12370
  %v12449 = vpack.c.b16 %v12373, %v12371
  %v12450 = vpack.c.b16 %v12376, %v12374
  %v12451 = vpack.c.b16 %v12377, %v12375
  %v12452 = vpack.c.b16 %v12380, %v12378
  %v12453 = vpack.c.b16 %v12381, %v12379
  %v12454 = vpack.c.b16 %v12384, %v12382
  %v12455 = vpack.c.b16 %v12385, %v12383
  %v12456 = vpack.c.b16 %v12388, %v12386
  %v12457 = vpack.c.b16 %v12389, %v12387
  %v12458 = vpack.c.b16 %v12392, %v12390
  %v12459 = vpack.c.b16 %v12393, %v12391
  %v12460 = vpack.c.b16 %v12396, %v12394
  %v12461 = vpack.c.b16 %v12397, %v12395
  %12526 = vmatprep.subr.bf16.mxu0 %v12399
  %12527 = vmatpush1.bf16.msra.mxu0 %v12398
  %12528 = vmatprep.subr.bf16.mxu0 %v12401
  %12529 = vmatpush1.bf16.msra.mxu0 %v12400
  %12530 = vmatprep.subr.bf16.mxu0 %v12403
  %12531 = vmatpush1.bf16.msra.mxu0 %v12402
  %12532 = vmatprep.subr.bf16.mxu0 %v12405
  %12533 = vmatpush1.bf16.msra.mxu0 %v12404
  %12534 = vmatprep.subr.bf16.mxu0 %v12407
  %12535 = vmatpush1.bf16.msra.mxu0 %v12406
  %12536 = vmatprep.subr.bf16.mxu0 %v12409
  %12537 = vmatpush1.bf16.msra.mxu0 %v12408
  %12538 = vmatprep.subr.bf16.mxu0 %v12411
  %12539 = vmatpush1.bf16.msra.mxu0 %v12410
  %12540 = vmatprep.subr.bf16.mxu0 %v12413
  %12541 = vmatpush1.bf16.msra.mxu0 %v12412
  %12542 = vmatprep.subr.bf16.mxu0 %v12415
  %12543 = vmatpush1.bf16.msra.mxu0 %v12414
  %12544 = vmatprep.subr.bf16.mxu0 %v12417
  %12545 = vmatpush1.bf16.msra.mxu0 %v12416
  %12546 = vmatprep.subr.bf16.mxu0 %v12419
  %12547 = vmatpush1.bf16.msra.mxu0 %v12418
  %12548 = vmatprep.subr.bf16.mxu0 %v12421
  %12549 = vmatpush1.bf16.msra.mxu0 %v12420
  %12550 = vmatprep.subr.bf16.mxu0 %v12423
  %12551 = vmatpush1.bf16.msra.mxu0 %v12422
  %12552 = vmatprep.subr.bf16.mxu0 %v12425
  %12553 = vmatpush1.bf16.msra.mxu0 %v12424
  %12554 = vmatprep.subr.bf16.mxu0 %v12427
  %12555 = vmatpush1.bf16.msra.mxu0 %v12426
  %12556 = vmatprep.subr.bf16.mxu0 %v12429
  %12557 = vmatpush1.bf16.msra.mxu0 %v12428
  %12558 = vmatprep.mubr.bf16.mxu0 %v12125
  %12559 = vmatmul.mubr.bf16.gmra.mrb[0].mxu0 %v12124
  %v12560 = vpop.f32.mrb[0].mxu0
  %v12561 = vadd.f32 %v12199, %v12560
  %v12562 = vpop.f32.mrb[0].mxu0
  %v12563 = vadd.f32 %v12203, %v12562
  %v12564 = vpop.f32.mrb[0].mxu0
  %v12565 = vadd.f32 %v12199, %v12564
  %v12566 = vpop.f32.mrb[0].mxu0
  %v12567 = vadd.f32 %v12203, %v12566
  %12568 = vdwg.mxu0
  %12569 = vmatprep.subr.bf16.mxu0 %v12431
  %12570 = vmatpush1.bf16.msra.mxu0 %v12430
  %12571 = vmatprep.subr.bf16.mxu0 %v12433
  %12572 = vmatpush1.bf16.msra.mxu0 %v12432
  %12573 = vmatprep.subr.bf16.mxu0 %v12435
  %12574 = vmatpush1.bf16.msra.mxu0 %v12434
  %12575 = vmatprep.subr.bf16.mxu0 %v12437
  %12576 = vmatpush1.bf16.msra.mxu0 %v12436
  %12577 = vmatprep.subr.bf16.mxu0 %v12439
  %12578 = vmatpush1.bf16.msra.mxu0 %v12438
  %12579 = vmatprep.subr.bf16.mxu0 %v12441
  %12580 = vmatpush1.bf16.msra.mxu0 %v12440
  %12581 = vmatprep.subr.bf16.mxu0 %v12443
  %12582 = vmatpush1.bf16.msra.mxu0 %v12442
  %12583 = vmatprep.subr.bf16.mxu0 %v12445
  %12584 = vmatpush1.bf16.msra.mxu0 %v12444
  %12585 = vmatprep.subr.bf16.mxu0 %v12447
  %12586 = vmatpush1.bf16.msra.mxu0 %v12446
  %12587 = vmatprep.subr.bf16.mxu0 %v12449
  %12588 = vmatpush1.bf16.msra.mxu0 %v12448
  %12589 = vmatprep.subr.bf16.mxu0 %v12451
  %12590 = vmatpush1.bf16.msra.mxu0 %v12450
  %12591 = vmatprep.subr.bf16.mxu0 %v12453
  %12592 = vmatpush1.bf16.msra.mxu0 %v12452
  %12593 = vmatprep.subr.bf16.mxu0 %v12455
  %12594 = vmatpush1.bf16.msra.mxu0 %v12454
  %12595 = vmatprep.subr.bf16.mxu0 %v12457
  %12596 = vmatpush1.bf16.msra.mxu0 %v12456
  %12597 = vmatprep.subr.bf16.mxu0 %v12459
  %12598 = vmatpush1.bf16.msra.mxu0 %v12458
  %12599 = vmatprep.subr.bf16.mxu0 %v12461
  %12600 = vmatpush1.bf16.msra.mxu0 %v12460
  %12601 = vmatprep.mubr.bf16.mxu0 %v12127
  %12602 = vmatmul.mubr.bf16.gmra.mrb[0].mxu0 %v12126
  %v12603 = vpop.f32.mrb[0].mxu0
  %v12604 = vadd.f32 %v12561, %v12603
  %v12605 = vpop.f32.mrb[0].mxu0
  %v12606 = vadd.f32 %v12563, %v12605
  %v12607 = vpop.f32.mrb[0].mxu0
  %v12608 = vadd.f32 %v12565, %v12607
  %v12609 = vpop.f32.mrb[0].mxu0
  %v12610 = vadd.f32 %v12567, %v12609
  %12611 = vdwg.mxu0
  %v12612 = vmax.f32 %v12604, 0.0
  %v12613 = vmax.f32 %v12606, 0.0
  %v12614 = vmax.f32 %v12608, 0.0
  %v12615 = vmax.f32 %v12610, 0.0
  %v12616 = vpack.c.bf16 %v12614, %v12612
  %v12617 = vpack.c.bf16 %v12615, %v12613
  %s12618 = scalar_lea.vmem %s8, 256
  %v12619 = vld [vmem:[%s12618] sm:$0xf]
  %v12620 = vld [vmem:[%s12618 + $0x4] sm:$0xf]
  %v12621 = vld [vmem:[%s12618 + $0x8] sm:$0xf]
  %v12622 = vld [vmem:[%s12618 + $0xc] sm:$0xf]
  %v12623 = vld [vmem:[%s12618 + $0x10] sm:$0xf]
  %v12624 = vld [vmem:[%s12618 + $0x14] sm:$0xf]
  %v12625 = vld [vmem:[%s12618 + $0x18] sm:$0xf]
  %v12626 = vld [vmem:[%s12618 + $0x1c] sm:$0xf]
  %v12627 = vld [vmem:[%s12618 + $0x20] sm:$0xf]
  %v12628 = vld [vmem:[%s12618 + $0x24] sm:$0xf]
  %v12629 = vld [vmem:[%s12618 + $0x28] sm:$0xf]
  %v12630 = vld [vmem:[%s12618 + $0x2c] sm:$0xf]
  %v12631 = vld [vmem:[%s12618 + $0x30] sm:$0xf]
  %v12632 = vld [vmem:[%s12618 + $0x34] sm:$0xf]
  %v12633 = vld [vmem:[%s12618 + $0x38] sm:$0xf]
  %v12634 = vld [vmem:[%s12618 + $0x3c] sm:$0xf]
  %v12635 = vld [vmem:[%s12618 + $0x40] sm:$0xf]
  %v12636 = vld [vmem:[%s12618 + $0x44] sm:$0xf]
  %v12637 = vld [vmem:[%s12618 + $0x48] sm:$0xf]
  %v12638 = vld [vmem:[%s12618 + $0x4c] sm:$0xf]
  %v12639 = vld [vmem:[%s12618 + $0x50] sm:$0xf]
  %v12640 = vld [vmem:[%s12618 + $0x54] sm:$0xf]
  %v12641 = vld [vmem:[%s12618 + $0x58] sm:$0xf]
  %v12642 = vld [vmem:[%s12618 + $0x5c] sm:$0xf]
  %v12643 = vld [vmem:[%s12618 + $0x60] sm:$0xf]
  %v12644 = vld [vmem:[%s12618 + $0x64] sm:$0xf]
  %v12645 = vld [vmem:[%s12618 + $0x68] sm:$0xf]
  %v12646 = vld [vmem:[%s12618 + $0x6c] sm:$0xf]
  %v12647 = vld [vmem:[%s12618 + $0x70] sm:$0xf]
  %v12648 = vld [vmem:[%s12618 + $0x74] sm:$0xf]
  %v12649 = vld [vmem:[%s12618 + $0x78] sm:$0xf]
  %v12650 = vld [vmem:[%s12618 + $0x7c] sm:$0xf]
  %s12651 = scalar_lea.vmem %s9, 2
  %v12652 = vld [vmem:[%s12651] sm:$0x1]
  %v12654 = vlaneseq
  %v12655 = vshrl.u32 %v12654, 7
  %v12656 = vsub.s32 0, %v12655
  %v12657 = vrot.slane %v12652, %v12656
  %v12691 = vunpack.c.l.b16 %v12619
  %v12692 = vunpack.c.l.b16 %v12620
  %v12693 = vunpack.c.l.b16 %v12621
  %v12694 = vunpack.c.l.b16 %v12622
  %v12695 = vunpack.c.l.b16 %v12623
  %v12696 = vunpack.c.l.b16 %v12624
  %v12697 = vunpack.c.l.b16 %v12625
  %v12698 = vunpack.c.l.b16 %v12626
  %v12699 = vunpack.c.l.b16 %v12627
  %v12700 = vunpack.c.l.b16 %v12628
  %v12701 = vunpack.c.l.b16 %v12629
  %v12702 = vunpack.c.l.b16 %v12630
  %v12703 = vunpack.c.l.b16 %v12631
  %v12704 = vunpack.c.l.b16 %v12632
  %v12705 = vunpack.c.l.b16 %v12633
  %v12706 = vunpack.c.l.b16 %v12634
  %v12707 = vunpack.c.l.b16 %v12635
  %v12708 = vunpack.c.l.b16 %v12636
  %v12709 = vunpack.c.l.b16 %v12637
  %v12710 = vunpack.c.l.b16 %v12638
  %v12711 = vunpack.c.l.b16 %v12639
  %v12712 = vunpack.c.l.b16 %v12640
  %v12713 = vunpack.c.l.b16 %v12641
  %v12714 = vunpack.c.l.b16 %v12642
  %v12715 = vunpack.c.l.b16 %v12643
  %v12716 = vunpack.c.l.b16 %v12644
  %v12717 = vunpack.c.l.b16 %v12645
  %v12718 = vunpack.c.l.b16 %v12646
  %v12719 = vunpack.c.l.b16 %v12647
  %v12720 = vunpack.c.l.b16 %v12648
  %v12721 = vunpack.c.l.b16 %v12649
  %v12722 = vunpack.c.l.b16 %v12650
  %v12723 = vpack.c.b16 %v12692, %v12691
  %v12724 = vpack.c.b16 %v12694, %v12693
  %v12725 = vpack.c.b16 %v12696, %v12695
  %v12726 = vpack.c.b16 %v12698, %v12697
  %v12727 = vpack.c.b16 %v12700, %v12699
  %v12728 = vpack.c.b16 %v12702, %v12701
  %v12729 = vpack.c.b16 %v12704, %v12703
  %v12730 = vpack.c.b16 %v12706, %v12705
  %v12731 = vpack.c.b16 %v12708, %v12707
  %v12732 = vpack.c.b16 %v12710, %v12709
  %v12733 = vpack.c.b16 %v12712, %v12711
  %v12734 = vpack.c.b16 %v12714, %v12713
  %v12735 = vpack.c.b16 %v12716, %v12715
  %v12736 = vpack.c.b16 %v12718, %v12717
  %v12737 = vpack.c.b16 %v12720, %v12719
  %v12738 = vpack.c.b16 %v12722, %v12721
  %12755 = vmatprep.subr.bf16.mxu0 0
  %12756 = vmatpush1.bf16.msra.mxu0 %v12723
  %12757 = vmatprep.subr.bf16.mxu0 0
  %12758 = vmatpush1.bf16.msra.mxu0 %v12724
  %12759 = vmatprep.subr.bf16.mxu0 0
  %12760 = vmatpush1.bf16.msra.mxu0 %v12725
  %12761 = vmatprep.subr.bf16.mxu0 0
  %12762 = vmatpush1.bf16.msra.mxu0 %v12726
  %12763 = vmatprep.subr.bf16.mxu0 0
  %12764 = vmatpush1.bf16.msra.mxu0 %v12727
  %12765 = vmatprep.subr.bf16.mxu0 0
  %12766 = vmatpush1.bf16.msra.mxu0 %v12728
  %12767 = vmatprep.subr.bf16.mxu0 0
  %12768 = vmatpush1.bf16.msra.mxu0 %v12729
  %12769 = vmatprep.subr.bf16.mxu0 0
  %12770 = vmatpush1.bf16.msra.mxu0 %v12730
  %12771 = vmatprep.subr.bf16.mxu0 0
  %12772 = vmatpush1.bf16.msra.mxu0 %v12731
  %12773 = vmatprep.subr.bf16.mxu0 0
  %12774 = vmatpush1.bf16.msra.mxu0 %v12732
  %12775 = vmatprep.subr.bf16.mxu0 0
  %12776 = vmatpush1.bf16.msra.mxu0 %v12733
  %12777 = vmatprep.subr.bf16.mxu0 0
  %12778 = vmatpush1.bf16.msra.mxu0 %v12734
  %12779 = vmatprep.subr.bf16.mxu0 0
  %12780 = vmatpush1.bf16.msra.mxu0 %v12735
  %12781 = vmatprep.subr.bf16.mxu0 0
  %12782 = vmatpush1.bf16.msra.mxu0 %v12736
  %12783 = vmatprep.subr.bf16.mxu0 0
  %12784 = vmatpush1.bf16.msra.mxu0 %v12737
  %12785 = vmatprep.subr.bf16.mxu0 0
  %12786 = vmatpush1.bf16.msra.mxu0 %v12738
  %12787 = vmatprep.mubr.bf16.mxu0 %v12617
  %12788 = vmatmul.mubr.bf16.gmra.mrb[0].mxu0 %v12616
  %v12789 = vpop.f32.mrb[0].mxu0
  %v12790 = vadd.f32 %v12657, %v12789
  %v12791 = vpop.f32.mrb[0].mxu0
  %v12792 = vpop.f32.mrb[0].mxu0
  %v12793 = vadd.f32 %v12657, %v12792
  %v12794 = vpop.f32.mrb[0].mxu0
  %12795 = vdwg.mxu0
  %v12796 = vmax.f32 %v12790, 0.0
  %v12797 = vmax.f32 %v12793, 0.0
  %v12798 = vpack.c.bf16 %v12797, %v12796
  %s12799 = scalar_lea.vmem %s10, 128
  %v12800 = vld [vmem:[%s12799] sm:$0xf]
  %v12801 = vld [vmem:[%s12799 + $0x4] sm:$0xf]
  %v12802 = vld [vmem:[%s12799 + $0x8] sm:$0xf]
  %v12803 = vld [vmem:[%s12799 + $0xc] sm:$0xf]
  %v12804 = vld [vmem:[%s12799 + $0x10] sm:$0xf]
  %v12805 = vld [vmem:[%s12799 + $0x14] sm:$0xf]
  %v12806 = vld [vmem:[%s12799 + $0x18] sm:$0xf]
  %v12807 = vld [vmem:[%s12799 + $0x1c] sm:$0xf]
  %v12808 = vld [vmem:[%s12799 + $0x20] sm:$0xf]
  %v12809 = vld [vmem:[%s12799 + $0x24] sm:$0xf]
  %v12810 = vld [vmem:[%s12799 + $0x28] sm:$0xf]
  %v12811 = vld [vmem:[%s12799 + $0x2c] sm:$0xf]
  %v12812 = vld [vmem:[%s12799 + $0x30] sm:$0xf]
  %v12813 = vld [vmem:[%s12799 + $0x34] sm:$0xf]
  %v12814 = vld [vmem:[%s12799 + $0x38] sm:$0xf]
  %v12815 = vld [vmem:[%s12799 + $0x3c] sm:$0xf]
  %s12816 = scalar_lea.vmem %s11, 2
  %v12817 = vld [vmem:[%s12816] sm:$0x1]
  %v12819 = vlaneseq
  %v12820 = vshrl.u32 %v12819, 7
  %v12821 = vsub.s32 0, %v12820
  %v12822 = vrot.slane %v12817, %v12821
  %v12840 = vunpack.c.l.b16 %v12800
  %v12841 = vunpack.c.l.b16 %v12801
  %v12842 = vunpack.c.l.b16 %v12802
  %v12843 = vunpack.c.l.b16 %v12803
  %v12844 = vunpack.c.l.b16 %v12804
  %v12845 = vunpack.c.l.b16 %v12805
  %v12846 = vunpack.c.l.b16 %v12806
  %v12847 = vunpack.c.l.b16 %v12807
  %v12848 = vunpack.c.l.b16 %v12808
  %v12849 = vunpack.c.l.b16 %v12809
  %v12850 = vunpack.c.l.b16 %v12810
  %v12851 = vunpack.c.l.b16 %v12811
  %v12852 = vunpack.c.l.b16 %v12812
  %v12853 = vunpack.c.l.b16 %v12813
  %v12854 = vunpack.c.l.b16 %v12814
  %v12855 = vunpack.c.l.b16 %v12815
  %v12856 = vpack.c.b16 %v12841, %v12840
  %v12857 = vpack.c.b16 %v12843, %v12842
  %v12858 = vpack.c.b16 %v12845, %v12844
  %v12859 = vpack.c.b16 %v12847, %v12846
  %v12860 = vpack.c.b16 %v12849, %v12848
  %v12861 = vpack.c.b16 %v12851, %v12850
  %v12862 = vpack.c.b16 %v12853, %v12852
  %v12863 = vpack.c.b16 %v12855, %v12854
  %12872 = vmatprep.subr.bf16.mxu0 0
  %12873 = vmatpush1.bf16.msra.mxu0 %v12856
  %12874 = vmatprep.subr.bf16.mxu0 0
  %12875 = vmatpush1.bf16.msra.mxu0 %v12857
  %12876 = vmatprep.subr.bf16.mxu0 0
  %12877 = vmatpush1.bf16.msra.mxu0 %v12858
  %12878 = vmatprep.subr.bf16.mxu0 0
  %12879 = vmatpush1.bf16.msra.mxu0 %v12859
  %12880 = vmatprep.subr.bf16.mxu0 0
  %12881 = vmatpush1.bf16.msra.mxu0 %v12860
  %12882 = vmatprep.subr.bf16.mxu0 0
  %12883 = vmatpush1.bf16.msra.mxu0 %v12861
  %12884 = vmatprep.subr.bf16.mxu0 0
  %12885 = vmatpush1.bf16.msra.mxu0 %v12862
  %12886 = vmatprep.subr.bf16.mxu0 0
  %12887 = vmatpush1.bf16.msra.mxu0 %v12863
  %12888 = vmatprep.subr.bf16.mxu0 0
  %12889 = vmatpush1.bf16.msra.mxu0 0
  %12890 = vmatprep.subr.bf16.mxu0 0
  %12891 = vmatpush1.bf16.msra.mxu0 0
  %12892 = vmatprep.subr.bf16.mxu0 0
  %12893 = vmatpush1.bf16.msra.mxu0 0
  %12894 = vmatprep.subr.bf16.mxu0 0
  %12895 = vmatpush1.bf16.msra.mxu0 0
  %12896 = vmatprep.subr.bf16.mxu0 0
  %12897 = vmatpush1.bf16.msra.mxu0 0
  %12898 = vmatprep.subr.bf16.mxu0 0
  %12899 = vmatpush1.bf16.msra.mxu0 0
  %12900 = vmatprep.subr.bf16.mxu0 0
  %12901 = vmatpush1.bf16.msra.mxu0 0
  %12902 = vmatprep.subr.bf16.mxu0 0
  %12903 = vmatpush1.bf16.msra.mxu0 0
  %12904 = vmatprep.mubr.bf16.mxu0 0
  %12905 = vmatmul.mubr.bf16.gmra.mrb[0].mxu0 %v12798
  %v12906 = vpop.f32.mrb[0].mxu0
  %v12907 = vadd.f32 %v12822, %v12906
  %v12908 = vpop.f32.mrb[0].mxu0
  %v12909 = vpop.f32.mrb[0].mxu0
  %v12910 = vadd.f32 %v12822, %v12909
  %v12911 = vpop.f32.mrb[0].mxu0
  %12912 = vdwg.mxu0
  %v12913 = vadd.f32 %v11792, %v12907
  %v12914 = vadd.f32 %v11793, %v12910
  %s12915 = scalar_lea.vmem %s12, 32
  %12916 = vst [vmem:[%s12915] sm:$0xff] %v12913
  %12917 = vst [vmem:[%s12915 + $0x8] sm:$0xff] %v12914
  // Predicated region
  $region50: #{model_forward.2} parent=0 // pred_check
    _
  $region51: #{model_forward.2} parent=0 // pred_check_branch
    %12919 = sbr.rel (0) target = $region53
  $region52: #{model_forward.2} parent=0 // pred_region
    _
  $region53: #{model_forward.2} parent=0 // pred_fallthru
    _
  // Predicated region
  $region54: #{model_forward.2} parent=0 // pred_check
    _
  $region55: #{model_forward.2} parent=0 // pred_check_branch
    %12921 = sbr.rel (0) target = $region57
  $region56: #{model_forward.2} parent=0 // pred_region
    _
  $region57: #{model_forward.2} parent=0 // pred_fallthru
    _

</llo_original>
